<compile_context>
chip_gen: v7x
topology: tpu7x:2x2x1
jax: 0.10.0
libtpu: 0.0.40
codegen_flags: <defaults>
</compile_context>

<pallas_src>
import math

import jax
import jax.numpy as jnp
from jax import lax
from jax.experimental import pallas as pl
from jax.experimental.pallas import tpu as pltpu

N, C, H, W = 1, 24, 64, 64
SPLIT = 8                               # v has 8 channels -> three 8-channel outputs
INV_SCALE = math.sqrt(float(C))         # sqrt(w.size(1)) == sqrt(24)


def _attn_kernel(w_ref, q_ref, k_ref, v_ref):
    # w_ref: (1, 24, 64, 64); q/k/v_ref: (1, 8, 64, 64) each.
    w = w_ref[0].astype(jnp.float32)                              # (24, 64, 64)

    # S = W @ W^T per channel; contract both operands on their last dim so no
    # explicit transpose is materialized (MXU handles it natively).
    s = lax.dot_general(
        w, w,
        dimension_numbers=(((2,), (2,)), ((0,), (0,))),
        preferred_element_type=jnp.float32,
    ) * (1.0 / INV_SCALE)                                         # (24, 64, 64)

    # Numerically-stable softmax over the last dim.
    m = jnp.max(s, axis=-1, keepdims=True)
    p = jnp.exp(s - m)
    denom = jnp.sum(p, axis=-1, keepdims=True)
    a = p * pl.reciprocal(denom, approx=False)

    # out = A @ W (batched over channels).
    out = lax.dot_general(
        a, w,
        dimension_numbers=(((2,), (1,)), ((0,), (0,))),
        preferred_element_type=jnp.float32,
    ).astype(q_ref.dtype)                                         # (24, 64, 64)

    # Emit the three 8-channel chunks directly: no wrapper-side split copies.
    # Channel is a leading (untiled) dim, so these slices stay within vreg tiles.
    q_ref[0] = out[0 * SPLIT:1 * SPLIT]
    k_ref[0] = out[1 * SPLIT:2 * SPLIT]
    v_ref[0] = out[2 * SPLIT:3 * SPLIT]


def model_forward(x1, key_param):
    # key_param (shape (128,)) is a module parameter but unused in forward,
    # matching the PyTorch reference.
    del key_param
    n, c, h, w = x1.shape
    assert (n, c, h, w) == (N, C, H, W)

    # Advisory cost so XLA can overlap this tiny custom call with neighbors.
    flops = (n * c) * 2 * (2 * h * h * w)          # two 64x64x64 matmuls / chan
    transcendentals = (n * c) * h * w              # exp in softmax
    bytes_accessed = 2 * (n * c) * h * w * x1.dtype.itemsize
    cost = pl.CostEstimate(
        flops=flops, transcendentals=transcendentals, bytes_accessed=bytes_accessed
    )

    out_chunk = jax.ShapeDtypeStruct((n, SPLIT, h, w), x1.dtype)

    # TODO(synk): the reference calls output.split(v.size()) which is invalid
    # in PyTorch (sections [1, 8, 64, 64] along dim 0 of size 1); we implement
    # the evident intent: split into v-channel-sized (8) chunks along dim 1.
    q, k, v = pl.pallas_call(
        _attn_kernel,
        out_shape=(out_chunk, out_chunk, out_chunk),
        grid_spec=pltpu.PrefetchScalarGridSpec(
            num_scalar_prefetch=0,
            grid=(1,),
            in_specs=[pl.BlockSpec((1, c, h, w), lambda i: (0, 0, 0, 0))],
            out_specs=(
                pl.BlockSpec((1, SPLIT, h, w), lambda i: (0, 0, 0, 0)),
                pl.BlockSpec((1, SPLIT, h, w), lambda i: (0, 0, 0, 0)),
                pl.BlockSpec((1, SPLIT, h, w), lambda i: (0, 0, 0, 0)),
            ),
        ),
        compiler_params=pltpu.CompilerParams(
            dimension_semantics=("arbitrary",)),
        cost_estimate=cost,
    )(x1)
    return q, k, v


if __name__ == "__main__":
    key = jax.random.PRNGKey(0)
    k_x, k_p = jax.random.split(key)
    x1 = jax.random.normal(k_x, (N, C, H, W), dtype=jnp.float32)
    key_param = jax.random.normal(k_p, (128,), dtype=jnp.float32)

    outs = jax.jit(model_forward)(x1, key_param)
    outs = jax.block_until_ready(outs)

    # Light sanity check against a pure-JAX reference.
    s_ref = jnp.einsum("nchw,ncvw->nchv", x1, x1) / INV_SCALE
    a_ref = jax.nn.softmax(s_ref, axis=-1)
    o_ref = jnp.einsum("nchv,ncvw->nchw", a_ref, x1)
    full = jnp.concatenate(outs, axis=1)
    assert full.shape == x1.shape
    assert jnp.allclose(full, o_ref, atol=1e-4, rtol=1e-4)

    print("KERNEL_OK")
</pallas_src>

<mosaic_0001>
module attributes {stable_mosaic.version = 11 : i64} {
  func.func @_attn_kernel(%arg0: i32, %arg1: memref<1x24x64x64xf32, #tpu.memory_space<vmem>>, %arg2: memref<1x8x64x64xf32, #tpu.memory_space<vmem>>, %arg3: memref<1x8x64x64xf32, #tpu.memory_space<vmem>>, %arg4: memref<1x8x64x64xf32, #tpu.memory_space<vmem>>) attributes {dimension_semantics = [#tpu.dimension_semantics<arbitrary>], iteration_bounds = array<i64: 1>, scalar_prefetch = 0 : i64, scratch_operands = 0 : i64, tpu.core_type = #tpu.core_type<tc>, window_params = [{pipeline_mode = #tpu.pipeline_mode<synchronous>, transform_indices = @transform_0, window_bounds = array<i64: 1, 24, 64, 64>}, {pipeline_mode = #tpu.pipeline_mode<synchronous>, transform_indices = @transform_1, window_bounds = array<i64: 1, 8, 64, 64>}, {pipeline_mode = #tpu.pipeline_mode<synchronous>, transform_indices = @transform_2, window_bounds = array<i64: 1, 8, 64, 64>}, {pipeline_mode = #tpu.pipeline_mode<synchronous>, transform_indices = @transform_3, window_bounds = array<i64: 1, 8, 64, 64>}]} {
    %c0 = arith.constant 0 : index
    %c0_0 = arith.constant 0 : index
    %c0_1 = arith.constant 0 : index
    %c0_2 = arith.constant 0 : index
    %0 = vector.load %arg1[%c0, %c0_0, %c0_1, %c0_2] : memref<1x24x64x64xf32, #tpu.memory_space<vmem>>, vector<1x24x64x64xf32>
    %1 = vector.shape_cast %0 : vector<1x24x64x64xf32> to vector<24x64x64xf32>
    %cst = arith.constant dense<0.000000e+00> : vector<24x64x64xf32>
    %2 = tpu.matmul %1, %1, %cst {dimension_numbers = #tpu.dot_dimension_numbers<[2], [2], [1], [1], [0, 0, 0, 1, 1, 1], [0], [0]>} : vector<24x64x64xf32>, vector<24x64x64xf32>, vector<24x64x64xf32> -> vector<24x64x64xf32>
    %cst_3 = arith.constant 0.204124153 : f32
    %3 = vector.broadcast %cst_3 : f32 to vector<24x64x64xf32>
    %4 = arith.mulf %2, %3 : vector<24x64x64xf32>
    %cst_4 = arith.constant dense<0xFF800000> : vector<24x64xf32>
    %5 = vector.multi_reduction <maximumf>, %4, %cst_4 [2] : vector<24x64x64xf32> to vector<24x64xf32>
    %6 = vector.shape_cast %5 : vector<24x64xf32> to vector<24x64x1xf32>
    %7 = vector.broadcast %6 : vector<24x64x1xf32> to vector<24x64x64xf32>
    %8 = arith.subf %4, %7 : vector<24x64x64xf32>
    %9 = math.exp %8 : vector<24x64x64xf32>
    %cst_5 = arith.constant dense<0.000000e+00> : vector<24x64xf32>
    %10 = vector.multi_reduction <add>, %9, %cst_5 [2] : vector<24x64x64xf32> to vector<24x64xf32>
    %11 = vector.shape_cast %10 : vector<24x64xf32> to vector<24x64x1xf32>
    %12 = tpu.reciprocal %11 : vector<24x64x1xf32> -> vector<24x64x1xf32>
    %13 = vector.broadcast %12 : vector<24x64x1xf32> to vector<24x64x64xf32>
    %14 = arith.mulf %9, %13 : vector<24x64x64xf32>
    %cst_6 = arith.constant dense<0.000000e+00> : vector<24x64x64xf32>
    %15 = tpu.matmul %14, %1, %cst_6 {dimension_numbers = #tpu.dot_dimension_numbers<[2], [1], [1], [2], [0, 0, 0, 1, 1, 2], [0], [0]>} : vector<24x64x64xf32>, vector<24x64x64xf32>, vector<24x64x64xf32> -> vector<24x64x64xf32>
    %16 = vector.extract_strided_slice %15 {offsets = [0, 0, 0], sizes = [8, 64, 64], strides = [1, 1, 1]} : vector<24x64x64xf32> to vector<8x64x64xf32>
    %c0_7 = arith.constant 0 : index
    %c0_8 = arith.constant 0 : index
    %c0_9 = arith.constant 0 : index
    %c0_10 = arith.constant 0 : index
    %17 = vector.load %arg2[%c0_7, %c0_8, %c0_9, %c0_10] : memref<1x8x64x64xf32, #tpu.memory_space<vmem>>, vector<1x8x64x64xf32>
    %18 = vector.shape_cast %17 : vector<1x8x64x64xf32> to vector<8x64x64xf32>
    %19 = vector.shape_cast %16 : vector<8x64x64xf32> to vector<1x8x64x64xf32>
    tpu.vector_store %arg2[%c0_7, %c0_8, %c0_9, %c0_10], %19 {strides = array<i32>} : memref<1x8x64x64xf32, #tpu.memory_space<vmem>>, vector<1x8x64x64xf32>,
    %20 = vector.extract_strided_slice %15 {offsets = [8, 0, 0], sizes = [8, 64, 64], strides = [1, 1, 1]} : vector<24x64x64xf32> to vector<8x64x64xf32>
    %c0_11 = arith.constant 0 : index
    %c0_12 = arith.constant 0 : index
    %c0_13 = arith.constant 0 : index
    %c0_14 = arith.constant 0 : index
    %21 = vector.load %arg3[%c0_11, %c0_12, %c0_13, %c0_14] : memref<1x8x64x64xf32, #tpu.memory_space<vmem>>, vector<1x8x64x64xf32>
    %22 = vector.shape_cast %21 : vector<1x8x64x64xf32> to vector<8x64x64xf32>
    %23 = vector.shape_cast %20 : vector<8x64x64xf32> to vector<1x8x64x64xf32>
    tpu.vector_store %arg3[%c0_11, %c0_12, %c0_13, %c0_14], %23 {strides = array<i32>} : memref<1x8x64x64xf32, #tpu.memory_space<vmem>>, vector<1x8x64x64xf32>,
    %24 = vector.extract_strided_slice %15 {offsets = [16, 0, 0], sizes = [8, 64, 64], strides = [1, 1, 1]} : vector<24x64x64xf32> to vector<8x64x64xf32>
    %c0_15 = arith.constant 0 : index
    %c0_16 = arith.constant 0 : index
    %c0_17 = arith.constant 0 : index
    %c0_18 = arith.constant 0 : index
    %25 = vector.load %arg4[%c0_15, %c0_16, %c0_17, %c0_18] : memref<1x8x64x64xf32, #tpu.memory_space<vmem>>, vector<1x8x64x64xf32>
    %26 = vector.shape_cast %25 : vector<1x8x64x64xf32> to vector<8x64x64xf32>
    %27 = vector.shape_cast %24 : vector<8x64x64xf32> to vector<1x8x64x64xf32>
    tpu.vector_store %arg4[%c0_15, %c0_16, %c0_17, %c0_18], %27 {strides = array<i32>} : memref<1x8x64x64xf32, #tpu.memory_space<vmem>>, vector<1x8x64x64xf32>,
    return
  }
  func.func @transform_0(%arg0: i32) -> (i32, i32, i32, i32) {
    %c0_i32 = arith.constant 0 : i32
    %c0_i32_0 = arith.constant 0 : i32
    %c0_i32_1 = arith.constant 0 : i32
    %c0_i32_2 = arith.constant 0 : i32
    %c0_i32_3 = arith.constant 0 : i32
    return %c0_i32, %c0_i32_0, %c0_i32_1, %c0_i32_2 : i32, i32, i32, i32
  }
  func.func @transform_1(%arg0: i32) -> (i32, i32, i32, i32) {
    %c0_i32 = arith.constant 0 : i32
    %c0_i32_0 = arith.constant 0 : i32
    %c0_i32_1 = arith.constant 0 : i32
    %c0_i32_2 = arith.constant 0 : i32
    %c0_i32_3 = arith.constant 0 : i32
    return %c0_i32, %c0_i32_0, %c0_i32_1, %c0_i32_2 : i32, i32, i32, i32
  }
  func.func @transform_2(%arg0: i32) -> (i32, i32, i32, i32) {
    %c0_i32 = arith.constant 0 : i32
    %c0_i32_0 = arith.constant 0 : i32
    %c0_i32_1 = arith.constant 0 : i32
    %c0_i32_2 = arith.constant 0 : i32
    %c0_i32_3 = arith.constant 0 : i32
    return %c0_i32, %c0_i32_0, %c0_i32_1, %c0_i32_2 : i32, i32, i32, i32
  }
  func.func @transform_3(%arg0: i32) -> (i32, i32, i32, i32) {
    %c0_i32 = arith.constant 0 : i32
    %c0_i32_0 = arith.constant 0 : i32
    %c0_i32_1 = arith.constant 0 : i32
    %c0_i32_2 = arith.constant 0 : i32
    %c0_i32_3 = arith.constant 0 : i32
    return %c0_i32, %c0_i32_0, %c0_i32_1, %c0_i32_2 : i32, i32, i32, i32
  }
}

</mosaic_0001>

<llo_original>
// kernel: model_forward.1
$region0: #{model_forward.1}
  #allocation0 [shape = 'u32[]', space=smem, size = 0x4, offset = 0x4, fixed_abs, tag = 'smem constant byte address 0x4 - core index']
  #allocation1 [shape = 'u32[144,128]{1,0:T(1,128)}', space=vmem, size = 0x12000, scoped, tag = 'internal scratch']
  %s0 = inlined_call_operand.hbm [shape: f32[1,24,64,64], index: 0, kind: input, shape index: {}]
  %s1 = inlined_call_operand.hbm [shape: f32[1,8,64,64], index: 1, kind: output, shape index: {0}]
  %s2 = inlined_call_operand.hbm [shape: f32[1,8,64,64], index: 2, kind: output, shape index: {1}]
  %s3 = inlined_call_operand.hbm [shape: f32[1,8,64,64], index: 3, kind: output, shape index: {2}]
  %4 = xla_tuple %s1, %s2, %s3
  %s5 = sld [smem:[#allocation0]]
  $region34: #{model_forward.1} parent=0
    _
  %s7 = ssub.s32 1, %s5
  %s8 = scalar_select 0, %s7, %s5
  $region1: #{model_forward.1} parent=0
    #allocation2 [shape = 'u8[786432]{0}', space=vmem, size = 0xc0000, scoped, tag = 'input window, operand 0, single buffered']
    #allocation3 [shape = 's32[1]{0}', space=sflag, size = 0x4, scoped, tag = 'scoped memory for model_forward.1']
    #allocation4 [shape = 's32[1]{0}', space=sflag, size = 0x4, scoped, tag = 'scoped memory for model_forward.1']
    #allocation5 [shape = 'u8[262144]{0}', space=vmem, size = 0x40000, scoped, tag = 'output window, operand 0, single buffered']
    #allocation6 [shape = 'u8[262144]{0}', space=vmem, size = 0x40000, scoped, tag = 'output window, operand 1, single buffered']
    #allocation7 [shape = 's32[1]{0}', space=sflag, size = 0x4, scoped, tag = 'scoped memory for model_forward.1']
    #allocation8 [shape = 'u8[262144]{0}', space=vmem, size = 0x40000, scoped, tag = 'output window, operand 2, single buffered']
    %9 = vsyncpa [#allocation3], 0
    %10 = vsyncpa [#allocation4], 0
    %11 = vsyncpa [#allocation7], 0
    // Predicated region
    $region2: #{model_forward.1} parent=1 // pred_check
      _
    $region3: #{model_forward.1} parent=1 // pred_check_branch
      %13 = sbr.rel (0) target = $region5
    $region4: #{model_forward.1} parent=1 // pred_region
      %s15 = ssub.s32 24576, 24576
      %16 = vsyncadd [#allocation3], %s15
      %s17 = sshll.u32 [#allocation2], 4
      %s18 = int_to_ptr.vmem [resolvable:$true] %s17
      %23 = dma.hbm_to_vmem [thread:$0]  %s0, 24576, %s18, [#allocation3], 128, 128, 8
    $region5: #{model_forward.1} parent=1 // pred_fallthru
      _
    // Predicated region
    $region6: #{model_forward.1} parent=1 // pred_check
      _
    $region7: #{model_forward.1} parent=1 // pred_check_branch
      %25 = sbr.rel (0) target = $region9
    $region8: #{model_forward.1} parent=1 // pred_region
      %26 = dma.done [#allocation3], 24576
    $region9: #{model_forward.1} parent=1 // pred_fallthru
      _
    %v27 = vld [vmem:[#allocation2] sm:$0xff]
    %v28 = vld [vmem:[#allocation2 + $0x8] sm:$0xff]
    %v29 = vld [vmem:[#allocation2 + $0x10] sm:$0xff]
    %v30 = vld [vmem:[#allocation2 + $0x18] sm:$0xff]
    %v31 = vld [vmem:[#allocation2 + $0x20] sm:$0xff]
    %v32 = vld [vmem:[#allocation2 + $0x28] sm:$0xff]
    %v33 = vld [vmem:[#allocation2 + $0x30] sm:$0xff]
    %v34 = vld [vmem:[#allocation2 + $0x38] sm:$0xff]
    %v35 = vld [vmem:[#allocation2 + $0x40] sm:$0xff]
    %v36 = vld [vmem:[#allocation2 + $0x48] sm:$0xff]
    %v37 = vld [vmem:[#allocation2 + $0x50] sm:$0xff]
    %v38 = vld [vmem:[#allocation2 + $0x58] sm:$0xff]
    %v39 = vld [vmem:[#allocation2 + $0x60] sm:$0xff]
    %v40 = vld [vmem:[#allocation2 + $0x68] sm:$0xff]
    %v41 = vld [vmem:[#allocation2 + $0x70] sm:$0xff]
    %v42 = vld [vmem:[#allocation2 + $0x78] sm:$0xff]
    %v43 = vld [vmem:[#allocation2 + $0x80] sm:$0xff]
    %v44 = vld [vmem:[#allocation2 + $0x88] sm:$0xff]
    %v45 = vld [vmem:[#allocation2 + $0x90] sm:$0xff]
    %v46 = vld [vmem:[#allocation2 + $0x98] sm:$0xff]
    %v47 = vld [vmem:[#allocation2 + $0xa0] sm:$0xff]
    %v48 = vld [vmem:[#allocation2 + $0xa8] sm:$0xff]
    %v49 = vld [vmem:[#allocation2 + $0xb0] sm:$0xff]
    %v50 = vld [vmem:[#allocation2 + $0xb8] sm:$0xff]
    %v51 = vld [vmem:[#allocation2 + $0xc0] sm:$0xff]
    %v52 = vld [vmem:[#allocation2 + $0xc8] sm:$0xff]
    %v53 = vld [vmem:[#allocation2 + $0xd0] sm:$0xff]
    %v54 = vld [vmem:[#allocation2 + $0xd8] sm:$0xff]
    %v55 = vld [vmem:[#allocation2 + $0xe0] sm:$0xff]
    %v56 = vld [vmem:[#allocation2 + $0xe8] sm:$0xff]
    %v57 = vld [vmem:[#allocation2 + $0xf0] sm:$0xff]
    %v58 = vld [vmem:[#allocation2 + $0xf8] sm:$0xff]
    %v59 = vld [vmem:[#allocation2 + $0x100] sm:$0xff]
    %v60 = vld [vmem:[#allocation2 + $0x108] sm:$0xff]
    %v61 = vld [vmem:[#allocation2 + $0x110] sm:$0xff]
    %v62 = vld [vmem:[#allocation2 + $0x118] sm:$0xff]
    %v63 = vld [vmem:[#allocation2 + $0x120] sm:$0xff]
    %v64 = vld [vmem:[#allocation2 + $0x128] sm:$0xff]
    %v65 = vld [vmem:[#allocation2 + $0x130] sm:$0xff]
    %v66 = vld [vmem:[#allocation2 + $0x138] sm:$0xff]
    %v67 = vld [vmem:[#allocation2 + $0x140] sm:$0xff]
    %v68 = vld [vmem:[#allocation2 + $0x148] sm:$0xff]
    %v69 = vld [vmem:[#allocation2 + $0x150] sm:$0xff]
    %v70 = vld [vmem:[#allocation2 + $0x158] sm:$0xff]
    %v71 = vld [vmem:[#allocation2 + $0x160] sm:$0xff]
    %v72 = vld [vmem:[#allocation2 + $0x168] sm:$0xff]
    %v73 = vld [vmem:[#allocation2 + $0x170] sm:$0xff]
    %v74 = vld [vmem:[#allocation2 + $0x178] sm:$0xff]
    %v75 = vld [vmem:[#allocation2 + $0x180] sm:$0xff]
    %v76 = vld [vmem:[#allocation2 + $0x188] sm:$0xff]
    %v77 = vld [vmem:[#allocation2 + $0x190] sm:$0xff]
    %v78 = vld [vmem:[#allocation2 + $0x198] sm:$0xff]
    %v79 = vld [vmem:[#allocation2 + $0x1a0] sm:$0xff]
    %v80 = vld [vmem:[#allocation2 + $0x1a8] sm:$0xff]
    %v81 = vld [vmem:[#allocation2 + $0x1b0] sm:$0xff]
    %v82 = vld [vmem:[#allocation2 + $0x1b8] sm:$0xff]
    %v83 = vld [vmem:[#allocation2 + $0x1c0] sm:$0xff]
    %v84 = vld [vmem:[#allocation2 + $0x1c8] sm:$0xff]
    %v85 = vld [vmem:[#allocation2 + $0x1d0] sm:$0xff]
    %v86 = vld [vmem:[#allocation2 + $0x1d8] sm:$0xff]
    %v87 = vld [vmem:[#allocation2 + $0x1e0] sm:$0xff]
    %v88 = vld [vmem:[#allocation2 + $0x1e8] sm:$0xff]
    %v89 = vld [vmem:[#allocation2 + $0x1f0] sm:$0xff]
    %v90 = vld [vmem:[#allocation2 + $0x1f8] sm:$0xff]
    %v91 = vld [vmem:[#allocation2 + $0x200] sm:$0xff]
    %v92 = vld [vmem:[#allocation2 + $0x208] sm:$0xff]
    %v93 = vld [vmem:[#allocation2 + $0x210] sm:$0xff]
    %v94 = vld [vmem:[#allocation2 + $0x218] sm:$0xff]
    %v95 = vld [vmem:[#allocation2 + $0x220] sm:$0xff]
    %v96 = vld [vmem:[#allocation2 + $0x228] sm:$0xff]
    %v97 = vld [vmem:[#allocation2 + $0x230] sm:$0xff]
    %v98 = vld [vmem:[#allocation2 + $0x238] sm:$0xff]
    %v99 = vld [vmem:[#allocation2 + $0x240] sm:$0xff]
    %v100 = vld [vmem:[#allocation2 + $0x248] sm:$0xff]
    %v101 = vld [vmem:[#allocation2 + $0x250] sm:$0xff]
    %v102 = vld [vmem:[#allocation2 + $0x258] sm:$0xff]
    %v103 = vld [vmem:[#allocation2 + $0x260] sm:$0xff]
    %v104 = vld [vmem:[#allocation2 + $0x268] sm:$0xff]
    %v105 = vld [vmem:[#allocation2 + $0x270] sm:$0xff]
    %v106 = vld [vmem:[#allocation2 + $0x278] sm:$0xff]
    %v107 = vld [vmem:[#allocation2 + $0x280] sm:$0xff]
    %v108 = vld [vmem:[#allocation2 + $0x288] sm:$0xff]
    %v109 = vld [vmem:[#allocation2 + $0x290] sm:$0xff]
    %v110 = vld [vmem:[#allocation2 + $0x298] sm:$0xff]
    %v111 = vld [vmem:[#allocation2 + $0x2a0] sm:$0xff]
    %v112 = vld [vmem:[#allocation2 + $0x2a8] sm:$0xff]
    %v113 = vld [vmem:[#allocation2 + $0x2b0] sm:$0xff]
    %v114 = vld [vmem:[#allocation2 + $0x2b8] sm:$0xff]
    %v115 = vld [vmem:[#allocation2 + $0x2c0] sm:$0xff]
    %v116 = vld [vmem:[#allocation2 + $0x2c8] sm:$0xff]
    %v117 = vld [vmem:[#allocation2 + $0x2d0] sm:$0xff]
    %v118 = vld [vmem:[#allocation2 + $0x2d8] sm:$0xff]
    %v119 = vld [vmem:[#allocation2 + $0x2e0] sm:$0xff]
    %v120 = vld [vmem:[#allocation2 + $0x2e8] sm:$0xff]
    %v121 = vld [vmem:[#allocation2 + $0x2f0] sm:$0xff]
    %v122 = vld [vmem:[#allocation2 + $0x2f8] sm:$0xff]
    %v123 = vld [vmem:[#allocation2 + $0x300] sm:$0xff]
    %v124 = vld [vmem:[#allocation2 + $0x308] sm:$0xff]
    %v125 = vld [vmem:[#allocation2 + $0x310] sm:$0xff]
    %v126 = vld [vmem:[#allocation2 + $0x318] sm:$0xff]
    %v127 = vld [vmem:[#allocation2 + $0x320] sm:$0xff]
    %v128 = vld [vmem:[#allocation2 + $0x328] sm:$0xff]
    %v129 = vld [vmem:[#allocation2 + $0x330] sm:$0xff]
    %v130 = vld [vmem:[#allocation2 + $0x338] sm:$0xff]
    %v131 = vld [vmem:[#allocation2 + $0x340] sm:$0xff]
    %v132 = vld [vmem:[#allocation2 + $0x348] sm:$0xff]
    %v133 = vld [vmem:[#allocation2 + $0x350] sm:$0xff]
    %v134 = vld [vmem:[#allocation2 + $0x358] sm:$0xff]
    %v135 = vld [vmem:[#allocation2 + $0x360] sm:$0xff]
    %v136 = vld [vmem:[#allocation2 + $0x368] sm:$0xff]
    %v137 = vld [vmem:[#allocation2 + $0x370] sm:$0xff]
    %v138 = vld [vmem:[#allocation2 + $0x378] sm:$0xff]
    %v139 = vld [vmem:[#allocation2 + $0x380] sm:$0xff]
    %v140 = vld [vmem:[#allocation2 + $0x388] sm:$0xff]
    %v141 = vld [vmem:[#allocation2 + $0x390] sm:$0xff]
    %v142 = vld [vmem:[#allocation2 + $0x398] sm:$0xff]
    %v143 = vld [vmem:[#allocation2 + $0x3a0] sm:$0xff]
    %v144 = vld [vmem:[#allocation2 + $0x3a8] sm:$0xff]
    %v145 = vld [vmem:[#allocation2 + $0x3b0] sm:$0xff]
    %v146 = vld [vmem:[#allocation2 + $0x3b8] sm:$0xff]
    %v147 = vld [vmem:[#allocation2 + $0x3c0] sm:$0xff]
    %v148 = vld [vmem:[#allocation2 + $0x3c8] sm:$0xff]
    %v149 = vld [vmem:[#allocation2 + $0x3d0] sm:$0xff]
    %v150 = vld [vmem:[#allocation2 + $0x3d8] sm:$0xff]
    %v151 = vld [vmem:[#allocation2 + $0x3e0] sm:$0xff]
    %v152 = vld [vmem:[#allocation2 + $0x3e8] sm:$0xff]
    %v153 = vld [vmem:[#allocation2 + $0x3f0] sm:$0xff]
    %v154 = vld [vmem:[#allocation2 + $0x3f8] sm:$0xff]
    %v155 = vld [vmem:[#allocation2 + $0x400] sm:$0xff]
    %v156 = vld [vmem:[#allocation2 + $0x408] sm:$0xff]
    %v157 = vld [vmem:[#allocation2 + $0x410] sm:$0xff]
    %v158 = vld [vmem:[#allocation2 + $0x418] sm:$0xff]
    %v159 = vld [vmem:[#allocation2 + $0x420] sm:$0xff]
    %v160 = vld [vmem:[#allocation2 + $0x428] sm:$0xff]
    %v161 = vld [vmem:[#allocation2 + $0x430] sm:$0xff]
    %v162 = vld [vmem:[#allocation2 + $0x438] sm:$0xff]
    %v163 = vld [vmem:[#allocation2 + $0x440] sm:$0xff]
    %v164 = vld [vmem:[#allocation2 + $0x448] sm:$0xff]
    %v165 = vld [vmem:[#allocation2 + $0x450] sm:$0xff]
    %v166 = vld [vmem:[#allocation2 + $0x458] sm:$0xff]
    %v167 = vld [vmem:[#allocation2 + $0x460] sm:$0xff]
    %v168 = vld [vmem:[#allocation2 + $0x468] sm:$0xff]
    %v169 = vld [vmem:[#allocation2 + $0x470] sm:$0xff]
    %v170 = vld [vmem:[#allocation2 + $0x478] sm:$0xff]
    %v171 = vld [vmem:[#allocation2 + $0x480] sm:$0xff]
    %v172 = vld [vmem:[#allocation2 + $0x488] sm:$0xff]
    %v173 = vld [vmem:[#allocation2 + $0x490] sm:$0xff]
    %v174 = vld [vmem:[#allocation2 + $0x498] sm:$0xff]
    %v175 = vld [vmem:[#allocation2 + $0x4a0] sm:$0xff]
    %v176 = vld [vmem:[#allocation2 + $0x4a8] sm:$0xff]
    %v177 = vld [vmem:[#allocation2 + $0x4b0] sm:$0xff]
    %v178 = vld [vmem:[#allocation2 + $0x4b8] sm:$0xff]
    %v179 = vld [vmem:[#allocation2 + $0x4c0] sm:$0xff]
    %v180 = vld [vmem:[#allocation2 + $0x4c8] sm:$0xff]
    %v181 = vld [vmem:[#allocation2 + $0x4d0] sm:$0xff]
    %v182 = vld [vmem:[#allocation2 + $0x4d8] sm:$0xff]
    %v183 = vld [vmem:[#allocation2 + $0x4e0] sm:$0xff]
    %v184 = vld [vmem:[#allocation2 + $0x4e8] sm:$0xff]
    %v185 = vld [vmem:[#allocation2 + $0x4f0] sm:$0xff]
    %v186 = vld [vmem:[#allocation2 + $0x4f8] sm:$0xff]
    %v187 = vld [vmem:[#allocation2 + $0x500] sm:$0xff]
    %v188 = vld [vmem:[#allocation2 + $0x508] sm:$0xff]
    %v189 = vld [vmem:[#allocation2 + $0x510] sm:$0xff]
    %v190 = vld [vmem:[#allocation2 + $0x518] sm:$0xff]
    %v191 = vld [vmem:[#allocation2 + $0x520] sm:$0xff]
    %v192 = vld [vmem:[#allocation2 + $0x528] sm:$0xff]
    %v193 = vld [vmem:[#allocation2 + $0x530] sm:$0xff]
    %v194 = vld [vmem:[#allocation2 + $0x538] sm:$0xff]
    %v195 = vld [vmem:[#allocation2 + $0x540] sm:$0xff]
    %v196 = vld [vmem:[#allocation2 + $0x548] sm:$0xff]
    %v197 = vld [vmem:[#allocation2 + $0x550] sm:$0xff]
    %v198 = vld [vmem:[#allocation2 + $0x558] sm:$0xff]
    %v199 = vld [vmem:[#allocation2 + $0x560] sm:$0xff]
    %v200 = vld [vmem:[#allocation2 + $0x568] sm:$0xff]
    %v201 = vld [vmem:[#allocation2 + $0x570] sm:$0xff]
    %v202 = vld [vmem:[#allocation2 + $0x578] sm:$0xff]
    %v203 = vld [vmem:[#allocation2 + $0x580] sm:$0xff]
    %v204 = vld [vmem:[#allocation2 + $0x588] sm:$0xff]
    %v205 = vld [vmem:[#allocation2 + $0x590] sm:$0xff]
    %v206 = vld [vmem:[#allocation2 + $0x598] sm:$0xff]
    %v207 = vld [vmem:[#allocation2 + $0x5a0] sm:$0xff]
    %v208 = vld [vmem:[#allocation2 + $0x5a8] sm:$0xff]
    %v209 = vld [vmem:[#allocation2 + $0x5b0] sm:$0xff]
    %v210 = vld [vmem:[#allocation2 + $0x5b8] sm:$0xff]
    %v211 = vld [vmem:[#allocation2 + $0x5c0] sm:$0xff]
    %v212 = vld [vmem:[#allocation2 + $0x5c8] sm:$0xff]
    %v213 = vld [vmem:[#allocation2 + $0x5d0] sm:$0xff]
    %v214 = vld [vmem:[#allocation2 + $0x5d8] sm:$0xff]
    %v215 = vld [vmem:[#allocation2 + $0x5e0] sm:$0xff]
    %v216 = vld [vmem:[#allocation2 + $0x5e8] sm:$0xff]
    %v217 = vld [vmem:[#allocation2 + $0x5f0] sm:$0xff]
    %v218 = vld [vmem:[#allocation2 + $0x5f8] sm:$0xff]
    %vm219 = vcmask 523264
    %v221 = vsel %vm219, %v27, 0
    %v224 = vsel %vm219, %v28, 0
    %v227 = vsel %vm219, %v29, 0
    %v230 = vsel %vm219, %v30, 0
    %v233 = vsel %vm219, %v31, 0
    %v236 = vsel %vm219, %v32, 0
    %v239 = vsel %vm219, %v33, 0
    %v242 = vsel %vm219, %v34, 0
    %244 = vmatprep.subr.mxu0 0.0
    %245 = vmatpush1.xpose.msra.mxu0 %v221
    %246 = vmatprep.subr.mxu0 0.0
    %247 = vmatpush1.xpose.msra.mxu0 %v224
    %248 = vmatprep.subr.mxu0 0.0
    %249 = vmatpush1.xpose.msra.mxu0 %v227
    %250 = vmatprep.subr.mxu0 0.0
    %251 = vmatpush1.xpose.msra.mxu0 %v230
    %252 = vmatprep.subr.mxu0 0.0
    %253 = vmatpush1.xpose.msra.mxu0 %v233
    %254 = vmatprep.subr.mxu0 0.0
    %255 = vmatpush1.xpose.msra.mxu0 %v236
    %256 = vmatprep.subr.mxu0 0.0
    %257 = vmatpush1.xpose.msra.mxu0 %v239
    %258 = vmatprep.subr.mxu0 0.0
    %259 = vmatpush1.xpose.msra.mxu0 %v242
    %260 = vmatprep.subr.mxu0 0.0
    %261 = vmatpush1.xpose.msra.mxu0 0.0
    %262 = vmatprep.subr.mxu0 0.0
    %263 = vmatpush1.xpose.msra.mxu0 0.0
    %264 = vmatprep.subr.mxu0 0.0
    %265 = vmatpush1.xpose.msra.mxu0 0.0
    %266 = vmatprep.subr.mxu0 0.0
    %267 = vmatpush1.xpose.msra.mxu0 0.0
    %268 = vmatprep.subr.mxu0 0.0
    %269 = vmatpush1.xpose.msra.mxu0 0.0
    %270 = vmatprep.subr.mxu0 0.0
    %271 = vmatpush1.xpose.msra.mxu0 0.0
    %272 = vmatprep.subr.mxu0 0.0
    %273 = vmatpush1.xpose.msra.mxu0 0.0
    %274 = vmatprep.subr.mxu0 0.0
    %275 = vmatpush1.xpose.msra.mxu0 0.0
    %276 = vmatprep.subr.mxu0 0.0
    %277 = vmatpush1.xpose.msra.mxu0 0.0
    %278 = vmatprep.subr.mxu0 0.0
    %279 = vmatpush1.xpose.msra.mxu0 0.0
    %280 = vmatprep.subr.mxu0 0.0
    %281 = vmatpush1.xpose.msra.mxu0 0.0
    %282 = vmatprep.subr.mxu0 0.0
    %283 = vmatpush1.xpose.msra.mxu0 0.0
    %284 = vmatprep.subr.mxu0 0.0
    %285 = vmatpush1.xpose.msra.mxu0 0.0
    %286 = vmatprep.subr.mxu0 0.0
    %287 = vmatpush1.xpose.msra.mxu0 0.0
    %288 = vmatprep.subr.mxu0 0.0
    %289 = vmatpush1.xpose.msra.mxu0 0.0
    %290 = vmatprep.subr.mxu0 0.0
    %291 = vmatpush1.xpose.msra.mxu0 0.0
    %292 = vmatprep.subr.mxu0 0.0
    %293 = vmatpush1.xpose.msra.mxu0 0.0
    %294 = vmatprep.subr.mxu0 0.0
    %295 = vmatpush1.xpose.msra.mxu0 0.0
    %296 = vmatprep.subr.mxu0 0.0
    %297 = vmatpush1.xpose.msra.mxu0 0.0
    %298 = vmatprep.subr.mxu0 0.0
    %299 = vmatpush1.xpose.msra.mxu0 0.0
    %300 = vmatprep.subr.mxu0 0.0
    %301 = vmatpush1.xpose.msra.mxu0 0.0
    %302 = vmatprep.subr.mxu0 0.0
    %303 = vmatpush1.xpose.msra.mxu0 0.0
    %304 = vmatprep.subr.mxu0 0.0
    %305 = vmatpush1.xpose.msra.mxu0 0.0
    %306 = vmatprep.subr.mxu0 0.0
    %307 = vmatpush1.xpose.msra.mxu0 0.0
    %308 = vmatprep.mubr.f32.mxu0 0.0
    %309 = vmatmul.mubr.f32.gmra.mrb[0].mxu0 %v221
    %v310 = vpop.f32.mrb[0].mxu0
    %v311 = vadd.f32 0.0, %v310
    %v312 = vpop.f32.mrb[0].mxu0
    %313 = vmatprep.mubr.f32.mxu0 0.0
    %314 = vmatmul.mubr.f32.gmra.mrb[0].mxu0 %v224
    %v315 = vpop.f32.mrb[0].mxu0
    %v316 = vadd.f32 0.0, %v315
    %v317 = vpop.f32.mrb[0].mxu0
    %318 = vmatprep.mubr.f32.mxu0 0.0
    %319 = vmatmul.mubr.f32.gmra.mrb[0].mxu0 %v227
    %v320 = vpop.f32.mrb[0].mxu0
    %v321 = vadd.f32 0.0, %v320
    %v322 = vpop.f32.mrb[0].mxu0
    %323 = vmatprep.mubr.f32.mxu0 0.0
    %324 = vmatmul.mubr.f32.gmra.mrb[0].mxu0 %v230
    %v325 = vpop.f32.mrb[0].mxu0
    %v326 = vadd.f32 0.0, %v325
    %v327 = vpop.f32.mrb[0].mxu0
    %328 = vmatprep.mubr.f32.mxu0 0.0
    %329 = vmatmul.mubr.f32.gmra.mrb[0].mxu0 %v233
    %v330 = vpop.f32.mrb[0].mxu0
    %v331 = vadd.f32 0.0, %v330
    %v332 = vpop.f32.mrb[0].mxu0
    %333 = vmatprep.mubr.f32.mxu0 0.0
    %334 = vmatmul.mubr.f32.gmra.mrb[0].mxu0 %v236
    %v335 = vpop.f32.mrb[0].mxu0
    %v336 = vadd.f32 0.0, %v335
    %v337 = vpop.f32.mrb[0].mxu0
    %338 = vmatprep.mubr.f32.mxu0 0.0
    %339 = vmatmul.mubr.f32.gmra.mrb[0].mxu0 %v239
    %v340 = vpop.f32.mrb[0].mxu0
    %v341 = vadd.f32 0.0, %v340
    %v342 = vpop.f32.mrb[0].mxu0
    %343 = vmatprep.mubr.f32.mxu0 0.0
    %344 = vmatmul.mubr.f32.gmra.mrb[0].mxu0 %v242
    %v345 = vpop.f32.mrb[0].mxu0
    %v346 = vadd.f32 0.0, %v345
    %v347 = vpop.f32.mrb[0].mxu0
    %348 = vdwg.mxu0
    %v350 = vsel %vm219, %v35, 0
    %v353 = vsel %vm219, %v36, 0
    %v356 = vsel %vm219, %v37, 0
    %v359 = vsel %vm219, %v38, 0
    %v362 = vsel %vm219, %v39, 0
    %v365 = vsel %vm219, %v40, 0
    %v368 = vsel %vm219, %v41, 0
    %v371 = vsel %vm219, %v42, 0
    %373 = vmatprep.subr.mxu0 0.0
    %374 = vmatpush1.xpose.msra.mxu0 %v350
    %375 = vmatprep.subr.mxu0 0.0
    %376 = vmatpush1.xpose.msra.mxu0 %v353
    %377 = vmatprep.subr.mxu0 0.0
    %378 = vmatpush1.xpose.msra.mxu0 %v356
    %379 = vmatprep.subr.mxu0 0.0
    %380 = vmatpush1.xpose.msra.mxu0 %v359
    %381 = vmatprep.subr.mxu0 0.0
    %382 = vmatpush1.xpose.msra.mxu0 %v362
    %383 = vmatprep.subr.mxu0 0.0
    %384 = vmatpush1.xpose.msra.mxu0 %v365
    %385 = vmatprep.subr.mxu0 0.0
    %386 = vmatpush1.xpose.msra.mxu0 %v368
    %387 = vmatprep.subr.mxu0 0.0
    %388 = vmatpush1.xpose.msra.mxu0 %v371
    %389 = vmatprep.subr.mxu0 0.0
    %390 = vmatpush1.xpose.msra.mxu0 0.0
    %391 = vmatprep.subr.mxu0 0.0
    %392 = vmatpush1.xpose.msra.mxu0 0.0
    %393 = vmatprep.subr.mxu0 0.0
    %394 = vmatpush1.xpose.msra.mxu0 0.0
    %395 = vmatprep.subr.mxu0 0.0
    %396 = vmatpush1.xpose.msra.mxu0 0.0
    %397 = vmatprep.subr.mxu0 0.0
    %398 = vmatpush1.xpose.msra.mxu0 0.0
    %399 = vmatprep.subr.mxu0 0.0
    %400 = vmatpush1.xpose.msra.mxu0 0.0
    %401 = vmatprep.subr.mxu0 0.0
    %402 = vmatpush1.xpose.msra.mxu0 0.0
    %403 = vmatprep.subr.mxu0 0.0
    %404 = vmatpush1.xpose.msra.mxu0 0.0
    %405 = vmatprep.subr.mxu0 0.0
    %406 = vmatpush1.xpose.msra.mxu0 0.0
    %407 = vmatprep.subr.mxu0 0.0
    %408 = vmatpush1.xpose.msra.mxu0 0.0
    %409 = vmatprep.subr.mxu0 0.0
    %410 = vmatpush1.xpose.msra.mxu0 0.0
    %411 = vmatprep.subr.mxu0 0.0
    %412 = vmatpush1.xpose.msra.mxu0 0.0
    %413 = vmatprep.subr.mxu0 0.0
    %414 = vmatpush1.xpose.msra.mxu0 0.0
    %415 = vmatprep.subr.mxu0 0.0
    %416 = vmatpush1.xpose.msra.mxu0 0.0
    %417 = vmatprep.subr.mxu0 0.0
    %418 = vmatpush1.xpose.msra.mxu0 0.0
    %419 = vmatprep.subr.mxu0 0.0
    %420 = vmatpush1.xpose.msra.mxu0 0.0
    %421 = vmatprep.subr.mxu0 0.0
    %422 = vmatpush1.xpose.msra.mxu0 0.0
    %423 = vmatprep.subr.mxu0 0.0
    %424 = vmatpush1.xpose.msra.mxu0 0.0
    %425 = vmatprep.subr.mxu0 0.0
    %426 = vmatpush1.xpose.msra.mxu0 0.0
    %427 = vmatprep.subr.mxu0 0.0
    %428 = vmatpush1.xpose.msra.mxu0 0.0
    %429 = vmatprep.subr.mxu0 0.0
    %430 = vmatpush1.xpose.msra.mxu0 0.0
    %431 = vmatprep.subr.mxu0 0.0
    %432 = vmatpush1.xpose.msra.mxu0 0.0
    %433 = vmatprep.subr.mxu0 0.0
    %434 = vmatpush1.xpose.msra.mxu0 0.0
    %435 = vmatprep.subr.mxu0 0.0
    %436 = vmatpush1.xpose.msra.mxu0 0.0
    %437 = vmatprep.mubr.f32.mxu0 0.0
    %438 = vmatmul.mubr.f32.gmra.mrb[0].mxu0 %v350
    %v439 = vpop.f32.mrb[0].mxu0
    %v440 = vadd.f32 0.0, %v439
    %v441 = vpop.f32.mrb[0].mxu0
    %442 = vmatprep.mubr.f32.mxu0 0.0
    %443 = vmatmul.mubr.f32.gmra.mrb[0].mxu0 %v353
    %v444 = vpop.f32.mrb[0].mxu0
    %v445 = vadd.f32 0.0, %v444
    %v446 = vpop.f32.mrb[0].mxu0
    %447 = vmatprep.mubr.f32.mxu0 0.0
    %448 = vmatmul.mubr.f32.gmra.mrb[0].mxu0 %v356
    %v449 = vpop.f32.mrb[0].mxu0
    %v450 = vadd.f32 0.0, %v449
    %v451 = vpop.f32.mrb[0].mxu0
    %452 = vmatprep.mubr.f32.mxu0 0.0
    %453 = vmatmul.mubr.f32.gmra.mrb[0].mxu0 %v359
    %v454 = vpop.f32.mrb[0].mxu0
    %v455 = vadd.f32 0.0, %v454
    %v456 = vpop.f32.mrb[0].mxu0
    %457 = vmatprep.mubr.f32.mxu0 0.0
    %458 = vmatmul.mubr.f32.gmra.mrb[0].mxu0 %v362
    %v459 = vpop.f32.mrb[0].mxu0
    %v460 = vadd.f32 0.0, %v459
    %v461 = vpop.f32.mrb[0].mxu0
    %462 = vmatprep.mubr.f32.mxu0 0.0
    %463 = vmatmul.mubr.f32.gmra.mrb[0].mxu0 %v365
    %v464 = vpop.f32.mrb[0].mxu0
    %v465 = vadd.f32 0.0, %v464
    %v466 = vpop.f32.mrb[0].mxu0
    %467 = vmatprep.mubr.f32.mxu0 0.0
    %468 = vmatmul.mubr.f32.gmra.mrb[0].mxu0 %v368
    %v469 = vpop.f32.mrb[0].mxu0
    %v470 = vadd.f32 0.0, %v469
    %v471 = vpop.f32.mrb[0].mxu0
    %472 = vmatprep.mubr.f32.mxu0 0.0
    %473 = vmatmul.mubr.f32.gmra.mrb[0].mxu0 %v371
    %v474 = vpop.f32.mrb[0].mxu0
    %v475 = vadd.f32 0.0, %v474
    %v476 = vpop.f32.mrb[0].mxu0
    %477 = vdwg.mxu0
    %v479 = vsel %vm219, %v43, 0
    %v482 = vsel %vm219, %v44, 0
    %v485 = vsel %vm219, %v45, 0
    %v488 = vsel %vm219, %v46, 0
    %v491 = vsel %vm219, %v47, 0
    %v494 = vsel %vm219, %v48, 0
    %v497 = vsel %vm219, %v49, 0
    %v500 = vsel %vm219, %v50, 0
    %502 = vmatprep.subr.mxu0 0.0
    %503 = vmatpush1.xpose.msra.mxu0 %v479
    %504 = vmatprep.subr.mxu0 0.0
    %505 = vmatpush1.xpose.msra.mxu0 %v482
    %506 = vmatprep.subr.mxu0 0.0
    %507 = vmatpush1.xpose.msra.mxu0 %v485
    %508 = vmatprep.subr.mxu0 0.0
    %509 = vmatpush1.xpose.msra.mxu0 %v488
    %510 = vmatprep.subr.mxu0 0.0
    %511 = vmatpush1.xpose.msra.mxu0 %v491
    %512 = vmatprep.subr.mxu0 0.0
    %513 = vmatpush1.xpose.msra.mxu0 %v494
    %514 = vmatprep.subr.mxu0 0.0
    %515 = vmatpush1.xpose.msra.mxu0 %v497
    %516 = vmatprep.subr.mxu0 0.0
    %517 = vmatpush1.xpose.msra.mxu0 %v500
    %518 = vmatprep.subr.mxu0 0.0
    %519 = vmatpush1.xpose.msra.mxu0 0.0
    %520 = vmatprep.subr.mxu0 0.0
    %521 = vmatpush1.xpose.msra.mxu0 0.0
    %522 = vmatprep.subr.mxu0 0.0
    %523 = vmatpush1.xpose.msra.mxu0 0.0
    %524 = vmatprep.subr.mxu0 0.0
    %525 = vmatpush1.xpose.msra.mxu0 0.0
    %526 = vmatprep.subr.mxu0 0.0
    %527 = vmatpush1.xpose.msra.mxu0 0.0
    %528 = vmatprep.subr.mxu0 0.0
    %529 = vmatpush1.xpose.msra.mxu0 0.0
    %530 = vmatprep.subr.mxu0 0.0
    %531 = vmatpush1.xpose.msra.mxu0 0.0
    %532 = vmatprep.subr.mxu0 0.0
    %533 = vmatpush1.xpose.msra.mxu0 0.0
    %534 = vmatprep.subr.mxu0 0.0
    %535 = vmatpush1.xpose.msra.mxu0 0.0
    %536 = vmatprep.subr.mxu0 0.0
    %537 = vmatpush1.xpose.msra.mxu0 0.0
    %538 = vmatprep.subr.mxu0 0.0
    %539 = vmatpush1.xpose.msra.mxu0 0.0
    %540 = vmatprep.subr.mxu0 0.0
    %541 = vmatpush1.xpose.msra.mxu0 0.0
    %542 = vmatprep.subr.mxu0 0.0
    %543 = vmatpush1.xpose.msra.mxu0 0.0
    %544 = vmatprep.subr.mxu0 0.0
    %545 = vmatpush1.xpose.msra.mxu0 0.0
    %546 = vmatprep.subr.mxu0 0.0
    %547 = vmatpush1.xpose.msra.mxu0 0.0
    %548 = vmatprep.subr.mxu0 0.0
    %549 = vmatpush1.xpose.msra.mxu0 0.0
    %550 = vmatprep.subr.mxu0 0.0
    %551 = vmatpush1.xpose.msra.mxu0 0.0
    %552 = vmatprep.subr.mxu0 0.0
    %553 = vmatpush1.xpose.msra.mxu0 0.0
    %554 = vmatprep.subr.mxu0 0.0
    %555 = vmatpush1.xpose.msra.mxu0 0.0
    %556 = vmatprep.subr.mxu0 0.0
    %557 = vmatpush1.xpose.msra.mxu0 0.0
    %558 = vmatprep.subr.mxu0 0.0
    %559 = vmatpush1.xpose.msra.mxu0 0.0
    %560 = vmatprep.subr.mxu0 0.0
    %561 = vmatpush1.xpose.msra.mxu0 0.0
    %562 = vmatprep.subr.mxu0 0.0
    %563 = vmatpush1.xpose.msra.mxu0 0.0
    %564 = vmatprep.subr.mxu0 0.0
    %565 = vmatpush1.xpose.msra.mxu0 0.0
    %566 = vmatprep.mubr.f32.mxu0 0.0
    %567 = vmatmul.mubr.f32.gmra.mrb[0].mxu0 %v479
    %v568 = vpop.f32.mrb[0].mxu0
    %v569 = vadd.f32 0.0, %v568
    %v570 = vpop.f32.mrb[0].mxu0
    %571 = vmatprep.mubr.f32.mxu0 0.0
    %572 = vmatmul.mubr.f32.gmra.mrb[0].mxu0 %v482
    %v573 = vpop.f32.mrb[0].mxu0
    %v574 = vadd.f32 0.0, %v573
    %v575 = vpop.f32.mrb[0].mxu0
    %576 = vmatprep.mubr.f32.mxu0 0.0
    %577 = vmatmul.mubr.f32.gmra.mrb[0].mxu0 %v485
    %v578 = vpop.f32.mrb[0].mxu0
    %v579 = vadd.f32 0.0, %v578
    %v580 = vpop.f32.mrb[0].mxu0
    %581 = vmatprep.mubr.f32.mxu0 0.0
    %582 = vmatmul.mubr.f32.gmra.mrb[0].mxu0 %v488
    %v583 = vpop.f32.mrb[0].mxu0
    %v584 = vadd.f32 0.0, %v583
    %v585 = vpop.f32.mrb[0].mxu0
    %586 = vmatprep.mubr.f32.mxu0 0.0
    %587 = vmatmul.mubr.f32.gmra.mrb[0].mxu0 %v491
    %v588 = vpop.f32.mrb[0].mxu0
    %v589 = vadd.f32 0.0, %v588
    %v590 = vpop.f32.mrb[0].mxu0
    %591 = vmatprep.mubr.f32.mxu0 0.0
    %592 = vmatmul.mubr.f32.gmra.mrb[0].mxu0 %v494
    %v593 = vpop.f32.mrb[0].mxu0
    %v594 = vadd.f32 0.0, %v593
    %v595 = vpop.f32.mrb[0].mxu0
    %596 = vmatprep.mubr.f32.mxu0 0.0
    %597 = vmatmul.mubr.f32.gmra.mrb[0].mxu0 %v497
    %v598 = vpop.f32.mrb[0].mxu0
    %v599 = vadd.f32 0.0, %v598
    %v600 = vpop.f32.mrb[0].mxu0
    %601 = vmatprep.mubr.f32.mxu0 0.0
    %602 = vmatmul.mubr.f32.gmra.mrb[0].mxu0 %v500
    %v603 = vpop.f32.mrb[0].mxu0
    %v604 = vadd.f32 0.0, %v603
    %v605 = vpop.f32.mrb[0].mxu0
    %606 = vdwg.mxu0
    %v608 = vsel %vm219, %v51, 0
    %v611 = vsel %vm219, %v52, 0
    %v614 = vsel %vm219, %v53, 0
    %v617 = vsel %vm219, %v54, 0
    %v620 = vsel %vm219, %v55, 0
    %v623 = vsel %vm219, %v56, 0
    %v626 = vsel %vm219, %v57, 0
    %v629 = vsel %vm219, %v58, 0
    %631 = vmatprep.subr.mxu0 0.0
    %632 = vmatpush1.xpose.msra.mxu0 %v608
    %633 = vmatprep.subr.mxu0 0.0
    %634 = vmatpush1.xpose.msra.mxu0 %v611
    %635 = vmatprep.subr.mxu0 0.0
    %636 = vmatpush1.xpose.msra.mxu0 %v614
    %637 = vmatprep.subr.mxu0 0.0
    %638 = vmatpush1.xpose.msra.mxu0 %v617
    %639 = vmatprep.subr.mxu0 0.0
    %640 = vmatpush1.xpose.msra.mxu0 %v620
    %641 = vmatprep.subr.mxu0 0.0
    %642 = vmatpush1.xpose.msra.mxu0 %v623
    %643 = vmatprep.subr.mxu0 0.0
    %644 = vmatpush1.xpose.msra.mxu0 %v626
    %645 = vmatprep.subr.mxu0 0.0
    %646 = vmatpush1.xpose.msra.mxu0 %v629
    %647 = vmatprep.subr.mxu0 0.0
    %648 = vmatpush1.xpose.msra.mxu0 0.0
    %649 = vmatprep.subr.mxu0 0.0
    %650 = vmatpush1.xpose.msra.mxu0 0.0
    %651 = vmatprep.subr.mxu0 0.0
    %652 = vmatpush1.xpose.msra.mxu0 0.0
    %653 = vmatprep.subr.mxu0 0.0
    %654 = vmatpush1.xpose.msra.mxu0 0.0
    %655 = vmatprep.subr.mxu0 0.0
    %656 = vmatpush1.xpose.msra.mxu0 0.0
    %657 = vmatprep.subr.mxu0 0.0
    %658 = vmatpush1.xpose.msra.mxu0 0.0
    %659 = vmatprep.subr.mxu0 0.0
    %660 = vmatpush1.xpose.msra.mxu0 0.0
    %661 = vmatprep.subr.mxu0 0.0
    %662 = vmatpush1.xpose.msra.mxu0 0.0
    %663 = vmatprep.subr.mxu0 0.0
    %664 = vmatpush1.xpose.msra.mxu0 0.0
    %665 = vmatprep.subr.mxu0 0.0
    %666 = vmatpush1.xpose.msra.mxu0 0.0
    %667 = vmatprep.subr.mxu0 0.0
    %668 = vmatpush1.xpose.msra.mxu0 0.0
    %669 = vmatprep.subr.mxu0 0.0
    %670 = vmatpush1.xpose.msra.mxu0 0.0
    %671 = vmatprep.subr.mxu0 0.0
    %672 = vmatpush1.xpose.msra.mxu0 0.0
    %673 = vmatprep.subr.mxu0 0.0
    %674 = vmatpush1.xpose.msra.mxu0 0.0
    %675 = vmatprep.subr.mxu0 0.0
    %676 = vmatpush1.xpose.msra.mxu0 0.0
    %677 = vmatprep.subr.mxu0 0.0
    %678 = vmatpush1.xpose.msra.mxu0 0.0
    %679 = vmatprep.subr.mxu0 0.0
    %680 = vmatpush1.xpose.msra.mxu0 0.0
    %681 = vmatprep.subr.mxu0 0.0
    %682 = vmatpush1.xpose.msra.mxu0 0.0
    %683 = vmatprep.subr.mxu0 0.0
    %684 = vmatpush1.xpose.msra.mxu0 0.0
    %685 = vmatprep.subr.mxu0 0.0
    %686 = vmatpush1.xpose.msra.mxu0 0.0
    %687 = vmatprep.subr.mxu0 0.0
    %688 = vmatpush1.xpose.msra.mxu0 0.0
    %689 = vmatprep.subr.mxu0 0.0
    %690 = vmatpush1.xpose.msra.mxu0 0.0
    %691 = vmatprep.subr.mxu0 0.0
    %692 = vmatpush1.xpose.msra.mxu0 0.0
    %693 = vmatprep.subr.mxu0 0.0
    %694 = vmatpush1.xpose.msra.mxu0 0.0
    %695 = vmatprep.mubr.f32.mxu0 0.0
    %696 = vmatmul.mubr.f32.gmra.mrb[0].mxu0 %v608
    %v697 = vpop.f32.mrb[0].mxu0
    %v698 = vadd.f32 0.0, %v697
    %v699 = vpop.f32.mrb[0].mxu0
    %700 = vmatprep.mubr.f32.mxu0 0.0
    %701 = vmatmul.mubr.f32.gmra.mrb[0].mxu0 %v611
    %v702 = vpop.f32.mrb[0].mxu0
    %v703 = vadd.f32 0.0, %v702
    %v704 = vpop.f32.mrb[0].mxu0
    %705 = vmatprep.mubr.f32.mxu0 0.0
    %706 = vmatmul.mubr.f32.gmra.mrb[0].mxu0 %v614
    %v707 = vpop.f32.mrb[0].mxu0
    %v708 = vadd.f32 0.0, %v707
    %v709 = vpop.f32.mrb[0].mxu0
    %710 = vmatprep.mubr.f32.mxu0 0.0
    %711 = vmatmul.mubr.f32.gmra.mrb[0].mxu0 %v617
    %v712 = vpop.f32.mrb[0].mxu0
    %v713 = vadd.f32 0.0, %v712
    %v714 = vpop.f32.mrb[0].mxu0
    %715 = vmatprep.mubr.f32.mxu0 0.0
    %716 = vmatmul.mubr.f32.gmra.mrb[0].mxu0 %v620
    %v717 = vpop.f32.mrb[0].mxu0
    %v718 = vadd.f32 0.0, %v717
    %v719 = vpop.f32.mrb[0].mxu0
    %720 = vmatprep.mubr.f32.mxu0 0.0
    %721 = vmatmul.mubr.f32.gmra.mrb[0].mxu0 %v623
    %v722 = vpop.f32.mrb[0].mxu0
    %v723 = vadd.f32 0.0, %v722
    %v724 = vpop.f32.mrb[0].mxu0
    %725 = vmatprep.mubr.f32.mxu0 0.0
    %726 = vmatmul.mubr.f32.gmra.mrb[0].mxu0 %v626
    %v727 = vpop.f32.mrb[0].mxu0
    %v728 = vadd.f32 0.0, %v727
    %v729 = vpop.f32.mrb[0].mxu0
    %730 = vmatprep.mubr.f32.mxu0 0.0
    %731 = vmatmul.mubr.f32.gmra.mrb[0].mxu0 %v629
    %v732 = vpop.f32.mrb[0].mxu0
    %v733 = vadd.f32 0.0, %v732
    %v734 = vpop.f32.mrb[0].mxu0
    %735 = vdwg.mxu0
    %v737 = vsel %vm219, %v59, 0
    %v740 = vsel %vm219, %v60, 0
    %v743 = vsel %vm219, %v61, 0
    %v746 = vsel %vm219, %v62, 0
    %v749 = vsel %vm219, %v63, 0
    %v752 = vsel %vm219, %v64, 0
    %v755 = vsel %vm219, %v65, 0
    %v758 = vsel %vm219, %v66, 0
    %760 = vmatprep.subr.mxu0 0.0
    %761 = vmatpush1.xpose.msra.mxu0 %v737
    %762 = vmatprep.subr.mxu0 0.0
    %763 = vmatpush1.xpose.msra.mxu0 %v740
    %764 = vmatprep.subr.mxu0 0.0
    %765 = vmatpush1.xpose.msra.mxu0 %v743
    %766 = vmatprep.subr.mxu0 0.0
    %767 = vmatpush1.xpose.msra.mxu0 %v746
    %768 = vmatprep.subr.mxu0 0.0
    %769 = vmatpush1.xpose.msra.mxu0 %v749
    %770 = vmatprep.subr.mxu0 0.0
    %771 = vmatpush1.xpose.msra.mxu0 %v752
    %772 = vmatprep.subr.mxu0 0.0
    %773 = vmatpush1.xpose.msra.mxu0 %v755
    %774 = vmatprep.subr.mxu0 0.0
    %775 = vmatpush1.xpose.msra.mxu0 %v758
    %776 = vmatprep.subr.mxu0 0.0
    %777 = vmatpush1.xpose.msra.mxu0 0.0
    %778 = vmatprep.subr.mxu0 0.0
    %779 = vmatpush1.xpose.msra.mxu0 0.0
    %780 = vmatprep.subr.mxu0 0.0
    %781 = vmatpush1.xpose.msra.mxu0 0.0
    %782 = vmatprep.subr.mxu0 0.0
    %783 = vmatpush1.xpose.msra.mxu0 0.0
    %784 = vmatprep.subr.mxu0 0.0
    %785 = vmatpush1.xpose.msra.mxu0 0.0
    %786 = vmatprep.subr.mxu0 0.0
    %787 = vmatpush1.xpose.msra.mxu0 0.0
    %788 = vmatprep.subr.mxu0 0.0
    %789 = vmatpush1.xpose.msra.mxu0 0.0
    %790 = vmatprep.subr.mxu0 0.0
    %791 = vmatpush1.xpose.msra.mxu0 0.0
    %792 = vmatprep.subr.mxu0 0.0
    %793 = vmatpush1.xpose.msra.mxu0 0.0
    %794 = vmatprep.subr.mxu0 0.0
    %795 = vmatpush1.xpose.msra.mxu0 0.0
    %796 = vmatprep.subr.mxu0 0.0
    %797 = vmatpush1.xpose.msra.mxu0 0.0
    %798 = vmatprep.subr.mxu0 0.0
    %799 = vmatpush1.xpose.msra.mxu0 0.0
    %800 = vmatprep.subr.mxu0 0.0
    %801 = vmatpush1.xpose.msra.mxu0 0.0
    %802 = vmatprep.subr.mxu0 0.0
    %803 = vmatpush1.xpose.msra.mxu0 0.0
    %804 = vmatprep.subr.mxu0 0.0
    %805 = vmatpush1.xpose.msra.mxu0 0.0
    %806 = vmatprep.subr.mxu0 0.0
    %807 = vmatpush1.xpose.msra.mxu0 0.0
    %808 = vmatprep.subr.mxu0 0.0
    %809 = vmatpush1.xpose.msra.mxu0 0.0
    %810 = vmatprep.subr.mxu0 0.0
    %811 = vmatpush1.xpose.msra.mxu0 0.0
    %812 = vmatprep.subr.mxu0 0.0
    %813 = vmatpush1.xpose.msra.mxu0 0.0
    %814 = vmatprep.subr.mxu0 0.0
    %815 = vmatpush1.xpose.msra.mxu0 0.0
    %816 = vmatprep.subr.mxu0 0.0
    %817 = vmatpush1.xpose.msra.mxu0 0.0
    %818 = vmatprep.subr.mxu0 0.0
    %819 = vmatpush1.xpose.msra.mxu0 0.0
    %820 = vmatprep.subr.mxu0 0.0
    %821 = vmatpush1.xpose.msra.mxu0 0.0
    %822 = vmatprep.subr.mxu0 0.0
    %823 = vmatpush1.xpose.msra.mxu0 0.0
    %824 = vmatprep.mubr.f32.mxu0 0.0
    %825 = vmatmul.mubr.f32.gmra.mrb[0].mxu0 %v737
    %v826 = vpop.f32.mrb[0].mxu0
    %v827 = vadd.f32 0.0, %v826
    %v828 = vpop.f32.mrb[0].mxu0
    %829 = vmatprep.mubr.f32.mxu0 0.0
    %830 = vmatmul.mubr.f32.gmra.mrb[0].mxu0 %v740
    %v831 = vpop.f32.mrb[0].mxu0
    %v832 = vadd.f32 0.0, %v831
    %v833 = vpop.f32.mrb[0].mxu0
    %834 = vmatprep.mubr.f32.mxu0 0.0
    %835 = vmatmul.mubr.f32.gmra.mrb[0].mxu0 %v743
    %v836 = vpop.f32.mrb[0].mxu0
    %v837 = vadd.f32 0.0, %v836
    %v838 = vpop.f32.mrb[0].mxu0
    %839 = vmatprep.mubr.f32.mxu0 0.0
    %840 = vmatmul.mubr.f32.gmra.mrb[0].mxu0 %v746
    %v841 = vpop.f32.mrb[0].mxu0
    %v842 = vadd.f32 0.0, %v841
    %v843 = vpop.f32.mrb[0].mxu0
    %844 = vmatprep.mubr.f32.mxu0 0.0
    %845 = vmatmul.mubr.f32.gmra.mrb[0].mxu0 %v749
    %v846 = vpop.f32.mrb[0].mxu0
    %v847 = vadd.f32 0.0, %v846
    %v848 = vpop.f32.mrb[0].mxu0
    %849 = vmatprep.mubr.f32.mxu0 0.0
    %850 = vmatmul.mubr.f32.gmra.mrb[0].mxu0 %v752
    %v851 = vpop.f32.mrb[0].mxu0
    %v852 = vadd.f32 0.0, %v851
    %v853 = vpop.f32.mrb[0].mxu0
    %854 = vmatprep.mubr.f32.mxu0 0.0
    %855 = vmatmul.mubr.f32.gmra.mrb[0].mxu0 %v755
    %v856 = vpop.f32.mrb[0].mxu0
    %v857 = vadd.f32 0.0, %v856
    %v858 = vpop.f32.mrb[0].mxu0
    %859 = vmatprep.mubr.f32.mxu0 0.0
    %860 = vmatmul.mubr.f32.gmra.mrb[0].mxu0 %v758
    %v861 = vpop.f32.mrb[0].mxu0
    %v862 = vadd.f32 0.0, %v861
    %v863 = vpop.f32.mrb[0].mxu0
    %864 = vdwg.mxu0
    %v866 = vsel %vm219, %v67, 0
    %v869 = vsel %vm219, %v68, 0
    %v872 = vsel %vm219, %v69, 0
    %v875 = vsel %vm219, %v70, 0
    %v878 = vsel %vm219, %v71, 0
    %v881 = vsel %vm219, %v72, 0
    %v884 = vsel %vm219, %v73, 0
    %v887 = vsel %vm219, %v74, 0
    %889 = vmatprep.subr.mxu0 0.0
    %890 = vmatpush1.xpose.msra.mxu0 %v866
    %891 = vmatprep.subr.mxu0 0.0
    %892 = vmatpush1.xpose.msra.mxu0 %v869
    %893 = vmatprep.subr.mxu0 0.0
    %894 = vmatpush1.xpose.msra.mxu0 %v872
    %895 = vmatprep.subr.mxu0 0.0
    %896 = vmatpush1.xpose.msra.mxu0 %v875
    %897 = vmatprep.subr.mxu0 0.0
    %898 = vmatpush1.xpose.msra.mxu0 %v878
    %899 = vmatprep.subr.mxu0 0.0
    %900 = vmatpush1.xpose.msra.mxu0 %v881
    %901 = vmatprep.subr.mxu0 0.0
    %902 = vmatpush1.xpose.msra.mxu0 %v884
    %903 = vmatprep.subr.mxu0 0.0
    %904 = vmatpush1.xpose.msra.mxu0 %v887
    %905 = vmatprep.subr.mxu0 0.0
    %906 = vmatpush1.xpose.msra.mxu0 0.0
    %907 = vmatprep.subr.mxu0 0.0
    %908 = vmatpush1.xpose.msra.mxu0 0.0
    %909 = vmatprep.subr.mxu0 0.0
    %910 = vmatpush1.xpose.msra.mxu0 0.0
    %911 = vmatprep.subr.mxu0 0.0
    %912 = vmatpush1.xpose.msra.mxu0 0.0
    %913 = vmatprep.subr.mxu0 0.0
    %914 = vmatpush1.xpose.msra.mxu0 0.0
    %915 = vmatprep.subr.mxu0 0.0
    %916 = vmatpush1.xpose.msra.mxu0 0.0
    %917 = vmatprep.subr.mxu0 0.0
    %918 = vmatpush1.xpose.msra.mxu0 0.0
    %919 = vmatprep.subr.mxu0 0.0
    %920 = vmatpush1.xpose.msra.mxu0 0.0
    %921 = vmatprep.subr.mxu0 0.0
    %922 = vmatpush1.xpose.msra.mxu0 0.0
    %923 = vmatprep.subr.mxu0 0.0
    %924 = vmatpush1.xpose.msra.mxu0 0.0
    %925 = vmatprep.subr.mxu0 0.0
    %926 = vmatpush1.xpose.msra.mxu0 0.0
    %927 = vmatprep.subr.mxu0 0.0
    %928 = vmatpush1.xpose.msra.mxu0 0.0
    %929 = vmatprep.subr.mxu0 0.0
    %930 = vmatpush1.xpose.msra.mxu0 0.0
    %931 = vmatprep.subr.mxu0 0.0
    %932 = vmatpush1.xpose.msra.mxu0 0.0
    %933 = vmatprep.subr.mxu0 0.0
    %934 = vmatpush1.xpose.msra.mxu0 0.0
    %935 = vmatprep.subr.mxu0 0.0
    %936 = vmatpush1.xpose.msra.mxu0 0.0
    %937 = vmatprep.subr.mxu0 0.0
    %938 = vmatpush1.xpose.msra.mxu0 0.0
    %939 = vmatprep.subr.mxu0 0.0
    %940 = vmatpush1.xpose.msra.mxu0 0.0
    %941 = vmatprep.subr.mxu0 0.0
    %942 = vmatpush1.xpose.msra.mxu0 0.0
    %943 = vmatprep.subr.mxu0 0.0
    %944 = vmatpush1.xpose.msra.mxu0 0.0
    %945 = vmatprep.subr.mxu0 0.0
    %946 = vmatpush1.xpose.msra.mxu0 0.0
    %947 = vmatprep.subr.mxu0 0.0
    %948 = vmatpush1.xpose.msra.mxu0 0.0
    %949 = vmatprep.subr.mxu0 0.0
    %950 = vmatpush1.xpose.msra.mxu0 0.0
    %951 = vmatprep.subr.mxu0 0.0
    %952 = vmatpush1.xpose.msra.mxu0 0.0
    %953 = vmatprep.mubr.f32.mxu0 0.0
    %954 = vmatmul.mubr.f32.gmra.mrb[0].mxu0 %v866
    %v955 = vpop.f32.mrb[0].mxu0
    %v956 = vadd.f32 0.0, %v955
    %v957 = vpop.f32.mrb[0].mxu0
    %958 = vmatprep.mubr.f32.mxu0 0.0
    %959 = vmatmul.mubr.f32.gmra.mrb[0].mxu0 %v869
    %v960 = vpop.f32.mrb[0].mxu0
    %v961 = vadd.f32 0.0, %v960
    %v962 = vpop.f32.mrb[0].mxu0
    %963 = vmatprep.mubr.f32.mxu0 0.0
    %964 = vmatmul.mubr.f32.gmra.mrb[0].mxu0 %v872
    %v965 = vpop.f32.mrb[0].mxu0
    %v966 = vadd.f32 0.0, %v965
    %v967 = vpop.f32.mrb[0].mxu0
    %968 = vmatprep.mubr.f32.mxu0 0.0
    %969 = vmatmul.mubr.f32.gmra.mrb[0].mxu0 %v875
    %v970 = vpop.f32.mrb[0].mxu0
    %v971 = vadd.f32 0.0, %v970
    %v972 = vpop.f32.mrb[0].mxu0
    %973 = vmatprep.mubr.f32.mxu0 0.0
    %974 = vmatmul.mubr.f32.gmra.mrb[0].mxu0 %v878
    %v975 = vpop.f32.mrb[0].mxu0
    %v976 = vadd.f32 0.0, %v975
    %v977 = vpop.f32.mrb[0].mxu0
    %978 = vmatprep.mubr.f32.mxu0 0.0
    %979 = vmatmul.mubr.f32.gmra.mrb[0].mxu0 %v881
    %v980 = vpop.f32.mrb[0].mxu0
    %v981 = vadd.f32 0.0, %v980
    %v982 = vpop.f32.mrb[0].mxu0
    %983 = vmatprep.mubr.f32.mxu0 0.0
    %984 = vmatmul.mubr.f32.gmra.mrb[0].mxu0 %v884
    %v985 = vpop.f32.mrb[0].mxu0
    %v986 = vadd.f32 0.0, %v985
    %v987 = vpop.f32.mrb[0].mxu0
    %988 = vmatprep.mubr.f32.mxu0 0.0
    %989 = vmatmul.mubr.f32.gmra.mrb[0].mxu0 %v887
    %v990 = vpop.f32.mrb[0].mxu0
    %v991 = vadd.f32 0.0, %v990
    %v992 = vpop.f32.mrb[0].mxu0
    %993 = vdwg.mxu0
    %v995 = vsel %vm219, %v75, 0
    %v998 = vsel %vm219, %v76, 0
    %v1001 = vsel %vm219, %v77, 0
    %v1004 = vsel %vm219, %v78, 0
    %v1007 = vsel %vm219, %v79, 0
    %v1010 = vsel %vm219, %v80, 0
    %v1013 = vsel %vm219, %v81, 0
    %v1016 = vsel %vm219, %v82, 0
    %1018 = vmatprep.subr.mxu0 0.0
    %1019 = vmatpush1.xpose.msra.mxu0 %v995
    %1020 = vmatprep.subr.mxu0 0.0
    %1021 = vmatpush1.xpose.msra.mxu0 %v998
    %1022 = vmatprep.subr.mxu0 0.0
    %1023 = vmatpush1.xpose.msra.mxu0 %v1001
    %1024 = vmatprep.subr.mxu0 0.0
    %1025 = vmatpush1.xpose.msra.mxu0 %v1004
    %1026 = vmatprep.subr.mxu0 0.0
    %1027 = vmatpush1.xpose.msra.mxu0 %v1007
    %1028 = vmatprep.subr.mxu0 0.0
    %1029 = vmatpush1.xpose.msra.mxu0 %v1010
    %1030 = vmatprep.subr.mxu0 0.0
    %1031 = vmatpush1.xpose.msra.mxu0 %v1013
    %1032 = vmatprep.subr.mxu0 0.0
    %1033 = vmatpush1.xpose.msra.mxu0 %v1016
    %1034 = vmatprep.subr.mxu0 0.0
    %1035 = vmatpush1.xpose.msra.mxu0 0.0
    %1036 = vmatprep.subr.mxu0 0.0
    %1037 = vmatpush1.xpose.msra.mxu0 0.0
    %1038 = vmatprep.subr.mxu0 0.0
    %1039 = vmatpush1.xpose.msra.mxu0 0.0
    %1040 = vmatprep.subr.mxu0 0.0
    %1041 = vmatpush1.xpose.msra.mxu0 0.0
    %1042 = vmatprep.subr.mxu0 0.0
    %1043 = vmatpush1.xpose.msra.mxu0 0.0
    %1044 = vmatprep.subr.mxu0 0.0
    %1045 = vmatpush1.xpose.msra.mxu0 0.0
    %1046 = vmatprep.subr.mxu0 0.0
    %1047 = vmatpush1.xpose.msra.mxu0 0.0
    %1048 = vmatprep.subr.mxu0 0.0
    %1049 = vmatpush1.xpose.msra.mxu0 0.0
    %1050 = vmatprep.subr.mxu0 0.0
    %1051 = vmatpush1.xpose.msra.mxu0 0.0
    %1052 = vmatprep.subr.mxu0 0.0
    %1053 = vmatpush1.xpose.msra.mxu0 0.0
    %1054 = vmatprep.subr.mxu0 0.0
    %1055 = vmatpush1.xpose.msra.mxu0 0.0
    %1056 = vmatprep.subr.mxu0 0.0
    %1057 = vmatpush1.xpose.msra.mxu0 0.0
    %1058 = vmatprep.subr.mxu0 0.0
    %1059 = vmatpush1.xpose.msra.mxu0 0.0
    %1060 = vmatprep.subr.mxu0 0.0
    %1061 = vmatpush1.xpose.msra.mxu0 0.0
    %1062 = vmatprep.subr.mxu0 0.0
    %1063 = vmatpush1.xpose.msra.mxu0 0.0
    %1064 = vmatprep.subr.mxu0 0.0
    %1065 = vmatpush1.xpose.msra.mxu0 0.0
    %1066 = vmatprep.subr.mxu0 0.0
    %1067 = vmatpush1.xpose.msra.mxu0 0.0
    %1068 = vmatprep.subr.mxu0 0.0
    %1069 = vmatpush1.xpose.msra.mxu0 0.0
    %1070 = vmatprep.subr.mxu0 0.0
    %1071 = vmatpush1.xpose.msra.mxu0 0.0
    %1072 = vmatprep.subr.mxu0 0.0
    %1073 = vmatpush1.xpose.msra.mxu0 0.0
    %1074 = vmatprep.subr.mxu0 0.0
    %1075 = vmatpush1.xpose.msra.mxu0 0.0
    %1076 = vmatprep.subr.mxu0 0.0
    %1077 = vmatpush1.xpose.msra.mxu0 0.0
    %1078 = vmatprep.subr.mxu0 0.0
    %1079 = vmatpush1.xpose.msra.mxu0 0.0
    %1080 = vmatprep.subr.mxu0 0.0
    %1081 = vmatpush1.xpose.msra.mxu0 0.0
    %1082 = vmatprep.mubr.f32.mxu0 0.0
    %1083 = vmatmul.mubr.f32.gmra.mrb[0].mxu0 %v995
    %v1084 = vpop.f32.mrb[0].mxu0
    %v1085 = vadd.f32 0.0, %v1084
    %v1086 = vpop.f32.mrb[0].mxu0
    %1087 = vmatprep.mubr.f32.mxu0 0.0
    %1088 = vmatmul.mubr.f32.gmra.mrb[0].mxu0 %v998
    %v1089 = vpop.f32.mrb[0].mxu0
    %v1090 = vadd.f32 0.0, %v1089
    %v1091 = vpop.f32.mrb[0].mxu0
    %1092 = vmatprep.mubr.f32.mxu0 0.0
    %1093 = vmatmul.mubr.f32.gmra.mrb[0].mxu0 %v1001
    %v1094 = vpop.f32.mrb[0].mxu0
    %v1095 = vadd.f32 0.0, %v1094
    %v1096 = vpop.f32.mrb[0].mxu0
    %1097 = vmatprep.mubr.f32.mxu0 0.0
    %1098 = vmatmul.mubr.f32.gmra.mrb[0].mxu0 %v1004
    %v1099 = vpop.f32.mrb[0].mxu0
    %v1100 = vadd.f32 0.0, %v1099
    %v1101 = vpop.f32.mrb[0].mxu0
    %1102 = vmatprep.mubr.f32.mxu0 0.0
    %1103 = vmatmul.mubr.f32.gmra.mrb[0].mxu0 %v1007
    %v1104 = vpop.f32.mrb[0].mxu0
    %v1105 = vadd.f32 0.0, %v1104
    %v1106 = vpop.f32.mrb[0].mxu0
    %1107 = vmatprep.mubr.f32.mxu0 0.0
    %1108 = vmatmul.mubr.f32.gmra.mrb[0].mxu0 %v1010
    %v1109 = vpop.f32.mrb[0].mxu0
    %v1110 = vadd.f32 0.0, %v1109
    %v1111 = vpop.f32.mrb[0].mxu0
    %1112 = vmatprep.mubr.f32.mxu0 0.0
    %1113 = vmatmul.mubr.f32.gmra.mrb[0].mxu0 %v1013
    %v1114 = vpop.f32.mrb[0].mxu0
    %v1115 = vadd.f32 0.0, %v1114
    %v1116 = vpop.f32.mrb[0].mxu0
    %1117 = vmatprep.mubr.f32.mxu0 0.0
    %1118 = vmatmul.mubr.f32.gmra.mrb[0].mxu0 %v1016
    %v1119 = vpop.f32.mrb[0].mxu0
    %v1120 = vadd.f32 0.0, %v1119
    %v1121 = vpop.f32.mrb[0].mxu0
    %1122 = vdwg.mxu0
    %v1124 = vsel %vm219, %v83, 0
    %v1127 = vsel %vm219, %v84, 0
    %v1130 = vsel %vm219, %v85, 0
    %v1133 = vsel %vm219, %v86, 0
    %v1136 = vsel %vm219, %v87, 0
    %v1139 = vsel %vm219, %v88, 0
    %v1142 = vsel %vm219, %v89, 0
    %v1145 = vsel %vm219, %v90, 0
    %1147 = vmatprep.subr.mxu0 0.0
    %1148 = vmatpush1.xpose.msra.mxu0 %v1124
    %1149 = vmatprep.subr.mxu0 0.0
    %1150 = vmatpush1.xpose.msra.mxu0 %v1127
    %1151 = vmatprep.subr.mxu0 0.0
    %1152 = vmatpush1.xpose.msra.mxu0 %v1130
    %1153 = vmatprep.subr.mxu0 0.0
    %1154 = vmatpush1.xpose.msra.mxu0 %v1133
    %1155 = vmatprep.subr.mxu0 0.0
    %1156 = vmatpush1.xpose.msra.mxu0 %v1136
    %1157 = vmatprep.subr.mxu0 0.0
    %1158 = vmatpush1.xpose.msra.mxu0 %v1139
    %1159 = vmatprep.subr.mxu0 0.0
    %1160 = vmatpush1.xpose.msra.mxu0 %v1142
    %1161 = vmatprep.subr.mxu0 0.0
    %1162 = vmatpush1.xpose.msra.mxu0 %v1145
    %1163 = vmatprep.subr.mxu0 0.0
    %1164 = vmatpush1.xpose.msra.mxu0 0.0
    %1165 = vmatprep.subr.mxu0 0.0
    %1166 = vmatpush1.xpose.msra.mxu0 0.0
    %1167 = vmatprep.subr.mxu0 0.0
    %1168 = vmatpush1.xpose.msra.mxu0 0.0
    %1169 = vmatprep.subr.mxu0 0.0
    %1170 = vmatpush1.xpose.msra.mxu0 0.0
    %1171 = vmatprep.subr.mxu0 0.0
    %1172 = vmatpush1.xpose.msra.mxu0 0.0
    %1173 = vmatprep.subr.mxu0 0.0
    %1174 = vmatpush1.xpose.msra.mxu0 0.0
    %1175 = vmatprep.subr.mxu0 0.0
    %1176 = vmatpush1.xpose.msra.mxu0 0.0
    %1177 = vmatprep.subr.mxu0 0.0
    %1178 = vmatpush1.xpose.msra.mxu0 0.0
    %1179 = vmatprep.subr.mxu0 0.0
    %1180 = vmatpush1.xpose.msra.mxu0 0.0
    %1181 = vmatprep.subr.mxu0 0.0
    %1182 = vmatpush1.xpose.msra.mxu0 0.0
    %1183 = vmatprep.subr.mxu0 0.0
    %1184 = vmatpush1.xpose.msra.mxu0 0.0
    %1185 = vmatprep.subr.mxu0 0.0
    %1186 = vmatpush1.xpose.msra.mxu0 0.0
    %1187 = vmatprep.subr.mxu0 0.0
    %1188 = vmatpush1.xpose.msra.mxu0 0.0
    %1189 = vmatprep.subr.mxu0 0.0
    %1190 = vmatpush1.xpose.msra.mxu0 0.0
    %1191 = vmatprep.subr.mxu0 0.0
    %1192 = vmatpush1.xpose.msra.mxu0 0.0
    %1193 = vmatprep.subr.mxu0 0.0
    %1194 = vmatpush1.xpose.msra.mxu0 0.0
    %1195 = vmatprep.subr.mxu0 0.0
    %1196 = vmatpush1.xpose.msra.mxu0 0.0
    %1197 = vmatprep.subr.mxu0 0.0
    %1198 = vmatpush1.xpose.msra.mxu0 0.0
    %1199 = vmatprep.subr.mxu0 0.0
    %1200 = vmatpush1.xpose.msra.mxu0 0.0
    %1201 = vmatprep.subr.mxu0 0.0
    %1202 = vmatpush1.xpose.msra.mxu0 0.0
    %1203 = vmatprep.subr.mxu0 0.0
    %1204 = vmatpush1.xpose.msra.mxu0 0.0
    %1205 = vmatprep.subr.mxu0 0.0
    %1206 = vmatpush1.xpose.msra.mxu0 0.0
    %1207 = vmatprep.subr.mxu0 0.0
    %1208 = vmatpush1.xpose.msra.mxu0 0.0
    %1209 = vmatprep.subr.mxu0 0.0
    %1210 = vmatpush1.xpose.msra.mxu0 0.0
    %1211 = vmatprep.mubr.f32.mxu0 0.0
    %1212 = vmatmul.mubr.f32.gmra.mrb[0].mxu0 %v1124
    %v1213 = vpop.f32.mrb[0].mxu0
    %v1214 = vadd.f32 0.0, %v1213
    %v1215 = vpop.f32.mrb[0].mxu0
    %1216 = vmatprep.mubr.f32.mxu0 0.0
    %1217 = vmatmul.mubr.f32.gmra.mrb[0].mxu0 %v1127
    %v1218 = vpop.f32.mrb[0].mxu0
    %v1219 = vadd.f32 0.0, %v1218
    %v1220 = vpop.f32.mrb[0].mxu0
    %1221 = vmatprep.mubr.f32.mxu0 0.0
    %1222 = vmatmul.mubr.f32.gmra.mrb[0].mxu0 %v1130
    %v1223 = vpop.f32.mrb[0].mxu0
    %v1224 = vadd.f32 0.0, %v1223
    %v1225 = vpop.f32.mrb[0].mxu0
    %1226 = vmatprep.mubr.f32.mxu0 0.0
    %1227 = vmatmul.mubr.f32.gmra.mrb[0].mxu0 %v1133
    %v1228 = vpop.f32.mrb[0].mxu0
    %v1229 = vadd.f32 0.0, %v1228
    %v1230 = vpop.f32.mrb[0].mxu0
    %1231 = vmatprep.mubr.f32.mxu0 0.0
    %1232 = vmatmul.mubr.f32.gmra.mrb[0].mxu0 %v1136
    %v1233 = vpop.f32.mrb[0].mxu0
    %v1234 = vadd.f32 0.0, %v1233
    %v1235 = vpop.f32.mrb[0].mxu0
    %1236 = vmatprep.mubr.f32.mxu0 0.0
    %1237 = vmatmul.mubr.f32.gmra.mrb[0].mxu0 %v1139
    %v1238 = vpop.f32.mrb[0].mxu0
    %v1239 = vadd.f32 0.0, %v1238
    %v1240 = vpop.f32.mrb[0].mxu0
    %1241 = vmatprep.mubr.f32.mxu0 0.0
    %1242 = vmatmul.mubr.f32.gmra.mrb[0].mxu0 %v1142
    %v1243 = vpop.f32.mrb[0].mxu0
    %v1244 = vadd.f32 0.0, %v1243
    %v1245 = vpop.f32.mrb[0].mxu0
    %1246 = vmatprep.mubr.f32.mxu0 0.0
    %1247 = vmatmul.mubr.f32.gmra.mrb[0].mxu0 %v1145
    %v1248 = vpop.f32.mrb[0].mxu0
    %v1249 = vadd.f32 0.0, %v1248
    %v1250 = vpop.f32.mrb[0].mxu0
    %1251 = vdwg.mxu0
    %v1253 = vsel %vm219, %v91, 0
    %v1256 = vsel %vm219, %v92, 0
    %v1259 = vsel %vm219, %v93, 0
    %v1262 = vsel %vm219, %v94, 0
    %v1265 = vsel %vm219, %v95, 0
    %v1268 = vsel %vm219, %v96, 0
    %v1271 = vsel %vm219, %v97, 0
    %v1274 = vsel %vm219, %v98, 0
    %1276 = vmatprep.subr.mxu0 0.0
    %1277 = vmatpush1.xpose.msra.mxu0 %v1253
    %1278 = vmatprep.subr.mxu0 0.0
    %1279 = vmatpush1.xpose.msra.mxu0 %v1256
    %1280 = vmatprep.subr.mxu0 0.0
    %1281 = vmatpush1.xpose.msra.mxu0 %v1259
    %1282 = vmatprep.subr.mxu0 0.0
    %1283 = vmatpush1.xpose.msra.mxu0 %v1262
    %1284 = vmatprep.subr.mxu0 0.0
    %1285 = vmatpush1.xpose.msra.mxu0 %v1265
    %1286 = vmatprep.subr.mxu0 0.0
    %1287 = vmatpush1.xpose.msra.mxu0 %v1268
    %1288 = vmatprep.subr.mxu0 0.0
    %1289 = vmatpush1.xpose.msra.mxu0 %v1271
    %1290 = vmatprep.subr.mxu0 0.0
    %1291 = vmatpush1.xpose.msra.mxu0 %v1274
    %1292 = vmatprep.subr.mxu0 0.0
    %1293 = vmatpush1.xpose.msra.mxu0 0.0
    %1294 = vmatprep.subr.mxu0 0.0
    %1295 = vmatpush1.xpose.msra.mxu0 0.0
    %1296 = vmatprep.subr.mxu0 0.0
    %1297 = vmatpush1.xpose.msra.mxu0 0.0
    %1298 = vmatprep.subr.mxu0 0.0
    %1299 = vmatpush1.xpose.msra.mxu0 0.0
    %1300 = vmatprep.subr.mxu0 0.0
    %1301 = vmatpush1.xpose.msra.mxu0 0.0
    %1302 = vmatprep.subr.mxu0 0.0
    %1303 = vmatpush1.xpose.msra.mxu0 0.0
    %1304 = vmatprep.subr.mxu0 0.0
    %1305 = vmatpush1.xpose.msra.mxu0 0.0
    %1306 = vmatprep.subr.mxu0 0.0
    %1307 = vmatpush1.xpose.msra.mxu0 0.0
    %1308 = vmatprep.subr.mxu0 0.0
    %1309 = vmatpush1.xpose.msra.mxu0 0.0
    %1310 = vmatprep.subr.mxu0 0.0
    %1311 = vmatpush1.xpose.msra.mxu0 0.0
    %1312 = vmatprep.subr.mxu0 0.0
    %1313 = vmatpush1.xpose.msra.mxu0 0.0
    %1314 = vmatprep.subr.mxu0 0.0
    %1315 = vmatpush1.xpose.msra.mxu0 0.0
    %1316 = vmatprep.subr.mxu0 0.0
    %1317 = vmatpush1.xpose.msra.mxu0 0.0
    %1318 = vmatprep.subr.mxu0 0.0
    %1319 = vmatpush1.xpose.msra.mxu0 0.0
    %1320 = vmatprep.subr.mxu0 0.0
    %1321 = vmatpush1.xpose.msra.mxu0 0.0
    %1322 = vmatprep.subr.mxu0 0.0
    %1323 = vmatpush1.xpose.msra.mxu0 0.0
    %1324 = vmatprep.subr.mxu0 0.0
    %1325 = vmatpush1.xpose.msra.mxu0 0.0
    %1326 = vmatprep.subr.mxu0 0.0
    %1327 = vmatpush1.xpose.msra.mxu0 0.0
    %1328 = vmatprep.subr.mxu0 0.0
    %1329 = vmatpush1.xpose.msra.mxu0 0.0
    %1330 = vmatprep.subr.mxu0 0.0
    %1331 = vmatpush1.xpose.msra.mxu0 0.0
    %1332 = vmatprep.subr.mxu0 0.0
    %1333 = vmatpush1.xpose.msra.mxu0 0.0
    %1334 = vmatprep.subr.mxu0 0.0
    %1335 = vmatpush1.xpose.msra.mxu0 0.0
    %1336 = vmatprep.subr.mxu0 0.0
    %1337 = vmatpush1.xpose.msra.mxu0 0.0
    %1338 = vmatprep.subr.mxu0 0.0
    %1339 = vmatpush1.xpose.msra.mxu0 0.0
    %1340 = vmatprep.mubr.f32.mxu0 0.0
    %1341 = vmatmul.mubr.f32.gmra.mrb[0].mxu0 %v1253
    %v1342 = vpop.f32.mrb[0].mxu0
    %v1343 = vadd.f32 0.0, %v1342
    %v1344 = vpop.f32.mrb[0].mxu0
    %1345 = vmatprep.mubr.f32.mxu0 0.0
    %1346 = vmatmul.mubr.f32.gmra.mrb[0].mxu0 %v1256
    %v1347 = vpop.f32.mrb[0].mxu0
    %v1348 = vadd.f32 0.0, %v1347
    %v1349 = vpop.f32.mrb[0].mxu0
    %1350 = vmatprep.mubr.f32.mxu0 0.0
    %1351 = vmatmul.mubr.f32.gmra.mrb[0].mxu0 %v1259
    %v1352 = vpop.f32.mrb[0].mxu0
    %v1353 = vadd.f32 0.0, %v1352
    %v1354 = vpop.f32.mrb[0].mxu0
    %1355 = vmatprep.mubr.f32.mxu0 0.0
    %1356 = vmatmul.mubr.f32.gmra.mrb[0].mxu0 %v1262
    %v1357 = vpop.f32.mrb[0].mxu0
    %v1358 = vadd.f32 0.0, %v1357
    %v1359 = vpop.f32.mrb[0].mxu0
    %1360 = vmatprep.mubr.f32.mxu0 0.0
    %1361 = vmatmul.mubr.f32.gmra.mrb[0].mxu0 %v1265
    %v1362 = vpop.f32.mrb[0].mxu0
    %v1363 = vadd.f32 0.0, %v1362
    %v1364 = vpop.f32.mrb[0].mxu0
    %1365 = vmatprep.mubr.f32.mxu0 0.0
    %1366 = vmatmul.mubr.f32.gmra.mrb[0].mxu0 %v1268
    %v1367 = vpop.f32.mrb[0].mxu0
    %v1368 = vadd.f32 0.0, %v1367
    %v1369 = vpop.f32.mrb[0].mxu0
    %1370 = vmatprep.mubr.f32.mxu0 0.0
    %1371 = vmatmul.mubr.f32.gmra.mrb[0].mxu0 %v1271
    %v1372 = vpop.f32.mrb[0].mxu0
    %v1373 = vadd.f32 0.0, %v1372
    %v1374 = vpop.f32.mrb[0].mxu0
    %1375 = vmatprep.mubr.f32.mxu0 0.0
    %1376 = vmatmul.mubr.f32.gmra.mrb[0].mxu0 %v1274
    %v1377 = vpop.f32.mrb[0].mxu0
    %v1378 = vadd.f32 0.0, %v1377
    %v1379 = vpop.f32.mrb[0].mxu0
    %1380 = vdwg.mxu0
    %v1382 = vsel %vm219, %v99, 0
    %v1385 = vsel %vm219, %v100, 0
    %v1388 = vsel %vm219, %v101, 0
    %v1391 = vsel %vm219, %v102, 0
    %v1394 = vsel %vm219, %v103, 0
    %v1397 = vsel %vm219, %v104, 0
    %v1400 = vsel %vm219, %v105, 0
    %v1403 = vsel %vm219, %v106, 0
    %1405 = vmatprep.subr.mxu0 0.0
    %1406 = vmatpush1.xpose.msra.mxu0 %v1382
    %1407 = vmatprep.subr.mxu0 0.0
    %1408 = vmatpush1.xpose.msra.mxu0 %v1385
    %1409 = vmatprep.subr.mxu0 0.0
    %1410 = vmatpush1.xpose.msra.mxu0 %v1388
    %1411 = vmatprep.subr.mxu0 0.0
    %1412 = vmatpush1.xpose.msra.mxu0 %v1391
    %1413 = vmatprep.subr.mxu0 0.0
    %1414 = vmatpush1.xpose.msra.mxu0 %v1394
    %1415 = vmatprep.subr.mxu0 0.0
    %1416 = vmatpush1.xpose.msra.mxu0 %v1397
    %1417 = vmatprep.subr.mxu0 0.0
    %1418 = vmatpush1.xpose.msra.mxu0 %v1400
    %1419 = vmatprep.subr.mxu0 0.0
    %1420 = vmatpush1.xpose.msra.mxu0 %v1403
    %1421 = vmatprep.subr.mxu0 0.0
    %1422 = vmatpush1.xpose.msra.mxu0 0.0
    %1423 = vmatprep.subr.mxu0 0.0
    %1424 = vmatpush1.xpose.msra.mxu0 0.0
    %1425 = vmatprep.subr.mxu0 0.0
    %1426 = vmatpush1.xpose.msra.mxu0 0.0
    %1427 = vmatprep.subr.mxu0 0.0
    %1428 = vmatpush1.xpose.msra.mxu0 0.0
    %1429 = vmatprep.subr.mxu0 0.0
    %1430 = vmatpush1.xpose.msra.mxu0 0.0
    %1431 = vmatprep.subr.mxu0 0.0
    %1432 = vmatpush1.xpose.msra.mxu0 0.0
    %1433 = vmatprep.subr.mxu0 0.0
    %1434 = vmatpush1.xpose.msra.mxu0 0.0
    %1435 = vmatprep.subr.mxu0 0.0
    %1436 = vmatpush1.xpose.msra.mxu0 0.0
    %1437 = vmatprep.subr.mxu0 0.0
    %1438 = vmatpush1.xpose.msra.mxu0 0.0
    %1439 = vmatprep.subr.mxu0 0.0
    %1440 = vmatpush1.xpose.msra.mxu0 0.0
    %1441 = vmatprep.subr.mxu0 0.0
    %1442 = vmatpush1.xpose.msra.mxu0 0.0
    %1443 = vmatprep.subr.mxu0 0.0
    %1444 = vmatpush1.xpose.msra.mxu0 0.0
    %1445 = vmatprep.subr.mxu0 0.0
    %1446 = vmatpush1.xpose.msra.mxu0 0.0
    %1447 = vmatprep.subr.mxu0 0.0
    %1448 = vmatpush1.xpose.msra.mxu0 0.0
    %1449 = vmatprep.subr.mxu0 0.0
    %1450 = vmatpush1.xpose.msra.mxu0 0.0
    %1451 = vmatprep.subr.mxu0 0.0
    %1452 = vmatpush1.xpose.msra.mxu0 0.0
    %1453 = vmatprep.subr.mxu0 0.0
    %1454 = vmatpush1.xpose.msra.mxu0 0.0
    %1455 = vmatprep.subr.mxu0 0.0
    %1456 = vmatpush1.xpose.msra.mxu0 0.0
    %1457 = vmatprep.subr.mxu0 0.0
    %1458 = vmatpush1.xpose.msra.mxu0 0.0
    %1459 = vmatprep.subr.mxu0 0.0
    %1460 = vmatpush1.xpose.msra.mxu0 0.0
    %1461 = vmatprep.subr.mxu0 0.0
    %1462 = vmatpush1.xpose.msra.mxu0 0.0
    %1463 = vmatprep.subr.mxu0 0.0
    %1464 = vmatpush1.xpose.msra.mxu0 0.0
    %1465 = vmatprep.subr.mxu0 0.0
    %1466 = vmatpush1.xpose.msra.mxu0 0.0
    %1467 = vmatprep.subr.mxu0 0.0
    %1468 = vmatpush1.xpose.msra.mxu0 0.0
    %1469 = vmatprep.mubr.f32.mxu0 0.0
    %1470 = vmatmul.mubr.f32.gmra.mrb[0].mxu0 %v1382
    %v1471 = vpop.f32.mrb[0].mxu0
    %v1472 = vadd.f32 0.0, %v1471
    %v1473 = vpop.f32.mrb[0].mxu0
    %1474 = vmatprep.mubr.f32.mxu0 0.0
    %1475 = vmatmul.mubr.f32.gmra.mrb[0].mxu0 %v1385
    %v1476 = vpop.f32.mrb[0].mxu0
    %v1477 = vadd.f32 0.0, %v1476
    %v1478 = vpop.f32.mrb[0].mxu0
    %1479 = vmatprep.mubr.f32.mxu0 0.0
    %1480 = vmatmul.mubr.f32.gmra.mrb[0].mxu0 %v1388
    %v1481 = vpop.f32.mrb[0].mxu0
    %v1482 = vadd.f32 0.0, %v1481
    %v1483 = vpop.f32.mrb[0].mxu0
    %1484 = vmatprep.mubr.f32.mxu0 0.0
    %1485 = vmatmul.mubr.f32.gmra.mrb[0].mxu0 %v1391
    %v1486 = vpop.f32.mrb[0].mxu0
    %v1487 = vadd.f32 0.0, %v1486
    %v1488 = vpop.f32.mrb[0].mxu0
    %1489 = vmatprep.mubr.f32.mxu0 0.0
    %1490 = vmatmul.mubr.f32.gmra.mrb[0].mxu0 %v1394
    %v1491 = vpop.f32.mrb[0].mxu0
    %v1492 = vadd.f32 0.0, %v1491
    %v1493 = vpop.f32.mrb[0].mxu0
    %1494 = vmatprep.mubr.f32.mxu0 0.0
    %1495 = vmatmul.mubr.f32.gmra.mrb[0].mxu0 %v1397
    %v1496 = vpop.f32.mrb[0].mxu0
    %v1497 = vadd.f32 0.0, %v1496
    %v1498 = vpop.f32.mrb[0].mxu0
    %1499 = vmatprep.mubr.f32.mxu0 0.0
    %1500 = vmatmul.mubr.f32.gmra.mrb[0].mxu0 %v1400
    %v1501 = vpop.f32.mrb[0].mxu0
    %v1502 = vadd.f32 0.0, %v1501
    %v1503 = vpop.f32.mrb[0].mxu0
    %1504 = vmatprep.mubr.f32.mxu0 0.0
    %1505 = vmatmul.mubr.f32.gmra.mrb[0].mxu0 %v1403
    %v1506 = vpop.f32.mrb[0].mxu0
    %v1507 = vadd.f32 0.0, %v1506
    %v1508 = vpop.f32.mrb[0].mxu0
    %1509 = vdwg.mxu0
    %v1511 = vsel %vm219, %v107, 0
    %v1514 = vsel %vm219, %v108, 0
    %v1517 = vsel %vm219, %v109, 0
    %v1520 = vsel %vm219, %v110, 0
    %v1523 = vsel %vm219, %v111, 0
    %v1526 = vsel %vm219, %v112, 0
    %v1529 = vsel %vm219, %v113, 0
    %v1532 = vsel %vm219, %v114, 0
    %1534 = vmatprep.subr.mxu0 0.0
    %1535 = vmatpush1.xpose.msra.mxu0 %v1511
    %1536 = vmatprep.subr.mxu0 0.0
    %1537 = vmatpush1.xpose.msra.mxu0 %v1514
    %1538 = vmatprep.subr.mxu0 0.0
    %1539 = vmatpush1.xpose.msra.mxu0 %v1517
    %1540 = vmatprep.subr.mxu0 0.0
    %1541 = vmatpush1.xpose.msra.mxu0 %v1520
    %1542 = vmatprep.subr.mxu0 0.0
    %1543 = vmatpush1.xpose.msra.mxu0 %v1523
    %1544 = vmatprep.subr.mxu0 0.0
    %1545 = vmatpush1.xpose.msra.mxu0 %v1526
    %1546 = vmatprep.subr.mxu0 0.0
    %1547 = vmatpush1.xpose.msra.mxu0 %v1529
    %1548 = vmatprep.subr.mxu0 0.0
    %1549 = vmatpush1.xpose.msra.mxu0 %v1532
    %1550 = vmatprep.subr.mxu0 0.0
    %1551 = vmatpush1.xpose.msra.mxu0 0.0
    %1552 = vmatprep.subr.mxu0 0.0
    %1553 = vmatpush1.xpose.msra.mxu0 0.0
    %1554 = vmatprep.subr.mxu0 0.0
    %1555 = vmatpush1.xpose.msra.mxu0 0.0
    %1556 = vmatprep.subr.mxu0 0.0
    %1557 = vmatpush1.xpose.msra.mxu0 0.0
    %1558 = vmatprep.subr.mxu0 0.0
    %1559 = vmatpush1.xpose.msra.mxu0 0.0
    %1560 = vmatprep.subr.mxu0 0.0
    %1561 = vmatpush1.xpose.msra.mxu0 0.0
    %1562 = vmatprep.subr.mxu0 0.0
    %1563 = vmatpush1.xpose.msra.mxu0 0.0
    %1564 = vmatprep.subr.mxu0 0.0
    %1565 = vmatpush1.xpose.msra.mxu0 0.0
    %1566 = vmatprep.subr.mxu0 0.0
    %1567 = vmatpush1.xpose.msra.mxu0 0.0
    %1568 = vmatprep.subr.mxu0 0.0
    %1569 = vmatpush1.xpose.msra.mxu0 0.0
    %1570 = vmatprep.subr.mxu0 0.0
    %1571 = vmatpush1.xpose.msra.mxu0 0.0
    %1572 = vmatprep.subr.mxu0 0.0
    %1573 = vmatpush1.xpose.msra.mxu0 0.0
    %1574 = vmatprep.subr.mxu0 0.0
    %1575 = vmatpush1.xpose.msra.mxu0 0.0
    %1576 = vmatprep.subr.mxu0 0.0
    %1577 = vmatpush1.xpose.msra.mxu0 0.0
    %1578 = vmatprep.subr.mxu0 0.0
    %1579 = vmatpush1.xpose.msra.mxu0 0.0
    %1580 = vmatprep.subr.mxu0 0.0
    %1581 = vmatpush1.xpose.msra.mxu0 0.0
    %1582 = vmatprep.subr.mxu0 0.0
    %1583 = vmatpush1.xpose.msra.mxu0 0.0
    %1584 = vmatprep.subr.mxu0 0.0
    %1585 = vmatpush1.xpose.msra.mxu0 0.0
    %1586 = vmatprep.subr.mxu0 0.0
    %1587 = vmatpush1.xpose.msra.mxu0 0.0
    %1588 = vmatprep.subr.mxu0 0.0
    %1589 = vmatpush1.xpose.msra.mxu0 0.0
    %1590 = vmatprep.subr.mxu0 0.0
    %1591 = vmatpush1.xpose.msra.mxu0 0.0
    %1592 = vmatprep.subr.mxu0 0.0
    %1593 = vmatpush1.xpose.msra.mxu0 0.0
    %1594 = vmatprep.subr.mxu0 0.0
    %1595 = vmatpush1.xpose.msra.mxu0 0.0
    %1596 = vmatprep.subr.mxu0 0.0
    %1597 = vmatpush1.xpose.msra.mxu0 0.0
    %1598 = vmatprep.mubr.f32.mxu0 0.0
    %1599 = vmatmul.mubr.f32.gmra.mrb[0].mxu0 %v1511
    %v1600 = vpop.f32.mrb[0].mxu0
    %v1601 = vadd.f32 0.0, %v1600
    %v1602 = vpop.f32.mrb[0].mxu0
    %1603 = vmatprep.mubr.f32.mxu0 0.0
    %1604 = vmatmul.mubr.f32.gmra.mrb[0].mxu0 %v1514
    %v1605 = vpop.f32.mrb[0].mxu0
    %v1606 = vadd.f32 0.0, %v1605
    %v1607 = vpop.f32.mrb[0].mxu0
    %1608 = vmatprep.mubr.f32.mxu0 0.0
    %1609 = vmatmul.mubr.f32.gmra.mrb[0].mxu0 %v1517
    %v1610 = vpop.f32.mrb[0].mxu0
    %v1611 = vadd.f32 0.0, %v1610
    %v1612 = vpop.f32.mrb[0].mxu0
    %1613 = vmatprep.mubr.f32.mxu0 0.0
    %1614 = vmatmul.mubr.f32.gmra.mrb[0].mxu0 %v1520
    %v1615 = vpop.f32.mrb[0].mxu0
    %v1616 = vadd.f32 0.0, %v1615
    %v1617 = vpop.f32.mrb[0].mxu0
    %1618 = vmatprep.mubr.f32.mxu0 0.0
    %1619 = vmatmul.mubr.f32.gmra.mrb[0].mxu0 %v1523
    %v1620 = vpop.f32.mrb[0].mxu0
    %v1621 = vadd.f32 0.0, %v1620
    %v1622 = vpop.f32.mrb[0].mxu0
    %1623 = vmatprep.mubr.f32.mxu0 0.0
    %1624 = vmatmul.mubr.f32.gmra.mrb[0].mxu0 %v1526
    %v1625 = vpop.f32.mrb[0].mxu0
    %v1626 = vadd.f32 0.0, %v1625
    %v1627 = vpop.f32.mrb[0].mxu0
    %1628 = vmatprep.mubr.f32.mxu0 0.0
    %1629 = vmatmul.mubr.f32.gmra.mrb[0].mxu0 %v1529
    %v1630 = vpop.f32.mrb[0].mxu0
    %v1631 = vadd.f32 0.0, %v1630
    %v1632 = vpop.f32.mrb[0].mxu0
    %1633 = vmatprep.mubr.f32.mxu0 0.0
    %1634 = vmatmul.mubr.f32.gmra.mrb[0].mxu0 %v1532
    %v1635 = vpop.f32.mrb[0].mxu0
    %v1636 = vadd.f32 0.0, %v1635
    %v1637 = vpop.f32.mrb[0].mxu0
    %1638 = vdwg.mxu0
    %v1640 = vsel %vm219, %v115, 0
    %v1643 = vsel %vm219, %v116, 0
    %v1646 = vsel %vm219, %v117, 0
    %v1649 = vsel %vm219, %v118, 0
    %v1652 = vsel %vm219, %v119, 0
    %v1655 = vsel %vm219, %v120, 0
    %v1658 = vsel %vm219, %v121, 0
    %v1661 = vsel %vm219, %v122, 0
    %1663 = vmatprep.subr.mxu0 0.0
    %1664 = vmatpush1.xpose.msra.mxu0 %v1640
    %1665 = vmatprep.subr.mxu0 0.0
    %1666 = vmatpush1.xpose.msra.mxu0 %v1643
    %1667 = vmatprep.subr.mxu0 0.0
    %1668 = vmatpush1.xpose.msra.mxu0 %v1646
    %1669 = vmatprep.subr.mxu0 0.0
    %1670 = vmatpush1.xpose.msra.mxu0 %v1649
    %1671 = vmatprep.subr.mxu0 0.0
    %1672 = vmatpush1.xpose.msra.mxu0 %v1652
    %1673 = vmatprep.subr.mxu0 0.0
    %1674 = vmatpush1.xpose.msra.mxu0 %v1655
    %1675 = vmatprep.subr.mxu0 0.0
    %1676 = vmatpush1.xpose.msra.mxu0 %v1658
    %1677 = vmatprep.subr.mxu0 0.0
    %1678 = vmatpush1.xpose.msra.mxu0 %v1661
    %1679 = vmatprep.subr.mxu0 0.0
    %1680 = vmatpush1.xpose.msra.mxu0 0.0
    %1681 = vmatprep.subr.mxu0 0.0
    %1682 = vmatpush1.xpose.msra.mxu0 0.0
    %1683 = vmatprep.subr.mxu0 0.0
    %1684 = vmatpush1.xpose.msra.mxu0 0.0
    %1685 = vmatprep.subr.mxu0 0.0
    %1686 = vmatpush1.xpose.msra.mxu0 0.0
    %1687 = vmatprep.subr.mxu0 0.0
    %1688 = vmatpush1.xpose.msra.mxu0 0.0
    %1689 = vmatprep.subr.mxu0 0.0
    %1690 = vmatpush1.xpose.msra.mxu0 0.0
    %1691 = vmatprep.subr.mxu0 0.0
    %1692 = vmatpush1.xpose.msra.mxu0 0.0
    %1693 = vmatprep.subr.mxu0 0.0
    %1694 = vmatpush1.xpose.msra.mxu0 0.0
    %1695 = vmatprep.subr.mxu0 0.0
    %1696 = vmatpush1.xpose.msra.mxu0 0.0
    %1697 = vmatprep.subr.mxu0 0.0
    %1698 = vmatpush1.xpose.msra.mxu0 0.0
    %1699 = vmatprep.subr.mxu0 0.0
    %1700 = vmatpush1.xpose.msra.mxu0 0.0
    %1701 = vmatprep.subr.mxu0 0.0
    %1702 = vmatpush1.xpose.msra.mxu0 0.0
    %1703 = vmatprep.subr.mxu0 0.0
    %1704 = vmatpush1.xpose.msra.mxu0 0.0
    %1705 = vmatprep.subr.mxu0 0.0
    %1706 = vmatpush1.xpose.msra.mxu0 0.0
    %1707 = vmatprep.subr.mxu0 0.0
    %1708 = vmatpush1.xpose.msra.mxu0 0.0
    %1709 = vmatprep.subr.mxu0 0.0
    %1710 = vmatpush1.xpose.msra.mxu0 0.0
    %1711 = vmatprep.subr.mxu0 0.0
    %1712 = vmatpush1.xpose.msra.mxu0 0.0
    %1713 = vmatprep.subr.mxu0 0.0
    %1714 = vmatpush1.xpose.msra.mxu0 0.0
    %1715 = vmatprep.subr.mxu0 0.0
    %1716 = vmatpush1.xpose.msra.mxu0 0.0
    %1717 = vmatprep.subr.mxu0 0.0
    %1718 = vmatpush1.xpose.msra.mxu0 0.0
    %1719 = vmatprep.subr.mxu0 0.0
    %1720 = vmatpush1.xpose.msra.mxu0 0.0
    %1721 = vmatprep.subr.mxu0 0.0
    %1722 = vmatpush1.xpose.msra.mxu0 0.0
    %1723 = vmatprep.subr.mxu0 0.0
    %1724 = vmatpush1.xpose.msra.mxu0 0.0
    %1725 = vmatprep.subr.mxu0 0.0
    %1726 = vmatpush1.xpose.msra.mxu0 0.0
    %1727 = vmatprep.mubr.f32.mxu0 0.0
    %1728 = vmatmul.mubr.f32.gmra.mrb[0].mxu0 %v1640
    %v1729 = vpop.f32.mrb[0].mxu0
    %v1730 = vadd.f32 0.0, %v1729
    %v1731 = vpop.f32.mrb[0].mxu0
    %1732 = vmatprep.mubr.f32.mxu0 0.0
    %1733 = vmatmul.mubr.f32.gmra.mrb[0].mxu0 %v1643
    %v1734 = vpop.f32.mrb[0].mxu0
    %v1735 = vadd.f32 0.0, %v1734
    %v1736 = vpop.f32.mrb[0].mxu0
    %1737 = vmatprep.mubr.f32.mxu0 0.0
    %1738 = vmatmul.mubr.f32.gmra.mrb[0].mxu0 %v1646
    %v1739 = vpop.f32.mrb[0].mxu0
    %v1740 = vadd.f32 0.0, %v1739
    %v1741 = vpop.f32.mrb[0].mxu0
    %1742 = vmatprep.mubr.f32.mxu0 0.0
    %1743 = vmatmul.mubr.f32.gmra.mrb[0].mxu0 %v1649
    %v1744 = vpop.f32.mrb[0].mxu0
    %v1745 = vadd.f32 0.0, %v1744
    %v1746 = vpop.f32.mrb[0].mxu0
    %1747 = vmatprep.mubr.f32.mxu0 0.0
    %1748 = vmatmul.mubr.f32.gmra.mrb[0].mxu0 %v1652
    %v1749 = vpop.f32.mrb[0].mxu0
    %v1750 = vadd.f32 0.0, %v1749
    %v1751 = vpop.f32.mrb[0].mxu0
    %1752 = vmatprep.mubr.f32.mxu0 0.0
    %1753 = vmatmul.mubr.f32.gmra.mrb[0].mxu0 %v1655
    %v1754 = vpop.f32.mrb[0].mxu0
    %v1755 = vadd.f32 0.0, %v1754
    %v1756 = vpop.f32.mrb[0].mxu0
    %1757 = vmatprep.mubr.f32.mxu0 0.0
    %1758 = vmatmul.mubr.f32.gmra.mrb[0].mxu0 %v1658
    %v1759 = vpop.f32.mrb[0].mxu0
    %v1760 = vadd.f32 0.0, %v1759
    %v1761 = vpop.f32.mrb[0].mxu0
    %1762 = vmatprep.mubr.f32.mxu0 0.0
    %1763 = vmatmul.mubr.f32.gmra.mrb[0].mxu0 %v1661
    %v1764 = vpop.f32.mrb[0].mxu0
    %v1765 = vadd.f32 0.0, %v1764
    %v1766 = vpop.f32.mrb[0].mxu0
    %1767 = vdwg.mxu0
    %v1769 = vsel %vm219, %v123, 0
    %v1772 = vsel %vm219, %v124, 0
    %v1775 = vsel %vm219, %v125, 0
    %v1778 = vsel %vm219, %v126, 0
    %v1781 = vsel %vm219, %v127, 0
    %v1784 = vsel %vm219, %v128, 0
    %v1787 = vsel %vm219, %v129, 0
    %v1790 = vsel %vm219, %v130, 0
    %1792 = vmatprep.subr.mxu0 0.0
    %1793 = vmatpush1.xpose.msra.mxu0 %v1769
    %1794 = vmatprep.subr.mxu0 0.0
    %1795 = vmatpush1.xpose.msra.mxu0 %v1772
    %1796 = vmatprep.subr.mxu0 0.0
    %1797 = vmatpush1.xpose.msra.mxu0 %v1775
    %1798 = vmatprep.subr.mxu0 0.0
    %1799 = vmatpush1.xpose.msra.mxu0 %v1778
    %1800 = vmatprep.subr.mxu0 0.0
    %1801 = vmatpush1.xpose.msra.mxu0 %v1781
    %1802 = vmatprep.subr.mxu0 0.0
    %1803 = vmatpush1.xpose.msra.mxu0 %v1784
    %1804 = vmatprep.subr.mxu0 0.0
    %1805 = vmatpush1.xpose.msra.mxu0 %v1787
    %1806 = vmatprep.subr.mxu0 0.0
    %1807 = vmatpush1.xpose.msra.mxu0 %v1790
    %1808 = vmatprep.subr.mxu0 0.0
    %1809 = vmatpush1.xpose.msra.mxu0 0.0
    %1810 = vmatprep.subr.mxu0 0.0
    %1811 = vmatpush1.xpose.msra.mxu0 0.0
    %1812 = vmatprep.subr.mxu0 0.0
    %1813 = vmatpush1.xpose.msra.mxu0 0.0
    %1814 = vmatprep.subr.mxu0 0.0
    %1815 = vmatpush1.xpose.msra.mxu0 0.0
    %1816 = vmatprep.subr.mxu0 0.0
    %1817 = vmatpush1.xpose.msra.mxu0 0.0
    %1818 = vmatprep.subr.mxu0 0.0
    %1819 = vmatpush1.xpose.msra.mxu0 0.0
    %1820 = vmatprep.subr.mxu0 0.0
    %1821 = vmatpush1.xpose.msra.mxu0 0.0
    %1822 = vmatprep.subr.mxu0 0.0
    %1823 = vmatpush1.xpose.msra.mxu0 0.0
    %1824 = vmatprep.subr.mxu0 0.0
    %1825 = vmatpush1.xpose.msra.mxu0 0.0
    %1826 = vmatprep.subr.mxu0 0.0
    %1827 = vmatpush1.xpose.msra.mxu0 0.0
    %1828 = vmatprep.subr.mxu0 0.0
    %1829 = vmatpush1.xpose.msra.mxu0 0.0
    %1830 = vmatprep.subr.mxu0 0.0
    %1831 = vmatpush1.xpose.msra.mxu0 0.0
    %1832 = vmatprep.subr.mxu0 0.0
    %1833 = vmatpush1.xpose.msra.mxu0 0.0
    %1834 = vmatprep.subr.mxu0 0.0
    %1835 = vmatpush1.xpose.msra.mxu0 0.0
    %1836 = vmatprep.subr.mxu0 0.0
    %1837 = vmatpush1.xpose.msra.mxu0 0.0
    %1838 = vmatprep.subr.mxu0 0.0
    %1839 = vmatpush1.xpose.msra.mxu0 0.0
    %1840 = vmatprep.subr.mxu0 0.0
    %1841 = vmatpush1.xpose.msra.mxu0 0.0
    %1842 = vmatprep.subr.mxu0 0.0
    %1843 = vmatpush1.xpose.msra.mxu0 0.0
    %1844 = vmatprep.subr.mxu0 0.0
    %1845 = vmatpush1.xpose.msra.mxu0 0.0
    %1846 = vmatprep.subr.mxu0 0.0
    %1847 = vmatpush1.xpose.msra.mxu0 0.0
    %1848 = vmatprep.subr.mxu0 0.0
    %1849 = vmatpush1.xpose.msra.mxu0 0.0
    %1850 = vmatprep.subr.mxu0 0.0
    %1851 = vmatpush1.xpose.msra.mxu0 0.0
    %1852 = vmatprep.subr.mxu0 0.0
    %1853 = vmatpush1.xpose.msra.mxu0 0.0
    %1854 = vmatprep.subr.mxu0 0.0
    %1855 = vmatpush1.xpose.msra.mxu0 0.0
    %1856 = vmatprep.mubr.f32.mxu0 0.0
    %1857 = vmatmul.mubr.f32.gmra.mrb[0].mxu0 %v1769
    %v1858 = vpop.f32.mrb[0].mxu0
    %v1859 = vadd.f32 0.0, %v1858
    %v1860 = vpop.f32.mrb[0].mxu0
    %1861 = vmatprep.mubr.f32.mxu0 0.0
    %1862 = vmatmul.mubr.f32.gmra.mrb[0].mxu0 %v1772
    %v1863 = vpop.f32.mrb[0].mxu0
    %v1864 = vadd.f32 0.0, %v1863
    %v1865 = vpop.f32.mrb[0].mxu0
    %1866 = vmatprep.mubr.f32.mxu0 0.0
    %1867 = vmatmul.mubr.f32.gmra.mrb[0].mxu0 %v1775
    %v1868 = vpop.f32.mrb[0].mxu0
    %v1869 = vadd.f32 0.0, %v1868
    %v1870 = vpop.f32.mrb[0].mxu0
    %1871 = vmatprep.mubr.f32.mxu0 0.0
    %1872 = vmatmul.mubr.f32.gmra.mrb[0].mxu0 %v1778
    %v1873 = vpop.f32.mrb[0].mxu0
    %v1874 = vadd.f32 0.0, %v1873
    %v1875 = vpop.f32.mrb[0].mxu0
    %1876 = vmatprep.mubr.f32.mxu0 0.0
    %1877 = vmatmul.mubr.f32.gmra.mrb[0].mxu0 %v1781
    %v1878 = vpop.f32.mrb[0].mxu0
    %v1879 = vadd.f32 0.0, %v1878
    %v1880 = vpop.f32.mrb[0].mxu0
    %1881 = vmatprep.mubr.f32.mxu0 0.0
    %1882 = vmatmul.mubr.f32.gmra.mrb[0].mxu0 %v1784
    %v1883 = vpop.f32.mrb[0].mxu0
    %v1884 = vadd.f32 0.0, %v1883
    %v1885 = vpop.f32.mrb[0].mxu0
    %1886 = vmatprep.mubr.f32.mxu0 0.0
    %1887 = vmatmul.mubr.f32.gmra.mrb[0].mxu0 %v1787
    %v1888 = vpop.f32.mrb[0].mxu0
    %v1889 = vadd.f32 0.0, %v1888
    %v1890 = vpop.f32.mrb[0].mxu0
    %1891 = vmatprep.mubr.f32.mxu0 0.0
    %1892 = vmatmul.mubr.f32.gmra.mrb[0].mxu0 %v1790
    %v1893 = vpop.f32.mrb[0].mxu0
    %v1894 = vadd.f32 0.0, %v1893
    %v1895 = vpop.f32.mrb[0].mxu0
    %1896 = vdwg.mxu0
    %v1898 = vsel %vm219, %v131, 0
    %v1901 = vsel %vm219, %v132, 0
    %v1904 = vsel %vm219, %v133, 0
    %v1907 = vsel %vm219, %v134, 0
    %v1910 = vsel %vm219, %v135, 0
    %v1913 = vsel %vm219, %v136, 0
    %v1916 = vsel %vm219, %v137, 0
    %v1919 = vsel %vm219, %v138, 0
    %1921 = vmatprep.subr.mxu0 0.0
    %1922 = vmatpush1.xpose.msra.mxu0 %v1898
    %1923 = vmatprep.subr.mxu0 0.0
    %1924 = vmatpush1.xpose.msra.mxu0 %v1901
    %1925 = vmatprep.subr.mxu0 0.0
    %1926 = vmatpush1.xpose.msra.mxu0 %v1904
    %1927 = vmatprep.subr.mxu0 0.0
    %1928 = vmatpush1.xpose.msra.mxu0 %v1907
    %1929 = vmatprep.subr.mxu0 0.0
    %1930 = vmatpush1.xpose.msra.mxu0 %v1910
    %1931 = vmatprep.subr.mxu0 0.0
    %1932 = vmatpush1.xpose.msra.mxu0 %v1913
    %1933 = vmatprep.subr.mxu0 0.0
    %1934 = vmatpush1.xpose.msra.mxu0 %v1916
    %1935 = vmatprep.subr.mxu0 0.0
    %1936 = vmatpush1.xpose.msra.mxu0 %v1919
    %1937 = vmatprep.subr.mxu0 0.0
    %1938 = vmatpush1.xpose.msra.mxu0 0.0
    %1939 = vmatprep.subr.mxu0 0.0
    %1940 = vmatpush1.xpose.msra.mxu0 0.0
    %1941 = vmatprep.subr.mxu0 0.0
    %1942 = vmatpush1.xpose.msra.mxu0 0.0
    %1943 = vmatprep.subr.mxu0 0.0
    %1944 = vmatpush1.xpose.msra.mxu0 0.0
    %1945 = vmatprep.subr.mxu0 0.0
    %1946 = vmatpush1.xpose.msra.mxu0 0.0
    %1947 = vmatprep.subr.mxu0 0.0
    %1948 = vmatpush1.xpose.msra.mxu0 0.0
    %1949 = vmatprep.subr.mxu0 0.0
    %1950 = vmatpush1.xpose.msra.mxu0 0.0
    %1951 = vmatprep.subr.mxu0 0.0
    %1952 = vmatpush1.xpose.msra.mxu0 0.0
    %1953 = vmatprep.subr.mxu0 0.0
    %1954 = vmatpush1.xpose.msra.mxu0 0.0
    %1955 = vmatprep.subr.mxu0 0.0
    %1956 = vmatpush1.xpose.msra.mxu0 0.0
    %1957 = vmatprep.subr.mxu0 0.0
    %1958 = vmatpush1.xpose.msra.mxu0 0.0
    %1959 = vmatprep.subr.mxu0 0.0
    %1960 = vmatpush1.xpose.msra.mxu0 0.0
    %1961 = vmatprep.subr.mxu0 0.0
    %1962 = vmatpush1.xpose.msra.mxu0 0.0
    %1963 = vmatprep.subr.mxu0 0.0
    %1964 = vmatpush1.xpose.msra.mxu0 0.0
    %1965 = vmatprep.subr.mxu0 0.0
    %1966 = vmatpush1.xpose.msra.mxu0 0.0
    %1967 = vmatprep.subr.mxu0 0.0
    %1968 = vmatpush1.xpose.msra.mxu0 0.0
    %1969 = vmatprep.subr.mxu0 0.0
    %1970 = vmatpush1.xpose.msra.mxu0 0.0
    %1971 = vmatprep.subr.mxu0 0.0
    %1972 = vmatpush1.xpose.msra.mxu0 0.0
    %1973 = vmatprep.subr.mxu0 0.0
    %1974 = vmatpush1.xpose.msra.mxu0 0.0
    %1975 = vmatprep.subr.mxu0 0.0
    %1976 = vmatpush1.xpose.msra.mxu0 0.0
    %1977 = vmatprep.subr.mxu0 0.0
    %1978 = vmatpush1.xpose.msra.mxu0 0.0
    %1979 = vmatprep.subr.mxu0 0.0
    %1980 = vmatpush1.xpose.msra.mxu0 0.0
    %1981 = vmatprep.subr.mxu0 0.0
    %1982 = vmatpush1.xpose.msra.mxu0 0.0
    %1983 = vmatprep.subr.mxu0 0.0
    %1984 = vmatpush1.xpose.msra.mxu0 0.0
    %1985 = vmatprep.mubr.f32.mxu0 0.0
    %1986 = vmatmul.mubr.f32.gmra.mrb[0].mxu0 %v1898
    %v1987 = vpop.f32.mrb[0].mxu0
    %v1988 = vadd.f32 0.0, %v1987
    %v1989 = vpop.f32.mrb[0].mxu0
    %1990 = vmatprep.mubr.f32.mxu0 0.0
    %1991 = vmatmul.mubr.f32.gmra.mrb[0].mxu0 %v1901
    %v1992 = vpop.f32.mrb[0].mxu0
    %v1993 = vadd.f32 0.0, %v1992
    %v1994 = vpop.f32.mrb[0].mxu0
    %1995 = vmatprep.mubr.f32.mxu0 0.0
    %1996 = vmatmul.mubr.f32.gmra.mrb[0].mxu0 %v1904
    %v1997 = vpop.f32.mrb[0].mxu0
    %v1998 = vadd.f32 0.0, %v1997
    %v1999 = vpop.f32.mrb[0].mxu0
    %2000 = vmatprep.mubr.f32.mxu0 0.0
    %2001 = vmatmul.mubr.f32.gmra.mrb[0].mxu0 %v1907
    %v2002 = vpop.f32.mrb[0].mxu0
    %v2003 = vadd.f32 0.0, %v2002
    %v2004 = vpop.f32.mrb[0].mxu0
    %2005 = vmatprep.mubr.f32.mxu0 0.0
    %2006 = vmatmul.mubr.f32.gmra.mrb[0].mxu0 %v1910
    %v2007 = vpop.f32.mrb[0].mxu0
    %v2008 = vadd.f32 0.0, %v2007
    %v2009 = vpop.f32.mrb[0].mxu0
    %2010 = vmatprep.mubr.f32.mxu0 0.0
    %2011 = vmatmul.mubr.f32.gmra.mrb[0].mxu0 %v1913
    %v2012 = vpop.f32.mrb[0].mxu0
    %v2013 = vadd.f32 0.0, %v2012
    %v2014 = vpop.f32.mrb[0].mxu0
    %2015 = vmatprep.mubr.f32.mxu0 0.0
    %2016 = vmatmul.mubr.f32.gmra.mrb[0].mxu0 %v1916
    %v2017 = vpop.f32.mrb[0].mxu0
    %v2018 = vadd.f32 0.0, %v2017
    %v2019 = vpop.f32.mrb[0].mxu0
    %2020 = vmatprep.mubr.f32.mxu0 0.0
    %2021 = vmatmul.mubr.f32.gmra.mrb[0].mxu0 %v1919
    %v2022 = vpop.f32.mrb[0].mxu0
    %v2023 = vadd.f32 0.0, %v2022
    %v2024 = vpop.f32.mrb[0].mxu0
    %2025 = vdwg.mxu0
    %v2027 = vsel %vm219, %v139, 0
    %v2030 = vsel %vm219, %v140, 0
    %v2033 = vsel %vm219, %v141, 0
    %v2036 = vsel %vm219, %v142, 0
    %v2039 = vsel %vm219, %v143, 0
    %v2042 = vsel %vm219, %v144, 0
    %v2045 = vsel %vm219, %v145, 0
    %v2048 = vsel %vm219, %v146, 0
    %2050 = vmatprep.subr.mxu0 0.0
    %2051 = vmatpush1.xpose.msra.mxu0 %v2027
    %2052 = vmatprep.subr.mxu0 0.0
    %2053 = vmatpush1.xpose.msra.mxu0 %v2030
    %2054 = vmatprep.subr.mxu0 0.0
    %2055 = vmatpush1.xpose.msra.mxu0 %v2033
    %2056 = vmatprep.subr.mxu0 0.0
    %2057 = vmatpush1.xpose.msra.mxu0 %v2036
    %2058 = vmatprep.subr.mxu0 0.0
    %2059 = vmatpush1.xpose.msra.mxu0 %v2039
    %2060 = vmatprep.subr.mxu0 0.0
    %2061 = vmatpush1.xpose.msra.mxu0 %v2042
    %2062 = vmatprep.subr.mxu0 0.0
    %2063 = vmatpush1.xpose.msra.mxu0 %v2045
    %2064 = vmatprep.subr.mxu0 0.0
    %2065 = vmatpush1.xpose.msra.mxu0 %v2048
    %2066 = vmatprep.subr.mxu0 0.0
    %2067 = vmatpush1.xpose.msra.mxu0 0.0
    %2068 = vmatprep.subr.mxu0 0.0
    %2069 = vmatpush1.xpose.msra.mxu0 0.0
    %2070 = vmatprep.subr.mxu0 0.0
    %2071 = vmatpush1.xpose.msra.mxu0 0.0
    %2072 = vmatprep.subr.mxu0 0.0
    %2073 = vmatpush1.xpose.msra.mxu0 0.0
    %2074 = vmatprep.subr.mxu0 0.0
    %2075 = vmatpush1.xpose.msra.mxu0 0.0
    %2076 = vmatprep.subr.mxu0 0.0
    %2077 = vmatpush1.xpose.msra.mxu0 0.0
    %2078 = vmatprep.subr.mxu0 0.0
    %2079 = vmatpush1.xpose.msra.mxu0 0.0
    %2080 = vmatprep.subr.mxu0 0.0
    %2081 = vmatpush1.xpose.msra.mxu0 0.0
    %2082 = vmatprep.subr.mxu0 0.0
    %2083 = vmatpush1.xpose.msra.mxu0 0.0
    %2084 = vmatprep.subr.mxu0 0.0
    %2085 = vmatpush1.xpose.msra.mxu0 0.0
    %2086 = vmatprep.subr.mxu0 0.0
    %2087 = vmatpush1.xpose.msra.mxu0 0.0
    %2088 = vmatprep.subr.mxu0 0.0
    %2089 = vmatpush1.xpose.msra.mxu0 0.0
    %2090 = vmatprep.subr.mxu0 0.0
    %2091 = vmatpush1.xpose.msra.mxu0 0.0
    %2092 = vmatprep.subr.mxu0 0.0
    %2093 = vmatpush1.xpose.msra.mxu0 0.0
    %2094 = vmatprep.subr.mxu0 0.0
    %2095 = vmatpush1.xpose.msra.mxu0 0.0
    %2096 = vmatprep.subr.mxu0 0.0
    %2097 = vmatpush1.xpose.msra.mxu0 0.0
    %2098 = vmatprep.subr.mxu0 0.0
    %2099 = vmatpush1.xpose.msra.mxu0 0.0
    %2100 = vmatprep.subr.mxu0 0.0
    %2101 = vmatpush1.xpose.msra.mxu0 0.0
    %2102 = vmatprep.subr.mxu0 0.0
    %2103 = vmatpush1.xpose.msra.mxu0 0.0
    %2104 = vmatprep.subr.mxu0 0.0
    %2105 = vmatpush1.xpose.msra.mxu0 0.0
    %2106 = vmatprep.subr.mxu0 0.0
    %2107 = vmatpush1.xpose.msra.mxu0 0.0
    %2108 = vmatprep.subr.mxu0 0.0
    %2109 = vmatpush1.xpose.msra.mxu0 0.0
    %2110 = vmatprep.subr.mxu0 0.0
    %2111 = vmatpush1.xpose.msra.mxu0 0.0
    %2112 = vmatprep.subr.mxu0 0.0
    %2113 = vmatpush1.xpose.msra.mxu0 0.0
    %2114 = vmatprep.mubr.f32.mxu0 0.0
    %2115 = vmatmul.mubr.f32.gmra.mrb[0].mxu0 %v2027
    %v2116 = vpop.f32.mrb[0].mxu0
    %v2117 = vadd.f32 0.0, %v2116
    %v2118 = vpop.f32.mrb[0].mxu0
    %2119 = vmatprep.mubr.f32.mxu0 0.0
    %2120 = vmatmul.mubr.f32.gmra.mrb[0].mxu0 %v2030
    %v2121 = vpop.f32.mrb[0].mxu0
    %v2122 = vadd.f32 0.0, %v2121
    %v2123 = vpop.f32.mrb[0].mxu0
    %2124 = vmatprep.mubr.f32.mxu0 0.0
    %2125 = vmatmul.mubr.f32.gmra.mrb[0].mxu0 %v2033
    %v2126 = vpop.f32.mrb[0].mxu0
    %v2127 = vadd.f32 0.0, %v2126
    %v2128 = vpop.f32.mrb[0].mxu0
    %2129 = vmatprep.mubr.f32.mxu0 0.0
    %2130 = vmatmul.mubr.f32.gmra.mrb[0].mxu0 %v2036
    %v2131 = vpop.f32.mrb[0].mxu0
    %v2132 = vadd.f32 0.0, %v2131
    %v2133 = vpop.f32.mrb[0].mxu0
    %2134 = vmatprep.mubr.f32.mxu0 0.0
    %2135 = vmatmul.mubr.f32.gmra.mrb[0].mxu0 %v2039
    %v2136 = vpop.f32.mrb[0].mxu0
    %v2137 = vadd.f32 0.0, %v2136
    %v2138 = vpop.f32.mrb[0].mxu0
    %2139 = vmatprep.mubr.f32.mxu0 0.0
    %2140 = vmatmul.mubr.f32.gmra.mrb[0].mxu0 %v2042
    %v2141 = vpop.f32.mrb[0].mxu0
    %v2142 = vadd.f32 0.0, %v2141
    %v2143 = vpop.f32.mrb[0].mxu0
    %2144 = vmatprep.mubr.f32.mxu0 0.0
    %2145 = vmatmul.mubr.f32.gmra.mrb[0].mxu0 %v2045
    %v2146 = vpop.f32.mrb[0].mxu0
    %v2147 = vadd.f32 0.0, %v2146
    %v2148 = vpop.f32.mrb[0].mxu0
    %2149 = vmatprep.mubr.f32.mxu0 0.0
    %2150 = vmatmul.mubr.f32.gmra.mrb[0].mxu0 %v2048
    %v2151 = vpop.f32.mrb[0].mxu0
    %v2152 = vadd.f32 0.0, %v2151
    %v2153 = vpop.f32.mrb[0].mxu0
    %2154 = vdwg.mxu0
    %v2156 = vsel %vm219, %v147, 0
    %v2159 = vsel %vm219, %v148, 0
    %v2162 = vsel %vm219, %v149, 0
    %v2165 = vsel %vm219, %v150, 0
    %v2168 = vsel %vm219, %v151, 0
    %v2171 = vsel %vm219, %v152, 0
    %v2174 = vsel %vm219, %v153, 0
    %v2177 = vsel %vm219, %v154, 0
    %2179 = vmatprep.subr.mxu0 0.0
    %2180 = vmatpush1.xpose.msra.mxu0 %v2156
    %2181 = vmatprep.subr.mxu0 0.0
    %2182 = vmatpush1.xpose.msra.mxu0 %v2159
    %2183 = vmatprep.subr.mxu0 0.0
    %2184 = vmatpush1.xpose.msra.mxu0 %v2162
    %2185 = vmatprep.subr.mxu0 0.0
    %2186 = vmatpush1.xpose.msra.mxu0 %v2165
    %2187 = vmatprep.subr.mxu0 0.0
    %2188 = vmatpush1.xpose.msra.mxu0 %v2168
    %2189 = vmatprep.subr.mxu0 0.0
    %2190 = vmatpush1.xpose.msra.mxu0 %v2171
    %2191 = vmatprep.subr.mxu0 0.0
    %2192 = vmatpush1.xpose.msra.mxu0 %v2174
    %2193 = vmatprep.subr.mxu0 0.0
    %2194 = vmatpush1.xpose.msra.mxu0 %v2177
    %2195 = vmatprep.subr.mxu0 0.0
    %2196 = vmatpush1.xpose.msra.mxu0 0.0
    %2197 = vmatprep.subr.mxu0 0.0
    %2198 = vmatpush1.xpose.msra.mxu0 0.0
    %2199 = vmatprep.subr.mxu0 0.0
    %2200 = vmatpush1.xpose.msra.mxu0 0.0
    %2201 = vmatprep.subr.mxu0 0.0
    %2202 = vmatpush1.xpose.msra.mxu0 0.0
    %2203 = vmatprep.subr.mxu0 0.0
    %2204 = vmatpush1.xpose.msra.mxu0 0.0
    %2205 = vmatprep.subr.mxu0 0.0
    %2206 = vmatpush1.xpose.msra.mxu0 0.0
    %2207 = vmatprep.subr.mxu0 0.0
    %2208 = vmatpush1.xpose.msra.mxu0 0.0
    %2209 = vmatprep.subr.mxu0 0.0
    %2210 = vmatpush1.xpose.msra.mxu0 0.0
    %2211 = vmatprep.subr.mxu0 0.0
    %2212 = vmatpush1.xpose.msra.mxu0 0.0
    %2213 = vmatprep.subr.mxu0 0.0
    %2214 = vmatpush1.xpose.msra.mxu0 0.0
    %2215 = vmatprep.subr.mxu0 0.0
    %2216 = vmatpush1.xpose.msra.mxu0 0.0
    %2217 = vmatprep.subr.mxu0 0.0
    %2218 = vmatpush1.xpose.msra.mxu0 0.0
    %2219 = vmatprep.subr.mxu0 0.0
    %2220 = vmatpush1.xpose.msra.mxu0 0.0
    %2221 = vmatprep.subr.mxu0 0.0
    %2222 = vmatpush1.xpose.msra.mxu0 0.0
    %2223 = vmatprep.subr.mxu0 0.0
    %2224 = vmatpush1.xpose.msra.mxu0 0.0
    %2225 = vmatprep.subr.mxu0 0.0
    %2226 = vmatpush1.xpose.msra.mxu0 0.0
    %2227 = vmatprep.subr.mxu0 0.0
    %2228 = vmatpush1.xpose.msra.mxu0 0.0
    %2229 = vmatprep.subr.mxu0 0.0
    %2230 = vmatpush1.xpose.msra.mxu0 0.0
    %2231 = vmatprep.subr.mxu0 0.0
    %2232 = vmatpush1.xpose.msra.mxu0 0.0
    %2233 = vmatprep.subr.mxu0 0.0
    %2234 = vmatpush1.xpose.msra.mxu0 0.0
    %2235 = vmatprep.subr.mxu0 0.0
    %2236 = vmatpush1.xpose.msra.mxu0 0.0
    %2237 = vmatprep.subr.mxu0 0.0
    %2238 = vmatpush1.xpose.msra.mxu0 0.0
    %2239 = vmatprep.subr.mxu0 0.0
    %2240 = vmatpush1.xpose.msra.mxu0 0.0
    %2241 = vmatprep.subr.mxu0 0.0
    %2242 = vmatpush1.xpose.msra.mxu0 0.0
    %2243 = vmatprep.mubr.f32.mxu0 0.0
    %2244 = vmatmul.mubr.f32.gmra.mrb[0].mxu0 %v2156
    %v2245 = vpop.f32.mrb[0].mxu0
    %v2246 = vadd.f32 0.0, %v2245
    %v2247 = vpop.f32.mrb[0].mxu0
    %2248 = vmatprep.mubr.f32.mxu0 0.0
    %2249 = vmatmul.mubr.f32.gmra.mrb[0].mxu0 %v2159
    %v2250 = vpop.f32.mrb[0].mxu0
    %v2251 = vadd.f32 0.0, %v2250
    %v2252 = vpop.f32.mrb[0].mxu0
    %2253 = vmatprep.mubr.f32.mxu0 0.0
    %2254 = vmatmul.mubr.f32.gmra.mrb[0].mxu0 %v2162
    %v2255 = vpop.f32.mrb[0].mxu0
    %v2256 = vadd.f32 0.0, %v2255
    %v2257 = vpop.f32.mrb[0].mxu0
    %2258 = vmatprep.mubr.f32.mxu0 0.0
    %2259 = vmatmul.mubr.f32.gmra.mrb[0].mxu0 %v2165
    %v2260 = vpop.f32.mrb[0].mxu0
    %v2261 = vadd.f32 0.0, %v2260
    %v2262 = vpop.f32.mrb[0].mxu0
    %2263 = vmatprep.mubr.f32.mxu0 0.0
    %2264 = vmatmul.mubr.f32.gmra.mrb[0].mxu0 %v2168
    %v2265 = vpop.f32.mrb[0].mxu0
    %v2266 = vadd.f32 0.0, %v2265
    %v2267 = vpop.f32.mrb[0].mxu0
    %2268 = vmatprep.mubr.f32.mxu0 0.0
    %2269 = vmatmul.mubr.f32.gmra.mrb[0].mxu0 %v2171
    %v2270 = vpop.f32.mrb[0].mxu0
    %v2271 = vadd.f32 0.0, %v2270
    %v2272 = vpop.f32.mrb[0].mxu0
    %2273 = vmatprep.mubr.f32.mxu0 0.0
    %2274 = vmatmul.mubr.f32.gmra.mrb[0].mxu0 %v2174
    %v2275 = vpop.f32.mrb[0].mxu0
    %v2276 = vadd.f32 0.0, %v2275
    %v2277 = vpop.f32.mrb[0].mxu0
    %2278 = vmatprep.mubr.f32.mxu0 0.0
    %2279 = vmatmul.mubr.f32.gmra.mrb[0].mxu0 %v2177
    %v2280 = vpop.f32.mrb[0].mxu0
    %v2281 = vadd.f32 0.0, %v2280
    %v2282 = vpop.f32.mrb[0].mxu0
    %2283 = vdwg.mxu0
    %v2285 = vsel %vm219, %v155, 0
    %v2288 = vsel %vm219, %v156, 0
    %v2291 = vsel %vm219, %v157, 0
    %v2294 = vsel %vm219, %v158, 0
    %v2297 = vsel %vm219, %v159, 0
    %v2300 = vsel %vm219, %v160, 0
    %v2303 = vsel %vm219, %v161, 0
    %v2306 = vsel %vm219, %v162, 0
    %2308 = vmatprep.subr.mxu0 0.0
    %2309 = vmatpush1.xpose.msra.mxu0 %v2285
    %2310 = vmatprep.subr.mxu0 0.0
    %2311 = vmatpush1.xpose.msra.mxu0 %v2288
    %2312 = vmatprep.subr.mxu0 0.0
    %2313 = vmatpush1.xpose.msra.mxu0 %v2291
    %2314 = vmatprep.subr.mxu0 0.0
    %2315 = vmatpush1.xpose.msra.mxu0 %v2294
    %2316 = vmatprep.subr.mxu0 0.0
    %2317 = vmatpush1.xpose.msra.mxu0 %v2297
    %2318 = vmatprep.subr.mxu0 0.0
    %2319 = vmatpush1.xpose.msra.mxu0 %v2300
    %2320 = vmatprep.subr.mxu0 0.0
    %2321 = vmatpush1.xpose.msra.mxu0 %v2303
    %2322 = vmatprep.subr.mxu0 0.0
    %2323 = vmatpush1.xpose.msra.mxu0 %v2306
    %2324 = vmatprep.subr.mxu0 0.0
    %2325 = vmatpush1.xpose.msra.mxu0 0.0
    %2326 = vmatprep.subr.mxu0 0.0
    %2327 = vmatpush1.xpose.msra.mxu0 0.0
    %2328 = vmatprep.subr.mxu0 0.0
    %2329 = vmatpush1.xpose.msra.mxu0 0.0
    %2330 = vmatprep.subr.mxu0 0.0
    %2331 = vmatpush1.xpose.msra.mxu0 0.0
    %2332 = vmatprep.subr.mxu0 0.0
    %2333 = vmatpush1.xpose.msra.mxu0 0.0
    %2334 = vmatprep.subr.mxu0 0.0
    %2335 = vmatpush1.xpose.msra.mxu0 0.0
    %2336 = vmatprep.subr.mxu0 0.0
    %2337 = vmatpush1.xpose.msra.mxu0 0.0
    %2338 = vmatprep.subr.mxu0 0.0
    %2339 = vmatpush1.xpose.msra.mxu0 0.0
    %2340 = vmatprep.subr.mxu0 0.0
    %2341 = vmatpush1.xpose.msra.mxu0 0.0
    %2342 = vmatprep.subr.mxu0 0.0
    %2343 = vmatpush1.xpose.msra.mxu0 0.0
    %2344 = vmatprep.subr.mxu0 0.0
    %2345 = vmatpush1.xpose.msra.mxu0 0.0
    %2346 = vmatprep.subr.mxu0 0.0
    %2347 = vmatpush1.xpose.msra.mxu0 0.0
    %2348 = vmatprep.subr.mxu0 0.0
    %2349 = vmatpush1.xpose.msra.mxu0 0.0
    %2350 = vmatprep.subr.mxu0 0.0
    %2351 = vmatpush1.xpose.msra.mxu0 0.0
    %2352 = vmatprep.subr.mxu0 0.0
    %2353 = vmatpush1.xpose.msra.mxu0 0.0
    %2354 = vmatprep.subr.mxu0 0.0
    %2355 = vmatpush1.xpose.msra.mxu0 0.0
    %2356 = vmatprep.subr.mxu0 0.0
    %2357 = vmatpush1.xpose.msra.mxu0 0.0
    %2358 = vmatprep.subr.mxu0 0.0
    %2359 = vmatpush1.xpose.msra.mxu0 0.0
    %2360 = vmatprep.subr.mxu0 0.0
    %2361 = vmatpush1.xpose.msra.mxu0 0.0
    %2362 = vmatprep.subr.mxu0 0.0
    %2363 = vmatpush1.xpose.msra.mxu0 0.0
    %2364 = vmatprep.subr.mxu0 0.0
    %2365 = vmatpush1.xpose.msra.mxu0 0.0
    %2366 = vmatprep.subr.mxu0 0.0
    %2367 = vmatpush1.xpose.msra.mxu0 0.0
    %2368 = vmatprep.subr.mxu0 0.0
    %2369 = vmatpush1.xpose.msra.mxu0 0.0
    %2370 = vmatprep.subr.mxu0 0.0
    %2371 = vmatpush1.xpose.msra.mxu0 0.0
    %2372 = vmatprep.mubr.f32.mxu0 0.0
    %2373 = vmatmul.mubr.f32.gmra.mrb[0].mxu0 %v2285
    %v2374 = vpop.f32.mrb[0].mxu0
    %v2375 = vadd.f32 0.0, %v2374
    %v2376 = vpop.f32.mrb[0].mxu0
    %2377 = vmatprep.mubr.f32.mxu0 0.0
    %2378 = vmatmul.mubr.f32.gmra.mrb[0].mxu0 %v2288
    %v2379 = vpop.f32.mrb[0].mxu0
    %v2380 = vadd.f32 0.0, %v2379
    %v2381 = vpop.f32.mrb[0].mxu0
    %2382 = vmatprep.mubr.f32.mxu0 0.0
    %2383 = vmatmul.mubr.f32.gmra.mrb[0].mxu0 %v2291
    %v2384 = vpop.f32.mrb[0].mxu0
    %v2385 = vadd.f32 0.0, %v2384
    %v2386 = vpop.f32.mrb[0].mxu0
    %2387 = vmatprep.mubr.f32.mxu0 0.0
    %2388 = vmatmul.mubr.f32.gmra.mrb[0].mxu0 %v2294
    %v2389 = vpop.f32.mrb[0].mxu0
    %v2390 = vadd.f32 0.0, %v2389
    %v2391 = vpop.f32.mrb[0].mxu0
    %2392 = vmatprep.mubr.f32.mxu0 0.0
    %2393 = vmatmul.mubr.f32.gmra.mrb[0].mxu0 %v2297
    %v2394 = vpop.f32.mrb[0].mxu0
    %v2395 = vadd.f32 0.0, %v2394
    %v2396 = vpop.f32.mrb[0].mxu0
    %2397 = vmatprep.mubr.f32.mxu0 0.0
    %2398 = vmatmul.mubr.f32.gmra.mrb[0].mxu0 %v2300
    %v2399 = vpop.f32.mrb[0].mxu0
    %v2400 = vadd.f32 0.0, %v2399
    %v2401 = vpop.f32.mrb[0].mxu0
    %2402 = vmatprep.mubr.f32.mxu0 0.0
    %2403 = vmatmul.mubr.f32.gmra.mrb[0].mxu0 %v2303
    %v2404 = vpop.f32.mrb[0].mxu0
    %v2405 = vadd.f32 0.0, %v2404
    %v2406 = vpop.f32.mrb[0].mxu0
    %2407 = vmatprep.mubr.f32.mxu0 0.0
    %2408 = vmatmul.mubr.f32.gmra.mrb[0].mxu0 %v2306
    %v2409 = vpop.f32.mrb[0].mxu0
    %v2410 = vadd.f32 0.0, %v2409
    %v2411 = vpop.f32.mrb[0].mxu0
    %2412 = vdwg.mxu0
    %v2414 = vsel %vm219, %v163, 0
    %v2417 = vsel %vm219, %v164, 0
    %v2420 = vsel %vm219, %v165, 0
    %v2423 = vsel %vm219, %v166, 0
    %v2426 = vsel %vm219, %v167, 0
    %v2429 = vsel %vm219, %v168, 0
    %v2432 = vsel %vm219, %v169, 0
    %v2435 = vsel %vm219, %v170, 0
    %2437 = vmatprep.subr.mxu0 0.0
    %2438 = vmatpush1.xpose.msra.mxu0 %v2414
    %2439 = vmatprep.subr.mxu0 0.0
    %2440 = vmatpush1.xpose.msra.mxu0 %v2417
    %2441 = vmatprep.subr.mxu0 0.0
    %2442 = vmatpush1.xpose.msra.mxu0 %v2420
    %2443 = vmatprep.subr.mxu0 0.0
    %2444 = vmatpush1.xpose.msra.mxu0 %v2423
    %2445 = vmatprep.subr.mxu0 0.0
    %2446 = vmatpush1.xpose.msra.mxu0 %v2426
    %2447 = vmatprep.subr.mxu0 0.0
    %2448 = vmatpush1.xpose.msra.mxu0 %v2429
    %2449 = vmatprep.subr.mxu0 0.0
    %2450 = vmatpush1.xpose.msra.mxu0 %v2432
    %2451 = vmatprep.subr.mxu0 0.0
    %2452 = vmatpush1.xpose.msra.mxu0 %v2435
    %2453 = vmatprep.subr.mxu0 0.0
    %2454 = vmatpush1.xpose.msra.mxu0 0.0
    %2455 = vmatprep.subr.mxu0 0.0
    %2456 = vmatpush1.xpose.msra.mxu0 0.0
    %2457 = vmatprep.subr.mxu0 0.0
    %2458 = vmatpush1.xpose.msra.mxu0 0.0
    %2459 = vmatprep.subr.mxu0 0.0
    %2460 = vmatpush1.xpose.msra.mxu0 0.0
    %2461 = vmatprep.subr.mxu0 0.0
    %2462 = vmatpush1.xpose.msra.mxu0 0.0
    %2463 = vmatprep.subr.mxu0 0.0
    %2464 = vmatpush1.xpose.msra.mxu0 0.0
    %2465 = vmatprep.subr.mxu0 0.0
    %2466 = vmatpush1.xpose.msra.mxu0 0.0
    %2467 = vmatprep.subr.mxu0 0.0
    %2468 = vmatpush1.xpose.msra.mxu0 0.0
    %2469 = vmatprep.subr.mxu0 0.0
    %2470 = vmatpush1.xpose.msra.mxu0 0.0
    %2471 = vmatprep.subr.mxu0 0.0
    %2472 = vmatpush1.xpose.msra.mxu0 0.0
    %2473 = vmatprep.subr.mxu0 0.0
    %2474 = vmatpush1.xpose.msra.mxu0 0.0
    %2475 = vmatprep.subr.mxu0 0.0
    %2476 = vmatpush1.xpose.msra.mxu0 0.0
    %2477 = vmatprep.subr.mxu0 0.0
    %2478 = vmatpush1.xpose.msra.mxu0 0.0
    %2479 = vmatprep.subr.mxu0 0.0
    %2480 = vmatpush1.xpose.msra.mxu0 0.0
    %2481 = vmatprep.subr.mxu0 0.0
    %2482 = vmatpush1.xpose.msra.mxu0 0.0
    %2483 = vmatprep.subr.mxu0 0.0
    %2484 = vmatpush1.xpose.msra.mxu0 0.0
    %2485 = vmatprep.subr.mxu0 0.0
    %2486 = vmatpush1.xpose.msra.mxu0 0.0
    %2487 = vmatprep.subr.mxu0 0.0
    %2488 = vmatpush1.xpose.msra.mxu0 0.0
    %2489 = vmatprep.subr.mxu0 0.0
    %2490 = vmatpush1.xpose.msra.mxu0 0.0
    %2491 = vmatprep.subr.mxu0 0.0
    %2492 = vmatpush1.xpose.msra.mxu0 0.0
    %2493 = vmatprep.subr.mxu0 0.0
    %2494 = vmatpush1.xpose.msra.mxu0 0.0
    %2495 = vmatprep.subr.mxu0 0.0
    %2496 = vmatpush1.xpose.msra.mxu0 0.0
    %2497 = vmatprep.subr.mxu0 0.0
    %2498 = vmatpush1.xpose.msra.mxu0 0.0
    %2499 = vmatprep.subr.mxu0 0.0
    %2500 = vmatpush1.xpose.msra.mxu0 0.0
    %2501 = vmatprep.mubr.f32.mxu0 0.0
    %2502 = vmatmul.mubr.f32.gmra.mrb[0].mxu0 %v2414
    %v2503 = vpop.f32.mrb[0].mxu0
    %v2504 = vadd.f32 0.0, %v2503
    %v2505 = vpop.f32.mrb[0].mxu0
    %2506 = vmatprep.mubr.f32.mxu0 0.0
    %2507 = vmatmul.mubr.f32.gmra.mrb[0].mxu0 %v2417
    %v2508 = vpop.f32.mrb[0].mxu0
    %v2509 = vadd.f32 0.0, %v2508
    %v2510 = vpop.f32.mrb[0].mxu0
    %2511 = vmatprep.mubr.f32.mxu0 0.0
    %2512 = vmatmul.mubr.f32.gmra.mrb[0].mxu0 %v2420
    %v2513 = vpop.f32.mrb[0].mxu0
    %v2514 = vadd.f32 0.0, %v2513
    %v2515 = vpop.f32.mrb[0].mxu0
    %2516 = vmatprep.mubr.f32.mxu0 0.0
    %2517 = vmatmul.mubr.f32.gmra.mrb[0].mxu0 %v2423
    %v2518 = vpop.f32.mrb[0].mxu0
    %v2519 = vadd.f32 0.0, %v2518
    %v2520 = vpop.f32.mrb[0].mxu0
    %2521 = vmatprep.mubr.f32.mxu0 0.0
    %2522 = vmatmul.mubr.f32.gmra.mrb[0].mxu0 %v2426
    %v2523 = vpop.f32.mrb[0].mxu0
    %v2524 = vadd.f32 0.0, %v2523
    %v2525 = vpop.f32.mrb[0].mxu0
    %2526 = vmatprep.mubr.f32.mxu0 0.0
    %2527 = vmatmul.mubr.f32.gmra.mrb[0].mxu0 %v2429
    %v2528 = vpop.f32.mrb[0].mxu0
    %v2529 = vadd.f32 0.0, %v2528
    %v2530 = vpop.f32.mrb[0].mxu0
    %2531 = vmatprep.mubr.f32.mxu0 0.0
    %2532 = vmatmul.mubr.f32.gmra.mrb[0].mxu0 %v2432
    %v2533 = vpop.f32.mrb[0].mxu0
    %v2534 = vadd.f32 0.0, %v2533
    %v2535 = vpop.f32.mrb[0].mxu0
    %2536 = vmatprep.mubr.f32.mxu0 0.0
    %2537 = vmatmul.mubr.f32.gmra.mrb[0].mxu0 %v2435
    %v2538 = vpop.f32.mrb[0].mxu0
    %v2539 = vadd.f32 0.0, %v2538
    %v2540 = vpop.f32.mrb[0].mxu0
    %2541 = vdwg.mxu0
    %v2543 = vsel %vm219, %v171, 0
    %v2546 = vsel %vm219, %v172, 0
    %v2549 = vsel %vm219, %v173, 0
    %v2552 = vsel %vm219, %v174, 0
    %v2555 = vsel %vm219, %v175, 0
    %v2558 = vsel %vm219, %v176, 0
    %v2561 = vsel %vm219, %v177, 0
    %v2564 = vsel %vm219, %v178, 0
    %2566 = vmatprep.subr.mxu0 0.0
    %2567 = vmatpush1.xpose.msra.mxu0 %v2543
    %2568 = vmatprep.subr.mxu0 0.0
    %2569 = vmatpush1.xpose.msra.mxu0 %v2546
    %2570 = vmatprep.subr.mxu0 0.0
    %2571 = vmatpush1.xpose.msra.mxu0 %v2549
    %2572 = vmatprep.subr.mxu0 0.0
    %2573 = vmatpush1.xpose.msra.mxu0 %v2552
    %2574 = vmatprep.subr.mxu0 0.0
    %2575 = vmatpush1.xpose.msra.mxu0 %v2555
    %2576 = vmatprep.subr.mxu0 0.0
    %2577 = vmatpush1.xpose.msra.mxu0 %v2558
    %2578 = vmatprep.subr.mxu0 0.0
    %2579 = vmatpush1.xpose.msra.mxu0 %v2561
    %2580 = vmatprep.subr.mxu0 0.0
    %2581 = vmatpush1.xpose.msra.mxu0 %v2564
    %2582 = vmatprep.subr.mxu0 0.0
    %2583 = vmatpush1.xpose.msra.mxu0 0.0
    %2584 = vmatprep.subr.mxu0 0.0
    %2585 = vmatpush1.xpose.msra.mxu0 0.0
    %2586 = vmatprep.subr.mxu0 0.0
    %2587 = vmatpush1.xpose.msra.mxu0 0.0
    %2588 = vmatprep.subr.mxu0 0.0
    %2589 = vmatpush1.xpose.msra.mxu0 0.0
    %2590 = vmatprep.subr.mxu0 0.0
    %2591 = vmatpush1.xpose.msra.mxu0 0.0
    %2592 = vmatprep.subr.mxu0 0.0
    %2593 = vmatpush1.xpose.msra.mxu0 0.0
    %2594 = vmatprep.subr.mxu0 0.0
    %2595 = vmatpush1.xpose.msra.mxu0 0.0
    %2596 = vmatprep.subr.mxu0 0.0
    %2597 = vmatpush1.xpose.msra.mxu0 0.0
    %2598 = vmatprep.subr.mxu0 0.0
    %2599 = vmatpush1.xpose.msra.mxu0 0.0
    %2600 = vmatprep.subr.mxu0 0.0
    %2601 = vmatpush1.xpose.msra.mxu0 0.0
    %2602 = vmatprep.subr.mxu0 0.0
    %2603 = vmatpush1.xpose.msra.mxu0 0.0
    %2604 = vmatprep.subr.mxu0 0.0
    %2605 = vmatpush1.xpose.msra.mxu0 0.0
    %2606 = vmatprep.subr.mxu0 0.0
    %2607 = vmatpush1.xpose.msra.mxu0 0.0
    %2608 = vmatprep.subr.mxu0 0.0
    %2609 = vmatpush1.xpose.msra.mxu0 0.0
    %2610 = vmatprep.subr.mxu0 0.0
    %2611 = vmatpush1.xpose.msra.mxu0 0.0
    %2612 = vmatprep.subr.mxu0 0.0
    %2613 = vmatpush1.xpose.msra.mxu0 0.0
    %2614 = vmatprep.subr.mxu0 0.0
    %2615 = vmatpush1.xpose.msra.mxu0 0.0
    %2616 = vmatprep.subr.mxu0 0.0
    %2617 = vmatpush1.xpose.msra.mxu0 0.0
    %2618 = vmatprep.subr.mxu0 0.0
    %2619 = vmatpush1.xpose.msra.mxu0 0.0
    %2620 = vmatprep.subr.mxu0 0.0
    %2621 = vmatpush1.xpose.msra.mxu0 0.0
    %2622 = vmatprep.subr.mxu0 0.0
    %2623 = vmatpush1.xpose.msra.mxu0 0.0
    %2624 = vmatprep.subr.mxu0 0.0
    %2625 = vmatpush1.xpose.msra.mxu0 0.0
    %2626 = vmatprep.subr.mxu0 0.0
    %2627 = vmatpush1.xpose.msra.mxu0 0.0
    %2628 = vmatprep.subr.mxu0 0.0
    %2629 = vmatpush1.xpose.msra.mxu0 0.0
    %2630 = vmatprep.mubr.f32.mxu0 0.0
    %2631 = vmatmul.mubr.f32.gmra.mrb[0].mxu0 %v2543
    %v2632 = vpop.f32.mrb[0].mxu0
    %v2633 = vadd.f32 0.0, %v2632
    %v2634 = vpop.f32.mrb[0].mxu0
    %2635 = vmatprep.mubr.f32.mxu0 0.0
    %2636 = vmatmul.mubr.f32.gmra.mrb[0].mxu0 %v2546
    %v2637 = vpop.f32.mrb[0].mxu0
    %v2638 = vadd.f32 0.0, %v2637
    %v2639 = vpop.f32.mrb[0].mxu0
    %2640 = vmatprep.mubr.f32.mxu0 0.0
    %2641 = vmatmul.mubr.f32.gmra.mrb[0].mxu0 %v2549
    %v2642 = vpop.f32.mrb[0].mxu0
    %v2643 = vadd.f32 0.0, %v2642
    %v2644 = vpop.f32.mrb[0].mxu0
    %2645 = vmatprep.mubr.f32.mxu0 0.0
    %2646 = vmatmul.mubr.f32.gmra.mrb[0].mxu0 %v2552
    %v2647 = vpop.f32.mrb[0].mxu0
    %v2648 = vadd.f32 0.0, %v2647
    %v2649 = vpop.f32.mrb[0].mxu0
    %2650 = vmatprep.mubr.f32.mxu0 0.0
    %2651 = vmatmul.mubr.f32.gmra.mrb[0].mxu0 %v2555
    %v2652 = vpop.f32.mrb[0].mxu0
    %v2653 = vadd.f32 0.0, %v2652
    %v2654 = vpop.f32.mrb[0].mxu0
    %2655 = vmatprep.mubr.f32.mxu0 0.0
    %2656 = vmatmul.mubr.f32.gmra.mrb[0].mxu0 %v2558
    %v2657 = vpop.f32.mrb[0].mxu0
    %v2658 = vadd.f32 0.0, %v2657
    %v2659 = vpop.f32.mrb[0].mxu0
    %2660 = vmatprep.mubr.f32.mxu0 0.0
    %2661 = vmatmul.mubr.f32.gmra.mrb[0].mxu0 %v2561
    %v2662 = vpop.f32.mrb[0].mxu0
    %v2663 = vadd.f32 0.0, %v2662
    %v2664 = vpop.f32.mrb[0].mxu0
    %2665 = vmatprep.mubr.f32.mxu0 0.0
    %2666 = vmatmul.mubr.f32.gmra.mrb[0].mxu0 %v2564
    %v2667 = vpop.f32.mrb[0].mxu0
    %v2668 = vadd.f32 0.0, %v2667
    %v2669 = vpop.f32.mrb[0].mxu0
    %2670 = vdwg.mxu0
    %v2672 = vsel %vm219, %v179, 0
    %v2675 = vsel %vm219, %v180, 0
    %v2678 = vsel %vm219, %v181, 0
    %v2681 = vsel %vm219, %v182, 0
    %v2684 = vsel %vm219, %v183, 0
    %v2687 = vsel %vm219, %v184, 0
    %v2690 = vsel %vm219, %v185, 0
    %v2693 = vsel %vm219, %v186, 0
    %2695 = vmatprep.subr.mxu0 0.0
    %2696 = vmatpush1.xpose.msra.mxu0 %v2672
    %2697 = vmatprep.subr.mxu0 0.0
    %2698 = vmatpush1.xpose.msra.mxu0 %v2675
    %2699 = vmatprep.subr.mxu0 0.0
    %2700 = vmatpush1.xpose.msra.mxu0 %v2678
    %2701 = vmatprep.subr.mxu0 0.0
    %2702 = vmatpush1.xpose.msra.mxu0 %v2681
    %2703 = vmatprep.subr.mxu0 0.0
    %2704 = vmatpush1.xpose.msra.mxu0 %v2684
    %2705 = vmatprep.subr.mxu0 0.0
    %2706 = vmatpush1.xpose.msra.mxu0 %v2687
    %2707 = vmatprep.subr.mxu0 0.0
    %2708 = vmatpush1.xpose.msra.mxu0 %v2690
    %2709 = vmatprep.subr.mxu0 0.0
    %2710 = vmatpush1.xpose.msra.mxu0 %v2693
    %2711 = vmatprep.subr.mxu0 0.0
    %2712 = vmatpush1.xpose.msra.mxu0 0.0
    %2713 = vmatprep.subr.mxu0 0.0
    %2714 = vmatpush1.xpose.msra.mxu0 0.0
    %2715 = vmatprep.subr.mxu0 0.0
    %2716 = vmatpush1.xpose.msra.mxu0 0.0
    %2717 = vmatprep.subr.mxu0 0.0
    %2718 = vmatpush1.xpose.msra.mxu0 0.0
    %2719 = vmatprep.subr.mxu0 0.0
    %2720 = vmatpush1.xpose.msra.mxu0 0.0
    %2721 = vmatprep.subr.mxu0 0.0
    %2722 = vmatpush1.xpose.msra.mxu0 0.0
    %2723 = vmatprep.subr.mxu0 0.0
    %2724 = vmatpush1.xpose.msra.mxu0 0.0
    %2725 = vmatprep.subr.mxu0 0.0
    %2726 = vmatpush1.xpose.msra.mxu0 0.0
    %2727 = vmatprep.subr.mxu0 0.0
    %2728 = vmatpush1.xpose.msra.mxu0 0.0
    %2729 = vmatprep.subr.mxu0 0.0
    %2730 = vmatpush1.xpose.msra.mxu0 0.0
    %2731 = vmatprep.subr.mxu0 0.0
    %2732 = vmatpush1.xpose.msra.mxu0 0.0
    %2733 = vmatprep.subr.mxu0 0.0
    %2734 = vmatpush1.xpose.msra.mxu0 0.0
    %2735 = vmatprep.subr.mxu0 0.0
    %2736 = vmatpush1.xpose.msra.mxu0 0.0
    %2737 = vmatprep.subr.mxu0 0.0
    %2738 = vmatpush1.xpose.msra.mxu0 0.0
    %2739 = vmatprep.subr.mxu0 0.0
    %2740 = vmatpush1.xpose.msra.mxu0 0.0
    %2741 = vmatprep.subr.mxu0 0.0
    %2742 = vmatpush1.xpose.msra.mxu0 0.0
    %2743 = vmatprep.subr.mxu0 0.0
    %2744 = vmatpush1.xpose.msra.mxu0 0.0
    %2745 = vmatprep.subr.mxu0 0.0
    %2746 = vmatpush1.xpose.msra.mxu0 0.0
    %2747 = vmatprep.subr.mxu0 0.0
    %2748 = vmatpush1.xpose.msra.mxu0 0.0
    %2749 = vmatprep.subr.mxu0 0.0
    %2750 = vmatpush1.xpose.msra.mxu0 0.0
    %2751 = vmatprep.subr.mxu0 0.0
    %2752 = vmatpush1.xpose.msra.mxu0 0.0
    %2753 = vmatprep.subr.mxu0 0.0
    %2754 = vmatpush1.xpose.msra.mxu0 0.0
    %2755 = vmatprep.subr.mxu0 0.0
    %2756 = vmatpush1.xpose.msra.mxu0 0.0
    %2757 = vmatprep.subr.mxu0 0.0
    %2758 = vmatpush1.xpose.msra.mxu0 0.0
    %2759 = vmatprep.mubr.f32.mxu0 0.0
    %2760 = vmatmul.mubr.f32.gmra.mrb[0].mxu0 %v2672
    %v2761 = vpop.f32.mrb[0].mxu0
    %v2762 = vadd.f32 0.0, %v2761
    %v2763 = vpop.f32.mrb[0].mxu0
    %2764 = vmatprep.mubr.f32.mxu0 0.0
    %2765 = vmatmul.mubr.f32.gmra.mrb[0].mxu0 %v2675
    %v2766 = vpop.f32.mrb[0].mxu0
    %v2767 = vadd.f32 0.0, %v2766
    %v2768 = vpop.f32.mrb[0].mxu0
    %2769 = vmatprep.mubr.f32.mxu0 0.0
    %2770 = vmatmul.mubr.f32.gmra.mrb[0].mxu0 %v2678
    %v2771 = vpop.f32.mrb[0].mxu0
    %v2772 = vadd.f32 0.0, %v2771
    %v2773 = vpop.f32.mrb[0].mxu0
    %2774 = vmatprep.mubr.f32.mxu0 0.0
    %2775 = vmatmul.mubr.f32.gmra.mrb[0].mxu0 %v2681
    %v2776 = vpop.f32.mrb[0].mxu0
    %v2777 = vadd.f32 0.0, %v2776
    %v2778 = vpop.f32.mrb[0].mxu0
    %2779 = vmatprep.mubr.f32.mxu0 0.0
    %2780 = vmatmul.mubr.f32.gmra.mrb[0].mxu0 %v2684
    %v2781 = vpop.f32.mrb[0].mxu0
    %v2782 = vadd.f32 0.0, %v2781
    %v2783 = vpop.f32.mrb[0].mxu0
    %2784 = vmatprep.mubr.f32.mxu0 0.0
    %2785 = vmatmul.mubr.f32.gmra.mrb[0].mxu0 %v2687
    %v2786 = vpop.f32.mrb[0].mxu0
    %v2787 = vadd.f32 0.0, %v2786
    %v2788 = vpop.f32.mrb[0].mxu0
    %2789 = vmatprep.mubr.f32.mxu0 0.0
    %2790 = vmatmul.mubr.f32.gmra.mrb[0].mxu0 %v2690
    %v2791 = vpop.f32.mrb[0].mxu0
    %v2792 = vadd.f32 0.0, %v2791
    %v2793 = vpop.f32.mrb[0].mxu0
    %2794 = vmatprep.mubr.f32.mxu0 0.0
    %2795 = vmatmul.mubr.f32.gmra.mrb[0].mxu0 %v2693
    %v2796 = vpop.f32.mrb[0].mxu0
    %v2797 = vadd.f32 0.0, %v2796
    %v2798 = vpop.f32.mrb[0].mxu0
    %2799 = vdwg.mxu0
    %v2801 = vsel %vm219, %v187, 0
    %v2804 = vsel %vm219, %v188, 0
    %v2807 = vsel %vm219, %v189, 0
    %v2810 = vsel %vm219, %v190, 0
    %v2813 = vsel %vm219, %v191, 0
    %v2816 = vsel %vm219, %v192, 0
    %v2819 = vsel %vm219, %v193, 0
    %v2822 = vsel %vm219, %v194, 0
    %2824 = vmatprep.subr.mxu0 0.0
    %2825 = vmatpush1.xpose.msra.mxu0 %v2801
    %2826 = vmatprep.subr.mxu0 0.0
    %2827 = vmatpush1.xpose.msra.mxu0 %v2804
    %2828 = vmatprep.subr.mxu0 0.0
    %2829 = vmatpush1.xpose.msra.mxu0 %v2807
    %2830 = vmatprep.subr.mxu0 0.0
    %2831 = vmatpush1.xpose.msra.mxu0 %v2810
    %2832 = vmatprep.subr.mxu0 0.0
    %2833 = vmatpush1.xpose.msra.mxu0 %v2813
    %2834 = vmatprep.subr.mxu0 0.0
    %2835 = vmatpush1.xpose.msra.mxu0 %v2816
    %2836 = vmatprep.subr.mxu0 0.0
    %2837 = vmatpush1.xpose.msra.mxu0 %v2819
    %2838 = vmatprep.subr.mxu0 0.0
    %2839 = vmatpush1.xpose.msra.mxu0 %v2822
    %2840 = vmatprep.subr.mxu0 0.0
    %2841 = vmatpush1.xpose.msra.mxu0 0.0
    %2842 = vmatprep.subr.mxu0 0.0
    %2843 = vmatpush1.xpose.msra.mxu0 0.0
    %2844 = vmatprep.subr.mxu0 0.0
    %2845 = vmatpush1.xpose.msra.mxu0 0.0
    %2846 = vmatprep.subr.mxu0 0.0
    %2847 = vmatpush1.xpose.msra.mxu0 0.0
    %2848 = vmatprep.subr.mxu0 0.0
    %2849 = vmatpush1.xpose.msra.mxu0 0.0
    %2850 = vmatprep.subr.mxu0 0.0
    %2851 = vmatpush1.xpose.msra.mxu0 0.0
    %2852 = vmatprep.subr.mxu0 0.0
    %2853 = vmatpush1.xpose.msra.mxu0 0.0
    %2854 = vmatprep.subr.mxu0 0.0
    %2855 = vmatpush1.xpose.msra.mxu0 0.0
    %2856 = vmatprep.subr.mxu0 0.0
    %2857 = vmatpush1.xpose.msra.mxu0 0.0
    %2858 = vmatprep.subr.mxu0 0.0
    %2859 = vmatpush1.xpose.msra.mxu0 0.0
    %2860 = vmatprep.subr.mxu0 0.0
    %2861 = vmatpush1.xpose.msra.mxu0 0.0
    %2862 = vmatprep.subr.mxu0 0.0
    %2863 = vmatpush1.xpose.msra.mxu0 0.0
    %2864 = vmatprep.subr.mxu0 0.0
    %2865 = vmatpush1.xpose.msra.mxu0 0.0
    %2866 = vmatprep.subr.mxu0 0.0
    %2867 = vmatpush1.xpose.msra.mxu0 0.0
    %2868 = vmatprep.subr.mxu0 0.0
    %2869 = vmatpush1.xpose.msra.mxu0 0.0
    %2870 = vmatprep.subr.mxu0 0.0
    %2871 = vmatpush1.xpose.msra.mxu0 0.0
    %2872 = vmatprep.subr.mxu0 0.0
    %2873 = vmatpush1.xpose.msra.mxu0 0.0
    %2874 = vmatprep.subr.mxu0 0.0
    %2875 = vmatpush1.xpose.msra.mxu0 0.0
    %2876 = vmatprep.subr.mxu0 0.0
    %2877 = vmatpush1.xpose.msra.mxu0 0.0
    %2878 = vmatprep.subr.mxu0 0.0
    %2879 = vmatpush1.xpose.msra.mxu0 0.0
    %2880 = vmatprep.subr.mxu0 0.0
    %2881 = vmatpush1.xpose.msra.mxu0 0.0
    %2882 = vmatprep.subr.mxu0 0.0
    %2883 = vmatpush1.xpose.msra.mxu0 0.0
    %2884 = vmatprep.subr.mxu0 0.0
    %2885 = vmatpush1.xpose.msra.mxu0 0.0
    %2886 = vmatprep.subr.mxu0 0.0
    %2887 = vmatpush1.xpose.msra.mxu0 0.0
    %2888 = vmatprep.mubr.f32.mxu0 0.0
    %2889 = vmatmul.mubr.f32.gmra.mrb[0].mxu0 %v2801
    %v2890 = vpop.f32.mrb[0].mxu0
    %v2891 = vadd.f32 0.0, %v2890
    %v2892 = vpop.f32.mrb[0].mxu0
    %2893 = vmatprep.mubr.f32.mxu0 0.0
    %2894 = vmatmul.mubr.f32.gmra.mrb[0].mxu0 %v2804
    %v2895 = vpop.f32.mrb[0].mxu0
    %v2896 = vadd.f32 0.0, %v2895
    %v2897 = vpop.f32.mrb[0].mxu0
    %2898 = vmatprep.mubr.f32.mxu0 0.0
    %2899 = vmatmul.mubr.f32.gmra.mrb[0].mxu0 %v2807
    %v2900 = vpop.f32.mrb[0].mxu0
    %v2901 = vadd.f32 0.0, %v2900
    %v2902 = vpop.f32.mrb[0].mxu0
    %2903 = vmatprep.mubr.f32.mxu0 0.0
    %2904 = vmatmul.mubr.f32.gmra.mrb[0].mxu0 %v2810
    %v2905 = vpop.f32.mrb[0].mxu0
    %v2906 = vadd.f32 0.0, %v2905
    %v2907 = vpop.f32.mrb[0].mxu0
    %2908 = vmatprep.mubr.f32.mxu0 0.0
    %2909 = vmatmul.mubr.f32.gmra.mrb[0].mxu0 %v2813
    %v2910 = vpop.f32.mrb[0].mxu0
    %v2911 = vadd.f32 0.0, %v2910
    %v2912 = vpop.f32.mrb[0].mxu0
    %2913 = vmatprep.mubr.f32.mxu0 0.0
    %2914 = vmatmul.mubr.f32.gmra.mrb[0].mxu0 %v2816
    %v2915 = vpop.f32.mrb[0].mxu0
    %v2916 = vadd.f32 0.0, %v2915
    %v2917 = vpop.f32.mrb[0].mxu0
    %2918 = vmatprep.mubr.f32.mxu0 0.0
    %2919 = vmatmul.mubr.f32.gmra.mrb[0].mxu0 %v2819
    %v2920 = vpop.f32.mrb[0].mxu0
    %v2921 = vadd.f32 0.0, %v2920
    %v2922 = vpop.f32.mrb[0].mxu0
    %2923 = vmatprep.mubr.f32.mxu0 0.0
    %2924 = vmatmul.mubr.f32.gmra.mrb[0].mxu0 %v2822
    %v2925 = vpop.f32.mrb[0].mxu0
    %v2926 = vadd.f32 0.0, %v2925
    %v2927 = vpop.f32.mrb[0].mxu0
    %2928 = vdwg.mxu0
    %v2930 = vsel %vm219, %v195, 0
    %v2933 = vsel %vm219, %v196, 0
    %v2936 = vsel %vm219, %v197, 0
    %v2939 = vsel %vm219, %v198, 0
    %v2942 = vsel %vm219, %v199, 0
    %v2945 = vsel %vm219, %v200, 0
    %v2948 = vsel %vm219, %v201, 0
    %v2951 = vsel %vm219, %v202, 0
    %2953 = vmatprep.subr.mxu0 0.0
    %2954 = vmatpush1.xpose.msra.mxu0 %v2930
    %2955 = vmatprep.subr.mxu0 0.0
    %2956 = vmatpush1.xpose.msra.mxu0 %v2933
    %2957 = vmatprep.subr.mxu0 0.0
    %2958 = vmatpush1.xpose.msra.mxu0 %v2936
    %2959 = vmatprep.subr.mxu0 0.0
    %2960 = vmatpush1.xpose.msra.mxu0 %v2939
    %2961 = vmatprep.subr.mxu0 0.0
    %2962 = vmatpush1.xpose.msra.mxu0 %v2942
    %2963 = vmatprep.subr.mxu0 0.0
    %2964 = vmatpush1.xpose.msra.mxu0 %v2945
    %2965 = vmatprep.subr.mxu0 0.0
    %2966 = vmatpush1.xpose.msra.mxu0 %v2948
    %2967 = vmatprep.subr.mxu0 0.0
    %2968 = vmatpush1.xpose.msra.mxu0 %v2951
    %2969 = vmatprep.subr.mxu0 0.0
    %2970 = vmatpush1.xpose.msra.mxu0 0.0
    %2971 = vmatprep.subr.mxu0 0.0
    %2972 = vmatpush1.xpose.msra.mxu0 0.0
    %2973 = vmatprep.subr.mxu0 0.0
    %2974 = vmatpush1.xpose.msra.mxu0 0.0
    %2975 = vmatprep.subr.mxu0 0.0
    %2976 = vmatpush1.xpose.msra.mxu0 0.0
    %2977 = vmatprep.subr.mxu0 0.0
    %2978 = vmatpush1.xpose.msra.mxu0 0.0
    %2979 = vmatprep.subr.mxu0 0.0
    %2980 = vmatpush1.xpose.msra.mxu0 0.0
    %2981 = vmatprep.subr.mxu0 0.0
    %2982 = vmatpush1.xpose.msra.mxu0 0.0
    %2983 = vmatprep.subr.mxu0 0.0
    %2984 = vmatpush1.xpose.msra.mxu0 0.0
    %2985 = vmatprep.subr.mxu0 0.0
    %2986 = vmatpush1.xpose.msra.mxu0 0.0
    %2987 = vmatprep.subr.mxu0 0.0
    %2988 = vmatpush1.xpose.msra.mxu0 0.0
    %2989 = vmatprep.subr.mxu0 0.0
    %2990 = vmatpush1.xpose.msra.mxu0 0.0
    %2991 = vmatprep.subr.mxu0 0.0
    %2992 = vmatpush1.xpose.msra.mxu0 0.0
    %2993 = vmatprep.subr.mxu0 0.0
    %2994 = vmatpush1.xpose.msra.mxu0 0.0
    %2995 = vmatprep.subr.mxu0 0.0
    %2996 = vmatpush1.xpose.msra.mxu0 0.0
    %2997 = vmatprep.subr.mxu0 0.0
    %2998 = vmatpush1.xpose.msra.mxu0 0.0
    %2999 = vmatprep.subr.mxu0 0.0
    %3000 = vmatpush1.xpose.msra.mxu0 0.0
    %3001 = vmatprep.subr.mxu0 0.0
    %3002 = vmatpush1.xpose.msra.mxu0 0.0
    %3003 = vmatprep.subr.mxu0 0.0
    %3004 = vmatpush1.xpose.msra.mxu0 0.0
    %3005 = vmatprep.subr.mxu0 0.0
    %3006 = vmatpush1.xpose.msra.mxu0 0.0
    %3007 = vmatprep.subr.mxu0 0.0
    %3008 = vmatpush1.xpose.msra.mxu0 0.0
    %3009 = vmatprep.subr.mxu0 0.0
    %3010 = vmatpush1.xpose.msra.mxu0 0.0
    %3011 = vmatprep.subr.mxu0 0.0
    %3012 = vmatpush1.xpose.msra.mxu0 0.0
    %3013 = vmatprep.subr.mxu0 0.0
    %3014 = vmatpush1.xpose.msra.mxu0 0.0
    %3015 = vmatprep.subr.mxu0 0.0
    %3016 = vmatpush1.xpose.msra.mxu0 0.0
    %3017 = vmatprep.mubr.f32.mxu0 0.0
    %3018 = vmatmul.mubr.f32.gmra.mrb[0].mxu0 %v2930
    %v3019 = vpop.f32.mrb[0].mxu0
    %v3020 = vadd.f32 0.0, %v3019
    %v3021 = vpop.f32.mrb[0].mxu0
    %3022 = vmatprep.mubr.f32.mxu0 0.0
    %3023 = vmatmul.mubr.f32.gmra.mrb[0].mxu0 %v2933
    %v3024 = vpop.f32.mrb[0].mxu0
    %v3025 = vadd.f32 0.0, %v3024
    %v3026 = vpop.f32.mrb[0].mxu0
    %3027 = vmatprep.mubr.f32.mxu0 0.0
    %3028 = vmatmul.mubr.f32.gmra.mrb[0].mxu0 %v2936
    %v3029 = vpop.f32.mrb[0].mxu0
    %v3030 = vadd.f32 0.0, %v3029
    %v3031 = vpop.f32.mrb[0].mxu0
    %3032 = vmatprep.mubr.f32.mxu0 0.0
    %3033 = vmatmul.mubr.f32.gmra.mrb[0].mxu0 %v2939
    %v3034 = vpop.f32.mrb[0].mxu0
    %v3035 = vadd.f32 0.0, %v3034
    %v3036 = vpop.f32.mrb[0].mxu0
    %3037 = vmatprep.mubr.f32.mxu0 0.0
    %3038 = vmatmul.mubr.f32.gmra.mrb[0].mxu0 %v2942
    %v3039 = vpop.f32.mrb[0].mxu0
    %v3040 = vadd.f32 0.0, %v3039
    %v3041 = vpop.f32.mrb[0].mxu0
    %3042 = vmatprep.mubr.f32.mxu0 0.0
    %3043 = vmatmul.mubr.f32.gmra.mrb[0].mxu0 %v2945
    %v3044 = vpop.f32.mrb[0].mxu0
    %v3045 = vadd.f32 0.0, %v3044
    %v3046 = vpop.f32.mrb[0].mxu0
    %3047 = vmatprep.mubr.f32.mxu0 0.0
    %3048 = vmatmul.mubr.f32.gmra.mrb[0].mxu0 %v2948
    %v3049 = vpop.f32.mrb[0].mxu0
    %v3050 = vadd.f32 0.0, %v3049
    %v3051 = vpop.f32.mrb[0].mxu0
    %3052 = vmatprep.mubr.f32.mxu0 0.0
    %3053 = vmatmul.mubr.f32.gmra.mrb[0].mxu0 %v2951
    %v3054 = vpop.f32.mrb[0].mxu0
    %v3055 = vadd.f32 0.0, %v3054
    %v3056 = vpop.f32.mrb[0].mxu0
    %3057 = vdwg.mxu0
    %v3059 = vsel %vm219, %v203, 0
    %v3062 = vsel %vm219, %v204, 0
    %v3065 = vsel %vm219, %v205, 0
    %v3068 = vsel %vm219, %v206, 0
    %v3071 = vsel %vm219, %v207, 0
    %v3074 = vsel %vm219, %v208, 0
    %v3077 = vsel %vm219, %v209, 0
    %v3080 = vsel %vm219, %v210, 0
    %3082 = vmatprep.subr.mxu0 0.0
    %3083 = vmatpush1.xpose.msra.mxu0 %v3059
    %3084 = vmatprep.subr.mxu0 0.0
    %3085 = vmatpush1.xpose.msra.mxu0 %v3062
    %3086 = vmatprep.subr.mxu0 0.0
    %3087 = vmatpush1.xpose.msra.mxu0 %v3065
    %3088 = vmatprep.subr.mxu0 0.0
    %3089 = vmatpush1.xpose.msra.mxu0 %v3068
    %3090 = vmatprep.subr.mxu0 0.0
    %3091 = vmatpush1.xpose.msra.mxu0 %v3071
    %3092 = vmatprep.subr.mxu0 0.0
    %3093 = vmatpush1.xpose.msra.mxu0 %v3074
    %3094 = vmatprep.subr.mxu0 0.0
    %3095 = vmatpush1.xpose.msra.mxu0 %v3077
    %3096 = vmatprep.subr.mxu0 0.0
    %3097 = vmatpush1.xpose.msra.mxu0 %v3080
    %3098 = vmatprep.subr.mxu0 0.0
    %3099 = vmatpush1.xpose.msra.mxu0 0.0
    %3100 = vmatprep.subr.mxu0 0.0
    %3101 = vmatpush1.xpose.msra.mxu0 0.0
    %3102 = vmatprep.subr.mxu0 0.0
    %3103 = vmatpush1.xpose.msra.mxu0 0.0
    %3104 = vmatprep.subr.mxu0 0.0
    %3105 = vmatpush1.xpose.msra.mxu0 0.0
    %3106 = vmatprep.subr.mxu0 0.0
    %3107 = vmatpush1.xpose.msra.mxu0 0.0
    %3108 = vmatprep.subr.mxu0 0.0
    %3109 = vmatpush1.xpose.msra.mxu0 0.0
    %3110 = vmatprep.subr.mxu0 0.0
    %3111 = vmatpush1.xpose.msra.mxu0 0.0
    %3112 = vmatprep.subr.mxu0 0.0
    %3113 = vmatpush1.xpose.msra.mxu0 0.0
    %3114 = vmatprep.subr.mxu0 0.0
    %3115 = vmatpush1.xpose.msra.mxu0 0.0
    %3116 = vmatprep.subr.mxu0 0.0
    %3117 = vmatpush1.xpose.msra.mxu0 0.0
    %3118 = vmatprep.subr.mxu0 0.0
    %3119 = vmatpush1.xpose.msra.mxu0 0.0
    %3120 = vmatprep.subr.mxu0 0.0
    %3121 = vmatpush1.xpose.msra.mxu0 0.0
    %3122 = vmatprep.subr.mxu0 0.0
    %3123 = vmatpush1.xpose.msra.mxu0 0.0
    %3124 = vmatprep.subr.mxu0 0.0
    %3125 = vmatpush1.xpose.msra.mxu0 0.0
    %3126 = vmatprep.subr.mxu0 0.0
    %3127 = vmatpush1.xpose.msra.mxu0 0.0
    %3128 = vmatprep.subr.mxu0 0.0
    %3129 = vmatpush1.xpose.msra.mxu0 0.0
    %3130 = vmatprep.subr.mxu0 0.0
    %3131 = vmatpush1.xpose.msra.mxu0 0.0
    %3132 = vmatprep.subr.mxu0 0.0
    %3133 = vmatpush1.xpose.msra.mxu0 0.0
    %3134 = vmatprep.subr.mxu0 0.0
    %3135 = vmatpush1.xpose.msra.mxu0 0.0
    %3136 = vmatprep.subr.mxu0 0.0
    %3137 = vmatpush1.xpose.msra.mxu0 0.0
    %3138 = vmatprep.subr.mxu0 0.0
    %3139 = vmatpush1.xpose.msra.mxu0 0.0
    %3140 = vmatprep.subr.mxu0 0.0
    %3141 = vmatpush1.xpose.msra.mxu0 0.0
    %3142 = vmatprep.subr.mxu0 0.0
    %3143 = vmatpush1.xpose.msra.mxu0 0.0
    %3144 = vmatprep.subr.mxu0 0.0
    %3145 = vmatpush1.xpose.msra.mxu0 0.0
    %3146 = vmatprep.mubr.f32.mxu0 0.0
    %3147 = vmatmul.mubr.f32.gmra.mrb[0].mxu0 %v3059
    %v3148 = vpop.f32.mrb[0].mxu0
    %v3149 = vadd.f32 0.0, %v3148
    %v3150 = vpop.f32.mrb[0].mxu0
    %3151 = vmatprep.mubr.f32.mxu0 0.0
    %3152 = vmatmul.mubr.f32.gmra.mrb[0].mxu0 %v3062
    %v3153 = vpop.f32.mrb[0].mxu0
    %v3154 = vadd.f32 0.0, %v3153
    %v3155 = vpop.f32.mrb[0].mxu0
    %3156 = vmatprep.mubr.f32.mxu0 0.0
    %3157 = vmatmul.mubr.f32.gmra.mrb[0].mxu0 %v3065
    %v3158 = vpop.f32.mrb[0].mxu0
    %v3159 = vadd.f32 0.0, %v3158
    %v3160 = vpop.f32.mrb[0].mxu0
    %3161 = vmatprep.mubr.f32.mxu0 0.0
    %3162 = vmatmul.mubr.f32.gmra.mrb[0].mxu0 %v3068
    %v3163 = vpop.f32.mrb[0].mxu0
    %v3164 = vadd.f32 0.0, %v3163
    %v3165 = vpop.f32.mrb[0].mxu0
    %3166 = vmatprep.mubr.f32.mxu0 0.0
    %3167 = vmatmul.mubr.f32.gmra.mrb[0].mxu0 %v3071
    %v3168 = vpop.f32.mrb[0].mxu0
    %v3169 = vadd.f32 0.0, %v3168
    %v3170 = vpop.f32.mrb[0].mxu0
    %3171 = vmatprep.mubr.f32.mxu0 0.0
    %3172 = vmatmul.mubr.f32.gmra.mrb[0].mxu0 %v3074
    %v3173 = vpop.f32.mrb[0].mxu0
    %v3174 = vadd.f32 0.0, %v3173
    %v3175 = vpop.f32.mrb[0].mxu0
    %3176 = vmatprep.mubr.f32.mxu0 0.0
    %3177 = vmatmul.mubr.f32.gmra.mrb[0].mxu0 %v3077
    %v3178 = vpop.f32.mrb[0].mxu0
    %v3179 = vadd.f32 0.0, %v3178
    %v3180 = vpop.f32.mrb[0].mxu0
    %3181 = vmatprep.mubr.f32.mxu0 0.0
    %3182 = vmatmul.mubr.f32.gmra.mrb[0].mxu0 %v3080
    %v3183 = vpop.f32.mrb[0].mxu0
    %v3184 = vadd.f32 0.0, %v3183
    %v3185 = vpop.f32.mrb[0].mxu0
    %3186 = vdwg.mxu0
    %v3188 = vsel %vm219, %v211, 0
    %v3191 = vsel %vm219, %v212, 0
    %v3194 = vsel %vm219, %v213, 0
    %v3197 = vsel %vm219, %v214, 0
    %v3200 = vsel %vm219, %v215, 0
    %v3203 = vsel %vm219, %v216, 0
    %v3206 = vsel %vm219, %v217, 0
    %v3209 = vsel %vm219, %v218, 0
    %3211 = vmatprep.subr.mxu0 0.0
    %3212 = vmatpush1.xpose.msra.mxu0 %v3188
    %3213 = vmatprep.subr.mxu0 0.0
    %3214 = vmatpush1.xpose.msra.mxu0 %v3191
    %3215 = vmatprep.subr.mxu0 0.0
    %3216 = vmatpush1.xpose.msra.mxu0 %v3194
    %3217 = vmatprep.subr.mxu0 0.0
    %3218 = vmatpush1.xpose.msra.mxu0 %v3197
    %3219 = vmatprep.subr.mxu0 0.0
    %3220 = vmatpush1.xpose.msra.mxu0 %v3200
    %3221 = vmatprep.subr.mxu0 0.0
    %3222 = vmatpush1.xpose.msra.mxu0 %v3203
    %3223 = vmatprep.subr.mxu0 0.0
    %3224 = vmatpush1.xpose.msra.mxu0 %v3206
    %3225 = vmatprep.subr.mxu0 0.0
    %3226 = vmatpush1.xpose.msra.mxu0 %v3209
    %3227 = vmatprep.subr.mxu0 0.0
    %3228 = vmatpush1.xpose.msra.mxu0 0.0
    %3229 = vmatprep.subr.mxu0 0.0
    %3230 = vmatpush1.xpose.msra.mxu0 0.0
    %3231 = vmatprep.subr.mxu0 0.0
    %3232 = vmatpush1.xpose.msra.mxu0 0.0
    %3233 = vmatprep.subr.mxu0 0.0
    %3234 = vmatpush1.xpose.msra.mxu0 0.0
    %3235 = vmatprep.subr.mxu0 0.0
    %3236 = vmatpush1.xpose.msra.mxu0 0.0
    %3237 = vmatprep.subr.mxu0 0.0
    %3238 = vmatpush1.xpose.msra.mxu0 0.0
    %3239 = vmatprep.subr.mxu0 0.0
    %3240 = vmatpush1.xpose.msra.mxu0 0.0
    %3241 = vmatprep.subr.mxu0 0.0
    %3242 = vmatpush1.xpose.msra.mxu0 0.0
    %3243 = vmatprep.subr.mxu0 0.0
    %3244 = vmatpush1.xpose.msra.mxu0 0.0
    %3245 = vmatprep.subr.mxu0 0.0
    %3246 = vmatpush1.xpose.msra.mxu0 0.0
    %3247 = vmatprep.subr.mxu0 0.0
    %3248 = vmatpush1.xpose.msra.mxu0 0.0
    %3249 = vmatprep.subr.mxu0 0.0
    %3250 = vmatpush1.xpose.msra.mxu0 0.0
    %3251 = vmatprep.subr.mxu0 0.0
    %3252 = vmatpush1.xpose.msra.mxu0 0.0
    %3253 = vmatprep.subr.mxu0 0.0
    %3254 = vmatpush1.xpose.msra.mxu0 0.0
    %3255 = vmatprep.subr.mxu0 0.0
    %3256 = vmatpush1.xpose.msra.mxu0 0.0
    %3257 = vmatprep.subr.mxu0 0.0
    %3258 = vmatpush1.xpose.msra.mxu0 0.0
    %3259 = vmatprep.subr.mxu0 0.0
    %3260 = vmatpush1.xpose.msra.mxu0 0.0
    %3261 = vmatprep.subr.mxu0 0.0
    %3262 = vmatpush1.xpose.msra.mxu0 0.0
    %3263 = vmatprep.subr.mxu0 0.0
    %3264 = vmatpush1.xpose.msra.mxu0 0.0
    %3265 = vmatprep.subr.mxu0 0.0
    %3266 = vmatpush1.xpose.msra.mxu0 0.0
    %3267 = vmatprep.subr.mxu0 0.0
    %3268 = vmatpush1.xpose.msra.mxu0 0.0
    %3269 = vmatprep.subr.mxu0 0.0
    %3270 = vmatpush1.xpose.msra.mxu0 0.0
    %3271 = vmatprep.subr.mxu0 0.0
    %3272 = vmatpush1.xpose.msra.mxu0 0.0
    %3273 = vmatprep.subr.mxu0 0.0
    %3274 = vmatpush1.xpose.msra.mxu0 0.0
    %3275 = vmatprep.mubr.f32.mxu0 0.0
    %3276 = vmatmul.mubr.f32.gmra.mrb[0].mxu0 %v3188
    %v3277 = vpop.f32.mrb[0].mxu0
    %v3278 = vadd.f32 0.0, %v3277
    %v3279 = vpop.f32.mrb[0].mxu0
    %3280 = vmatprep.mubr.f32.mxu0 0.0
    %3281 = vmatmul.mubr.f32.gmra.mrb[0].mxu0 %v3191
    %v3282 = vpop.f32.mrb[0].mxu0
    %v3283 = vadd.f32 0.0, %v3282
    %v3284 = vpop.f32.mrb[0].mxu0
    %3285 = vmatprep.mubr.f32.mxu0 0.0
    %3286 = vmatmul.mubr.f32.gmra.mrb[0].mxu0 %v3194
    %v3287 = vpop.f32.mrb[0].mxu0
    %v3288 = vadd.f32 0.0, %v3287
    %v3289 = vpop.f32.mrb[0].mxu0
    %3290 = vmatprep.mubr.f32.mxu0 0.0
    %3291 = vmatmul.mubr.f32.gmra.mrb[0].mxu0 %v3197
    %v3292 = vpop.f32.mrb[0].mxu0
    %v3293 = vadd.f32 0.0, %v3292
    %v3294 = vpop.f32.mrb[0].mxu0
    %3295 = vmatprep.mubr.f32.mxu0 0.0
    %3296 = vmatmul.mubr.f32.gmra.mrb[0].mxu0 %v3200
    %v3297 = vpop.f32.mrb[0].mxu0
    %v3298 = vadd.f32 0.0, %v3297
    %v3299 = vpop.f32.mrb[0].mxu0
    %3300 = vmatprep.mubr.f32.mxu0 0.0
    %3301 = vmatmul.mubr.f32.gmra.mrb[0].mxu0 %v3203
    %v3302 = vpop.f32.mrb[0].mxu0
    %v3303 = vadd.f32 0.0, %v3302
    %v3304 = vpop.f32.mrb[0].mxu0
    %3305 = vmatprep.mubr.f32.mxu0 0.0
    %3306 = vmatmul.mubr.f32.gmra.mrb[0].mxu0 %v3206
    %v3307 = vpop.f32.mrb[0].mxu0
    %v3308 = vadd.f32 0.0, %v3307
    %v3309 = vpop.f32.mrb[0].mxu0
    %3310 = vmatprep.mubr.f32.mxu0 0.0
    %3311 = vmatmul.mubr.f32.gmra.mrb[0].mxu0 %v3209
    %v3312 = vpop.f32.mrb[0].mxu0
    %v3313 = vadd.f32 0.0, %v3312
    %v3314 = vpop.f32.mrb[0].mxu0
    %3315 = vdwg.mxu0
    %v3316 = vmul.f32 %v311, 0.20412415
    %v3317 = vmul.f32 %v316, 0.20412415
    %v3318 = vmul.f32 %v321, 0.20412415
    %v3319 = vmul.f32 %v326, 0.20412415
    %v3320 = vmul.f32 %v331, 0.20412415
    %v3321 = vmul.f32 %v336, 0.20412415
    %v3322 = vmul.f32 %v341, 0.20412415
    %v3323 = vmul.f32 %v346, 0.20412415
    %v3324 = vmul.f32 %v440, 0.20412415
    %v3325 = vmul.f32 %v445, 0.20412415
    %v3326 = vmul.f32 %v450, 0.20412415
    %v3327 = vmul.f32 %v455, 0.20412415
    %v3328 = vmul.f32 %v460, 0.20412415
    %v3329 = vmul.f32 %v465, 0.20412415
    %v3330 = vmul.f32 %v470, 0.20412415
    %v3331 = vmul.f32 %v475, 0.20412415
    %v3332 = vmul.f32 %v569, 0.20412415
    %v3333 = vmul.f32 %v574, 0.20412415
    %v3334 = vmul.f32 %v579, 0.20412415
    %v3335 = vmul.f32 %v584, 0.20412415
    %v3336 = vmul.f32 %v589, 0.20412415
    %v3337 = vmul.f32 %v594, 0.20412415
    %v3338 = vmul.f32 %v599, 0.20412415
    %v3339 = vmul.f32 %v604, 0.20412415
    %v3340 = vmul.f32 %v698, 0.20412415
    %v3341 = vmul.f32 %v703, 0.20412415
    %v3342 = vmul.f32 %v708, 0.20412415
    %v3343 = vmul.f32 %v713, 0.20412415
    %v3344 = vmul.f32 %v718, 0.20412415
    %v3345 = vmul.f32 %v723, 0.20412415
    %v3346 = vmul.f32 %v728, 0.20412415
    %v3347 = vmul.f32 %v733, 0.20412415
    %v3348 = vmul.f32 %v827, 0.20412415
    %v3349 = vmul.f32 %v832, 0.20412415
    %v3350 = vmul.f32 %v837, 0.20412415
    %v3351 = vmul.f32 %v842, 0.20412415
    %v3352 = vmul.f32 %v847, 0.20412415
    %v3353 = vmul.f32 %v852, 0.20412415
    %v3354 = vmul.f32 %v857, 0.20412415
    %v3355 = vmul.f32 %v862, 0.20412415
    %v3356 = vmul.f32 %v956, 0.20412415
    %v3357 = vmul.f32 %v961, 0.20412415
    %v3358 = vmul.f32 %v966, 0.20412415
    %v3359 = vmul.f32 %v971, 0.20412415
    %v3360 = vmul.f32 %v976, 0.20412415
    %v3361 = vmul.f32 %v981, 0.20412415
    %v3362 = vmul.f32 %v986, 0.20412415
    %v3363 = vmul.f32 %v991, 0.20412415
    %v3364 = vmul.f32 %v1085, 0.20412415
    %v3365 = vmul.f32 %v1090, 0.20412415
    %v3366 = vmul.f32 %v1095, 0.20412415
    %v3367 = vmul.f32 %v1100, 0.20412415
    %v3368 = vmul.f32 %v1105, 0.20412415
    %v3369 = vmul.f32 %v1110, 0.20412415
    %v3370 = vmul.f32 %v1115, 0.20412415
    %v3371 = vmul.f32 %v1120, 0.20412415
    %v3372 = vmul.f32 %v1214, 0.20412415
    %v3373 = vmul.f32 %v1219, 0.20412415
    %v3374 = vmul.f32 %v1224, 0.20412415
    %v3375 = vmul.f32 %v1229, 0.20412415
    %v3376 = vmul.f32 %v1234, 0.20412415
    %v3377 = vmul.f32 %v1239, 0.20412415
    %v3378 = vmul.f32 %v1244, 0.20412415
    %v3379 = vmul.f32 %v1249, 0.20412415
    %v3380 = vmul.f32 %v1343, 0.20412415
    %v3381 = vmul.f32 %v1348, 0.20412415
    %v3382 = vmul.f32 %v1353, 0.20412415
    %v3383 = vmul.f32 %v1358, 0.20412415
    %v3384 = vmul.f32 %v1363, 0.20412415
    %v3385 = vmul.f32 %v1368, 0.20412415
    %v3386 = vmul.f32 %v1373, 0.20412415
    %v3387 = vmul.f32 %v1378, 0.20412415
    %v3388 = vmul.f32 %v1472, 0.20412415
    %v3389 = vmul.f32 %v1477, 0.20412415
    %v3390 = vmul.f32 %v1482, 0.20412415
    %v3391 = vmul.f32 %v1487, 0.20412415
    %v3392 = vmul.f32 %v1492, 0.20412415
    %v3393 = vmul.f32 %v1497, 0.20412415
    %v3394 = vmul.f32 %v1502, 0.20412415
    %v3395 = vmul.f32 %v1507, 0.20412415
    %v3396 = vmul.f32 %v1601, 0.20412415
    %v3397 = vmul.f32 %v1606, 0.20412415
    %v3398 = vmul.f32 %v1611, 0.20412415
    %v3399 = vmul.f32 %v1616, 0.20412415
    %v3400 = vmul.f32 %v1621, 0.20412415
    %v3401 = vmul.f32 %v1626, 0.20412415
    %v3402 = vmul.f32 %v1631, 0.20412415
    %v3403 = vmul.f32 %v1636, 0.20412415
    %v3404 = vmul.f32 %v1730, 0.20412415
    %v3405 = vmul.f32 %v1735, 0.20412415
    %v3406 = vmul.f32 %v1740, 0.20412415
    %v3407 = vmul.f32 %v1745, 0.20412415
    %v3408 = vmul.f32 %v1750, 0.20412415
    %v3409 = vmul.f32 %v1755, 0.20412415
    %v3410 = vmul.f32 %v1760, 0.20412415
    %v3411 = vmul.f32 %v1765, 0.20412415
    %v3412 = vmul.f32 %v1859, 0.20412415
    %v3413 = vmul.f32 %v1864, 0.20412415
    %v3414 = vmul.f32 %v1869, 0.20412415
    %v3415 = vmul.f32 %v1874, 0.20412415
    %v3416 = vmul.f32 %v1879, 0.20412415
    %v3417 = vmul.f32 %v1884, 0.20412415
    %v3418 = vmul.f32 %v1889, 0.20412415
    %v3419 = vmul.f32 %v1894, 0.20412415
    %v3420 = vmul.f32 %v1988, 0.20412415
    %v3421 = vmul.f32 %v1993, 0.20412415
    %v3422 = vmul.f32 %v1998, 0.20412415
    %v3423 = vmul.f32 %v2003, 0.20412415
    %v3424 = vmul.f32 %v2008, 0.20412415
    %v3425 = vmul.f32 %v2013, 0.20412415
    %v3426 = vmul.f32 %v2018, 0.20412415
    %v3427 = vmul.f32 %v2023, 0.20412415
    %v3428 = vmul.f32 %v2117, 0.20412415
    %v3429 = vmul.f32 %v2122, 0.20412415
    %v3430 = vmul.f32 %v2127, 0.20412415
    %v3431 = vmul.f32 %v2132, 0.20412415
    %v3432 = vmul.f32 %v2137, 0.20412415
    %v3433 = vmul.f32 %v2142, 0.20412415
    %v3434 = vmul.f32 %v2147, 0.20412415
    %v3435 = vmul.f32 %v2152, 0.20412415
    %v3436 = vmul.f32 %v2246, 0.20412415
    %v3437 = vmul.f32 %v2251, 0.20412415
    %v3438 = vmul.f32 %v2256, 0.20412415
    %v3439 = vmul.f32 %v2261, 0.20412415
    %v3440 = vmul.f32 %v2266, 0.20412415
    %v3441 = vmul.f32 %v2271, 0.20412415
    %v3442 = vmul.f32 %v2276, 0.20412415
    %v3443 = vmul.f32 %v2281, 0.20412415
    %v3444 = vmul.f32 %v2375, 0.20412415
    %v3445 = vmul.f32 %v2380, 0.20412415
    %v3446 = vmul.f32 %v2385, 0.20412415
    %v3447 = vmul.f32 %v2390, 0.20412415
    %v3448 = vmul.f32 %v2395, 0.20412415
    %v3449 = vmul.f32 %v2400, 0.20412415
    %v3450 = vmul.f32 %v2405, 0.20412415
    %v3451 = vmul.f32 %v2410, 0.20412415
    %v3452 = vmul.f32 %v2504, 0.20412415
    %v3453 = vmul.f32 %v2509, 0.20412415
    %v3454 = vmul.f32 %v2514, 0.20412415
    %v3455 = vmul.f32 %v2519, 0.20412415
    %v3456 = vmul.f32 %v2524, 0.20412415
    %v3457 = vmul.f32 %v2529, 0.20412415
    %v3458 = vmul.f32 %v2534, 0.20412415
    %v3459 = vmul.f32 %v2539, 0.20412415
    %v3460 = vmul.f32 %v2633, 0.20412415
    %v3461 = vmul.f32 %v2638, 0.20412415
    %v3462 = vmul.f32 %v2643, 0.20412415
    %v3463 = vmul.f32 %v2648, 0.20412415
    %v3464 = vmul.f32 %v2653, 0.20412415
    %v3465 = vmul.f32 %v2658, 0.20412415
    %v3466 = vmul.f32 %v2663, 0.20412415
    %v3467 = vmul.f32 %v2668, 0.20412415
    %v3468 = vmul.f32 %v2762, 0.20412415
    %v3469 = vmul.f32 %v2767, 0.20412415
    %v3470 = vmul.f32 %v2772, 0.20412415
    %v3471 = vmul.f32 %v2777, 0.20412415
    %v3472 = vmul.f32 %v2782, 0.20412415
    %v3473 = vmul.f32 %v2787, 0.20412415
    %v3474 = vmul.f32 %v2792, 0.20412415
    %v3475 = vmul.f32 %v2797, 0.20412415
    %v3476 = vmul.f32 %v2891, 0.20412415
    %v3477 = vmul.f32 %v2896, 0.20412415
    %v3478 = vmul.f32 %v2901, 0.20412415
    %v3479 = vmul.f32 %v2906, 0.20412415
    %v3480 = vmul.f32 %v2911, 0.20412415
    %v3481 = vmul.f32 %v2916, 0.20412415
    %v3482 = vmul.f32 %v2921, 0.20412415
    %v3483 = vmul.f32 %v2926, 0.20412415
    %v3484 = vmul.f32 %v3020, 0.20412415
    %v3485 = vmul.f32 %v3025, 0.20412415
    %v3486 = vmul.f32 %v3030, 0.20412415
    %v3487 = vmul.f32 %v3035, 0.20412415
    %v3488 = vmul.f32 %v3040, 0.20412415
    %v3489 = vmul.f32 %v3045, 0.20412415
    %v3490 = vmul.f32 %v3050, 0.20412415
    %v3491 = vmul.f32 %v3055, 0.20412415
    %v3492 = vmul.f32 %v3149, 0.20412415
    %v3493 = vmul.f32 %v3154, 0.20412415
    %v3494 = vmul.f32 %v3159, 0.20412415
    %v3495 = vmul.f32 %v3164, 0.20412415
    %v3496 = vmul.f32 %v3169, 0.20412415
    %v3497 = vmul.f32 %v3174, 0.20412415
    %v3498 = vmul.f32 %v3179, 0.20412415
    %v3499 = vmul.f32 %v3184, 0.20412415
    %v3500 = vmul.f32 %v3278, 0.20412415
    %v3501 = vmul.f32 %v3283, 0.20412415
    %v3502 = vmul.f32 %v3288, 0.20412415
    %v3503 = vmul.f32 %v3293, 0.20412415
    %v3504 = vmul.f32 %v3298, 0.20412415
    %v3505 = vmul.f32 %v3303, 0.20412415
    %v3506 = vmul.f32 %v3308, 0.20412415
    %v3507 = vmul.f32 %v3313, 0.20412415
    %v3508 = vsel %vm219, %v3316, -inf
    %3509 = vmax.xlane.f32.xlu0 %v3508
    %v3510 = vpop.xlane.xlu0 %3509
    %v3511 = vsel %vm219, %v3317, -inf
    %3512 = vmax.xlane.f32.xlu0 %v3511
    %v3513 = vpop.xlane.xlu0 %3512
    %v3514 = vsel %vm219, %v3318, -inf
    %3515 = vmax.xlane.f32.xlu0 %v3514
    %v3516 = vpop.xlane.xlu0 %3515
    %v3517 = vsel %vm219, %v3319, -inf
    %3518 = vmax.xlane.f32.xlu0 %v3517
    %v3519 = vpop.xlane.xlu0 %3518
    %v3520 = vsel %vm219, %v3320, -inf
    %3521 = vmax.xlane.f32.xlu0 %v3520
    %v3522 = vpop.xlane.xlu0 %3521
    %v3523 = vsel %vm219, %v3321, -inf
    %3524 = vmax.xlane.f32.xlu0 %v3523
    %v3525 = vpop.xlane.xlu0 %3524
    %v3526 = vsel %vm219, %v3322, -inf
    %3527 = vmax.xlane.f32.xlu0 %v3526
    %v3528 = vpop.xlane.xlu0 %3527
    %v3529 = vsel %vm219, %v3323, -inf
    %3530 = vmax.xlane.f32.xlu0 %v3529
    %v3531 = vpop.xlane.xlu0 %3530
    %v3532 = vsel %vm219, %v3324, -inf
    %3533 = vmax.xlane.f32.xlu0 %v3532
    %v3534 = vpop.xlane.xlu0 %3533
    %v3535 = vsel %vm219, %v3325, -inf
    %3536 = vmax.xlane.f32.xlu0 %v3535
    %v3537 = vpop.xlane.xlu0 %3536
    %v3538 = vsel %vm219, %v3326, -inf
    %3539 = vmax.xlane.f32.xlu0 %v3538
    %v3540 = vpop.xlane.xlu0 %3539
    %v3541 = vsel %vm219, %v3327, -inf
    %3542 = vmax.xlane.f32.xlu0 %v3541
    %v3543 = vpop.xlane.xlu0 %3542
    %v3544 = vsel %vm219, %v3328, -inf
    %3545 = vmax.xlane.f32.xlu0 %v3544
    %v3546 = vpop.xlane.xlu0 %3545
    %v3547 = vsel %vm219, %v3329, -inf
    %3548 = vmax.xlane.f32.xlu0 %v3547
    %v3549 = vpop.xlane.xlu0 %3548
    %v3550 = vsel %vm219, %v3330, -inf
    %3551 = vmax.xlane.f32.xlu0 %v3550
    %v3552 = vpop.xlane.xlu0 %3551
    %v3553 = vsel %vm219, %v3331, -inf
    %3554 = vmax.xlane.f32.xlu0 %v3553
    %v3555 = vpop.xlane.xlu0 %3554
    %v3556 = vsel %vm219, %v3332, -inf
    %3557 = vmax.xlane.f32.xlu0 %v3556
    %v3558 = vpop.xlane.xlu0 %3557
    %v3559 = vsel %vm219, %v3333, -inf
    %3560 = vmax.xlane.f32.xlu0 %v3559
    %v3561 = vpop.xlane.xlu0 %3560
    %v3562 = vsel %vm219, %v3334, -inf
    %3563 = vmax.xlane.f32.xlu0 %v3562
    %v3564 = vpop.xlane.xlu0 %3563
    %v3565 = vsel %vm219, %v3335, -inf
    %3566 = vmax.xlane.f32.xlu0 %v3565
    %v3567 = vpop.xlane.xlu0 %3566
    %v3568 = vsel %vm219, %v3336, -inf
    %3569 = vmax.xlane.f32.xlu0 %v3568
    %v3570 = vpop.xlane.xlu0 %3569
    %v3571 = vsel %vm219, %v3337, -inf
    %3572 = vmax.xlane.f32.xlu0 %v3571
    %v3573 = vpop.xlane.xlu0 %3572
    %v3574 = vsel %vm219, %v3338, -inf
    %3575 = vmax.xlane.f32.xlu0 %v3574
    %v3576 = vpop.xlane.xlu0 %3575
    %v3577 = vsel %vm219, %v3339, -inf
    %3578 = vmax.xlane.f32.xlu0 %v3577
    %v3579 = vpop.xlane.xlu0 %3578
    %v3580 = vsel %vm219, %v3340, -inf
    %3581 = vmax.xlane.f32.xlu0 %v3580
    %v3582 = vpop.xlane.xlu0 %3581
    %v3583 = vsel %vm219, %v3341, -inf
    %3584 = vmax.xlane.f32.xlu0 %v3583
    %v3585 = vpop.xlane.xlu0 %3584
    %v3586 = vsel %vm219, %v3342, -inf
    %3587 = vmax.xlane.f32.xlu0 %v3586
    %v3588 = vpop.xlane.xlu0 %3587
    %v3589 = vsel %vm219, %v3343, -inf
    %3590 = vmax.xlane.f32.xlu0 %v3589
    %v3591 = vpop.xlane.xlu0 %3590
    %v3592 = vsel %vm219, %v3344, -inf
    %3593 = vmax.xlane.f32.xlu0 %v3592
    %v3594 = vpop.xlane.xlu0 %3593
    %v3595 = vsel %vm219, %v3345, -inf
    %3596 = vmax.xlane.f32.xlu0 %v3595
    %v3597 = vpop.xlane.xlu0 %3596
    %v3598 = vsel %vm219, %v3346, -inf
    %3599 = vmax.xlane.f32.xlu0 %v3598
    %v3600 = vpop.xlane.xlu0 %3599
    %v3601 = vsel %vm219, %v3347, -inf
    %3602 = vmax.xlane.f32.xlu0 %v3601
    %v3603 = vpop.xlane.xlu0 %3602
    %v3604 = vsel %vm219, %v3348, -inf
    %3605 = vmax.xlane.f32.xlu0 %v3604
    %v3606 = vpop.xlane.xlu0 %3605
    %v3607 = vsel %vm219, %v3349, -inf
    %3608 = vmax.xlane.f32.xlu0 %v3607
    %v3609 = vpop.xlane.xlu0 %3608
    %v3610 = vsel %vm219, %v3350, -inf
    %3611 = vmax.xlane.f32.xlu0 %v3610
    %v3612 = vpop.xlane.xlu0 %3611
    %v3613 = vsel %vm219, %v3351, -inf
    %3614 = vmax.xlane.f32.xlu0 %v3613
    %v3615 = vpop.xlane.xlu0 %3614
    %v3616 = vsel %vm219, %v3352, -inf
    %3617 = vmax.xlane.f32.xlu0 %v3616
    %v3618 = vpop.xlane.xlu0 %3617
    %v3619 = vsel %vm219, %v3353, -inf
    %3620 = vmax.xlane.f32.xlu0 %v3619
    %v3621 = vpop.xlane.xlu0 %3620
    %v3622 = vsel %vm219, %v3354, -inf
    %3623 = vmax.xlane.f32.xlu0 %v3622
    %v3624 = vpop.xlane.xlu0 %3623
    %v3625 = vsel %vm219, %v3355, -inf
    %3626 = vmax.xlane.f32.xlu0 %v3625
    %v3627 = vpop.xlane.xlu0 %3626
    %v3628 = vsel %vm219, %v3356, -inf
    %3629 = vmax.xlane.f32.xlu0 %v3628
    %v3630 = vpop.xlane.xlu0 %3629
    %v3631 = vsel %vm219, %v3357, -inf
    %3632 = vmax.xlane.f32.xlu0 %v3631
    %v3633 = vpop.xlane.xlu0 %3632
    %v3634 = vsel %vm219, %v3358, -inf
    %3635 = vmax.xlane.f32.xlu0 %v3634
    %v3636 = vpop.xlane.xlu0 %3635
    %v3637 = vsel %vm219, %v3359, -inf
    %3638 = vmax.xlane.f32.xlu0 %v3637
    %v3639 = vpop.xlane.xlu0 %3638
    %v3640 = vsel %vm219, %v3360, -inf
    %3641 = vmax.xlane.f32.xlu0 %v3640
    %v3642 = vpop.xlane.xlu0 %3641
    %v3643 = vsel %vm219, %v3361, -inf
    %3644 = vmax.xlane.f32.xlu0 %v3643
    %v3645 = vpop.xlane.xlu0 %3644
    %v3646 = vsel %vm219, %v3362, -inf
    %3647 = vmax.xlane.f32.xlu0 %v3646
    %v3648 = vpop.xlane.xlu0 %3647
    %v3649 = vsel %vm219, %v3363, -inf
    %3650 = vmax.xlane.f32.xlu0 %v3649
    %v3651 = vpop.xlane.xlu0 %3650
    %v3652 = vsel %vm219, %v3364, -inf
    %3653 = vmax.xlane.f32.xlu0 %v3652
    %v3654 = vpop.xlane.xlu0 %3653
    %v3655 = vsel %vm219, %v3365, -inf
    %3656 = vmax.xlane.f32.xlu0 %v3655
    %v3657 = vpop.xlane.xlu0 %3656
    %v3658 = vsel %vm219, %v3366, -inf
    %3659 = vmax.xlane.f32.xlu0 %v3658
    %v3660 = vpop.xlane.xlu0 %3659
    %v3661 = vsel %vm219, %v3367, -inf
    %3662 = vmax.xlane.f32.xlu0 %v3661
    %v3663 = vpop.xlane.xlu0 %3662
    %v3664 = vsel %vm219, %v3368, -inf
    %3665 = vmax.xlane.f32.xlu0 %v3664
    %v3666 = vpop.xlane.xlu0 %3665
    %v3667 = vsel %vm219, %v3369, -inf
    %3668 = vmax.xlane.f32.xlu0 %v3667
    %v3669 = vpop.xlane.xlu0 %3668
    %v3670 = vsel %vm219, %v3370, -inf
    %3671 = vmax.xlane.f32.xlu0 %v3670
    %v3672 = vpop.xlane.xlu0 %3671
    %v3673 = vsel %vm219, %v3371, -inf
    %3674 = vmax.xlane.f32.xlu0 %v3673
    %v3675 = vpop.xlane.xlu0 %3674
    %v3676 = vsel %vm219, %v3372, -inf
    %3677 = vmax.xlane.f32.xlu0 %v3676
    %v3678 = vpop.xlane.xlu0 %3677
    %v3679 = vsel %vm219, %v3373, -inf
    %3680 = vmax.xlane.f32.xlu0 %v3679
    %v3681 = vpop.xlane.xlu0 %3680
    %v3682 = vsel %vm219, %v3374, -inf
    %3683 = vmax.xlane.f32.xlu0 %v3682
    %v3684 = vpop.xlane.xlu0 %3683
    %v3685 = vsel %vm219, %v3375, -inf
    %3686 = vmax.xlane.f32.xlu0 %v3685
    %v3687 = vpop.xlane.xlu0 %3686
    %v3688 = vsel %vm219, %v3376, -inf
    %3689 = vmax.xlane.f32.xlu0 %v3688
    %v3690 = vpop.xlane.xlu0 %3689
    %v3691 = vsel %vm219, %v3377, -inf
    %3692 = vmax.xlane.f32.xlu0 %v3691
    %v3693 = vpop.xlane.xlu0 %3692
    %v3694 = vsel %vm219, %v3378, -inf
    %3695 = vmax.xlane.f32.xlu0 %v3694
    %v3696 = vpop.xlane.xlu0 %3695
    %v3697 = vsel %vm219, %v3379, -inf
    %3698 = vmax.xlane.f32.xlu0 %v3697
    %v3699 = vpop.xlane.xlu0 %3698
    %v3700 = vsel %vm219, %v3380, -inf
    %3701 = vmax.xlane.f32.xlu0 %v3700
    %v3702 = vpop.xlane.xlu0 %3701
    %v3703 = vsel %vm219, %v3381, -inf
    %3704 = vmax.xlane.f32.xlu0 %v3703
    %v3705 = vpop.xlane.xlu0 %3704
    %v3706 = vsel %vm219, %v3382, -inf
    %3707 = vmax.xlane.f32.xlu0 %v3706
    %v3708 = vpop.xlane.xlu0 %3707
    %v3709 = vsel %vm219, %v3383, -inf
    %3710 = vmax.xlane.f32.xlu0 %v3709
    %v3711 = vpop.xlane.xlu0 %3710
    %v3712 = vsel %vm219, %v3384, -inf
    %3713 = vmax.xlane.f32.xlu0 %v3712
    %v3714 = vpop.xlane.xlu0 %3713
    %v3715 = vsel %vm219, %v3385, -inf
    %3716 = vmax.xlane.f32.xlu0 %v3715
    %v3717 = vpop.xlane.xlu0 %3716
    %v3718 = vsel %vm219, %v3386, -inf
    %3719 = vmax.xlane.f32.xlu0 %v3718
    %v3720 = vpop.xlane.xlu0 %3719
    %v3721 = vsel %vm219, %v3387, -inf
    %3722 = vmax.xlane.f32.xlu0 %v3721
    %v3723 = vpop.xlane.xlu0 %3722
    %v3724 = vsel %vm219, %v3388, -inf
    %3725 = vmax.xlane.f32.xlu0 %v3724
    %v3726 = vpop.xlane.xlu0 %3725
    %v3727 = vsel %vm219, %v3389, -inf
    %3728 = vmax.xlane.f32.xlu0 %v3727
    %v3729 = vpop.xlane.xlu0 %3728
    %v3730 = vsel %vm219, %v3390, -inf
    %3731 = vmax.xlane.f32.xlu0 %v3730
    %v3732 = vpop.xlane.xlu0 %3731
    %v3733 = vsel %vm219, %v3391, -inf
    %3734 = vmax.xlane.f32.xlu0 %v3733
    %v3735 = vpop.xlane.xlu0 %3734
    %v3736 = vsel %vm219, %v3392, -inf
    %3737 = vmax.xlane.f32.xlu0 %v3736
    %v3738 = vpop.xlane.xlu0 %3737
    %v3739 = vsel %vm219, %v3393, -inf
    %3740 = vmax.xlane.f32.xlu0 %v3739
    %v3741 = vpop.xlane.xlu0 %3740
    %v3742 = vsel %vm219, %v3394, -inf
    %3743 = vmax.xlane.f32.xlu0 %v3742
    %v3744 = vpop.xlane.xlu0 %3743
    %v3745 = vsel %vm219, %v3395, -inf
    %3746 = vmax.xlane.f32.xlu0 %v3745
    %v3747 = vpop.xlane.xlu0 %3746
    %v3748 = vsel %vm219, %v3396, -inf
    %3749 = vmax.xlane.f32.xlu0 %v3748
    %v3750 = vpop.xlane.xlu0 %3749
    %v3751 = vsel %vm219, %v3397, -inf
    %3752 = vmax.xlane.f32.xlu0 %v3751
    %v3753 = vpop.xlane.xlu0 %3752
    %v3754 = vsel %vm219, %v3398, -inf
    %3755 = vmax.xlane.f32.xlu0 %v3754
    %v3756 = vpop.xlane.xlu0 %3755
    %v3757 = vsel %vm219, %v3399, -inf
    %3758 = vmax.xlane.f32.xlu0 %v3757
    %v3759 = vpop.xlane.xlu0 %3758
    %v3760 = vsel %vm219, %v3400, -inf
    %3761 = vmax.xlane.f32.xlu0 %v3760
    %v3762 = vpop.xlane.xlu0 %3761
    %v3763 = vsel %vm219, %v3401, -inf
    %3764 = vmax.xlane.f32.xlu0 %v3763
    %v3765 = vpop.xlane.xlu0 %3764
    %v3766 = vsel %vm219, %v3402, -inf
    %3767 = vmax.xlane.f32.xlu0 %v3766
    %v3768 = vpop.xlane.xlu0 %3767
    %v3769 = vsel %vm219, %v3403, -inf
    %3770 = vmax.xlane.f32.xlu0 %v3769
    %v3771 = vpop.xlane.xlu0 %3770
    %v3772 = vsel %vm219, %v3404, -inf
    %3773 = vmax.xlane.f32.xlu0 %v3772
    %v3774 = vpop.xlane.xlu0 %3773
    %v3775 = vsel %vm219, %v3405, -inf
    %3776 = vmax.xlane.f32.xlu0 %v3775
    %v3777 = vpop.xlane.xlu0 %3776
    %v3778 = vsel %vm219, %v3406, -inf
    %3779 = vmax.xlane.f32.xlu0 %v3778
    %v3780 = vpop.xlane.xlu0 %3779
    %v3781 = vsel %vm219, %v3407, -inf
    %3782 = vmax.xlane.f32.xlu0 %v3781
    %v3783 = vpop.xlane.xlu0 %3782
    %v3784 = vsel %vm219, %v3408, -inf
    %3785 = vmax.xlane.f32.xlu0 %v3784
    %v3786 = vpop.xlane.xlu0 %3785
    %v3787 = vsel %vm219, %v3409, -inf
    %3788 = vmax.xlane.f32.xlu0 %v3787
    %v3789 = vpop.xlane.xlu0 %3788
    %v3790 = vsel %vm219, %v3410, -inf
    %3791 = vmax.xlane.f32.xlu0 %v3790
    %v3792 = vpop.xlane.xlu0 %3791
    %v3793 = vsel %vm219, %v3411, -inf
    %3794 = vmax.xlane.f32.xlu0 %v3793
    %v3795 = vpop.xlane.xlu0 %3794
    %v3796 = vsel %vm219, %v3412, -inf
    %3797 = vmax.xlane.f32.xlu0 %v3796
    %v3798 = vpop.xlane.xlu0 %3797
    %v3799 = vsel %vm219, %v3413, -inf
    %3800 = vmax.xlane.f32.xlu0 %v3799
    %v3801 = vpop.xlane.xlu0 %3800
    %v3802 = vsel %vm219, %v3414, -inf
    %3803 = vmax.xlane.f32.xlu0 %v3802
    %v3804 = vpop.xlane.xlu0 %3803
    %v3805 = vsel %vm219, %v3415, -inf
    %3806 = vmax.xlane.f32.xlu0 %v3805
    %v3807 = vpop.xlane.xlu0 %3806
    %v3808 = vsel %vm219, %v3416, -inf
    %3809 = vmax.xlane.f32.xlu0 %v3808
    %v3810 = vpop.xlane.xlu0 %3809
    %v3811 = vsel %vm219, %v3417, -inf
    %3812 = vmax.xlane.f32.xlu0 %v3811
    %v3813 = vpop.xlane.xlu0 %3812
    %v3814 = vsel %vm219, %v3418, -inf
    %3815 = vmax.xlane.f32.xlu0 %v3814
    %v3816 = vpop.xlane.xlu0 %3815
    %v3817 = vsel %vm219, %v3419, -inf
    %3818 = vmax.xlane.f32.xlu0 %v3817
    %v3819 = vpop.xlane.xlu0 %3818
    %v3820 = vsel %vm219, %v3420, -inf
    %3821 = vmax.xlane.f32.xlu0 %v3820
    %v3822 = vpop.xlane.xlu0 %3821
    %v3823 = vsel %vm219, %v3421, -inf
    %3824 = vmax.xlane.f32.xlu0 %v3823
    %v3825 = vpop.xlane.xlu0 %3824
    %v3826 = vsel %vm219, %v3422, -inf
    %3827 = vmax.xlane.f32.xlu0 %v3826
    %v3828 = vpop.xlane.xlu0 %3827
    %v3829 = vsel %vm219, %v3423, -inf
    %3830 = vmax.xlane.f32.xlu0 %v3829
    %v3831 = vpop.xlane.xlu0 %3830
    %v3832 = vsel %vm219, %v3424, -inf
    %3833 = vmax.xlane.f32.xlu0 %v3832
    %v3834 = vpop.xlane.xlu0 %3833
    %v3835 = vsel %vm219, %v3425, -inf
    %3836 = vmax.xlane.f32.xlu0 %v3835
    %v3837 = vpop.xlane.xlu0 %3836
    %v3838 = vsel %vm219, %v3426, -inf
    %3839 = vmax.xlane.f32.xlu0 %v3838
    %v3840 = vpop.xlane.xlu0 %3839
    %v3841 = vsel %vm219, %v3427, -inf
    %3842 = vmax.xlane.f32.xlu0 %v3841
    %v3843 = vpop.xlane.xlu0 %3842
    %v3844 = vsel %vm219, %v3428, -inf
    %3845 = vmax.xlane.f32.xlu0 %v3844
    %v3846 = vpop.xlane.xlu0 %3845
    %v3847 = vsel %vm219, %v3429, -inf
    %3848 = vmax.xlane.f32.xlu0 %v3847
    %v3849 = vpop.xlane.xlu0 %3848
    %v3850 = vsel %vm219, %v3430, -inf
    %3851 = vmax.xlane.f32.xlu0 %v3850
    %v3852 = vpop.xlane.xlu0 %3851
    %v3853 = vsel %vm219, %v3431, -inf
    %3854 = vmax.xlane.f32.xlu0 %v3853
    %v3855 = vpop.xlane.xlu0 %3854
    %v3856 = vsel %vm219, %v3432, -inf
    %3857 = vmax.xlane.f32.xlu0 %v3856
    %v3858 = vpop.xlane.xlu0 %3857
    %v3859 = vsel %vm219, %v3433, -inf
    %3860 = vmax.xlane.f32.xlu0 %v3859
    %v3861 = vpop.xlane.xlu0 %3860
    %v3862 = vsel %vm219, %v3434, -inf
    %3863 = vmax.xlane.f32.xlu0 %v3862
    %v3864 = vpop.xlane.xlu0 %3863
    %v3865 = vsel %vm219, %v3435, -inf
    %3866 = vmax.xlane.f32.xlu0 %v3865
    %v3867 = vpop.xlane.xlu0 %3866
    %v3868 = vsel %vm219, %v3436, -inf
    %3869 = vmax.xlane.f32.xlu0 %v3868
    %v3870 = vpop.xlane.xlu0 %3869
    %v3871 = vsel %vm219, %v3437, -inf
    %3872 = vmax.xlane.f32.xlu0 %v3871
    %v3873 = vpop.xlane.xlu0 %3872
    %v3874 = vsel %vm219, %v3438, -inf
    %3875 = vmax.xlane.f32.xlu0 %v3874
    %v3876 = vpop.xlane.xlu0 %3875
    %v3877 = vsel %vm219, %v3439, -inf
    %3878 = vmax.xlane.f32.xlu0 %v3877
    %v3879 = vpop.xlane.xlu0 %3878
    %v3880 = vsel %vm219, %v3440, -inf
    %3881 = vmax.xlane.f32.xlu0 %v3880
    %v3882 = vpop.xlane.xlu0 %3881
    %v3883 = vsel %vm219, %v3441, -inf
    %3884 = vmax.xlane.f32.xlu0 %v3883
    %v3885 = vpop.xlane.xlu0 %3884
    %v3886 = vsel %vm219, %v3442, -inf
    %3887 = vmax.xlane.f32.xlu0 %v3886
    %v3888 = vpop.xlane.xlu0 %3887
    %v3889 = vsel %vm219, %v3443, -inf
    %3890 = vmax.xlane.f32.xlu0 %v3889
    %v3891 = vpop.xlane.xlu0 %3890
    %v3892 = vsel %vm219, %v3444, -inf
    %3893 = vmax.xlane.f32.xlu0 %v3892
    %v3894 = vpop.xlane.xlu0 %3893
    %v3895 = vsel %vm219, %v3445, -inf
    %3896 = vmax.xlane.f32.xlu0 %v3895
    %v3897 = vpop.xlane.xlu0 %3896
    %v3898 = vsel %vm219, %v3446, -inf
    %3899 = vmax.xlane.f32.xlu0 %v3898
    %v3900 = vpop.xlane.xlu0 %3899
    %v3901 = vsel %vm219, %v3447, -inf
    %3902 = vmax.xlane.f32.xlu0 %v3901
    %v3903 = vpop.xlane.xlu0 %3902
    %v3904 = vsel %vm219, %v3448, -inf
    %3905 = vmax.xlane.f32.xlu0 %v3904
    %v3906 = vpop.xlane.xlu0 %3905
    %v3907 = vsel %vm219, %v3449, -inf
    %3908 = vmax.xlane.f32.xlu0 %v3907
    %v3909 = vpop.xlane.xlu0 %3908
    %v3910 = vsel %vm219, %v3450, -inf
    %3911 = vmax.xlane.f32.xlu0 %v3910
    %v3912 = vpop.xlane.xlu0 %3911
    %v3913 = vsel %vm219, %v3451, -inf
    %3914 = vmax.xlane.f32.xlu0 %v3913
    %v3915 = vpop.xlane.xlu0 %3914
    %v3916 = vsel %vm219, %v3452, -inf
    %3917 = vmax.xlane.f32.xlu0 %v3916
    %v3918 = vpop.xlane.xlu0 %3917
    %v3919 = vsel %vm219, %v3453, -inf
    %3920 = vmax.xlane.f32.xlu0 %v3919
    %v3921 = vpop.xlane.xlu0 %3920
    %v3922 = vsel %vm219, %v3454, -inf
    %3923 = vmax.xlane.f32.xlu0 %v3922
    %v3924 = vpop.xlane.xlu0 %3923
    %v3925 = vsel %vm219, %v3455, -inf
    %3926 = vmax.xlane.f32.xlu0 %v3925
    %v3927 = vpop.xlane.xlu0 %3926
    %v3928 = vsel %vm219, %v3456, -inf
    %3929 = vmax.xlane.f32.xlu0 %v3928
    %v3930 = vpop.xlane.xlu0 %3929
    %v3931 = vsel %vm219, %v3457, -inf
    %3932 = vmax.xlane.f32.xlu0 %v3931
    %v3933 = vpop.xlane.xlu0 %3932
    %v3934 = vsel %vm219, %v3458, -inf
    %3935 = vmax.xlane.f32.xlu0 %v3934
    %v3936 = vpop.xlane.xlu0 %3935
    %v3937 = vsel %vm219, %v3459, -inf
    %3938 = vmax.xlane.f32.xlu0 %v3937
    %v3939 = vpop.xlane.xlu0 %3938
    %v3940 = vsel %vm219, %v3460, -inf
    %3941 = vmax.xlane.f32.xlu0 %v3940
    %v3942 = vpop.xlane.xlu0 %3941
    %v3943 = vsel %vm219, %v3461, -inf
    %3944 = vmax.xlane.f32.xlu0 %v3943
    %v3945 = vpop.xlane.xlu0 %3944
    %v3946 = vsel %vm219, %v3462, -inf
    %3947 = vmax.xlane.f32.xlu0 %v3946
    %v3948 = vpop.xlane.xlu0 %3947
    %v3949 = vsel %vm219, %v3463, -inf
    %3950 = vmax.xlane.f32.xlu0 %v3949
    %v3951 = vpop.xlane.xlu0 %3950
    %v3952 = vsel %vm219, %v3464, -inf
    %3953 = vmax.xlane.f32.xlu0 %v3952
    %v3954 = vpop.xlane.xlu0 %3953
    %v3955 = vsel %vm219, %v3465, -inf
    %3956 = vmax.xlane.f32.xlu0 %v3955
    %v3957 = vpop.xlane.xlu0 %3956
    %v3958 = vsel %vm219, %v3466, -inf
    %3959 = vmax.xlane.f32.xlu0 %v3958
    %v3960 = vpop.xlane.xlu0 %3959
    %v3961 = vsel %vm219, %v3467, -inf
    %3962 = vmax.xlane.f32.xlu0 %v3961
    %v3963 = vpop.xlane.xlu0 %3962
    %v3964 = vsel %vm219, %v3468, -inf
    %3965 = vmax.xlane.f32.xlu0 %v3964
    %v3966 = vpop.xlane.xlu0 %3965
    %v3967 = vsel %vm219, %v3469, -inf
    %3968 = vmax.xlane.f32.xlu0 %v3967
    %v3969 = vpop.xlane.xlu0 %3968
    %v3970 = vsel %vm219, %v3470, -inf
    %3971 = vmax.xlane.f32.xlu0 %v3970
    %v3972 = vpop.xlane.xlu0 %3971
    %v3973 = vsel %vm219, %v3471, -inf
    %3974 = vmax.xlane.f32.xlu0 %v3973
    %v3975 = vpop.xlane.xlu0 %3974
    %v3976 = vsel %vm219, %v3472, -inf
    %3977 = vmax.xlane.f32.xlu0 %v3976
    %v3978 = vpop.xlane.xlu0 %3977
    %v3979 = vsel %vm219, %v3473, -inf
    %3980 = vmax.xlane.f32.xlu0 %v3979
    %v3981 = vpop.xlane.xlu0 %3980
    %v3982 = vsel %vm219, %v3474, -inf
    %3983 = vmax.xlane.f32.xlu0 %v3982
    %v3984 = vpop.xlane.xlu0 %3983
    %v3985 = vsel %vm219, %v3475, -inf
    %3986 = vmax.xlane.f32.xlu0 %v3985
    %v3987 = vpop.xlane.xlu0 %3986
    %v3988 = vsel %vm219, %v3476, -inf
    %3989 = vmax.xlane.f32.xlu0 %v3988
    %v3990 = vpop.xlane.xlu0 %3989
    %v3991 = vsel %vm219, %v3477, -inf
    %3992 = vmax.xlane.f32.xlu0 %v3991
    %v3993 = vpop.xlane.xlu0 %3992
    %v3994 = vsel %vm219, %v3478, -inf
    %3995 = vmax.xlane.f32.xlu0 %v3994
    %v3996 = vpop.xlane.xlu0 %3995
    %v3997 = vsel %vm219, %v3479, -inf
    %3998 = vmax.xlane.f32.xlu0 %v3997
    %v3999 = vpop.xlane.xlu0 %3998
    %v4000 = vsel %vm219, %v3480, -inf
    %4001 = vmax.xlane.f32.xlu0 %v4000
    %v4002 = vpop.xlane.xlu0 %4001
    %v4003 = vsel %vm219, %v3481, -inf
    %4004 = vmax.xlane.f32.xlu0 %v4003
    %v4005 = vpop.xlane.xlu0 %4004
    %v4006 = vsel %vm219, %v3482, -inf
    %4007 = vmax.xlane.f32.xlu0 %v4006
    %v4008 = vpop.xlane.xlu0 %4007
    %v4009 = vsel %vm219, %v3483, -inf
    %4010 = vmax.xlane.f32.xlu0 %v4009
    %v4011 = vpop.xlane.xlu0 %4010
    %v4012 = vsel %vm219, %v3484, -inf
    %4013 = vmax.xlane.f32.xlu0 %v4012
    %v4014 = vpop.xlane.xlu0 %4013
    %v4015 = vsel %vm219, %v3485, -inf
    %4016 = vmax.xlane.f32.xlu0 %v4015
    %v4017 = vpop.xlane.xlu0 %4016
    %v4018 = vsel %vm219, %v3486, -inf
    %4019 = vmax.xlane.f32.xlu0 %v4018
    %v4020 = vpop.xlane.xlu0 %4019
    %v4021 = vsel %vm219, %v3487, -inf
    %4022 = vmax.xlane.f32.xlu0 %v4021
    %v4023 = vpop.xlane.xlu0 %4022
    %v4024 = vsel %vm219, %v3488, -inf
    %4025 = vmax.xlane.f32.xlu0 %v4024
    %v4026 = vpop.xlane.xlu0 %4025
    %v4027 = vsel %vm219, %v3489, -inf
    %4028 = vmax.xlane.f32.xlu0 %v4027
    %v4029 = vpop.xlane.xlu0 %4028
    %v4030 = vsel %vm219, %v3490, -inf
    %4031 = vmax.xlane.f32.xlu0 %v4030
    %v4032 = vpop.xlane.xlu0 %4031
    %v4033 = vsel %vm219, %v3491, -inf
    %4034 = vmax.xlane.f32.xlu0 %v4033
    %v4035 = vpop.xlane.xlu0 %4034
    %v4036 = vsel %vm219, %v3492, -inf
    %4037 = vmax.xlane.f32.xlu0 %v4036
    %v4038 = vpop.xlane.xlu0 %4037
    %v4039 = vsel %vm219, %v3493, -inf
    %4040 = vmax.xlane.f32.xlu0 %v4039
    %v4041 = vpop.xlane.xlu0 %4040
    %v4042 = vsel %vm219, %v3494, -inf
    %4043 = vmax.xlane.f32.xlu0 %v4042
    %v4044 = vpop.xlane.xlu0 %4043
    %v4045 = vsel %vm219, %v3495, -inf
    %4046 = vmax.xlane.f32.xlu0 %v4045
    %v4047 = vpop.xlane.xlu0 %4046
    %v4048 = vsel %vm219, %v3496, -inf
    %4049 = vmax.xlane.f32.xlu0 %v4048
    %v4050 = vpop.xlane.xlu0 %4049
    %v4051 = vsel %vm219, %v3497, -inf
    %4052 = vmax.xlane.f32.xlu0 %v4051
    %v4053 = vpop.xlane.xlu0 %4052
    %v4054 = vsel %vm219, %v3498, -inf
    %4055 = vmax.xlane.f32.xlu0 %v4054
    %v4056 = vpop.xlane.xlu0 %4055
    %v4057 = vsel %vm219, %v3499, -inf
    %4058 = vmax.xlane.f32.xlu0 %v4057
    %v4059 = vpop.xlane.xlu0 %4058
    %v4060 = vsel %vm219, %v3500, -inf
    %4061 = vmax.xlane.f32.xlu0 %v4060
    %v4062 = vpop.xlane.xlu0 %4061
    %v4063 = vsel %vm219, %v3501, -inf
    %4064 = vmax.xlane.f32.xlu0 %v4063
    %v4065 = vpop.xlane.xlu0 %4064
    %v4066 = vsel %vm219, %v3502, -inf
    %4067 = vmax.xlane.f32.xlu0 %v4066
    %v4068 = vpop.xlane.xlu0 %4067
    %v4069 = vsel %vm219, %v3503, -inf
    %4070 = vmax.xlane.f32.xlu0 %v4069
    %v4071 = vpop.xlane.xlu0 %4070
    %v4072 = vsel %vm219, %v3504, -inf
    %4073 = vmax.xlane.f32.xlu0 %v4072
    %v4074 = vpop.xlane.xlu0 %4073
    %v4075 = vsel %vm219, %v3505, -inf
    %4076 = vmax.xlane.f32.xlu0 %v4075
    %v4077 = vpop.xlane.xlu0 %4076
    %v4078 = vsel %vm219, %v3506, -inf
    %4079 = vmax.xlane.f32.xlu0 %v4078
    %v4080 = vpop.xlane.xlu0 %4079
    %v4081 = vsel %vm219, %v3507, -inf
    %4082 = vmax.xlane.f32.xlu0 %v4081
    %v4083 = vpop.xlane.xlu0 %4082
    %v4084 = vsub.f32 %v3316, %v3510
    %v4085 = vsub.f32 %v3317, %v3513
    %v4086 = vsub.f32 %v3318, %v3516
    %v4087 = vsub.f32 %v3319, %v3519
    %v4088 = vsub.f32 %v3320, %v3522
    %v4089 = vsub.f32 %v3321, %v3525
    %v4090 = vsub.f32 %v3322, %v3528
    %v4091 = vsub.f32 %v3323, %v3531
    %v4092 = vsub.f32 %v3324, %v3534
    %v4093 = vsub.f32 %v3325, %v3537
    %v4094 = vsub.f32 %v3326, %v3540
    %v4095 = vsub.f32 %v3327, %v3543
    %v4096 = vsub.f32 %v3328, %v3546
    %v4097 = vsub.f32 %v3329, %v3549
    %v4098 = vsub.f32 %v3330, %v3552
    %v4099 = vsub.f32 %v3331, %v3555
    %v4100 = vsub.f32 %v3332, %v3558
    %v4101 = vsub.f32 %v3333, %v3561
    %v4102 = vsub.f32 %v3334, %v3564
    %v4103 = vsub.f32 %v3335, %v3567
    %v4104 = vsub.f32 %v3336, %v3570
    %v4105 = vsub.f32 %v3337, %v3573
    %v4106 = vsub.f32 %v3338, %v3576
    %v4107 = vsub.f32 %v3339, %v3579
    %v4108 = vsub.f32 %v3340, %v3582
    %v4109 = vsub.f32 %v3341, %v3585
    %v4110 = vsub.f32 %v3342, %v3588
    %v4111 = vsub.f32 %v3343, %v3591
    %v4112 = vsub.f32 %v3344, %v3594
    %v4113 = vsub.f32 %v3345, %v3597
    %v4114 = vsub.f32 %v3346, %v3600
    %v4115 = vsub.f32 %v3347, %v3603
    %v4116 = vsub.f32 %v3348, %v3606
    %v4117 = vsub.f32 %v3349, %v3609
    %v4118 = vsub.f32 %v3350, %v3612
    %v4119 = vsub.f32 %v3351, %v3615
    %v4120 = vsub.f32 %v3352, %v3618
    %v4121 = vsub.f32 %v3353, %v3621
    %v4122 = vsub.f32 %v3354, %v3624
    %v4123 = vsub.f32 %v3355, %v3627
    %v4124 = vsub.f32 %v3356, %v3630
    %v4125 = vsub.f32 %v3357, %v3633
    %v4126 = vsub.f32 %v3358, %v3636
    %v4127 = vsub.f32 %v3359, %v3639
    %v4128 = vsub.f32 %v3360, %v3642
    %v4129 = vsub.f32 %v3361, %v3645
    %v4130 = vsub.f32 %v3362, %v3648
    %v4131 = vsub.f32 %v3363, %v3651
    %v4132 = vsub.f32 %v3364, %v3654
    %v4133 = vsub.f32 %v3365, %v3657
    %v4134 = vsub.f32 %v3366, %v3660
    %v4135 = vsub.f32 %v3367, %v3663
    %v4136 = vsub.f32 %v3368, %v3666
    %v4137 = vsub.f32 %v3369, %v3669
    %v4138 = vsub.f32 %v3370, %v3672
    %v4139 = vsub.f32 %v3371, %v3675
    %v4140 = vsub.f32 %v3372, %v3678
    %v4141 = vsub.f32 %v3373, %v3681
    %v4142 = vsub.f32 %v3374, %v3684
    %v4143 = vsub.f32 %v3375, %v3687
    %v4144 = vsub.f32 %v3376, %v3690
    %v4145 = vsub.f32 %v3377, %v3693
    %v4146 = vsub.f32 %v3378, %v3696
    %v4147 = vsub.f32 %v3379, %v3699
    %v4148 = vsub.f32 %v3380, %v3702
    %v4149 = vsub.f32 %v3381, %v3705
    %v4150 = vsub.f32 %v3382, %v3708
    %v4151 = vsub.f32 %v3383, %v3711
    %v4152 = vsub.f32 %v3384, %v3714
    %v4153 = vsub.f32 %v3385, %v3717
    %v4154 = vsub.f32 %v3386, %v3720
    %v4155 = vsub.f32 %v3387, %v3723
    %v4156 = vsub.f32 %v3388, %v3726
    %v4157 = vsub.f32 %v3389, %v3729
    %v4158 = vsub.f32 %v3390, %v3732
    %v4159 = vsub.f32 %v3391, %v3735
    %v4160 = vsub.f32 %v3392, %v3738
    %v4161 = vsub.f32 %v3393, %v3741
    %v4162 = vsub.f32 %v3394, %v3744
    %v4163 = vsub.f32 %v3395, %v3747
    %v4164 = vsub.f32 %v3396, %v3750
    %v4165 = vsub.f32 %v3397, %v3753
    %v4166 = vsub.f32 %v3398, %v3756
    %v4167 = vsub.f32 %v3399, %v3759
    %v4168 = vsub.f32 %v3400, %v3762
    %v4169 = vsub.f32 %v3401, %v3765
    %v4170 = vsub.f32 %v3402, %v3768
    %v4171 = vsub.f32 %v3403, %v3771
    %v4172 = vsub.f32 %v3404, %v3774
    %v4173 = vsub.f32 %v3405, %v3777
    %v4174 = vsub.f32 %v3406, %v3780
    %v4175 = vsub.f32 %v3407, %v3783
    %v4176 = vsub.f32 %v3408, %v3786
    %v4177 = vsub.f32 %v3409, %v3789
    %v4178 = vsub.f32 %v3410, %v3792
    %v4179 = vsub.f32 %v3411, %v3795
    %v4180 = vsub.f32 %v3412, %v3798
    %v4181 = vsub.f32 %v3413, %v3801
    %v4182 = vsub.f32 %v3414, %v3804
    %v4183 = vsub.f32 %v3415, %v3807
    %v4184 = vsub.f32 %v3416, %v3810
    %v4185 = vsub.f32 %v3417, %v3813
    %v4186 = vsub.f32 %v3418, %v3816
    %v4187 = vsub.f32 %v3419, %v3819
    %v4188 = vsub.f32 %v3420, %v3822
    %v4189 = vsub.f32 %v3421, %v3825
    %v4190 = vsub.f32 %v3422, %v3828
    %v4191 = vsub.f32 %v3423, %v3831
    %v4192 = vsub.f32 %v3424, %v3834
    %v4193 = vsub.f32 %v3425, %v3837
    %v4194 = vsub.f32 %v3426, %v3840
    %v4195 = vsub.f32 %v3427, %v3843
    %v4196 = vsub.f32 %v3428, %v3846
    %v4197 = vsub.f32 %v3429, %v3849
    %v4198 = vsub.f32 %v3430, %v3852
    %v4199 = vsub.f32 %v3431, %v3855
    %v4200 = vsub.f32 %v3432, %v3858
    %v4201 = vsub.f32 %v3433, %v3861
    %v4202 = vsub.f32 %v3434, %v3864
    %v4203 = vsub.f32 %v3435, %v3867
    %v4204 = vsub.f32 %v3436, %v3870
    %v4205 = vsub.f32 %v3437, %v3873
    %v4206 = vsub.f32 %v3438, %v3876
    %v4207 = vsub.f32 %v3439, %v3879
    %v4208 = vsub.f32 %v3440, %v3882
    %v4209 = vsub.f32 %v3441, %v3885
    %v4210 = vsub.f32 %v3442, %v3888
    %v4211 = vsub.f32 %v3443, %v3891
    %v4212 = vsub.f32 %v3444, %v3894
    %v4213 = vsub.f32 %v3445, %v3897
    %v4214 = vsub.f32 %v3446, %v3900
    %v4215 = vsub.f32 %v3447, %v3903
    %v4216 = vsub.f32 %v3448, %v3906
    %v4217 = vsub.f32 %v3449, %v3909
    %v4218 = vsub.f32 %v3450, %v3912
    %v4219 = vsub.f32 %v3451, %v3915
    %v4220 = vsub.f32 %v3452, %v3918
    %v4221 = vsub.f32 %v3453, %v3921
    %v4222 = vsub.f32 %v3454, %v3924
    %v4223 = vsub.f32 %v3455, %v3927
    %v4224 = vsub.f32 %v3456, %v3930
    %v4225 = vsub.f32 %v3457, %v3933
    %v4226 = vsub.f32 %v3458, %v3936
    %v4227 = vsub.f32 %v3459, %v3939
    %v4228 = vsub.f32 %v3460, %v3942
    %v4229 = vsub.f32 %v3461, %v3945
    %v4230 = vsub.f32 %v3462, %v3948
    %v4231 = vsub.f32 %v3463, %v3951
    %v4232 = vsub.f32 %v3464, %v3954
    %v4233 = vsub.f32 %v3465, %v3957
    %v4234 = vsub.f32 %v3466, %v3960
    %v4235 = vsub.f32 %v3467, %v3963
    %v4236 = vsub.f32 %v3468, %v3966
    %v4237 = vsub.f32 %v3469, %v3969
    %v4238 = vsub.f32 %v3470, %v3972
    %v4239 = vsub.f32 %v3471, %v3975
    %v4240 = vsub.f32 %v3472, %v3978
    %v4241 = vsub.f32 %v3473, %v3981
    %v4242 = vsub.f32 %v3474, %v3984
    %v4243 = vsub.f32 %v3475, %v3987
    %v4244 = vsub.f32 %v3476, %v3990
    %v4245 = vsub.f32 %v3477, %v3993
    %v4246 = vsub.f32 %v3478, %v3996
    %v4247 = vsub.f32 %v3479, %v3999
    %v4248 = vsub.f32 %v3480, %v4002
    %v4249 = vsub.f32 %v3481, %v4005
    %v4250 = vsub.f32 %v3482, %v4008
    %v4251 = vsub.f32 %v3483, %v4011
    %v4252 = vsub.f32 %v3484, %v4014
    %v4253 = vsub.f32 %v3485, %v4017
    %v4254 = vsub.f32 %v3486, %v4020
    %v4255 = vsub.f32 %v3487, %v4023
    %v4256 = vsub.f32 %v3488, %v4026
    %v4257 = vsub.f32 %v3489, %v4029
    %v4258 = vsub.f32 %v3490, %v4032
    %v4259 = vsub.f32 %v3491, %v4035
    %v4260 = vsub.f32 %v3492, %v4038
    %v4261 = vsub.f32 %v3493, %v4041
    %v4262 = vsub.f32 %v3494, %v4044
    %v4263 = vsub.f32 %v3495, %v4047
    %v4264 = vsub.f32 %v3496, %v4050
    %v4265 = vsub.f32 %v3497, %v4053
    %v4266 = vsub.f32 %v3498, %v4056
    %v4267 = vsub.f32 %v3499, %v4059
    %v4268 = vsub.f32 %v3500, %v4062
    %v4269 = vsub.f32 %v3501, %v4065
    %v4270 = vsub.f32 %v3502, %v4068
    %v4271 = vsub.f32 %v3503, %v4071
    %v4272 = vsub.f32 %v3504, %v4074
    %v4273 = vsub.f32 %v3505, %v4077
    %v4274 = vsub.f32 %v3506, %v4080
    %v4275 = vsub.f32 %v3507, %v4083
    %v4276 = vmul.f32 %v4084, 1.442695
    %v4277 = vpow.pop %v4276
    %v4278 = vmul.f32 %v4085, 1.442695
    %v4279 = vpow.pop %v4278
    %v4280 = vmul.f32 %v4086, 1.442695
    %v4281 = vpow.pop %v4280
    %v4282 = vmul.f32 %v4087, 1.442695
    %v4283 = vpow.pop %v4282
    %v4284 = vmul.f32 %v4088, 1.442695
    %v4285 = vpow.pop %v4284
    %v4286 = vmul.f32 %v4089, 1.442695
    %v4287 = vpow.pop %v4286
    %v4288 = vmul.f32 %v4090, 1.442695
    %v4289 = vpow.pop %v4288
    %v4290 = vmul.f32 %v4091, 1.442695
    %v4291 = vpow.pop %v4290
    %v4292 = vmul.f32 %v4092, 1.442695
    %v4293 = vpow.pop %v4292
    %v4294 = vmul.f32 %v4093, 1.442695
    %v4295 = vpow.pop %v4294
    %v4296 = vmul.f32 %v4094, 1.442695
    %v4297 = vpow.pop %v4296
    %v4298 = vmul.f32 %v4095, 1.442695
    %v4299 = vpow.pop %v4298
    %v4300 = vmul.f32 %v4096, 1.442695
    %v4301 = vpow.pop %v4300
    %v4302 = vmul.f32 %v4097, 1.442695
    %v4303 = vpow.pop %v4302
    %v4304 = vmul.f32 %v4098, 1.442695
    %v4305 = vpow.pop %v4304
    %v4306 = vmul.f32 %v4099, 1.442695
    %v4307 = vpow.pop %v4306
    %v4308 = vmul.f32 %v4100, 1.442695
    %v4309 = vpow.pop %v4308
    %v4310 = vmul.f32 %v4101, 1.442695
    %v4311 = vpow.pop %v4310
    %v4312 = vmul.f32 %v4102, 1.442695
    %v4313 = vpow.pop %v4312
    %v4314 = vmul.f32 %v4103, 1.442695
    %v4315 = vpow.pop %v4314
    %v4316 = vmul.f32 %v4104, 1.442695
    %v4317 = vpow.pop %v4316
    %v4318 = vmul.f32 %v4105, 1.442695
    %v4319 = vpow.pop %v4318
    %v4320 = vmul.f32 %v4106, 1.442695
    %v4321 = vpow.pop %v4320
    %v4322 = vmul.f32 %v4107, 1.442695
    %v4323 = vpow.pop %v4322
    %v4324 = vmul.f32 %v4108, 1.442695
    %v4325 = vpow.pop %v4324
    %v4326 = vmul.f32 %v4109, 1.442695
    %v4327 = vpow.pop %v4326
    %v4328 = vmul.f32 %v4110, 1.442695
    %v4329 = vpow.pop %v4328
    %v4330 = vmul.f32 %v4111, 1.442695
    %v4331 = vpow.pop %v4330
    %v4332 = vmul.f32 %v4112, 1.442695
    %v4333 = vpow.pop %v4332
    %v4334 = vmul.f32 %v4113, 1.442695
    %v4335 = vpow.pop %v4334
    %v4336 = vmul.f32 %v4114, 1.442695
    %v4337 = vpow.pop %v4336
    %v4338 = vmul.f32 %v4115, 1.442695
    %v4339 = vpow.pop %v4338
    %v4340 = vmul.f32 %v4116, 1.442695
    %v4341 = vpow.pop %v4340
    %v4342 = vmul.f32 %v4117, 1.442695
    %v4343 = vpow.pop %v4342
    %v4344 = vmul.f32 %v4118, 1.442695
    %v4345 = vpow.pop %v4344
    %v4346 = vmul.f32 %v4119, 1.442695
    %v4347 = vpow.pop %v4346
    %v4348 = vmul.f32 %v4120, 1.442695
    %v4349 = vpow.pop %v4348
    %v4350 = vmul.f32 %v4121, 1.442695
    %v4351 = vpow.pop %v4350
    %v4352 = vmul.f32 %v4122, 1.442695
    %v4353 = vpow.pop %v4352
    %v4354 = vmul.f32 %v4123, 1.442695
    %v4355 = vpow.pop %v4354
    %v4356 = vmul.f32 %v4124, 1.442695
    %v4357 = vpow.pop %v4356
    %v4358 = vmul.f32 %v4125, 1.442695
    %v4359 = vpow.pop %v4358
    %v4360 = vmul.f32 %v4126, 1.442695
    %v4361 = vpow.pop %v4360
    %v4362 = vmul.f32 %v4127, 1.442695
    %v4363 = vpow.pop %v4362
    %v4364 = vmul.f32 %v4128, 1.442695
    %v4365 = vpow.pop %v4364
    %v4366 = vmul.f32 %v4129, 1.442695
    %v4367 = vpow.pop %v4366
    %v4368 = vmul.f32 %v4130, 1.442695
    %v4369 = vpow.pop %v4368
    %v4370 = vmul.f32 %v4131, 1.442695
    %v4371 = vpow.pop %v4370
    %v4372 = vmul.f32 %v4132, 1.442695
    %v4373 = vpow.pop %v4372
    %v4374 = vmul.f32 %v4133, 1.442695
    %v4375 = vpow.pop %v4374
    %v4376 = vmul.f32 %v4134, 1.442695
    %v4377 = vpow.pop %v4376
    %v4378 = vmul.f32 %v4135, 1.442695
    %v4379 = vpow.pop %v4378
    %v4380 = vmul.f32 %v4136, 1.442695
    %v4381 = vpow.pop %v4380
    %v4382 = vmul.f32 %v4137, 1.442695
    %v4383 = vpow.pop %v4382
    %v4384 = vmul.f32 %v4138, 1.442695
    %v4385 = vpow.pop %v4384
    %v4386 = vmul.f32 %v4139, 1.442695
    %v4387 = vpow.pop %v4386
    %v4388 = vmul.f32 %v4140, 1.442695
    %v4389 = vpow.pop %v4388
    %v4390 = vmul.f32 %v4141, 1.442695
    %v4391 = vpow.pop %v4390
    %v4392 = vmul.f32 %v4142, 1.442695
    %v4393 = vpow.pop %v4392
    %v4394 = vmul.f32 %v4143, 1.442695
    %v4395 = vpow.pop %v4394
    %v4396 = vmul.f32 %v4144, 1.442695
    %v4397 = vpow.pop %v4396
    %v4398 = vmul.f32 %v4145, 1.442695
    %v4399 = vpow.pop %v4398
    %v4400 = vmul.f32 %v4146, 1.442695
    %v4401 = vpow.pop %v4400
    %v4402 = vmul.f32 %v4147, 1.442695
    %v4403 = vpow.pop %v4402
    %v4404 = vmul.f32 %v4148, 1.442695
    %v4405 = vpow.pop %v4404
    %v4406 = vmul.f32 %v4149, 1.442695
    %v4407 = vpow.pop %v4406
    %v4408 = vmul.f32 %v4150, 1.442695
    %v4409 = vpow.pop %v4408
    %v4410 = vmul.f32 %v4151, 1.442695
    %v4411 = vpow.pop %v4410
    %v4412 = vmul.f32 %v4152, 1.442695
    %v4413 = vpow.pop %v4412
    %v4414 = vmul.f32 %v4153, 1.442695
    %v4415 = vpow.pop %v4414
    %v4416 = vmul.f32 %v4154, 1.442695
    %v4417 = vpow.pop %v4416
    %v4418 = vmul.f32 %v4155, 1.442695
    %v4419 = vpow.pop %v4418
    %v4420 = vmul.f32 %v4156, 1.442695
    %v4421 = vpow.pop %v4420
    %v4422 = vmul.f32 %v4157, 1.442695
    %v4423 = vpow.pop %v4422
    %v4424 = vmul.f32 %v4158, 1.442695
    %v4425 = vpow.pop %v4424
    %v4426 = vmul.f32 %v4159, 1.442695
    %v4427 = vpow.pop %v4426
    %v4428 = vmul.f32 %v4160, 1.442695
    %v4429 = vpow.pop %v4428
    %v4430 = vmul.f32 %v4161, 1.442695
    %v4431 = vpow.pop %v4430
    %v4432 = vmul.f32 %v4162, 1.442695
    %v4433 = vpow.pop %v4432
    %v4434 = vmul.f32 %v4163, 1.442695
    %v4435 = vpow.pop %v4434
    %v4436 = vmul.f32 %v4164, 1.442695
    %v4437 = vpow.pop %v4436
    %v4438 = vmul.f32 %v4165, 1.442695
    %v4439 = vpow.pop %v4438
    %v4440 = vmul.f32 %v4166, 1.442695
    %v4441 = vpow.pop %v4440
    %v4442 = vmul.f32 %v4167, 1.442695
    %v4443 = vpow.pop %v4442
    %v4444 = vmul.f32 %v4168, 1.442695
    %v4445 = vpow.pop %v4444
    %v4446 = vmul.f32 %v4169, 1.442695
    %v4447 = vpow.pop %v4446
    %v4448 = vmul.f32 %v4170, 1.442695
    %v4449 = vpow.pop %v4448
    %v4450 = vmul.f32 %v4171, 1.442695
    %v4451 = vpow.pop %v4450
    %v4452 = vmul.f32 %v4172, 1.442695
    %v4453 = vpow.pop %v4452
    %v4454 = vmul.f32 %v4173, 1.442695
    %v4455 = vpow.pop %v4454
    %v4456 = vmul.f32 %v4174, 1.442695
    %v4457 = vpow.pop %v4456
    %v4458 = vmul.f32 %v4175, 1.442695
    %v4459 = vpow.pop %v4458
    %v4460 = vmul.f32 %v4176, 1.442695
    %v4461 = vpow.pop %v4460
    %v4462 = vmul.f32 %v4177, 1.442695
    %v4463 = vpow.pop %v4462
    %v4464 = vmul.f32 %v4178, 1.442695
    %v4465 = vpow.pop %v4464
    %v4466 = vmul.f32 %v4179, 1.442695
    %v4467 = vpow.pop %v4466
    %v4468 = vmul.f32 %v4180, 1.442695
    %v4469 = vpow.pop %v4468
    %v4470 = vmul.f32 %v4181, 1.442695
    %v4471 = vpow.pop %v4470
    %v4472 = vmul.f32 %v4182, 1.442695
    %v4473 = vpow.pop %v4472
    %v4474 = vmul.f32 %v4183, 1.442695
    %v4475 = vpow.pop %v4474
    %v4476 = vmul.f32 %v4184, 1.442695
    %v4477 = vpow.pop %v4476
    %v4478 = vmul.f32 %v4185, 1.442695
    %v4479 = vpow.pop %v4478
    %v4480 = vmul.f32 %v4186, 1.442695
    %v4481 = vpow.pop %v4480
    %v4482 = vmul.f32 %v4187, 1.442695
    %v4483 = vpow.pop %v4482
    %v4484 = vmul.f32 %v4188, 1.442695
    %v4485 = vpow.pop %v4484
    %v4486 = vmul.f32 %v4189, 1.442695
    %v4487 = vpow.pop %v4486
    %v4488 = vmul.f32 %v4190, 1.442695
    %v4489 = vpow.pop %v4488
    %v4490 = vmul.f32 %v4191, 1.442695
    %v4491 = vpow.pop %v4490
    %v4492 = vmul.f32 %v4192, 1.442695
    %v4493 = vpow.pop %v4492
    %v4494 = vmul.f32 %v4193, 1.442695
    %v4495 = vpow.pop %v4494
    %v4496 = vmul.f32 %v4194, 1.442695
    %v4497 = vpow.pop %v4496
    %v4498 = vmul.f32 %v4195, 1.442695
    %v4499 = vpow.pop %v4498
    %v4500 = vmul.f32 %v4196, 1.442695
    %v4501 = vpow.pop %v4500
    %v4502 = vmul.f32 %v4197, 1.442695
    %v4503 = vpow.pop %v4502
    %v4504 = vmul.f32 %v4198, 1.442695
    %v4505 = vpow.pop %v4504
    %v4506 = vmul.f32 %v4199, 1.442695
    %v4507 = vpow.pop %v4506
    %v4508 = vmul.f32 %v4200, 1.442695
    %v4509 = vpow.pop %v4508
    %v4510 = vmul.f32 %v4201, 1.442695
    %v4511 = vpow.pop %v4510
    %v4512 = vmul.f32 %v4202, 1.442695
    %v4513 = vpow.pop %v4512
    %v4514 = vmul.f32 %v4203, 1.442695
    %v4515 = vpow.pop %v4514
    %v4516 = vmul.f32 %v4204, 1.442695
    %v4517 = vpow.pop %v4516
    %v4518 = vmul.f32 %v4205, 1.442695
    %v4519 = vpow.pop %v4518
    %v4520 = vmul.f32 %v4206, 1.442695
    %v4521 = vpow.pop %v4520
    %v4522 = vmul.f32 %v4207, 1.442695
    %v4523 = vpow.pop %v4522
    %v4524 = vmul.f32 %v4208, 1.442695
    %v4525 = vpow.pop %v4524
    %v4526 = vmul.f32 %v4209, 1.442695
    %v4527 = vpow.pop %v4526
    %v4528 = vmul.f32 %v4210, 1.442695
    %v4529 = vpow.pop %v4528
    %v4530 = vmul.f32 %v4211, 1.442695
    %v4531 = vpow.pop %v4530
    %v4532 = vmul.f32 %v4212, 1.442695
    %v4533 = vpow.pop %v4532
    %v4534 = vmul.f32 %v4213, 1.442695
    %v4535 = vpow.pop %v4534
    %v4536 = vmul.f32 %v4214, 1.442695
    %v4537 = vpow.pop %v4536
    %v4538 = vmul.f32 %v4215, 1.442695
    %v4539 = vpow.pop %v4538
    %v4540 = vmul.f32 %v4216, 1.442695
    %v4541 = vpow.pop %v4540
    %v4542 = vmul.f32 %v4217, 1.442695
    %v4543 = vpow.pop %v4542
    %v4544 = vmul.f32 %v4218, 1.442695
    %v4545 = vpow.pop %v4544
    %v4546 = vmul.f32 %v4219, 1.442695
    %v4547 = vpow.pop %v4546
    %v4548 = vmul.f32 %v4220, 1.442695
    %v4549 = vpow.pop %v4548
    %v4550 = vmul.f32 %v4221, 1.442695
    %v4551 = vpow.pop %v4550
    %v4552 = vmul.f32 %v4222, 1.442695
    %v4553 = vpow.pop %v4552
    %v4554 = vmul.f32 %v4223, 1.442695
    %v4555 = vpow.pop %v4554
    %v4556 = vmul.f32 %v4224, 1.442695
    %v4557 = vpow.pop %v4556
    %v4558 = vmul.f32 %v4225, 1.442695
    %v4559 = vpow.pop %v4558
    %v4560 = vmul.f32 %v4226, 1.442695
    %v4561 = vpow.pop %v4560
    %v4562 = vmul.f32 %v4227, 1.442695
    %v4563 = vpow.pop %v4562
    %v4564 = vmul.f32 %v4228, 1.442695
    %v4565 = vpow.pop %v4564
    %v4566 = vmul.f32 %v4229, 1.442695
    %v4567 = vpow.pop %v4566
    %v4568 = vmul.f32 %v4230, 1.442695
    %v4569 = vpow.pop %v4568
    %v4570 = vmul.f32 %v4231, 1.442695
    %v4571 = vpow.pop %v4570
    %v4572 = vmul.f32 %v4232, 1.442695
    %v4573 = vpow.pop %v4572
    %v4574 = vmul.f32 %v4233, 1.442695
    %v4575 = vpow.pop %v4574
    %v4576 = vmul.f32 %v4234, 1.442695
    %v4577 = vpow.pop %v4576
    %v4578 = vmul.f32 %v4235, 1.442695
    %v4579 = vpow.pop %v4578
    %v4580 = vmul.f32 %v4236, 1.442695
    %v4581 = vpow.pop %v4580
    %v4582 = vmul.f32 %v4237, 1.442695
    %v4583 = vpow.pop %v4582
    %v4584 = vmul.f32 %v4238, 1.442695
    %v4585 = vpow.pop %v4584
    %v4586 = vmul.f32 %v4239, 1.442695
    %v4587 = vpow.pop %v4586
    %v4588 = vmul.f32 %v4240, 1.442695
    %v4589 = vpow.pop %v4588
    %v4590 = vmul.f32 %v4241, 1.442695
    %v4591 = vpow.pop %v4590
    %v4592 = vmul.f32 %v4242, 1.442695
    %v4593 = vpow.pop %v4592
    %v4594 = vmul.f32 %v4243, 1.442695
    %v4595 = vpow.pop %v4594
    %v4596 = vmul.f32 %v4244, 1.442695
    %v4597 = vpow.pop %v4596
    %v4598 = vmul.f32 %v4245, 1.442695
    %v4599 = vpow.pop %v4598
    %v4600 = vmul.f32 %v4246, 1.442695
    %v4601 = vpow.pop %v4600
    %v4602 = vmul.f32 %v4247, 1.442695
    %v4603 = vpow.pop %v4602
    %v4604 = vmul.f32 %v4248, 1.442695
    %v4605 = vpow.pop %v4604
    %v4606 = vmul.f32 %v4249, 1.442695
    %v4607 = vpow.pop %v4606
    %v4608 = vmul.f32 %v4250, 1.442695
    %v4609 = vpow.pop %v4608
    %v4610 = vmul.f32 %v4251, 1.442695
    %v4611 = vpow.pop %v4610
    %v4612 = vmul.f32 %v4252, 1.442695
    %v4613 = vpow.pop %v4612
    %v4614 = vmul.f32 %v4253, 1.442695
    %v4615 = vpow.pop %v4614
    %v4616 = vmul.f32 %v4254, 1.442695
    %v4617 = vpow.pop %v4616
    %v4618 = vmul.f32 %v4255, 1.442695
    %v4619 = vpow.pop %v4618
    %v4620 = vmul.f32 %v4256, 1.442695
    %v4621 = vpow.pop %v4620
    %v4622 = vmul.f32 %v4257, 1.442695
    %v4623 = vpow.pop %v4622
    %v4624 = vmul.f32 %v4258, 1.442695
    %v4625 = vpow.pop %v4624
    %v4626 = vmul.f32 %v4259, 1.442695
    %v4627 = vpow.pop %v4626
    %v4628 = vmul.f32 %v4260, 1.442695
    %v4629 = vpow.pop %v4628
    %v4630 = vmul.f32 %v4261, 1.442695
    %v4631 = vpow.pop %v4630
    %v4632 = vmul.f32 %v4262, 1.442695
    %v4633 = vpow.pop %v4632
    %v4634 = vmul.f32 %v4263, 1.442695
    %v4635 = vpow.pop %v4634
    %v4636 = vmul.f32 %v4264, 1.442695
    %v4637 = vpow.pop %v4636
    %v4638 = vmul.f32 %v4265, 1.442695
    %v4639 = vpow.pop %v4638
    %v4640 = vmul.f32 %v4266, 1.442695
    %v4641 = vpow.pop %v4640
    %v4642 = vmul.f32 %v4267, 1.442695
    %v4643 = vpow.pop %v4642
    %v4644 = vmul.f32 %v4268, 1.442695
    %v4645 = vpow.pop %v4644
    %v4646 = vmul.f32 %v4269, 1.442695
    %v4647 = vpow.pop %v4646
    %v4648 = vmul.f32 %v4270, 1.442695
    %v4649 = vpow.pop %v4648
    %v4650 = vmul.f32 %v4271, 1.442695
    %v4651 = vpow.pop %v4650
    %v4652 = vmul.f32 %v4272, 1.442695
    %v4653 = vpow.pop %v4652
    %v4654 = vmul.f32 %v4273, 1.442695
    %v4655 = vpow.pop %v4654
    %v4656 = vmul.f32 %v4274, 1.442695
    %v4657 = vpow.pop %v4656
    %v4658 = vmul.f32 %v4275, 1.442695
    %v4659 = vpow.pop %v4658
    %v4660 = vsel %vm219, %v4277, 0.0
    %4661 = vadd.xlane.f32.xlu0 %v4660
    %v4662 = vpop.xlane.xlu0 %4661
    %v4663 = vsel %vm219, %v4279, 0.0
    %4664 = vadd.xlane.f32.xlu0 %v4663
    %v4665 = vpop.xlane.xlu0 %4664
    %v4666 = vsel %vm219, %v4281, 0.0
    %4667 = vadd.xlane.f32.xlu0 %v4666
    %v4668 = vpop.xlane.xlu0 %4667
    %v4669 = vsel %vm219, %v4283, 0.0
    %4670 = vadd.xlane.f32.xlu0 %v4669
    %v4671 = vpop.xlane.xlu0 %4670
    %v4672 = vsel %vm219, %v4285, 0.0
    %4673 = vadd.xlane.f32.xlu0 %v4672
    %v4674 = vpop.xlane.xlu0 %4673
    %v4675 = vsel %vm219, %v4287, 0.0
    %4676 = vadd.xlane.f32.xlu0 %v4675
    %v4677 = vpop.xlane.xlu0 %4676
    %v4678 = vsel %vm219, %v4289, 0.0
    %4679 = vadd.xlane.f32.xlu0 %v4678
    %v4680 = vpop.xlane.xlu0 %4679
    %v4681 = vsel %vm219, %v4291, 0.0
    %4682 = vadd.xlane.f32.xlu0 %v4681
    %v4683 = vpop.xlane.xlu0 %4682
    %v4684 = vsel %vm219, %v4293, 0.0
    %4685 = vadd.xlane.f32.xlu0 %v4684
    %v4686 = vpop.xlane.xlu0 %4685
    %v4687 = vsel %vm219, %v4295, 0.0
    %4688 = vadd.xlane.f32.xlu0 %v4687
    %v4689 = vpop.xlane.xlu0 %4688
    %v4690 = vsel %vm219, %v4297, 0.0
    %4691 = vadd.xlane.f32.xlu0 %v4690
    %v4692 = vpop.xlane.xlu0 %4691
    %v4693 = vsel %vm219, %v4299, 0.0
    %4694 = vadd.xlane.f32.xlu0 %v4693
    %v4695 = vpop.xlane.xlu0 %4694
    %v4696 = vsel %vm219, %v4301, 0.0
    %4697 = vadd.xlane.f32.xlu0 %v4696
    %v4698 = vpop.xlane.xlu0 %4697
    %v4699 = vsel %vm219, %v4303, 0.0
    %4700 = vadd.xlane.f32.xlu0 %v4699
    %v4701 = vpop.xlane.xlu0 %4700
    %v4702 = vsel %vm219, %v4305, 0.0
    %4703 = vadd.xlane.f32.xlu0 %v4702
    %v4704 = vpop.xlane.xlu0 %4703
    %v4705 = vsel %vm219, %v4307, 0.0
    %4706 = vadd.xlane.f32.xlu0 %v4705
    %v4707 = vpop.xlane.xlu0 %4706
    %v4708 = vsel %vm219, %v4309, 0.0
    %4709 = vadd.xlane.f32.xlu0 %v4708
    %v4710 = vpop.xlane.xlu0 %4709
    %v4711 = vsel %vm219, %v4311, 0.0
    %4712 = vadd.xlane.f32.xlu0 %v4711
    %v4713 = vpop.xlane.xlu0 %4712
    %v4714 = vsel %vm219, %v4313, 0.0
    %4715 = vadd.xlane.f32.xlu0 %v4714
    %v4716 = vpop.xlane.xlu0 %4715
    %v4717 = vsel %vm219, %v4315, 0.0
    %4718 = vadd.xlane.f32.xlu0 %v4717
    %v4719 = vpop.xlane.xlu0 %4718
    %v4720 = vsel %vm219, %v4317, 0.0
    %4721 = vadd.xlane.f32.xlu0 %v4720
    %v4722 = vpop.xlane.xlu0 %4721
    %v4723 = vsel %vm219, %v4319, 0.0
    %4724 = vadd.xlane.f32.xlu0 %v4723
    %v4725 = vpop.xlane.xlu0 %4724
    %v4726 = vsel %vm219, %v4321, 0.0
    %4727 = vadd.xlane.f32.xlu0 %v4726
    %v4728 = vpop.xlane.xlu0 %4727
    %v4729 = vsel %vm219, %v4323, 0.0
    %4730 = vadd.xlane.f32.xlu0 %v4729
    %v4731 = vpop.xlane.xlu0 %4730
    %v4732 = vsel %vm219, %v4325, 0.0
    %4733 = vadd.xlane.f32.xlu0 %v4732
    %v4734 = vpop.xlane.xlu0 %4733
    %v4735 = vsel %vm219, %v4327, 0.0
    %4736 = vadd.xlane.f32.xlu0 %v4735
    %v4737 = vpop.xlane.xlu0 %4736
    %v4738 = vsel %vm219, %v4329, 0.0
    %4739 = vadd.xlane.f32.xlu0 %v4738
    %v4740 = vpop.xlane.xlu0 %4739
    %v4741 = vsel %vm219, %v4331, 0.0
    %4742 = vadd.xlane.f32.xlu0 %v4741
    %v4743 = vpop.xlane.xlu0 %4742
    %v4744 = vsel %vm219, %v4333, 0.0
    %4745 = vadd.xlane.f32.xlu0 %v4744
    %v4746 = vpop.xlane.xlu0 %4745
    %v4747 = vsel %vm219, %v4335, 0.0
    %4748 = vadd.xlane.f32.xlu0 %v4747
    %v4749 = vpop.xlane.xlu0 %4748
    %v4750 = vsel %vm219, %v4337, 0.0
    %4751 = vadd.xlane.f32.xlu0 %v4750
    %v4752 = vpop.xlane.xlu0 %4751
    %v4753 = vsel %vm219, %v4339, 0.0
    %4754 = vadd.xlane.f32.xlu0 %v4753
    %v4755 = vpop.xlane.xlu0 %4754
    %v4756 = vsel %vm219, %v4341, 0.0
    %4757 = vadd.xlane.f32.xlu0 %v4756
    %v4758 = vpop.xlane.xlu0 %4757
    %v4759 = vsel %vm219, %v4343, 0.0
    %4760 = vadd.xlane.f32.xlu0 %v4759
    %v4761 = vpop.xlane.xlu0 %4760
    %v4762 = vsel %vm219, %v4345, 0.0
    %4763 = vadd.xlane.f32.xlu0 %v4762
    %v4764 = vpop.xlane.xlu0 %4763
    %v4765 = vsel %vm219, %v4347, 0.0
    %4766 = vadd.xlane.f32.xlu0 %v4765
    %v4767 = vpop.xlane.xlu0 %4766
    %v4768 = vsel %vm219, %v4349, 0.0
    %4769 = vadd.xlane.f32.xlu0 %v4768
    %v4770 = vpop.xlane.xlu0 %4769
    %v4771 = vsel %vm219, %v4351, 0.0
    %4772 = vadd.xlane.f32.xlu0 %v4771
    %v4773 = vpop.xlane.xlu0 %4772
    %v4774 = vsel %vm219, %v4353, 0.0
    %4775 = vadd.xlane.f32.xlu0 %v4774
    %v4776 = vpop.xlane.xlu0 %4775
    %v4777 = vsel %vm219, %v4355, 0.0
    %4778 = vadd.xlane.f32.xlu0 %v4777
    %v4779 = vpop.xlane.xlu0 %4778
    %v4780 = vsel %vm219, %v4357, 0.0
    %4781 = vadd.xlane.f32.xlu0 %v4780
    %v4782 = vpop.xlane.xlu0 %4781
    %v4783 = vsel %vm219, %v4359, 0.0
    %4784 = vadd.xlane.f32.xlu0 %v4783
    %v4785 = vpop.xlane.xlu0 %4784
    %v4786 = vsel %vm219, %v4361, 0.0
    %4787 = vadd.xlane.f32.xlu0 %v4786
    %v4788 = vpop.xlane.xlu0 %4787
    %v4789 = vsel %vm219, %v4363, 0.0
    %4790 = vadd.xlane.f32.xlu0 %v4789
    %v4791 = vpop.xlane.xlu0 %4790
    %v4792 = vsel %vm219, %v4365, 0.0
    %4793 = vadd.xlane.f32.xlu0 %v4792
    %v4794 = vpop.xlane.xlu0 %4793
    %v4795 = vsel %vm219, %v4367, 0.0
    %4796 = vadd.xlane.f32.xlu0 %v4795
    %v4797 = vpop.xlane.xlu0 %4796
    %v4798 = vsel %vm219, %v4369, 0.0
    %4799 = vadd.xlane.f32.xlu0 %v4798
    %v4800 = vpop.xlane.xlu0 %4799
    %v4801 = vsel %vm219, %v4371, 0.0
    %4802 = vadd.xlane.f32.xlu0 %v4801
    %v4803 = vpop.xlane.xlu0 %4802
    %v4804 = vsel %vm219, %v4373, 0.0
    %4805 = vadd.xlane.f32.xlu0 %v4804
    %v4806 = vpop.xlane.xlu0 %4805
    %v4807 = vsel %vm219, %v4375, 0.0
    %4808 = vadd.xlane.f32.xlu0 %v4807
    %v4809 = vpop.xlane.xlu0 %4808
    %v4810 = vsel %vm219, %v4377, 0.0
    %4811 = vadd.xlane.f32.xlu0 %v4810
    %v4812 = vpop.xlane.xlu0 %4811
    %v4813 = vsel %vm219, %v4379, 0.0
    %4814 = vadd.xlane.f32.xlu0 %v4813
    %v4815 = vpop.xlane.xlu0 %4814
    %v4816 = vsel %vm219, %v4381, 0.0
    %4817 = vadd.xlane.f32.xlu0 %v4816
    %v4818 = vpop.xlane.xlu0 %4817
    %v4819 = vsel %vm219, %v4383, 0.0
    %4820 = vadd.xlane.f32.xlu0 %v4819
    %v4821 = vpop.xlane.xlu0 %4820
    %v4822 = vsel %vm219, %v4385, 0.0
    %4823 = vadd.xlane.f32.xlu0 %v4822
    %v4824 = vpop.xlane.xlu0 %4823
    %v4825 = vsel %vm219, %v4387, 0.0
    %4826 = vadd.xlane.f32.xlu0 %v4825
    %v4827 = vpop.xlane.xlu0 %4826
    %v4828 = vsel %vm219, %v4389, 0.0
    %4829 = vadd.xlane.f32.xlu0 %v4828
    %v4830 = vpop.xlane.xlu0 %4829
    %v4831 = vsel %vm219, %v4391, 0.0
    %4832 = vadd.xlane.f32.xlu0 %v4831
    %v4833 = vpop.xlane.xlu0 %4832
    %v4834 = vsel %vm219, %v4393, 0.0
    %4835 = vadd.xlane.f32.xlu0 %v4834
    %v4836 = vpop.xlane.xlu0 %4835
    %v4837 = vsel %vm219, %v4395, 0.0
    %4838 = vadd.xlane.f32.xlu0 %v4837
    %v4839 = vpop.xlane.xlu0 %4838
    %v4840 = vsel %vm219, %v4397, 0.0
    %4841 = vadd.xlane.f32.xlu0 %v4840
    %v4842 = vpop.xlane.xlu0 %4841
    %v4843 = vsel %vm219, %v4399, 0.0
    %4844 = vadd.xlane.f32.xlu0 %v4843
    %v4845 = vpop.xlane.xlu0 %4844
    %v4846 = vsel %vm219, %v4401, 0.0
    %4847 = vadd.xlane.f32.xlu0 %v4846
    %v4848 = vpop.xlane.xlu0 %4847
    %v4849 = vsel %vm219, %v4403, 0.0
    %4850 = vadd.xlane.f32.xlu0 %v4849
    %v4851 = vpop.xlane.xlu0 %4850
    %v4852 = vsel %vm219, %v4405, 0.0
    %4853 = vadd.xlane.f32.xlu0 %v4852
    %v4854 = vpop.xlane.xlu0 %4853
    %v4855 = vsel %vm219, %v4407, 0.0
    %4856 = vadd.xlane.f32.xlu0 %v4855
    %v4857 = vpop.xlane.xlu0 %4856
    %v4858 = vsel %vm219, %v4409, 0.0
    %4859 = vadd.xlane.f32.xlu0 %v4858
    %v4860 = vpop.xlane.xlu0 %4859
    %v4861 = vsel %vm219, %v4411, 0.0
    %4862 = vadd.xlane.f32.xlu0 %v4861
    %v4863 = vpop.xlane.xlu0 %4862
    %v4864 = vsel %vm219, %v4413, 0.0
    %4865 = vadd.xlane.f32.xlu0 %v4864
    %v4866 = vpop.xlane.xlu0 %4865
    %v4867 = vsel %vm219, %v4415, 0.0
    %4868 = vadd.xlane.f32.xlu0 %v4867
    %v4869 = vpop.xlane.xlu0 %4868
    %v4870 = vsel %vm219, %v4417, 0.0
    %4871 = vadd.xlane.f32.xlu0 %v4870
    %v4872 = vpop.xlane.xlu0 %4871
    %v4873 = vsel %vm219, %v4419, 0.0
    %4874 = vadd.xlane.f32.xlu0 %v4873
    %v4875 = vpop.xlane.xlu0 %4874
    %v4876 = vsel %vm219, %v4421, 0.0
    %4877 = vadd.xlane.f32.xlu0 %v4876
    %v4878 = vpop.xlane.xlu0 %4877
    %v4879 = vsel %vm219, %v4423, 0.0
    %4880 = vadd.xlane.f32.xlu0 %v4879
    %v4881 = vpop.xlane.xlu0 %4880
    %v4882 = vsel %vm219, %v4425, 0.0
    %4883 = vadd.xlane.f32.xlu0 %v4882
    %v4884 = vpop.xlane.xlu0 %4883
    %v4885 = vsel %vm219, %v4427, 0.0
    %4886 = vadd.xlane.f32.xlu0 %v4885
    %v4887 = vpop.xlane.xlu0 %4886
    %v4888 = vsel %vm219, %v4429, 0.0
    %4889 = vadd.xlane.f32.xlu0 %v4888
    %v4890 = vpop.xlane.xlu0 %4889
    %v4891 = vsel %vm219, %v4431, 0.0
    %4892 = vadd.xlane.f32.xlu0 %v4891
    %v4893 = vpop.xlane.xlu0 %4892
    %v4894 = vsel %vm219, %v4433, 0.0
    %4895 = vadd.xlane.f32.xlu0 %v4894
    %v4896 = vpop.xlane.xlu0 %4895
    %v4897 = vsel %vm219, %v4435, 0.0
    %4898 = vadd.xlane.f32.xlu0 %v4897
    %v4899 = vpop.xlane.xlu0 %4898
    %v4900 = vsel %vm219, %v4437, 0.0
    %4901 = vadd.xlane.f32.xlu0 %v4900
    %v4902 = vpop.xlane.xlu0 %4901
    %v4903 = vsel %vm219, %v4439, 0.0
    %4904 = vadd.xlane.f32.xlu0 %v4903
    %v4905 = vpop.xlane.xlu0 %4904
    %v4906 = vsel %vm219, %v4441, 0.0
    %4907 = vadd.xlane.f32.xlu0 %v4906
    %v4908 = vpop.xlane.xlu0 %4907
    %v4909 = vsel %vm219, %v4443, 0.0
    %4910 = vadd.xlane.f32.xlu0 %v4909
    %v4911 = vpop.xlane.xlu0 %4910
    %v4912 = vsel %vm219, %v4445, 0.0
    %4913 = vadd.xlane.f32.xlu0 %v4912
    %v4914 = vpop.xlane.xlu0 %4913
    %v4915 = vsel %vm219, %v4447, 0.0
    %4916 = vadd.xlane.f32.xlu0 %v4915
    %v4917 = vpop.xlane.xlu0 %4916
    %v4918 = vsel %vm219, %v4449, 0.0
    %4919 = vadd.xlane.f32.xlu0 %v4918
    %v4920 = vpop.xlane.xlu0 %4919
    %v4921 = vsel %vm219, %v4451, 0.0
    %4922 = vadd.xlane.f32.xlu0 %v4921
    %v4923 = vpop.xlane.xlu0 %4922
    %v4924 = vsel %vm219, %v4453, 0.0
    %4925 = vadd.xlane.f32.xlu0 %v4924
    %v4926 = vpop.xlane.xlu0 %4925
    %v4927 = vsel %vm219, %v4455, 0.0
    %4928 = vadd.xlane.f32.xlu0 %v4927
    %v4929 = vpop.xlane.xlu0 %4928
    %v4930 = vsel %vm219, %v4457, 0.0
    %4931 = vadd.xlane.f32.xlu0 %v4930
    %v4932 = vpop.xlane.xlu0 %4931
    %v4933 = vsel %vm219, %v4459, 0.0
    %4934 = vadd.xlane.f32.xlu0 %v4933
    %v4935 = vpop.xlane.xlu0 %4934
    %v4936 = vsel %vm219, %v4461, 0.0
    %4937 = vadd.xlane.f32.xlu0 %v4936
    %v4938 = vpop.xlane.xlu0 %4937
    %v4939 = vsel %vm219, %v4463, 0.0
    %4940 = vadd.xlane.f32.xlu0 %v4939
    %v4941 = vpop.xlane.xlu0 %4940
    %v4942 = vsel %vm219, %v4465, 0.0
    %4943 = vadd.xlane.f32.xlu0 %v4942
    %v4944 = vpop.xlane.xlu0 %4943
    %v4945 = vsel %vm219, %v4467, 0.0
    %4946 = vadd.xlane.f32.xlu0 %v4945
    %v4947 = vpop.xlane.xlu0 %4946
    %v4948 = vsel %vm219, %v4469, 0.0
    %4949 = vadd.xlane.f32.xlu0 %v4948
    %v4950 = vpop.xlane.xlu0 %4949
    %v4951 = vsel %vm219, %v4471, 0.0
    %4952 = vadd.xlane.f32.xlu0 %v4951
    %v4953 = vpop.xlane.xlu0 %4952
    %v4954 = vsel %vm219, %v4473, 0.0
    %4955 = vadd.xlane.f32.xlu0 %v4954
    %v4956 = vpop.xlane.xlu0 %4955
    %v4957 = vsel %vm219, %v4475, 0.0
    %4958 = vadd.xlane.f32.xlu0 %v4957
    %v4959 = vpop.xlane.xlu0 %4958
    %v4960 = vsel %vm219, %v4477, 0.0
    %4961 = vadd.xlane.f32.xlu0 %v4960
    %v4962 = vpop.xlane.xlu0 %4961
    %v4963 = vsel %vm219, %v4479, 0.0
    %4964 = vadd.xlane.f32.xlu0 %v4963
    %v4965 = vpop.xlane.xlu0 %4964
    %v4966 = vsel %vm219, %v4481, 0.0
    %4967 = vadd.xlane.f32.xlu0 %v4966
    %v4968 = vpop.xlane.xlu0 %4967
    %v4969 = vsel %vm219, %v4483, 0.0
    %4970 = vadd.xlane.f32.xlu0 %v4969
    %v4971 = vpop.xlane.xlu0 %4970
    %v4972 = vsel %vm219, %v4485, 0.0
    %4973 = vadd.xlane.f32.xlu0 %v4972
    %v4974 = vpop.xlane.xlu0 %4973
    %v4975 = vsel %vm219, %v4487, 0.0
    %4976 = vadd.xlane.f32.xlu0 %v4975
    %v4977 = vpop.xlane.xlu0 %4976
    %v4978 = vsel %vm219, %v4489, 0.0
    %4979 = vadd.xlane.f32.xlu0 %v4978
    %v4980 = vpop.xlane.xlu0 %4979
    %v4981 = vsel %vm219, %v4491, 0.0
    %4982 = vadd.xlane.f32.xlu0 %v4981
    %v4983 = vpop.xlane.xlu0 %4982
    %v4984 = vsel %vm219, %v4493, 0.0
    %4985 = vadd.xlane.f32.xlu0 %v4984
    %v4986 = vpop.xlane.xlu0 %4985
    %v4987 = vsel %vm219, %v4495, 0.0
    %4988 = vadd.xlane.f32.xlu0 %v4987
    %v4989 = vpop.xlane.xlu0 %4988
    %v4990 = vsel %vm219, %v4497, 0.0
    %4991 = vadd.xlane.f32.xlu0 %v4990
    %v4992 = vpop.xlane.xlu0 %4991
    %v4993 = vsel %vm219, %v4499, 0.0
    %4994 = vadd.xlane.f32.xlu0 %v4993
    %v4995 = vpop.xlane.xlu0 %4994
    %v4996 = vsel %vm219, %v4501, 0.0
    %4997 = vadd.xlane.f32.xlu0 %v4996
    %v4998 = vpop.xlane.xlu0 %4997
    %v4999 = vsel %vm219, %v4503, 0.0
    %5000 = vadd.xlane.f32.xlu0 %v4999
    %v5001 = vpop.xlane.xlu0 %5000
    %v5002 = vsel %vm219, %v4505, 0.0
    %5003 = vadd.xlane.f32.xlu0 %v5002
    %v5004 = vpop.xlane.xlu0 %5003
    %v5005 = vsel %vm219, %v4507, 0.0
    %5006 = vadd.xlane.f32.xlu0 %v5005
    %v5007 = vpop.xlane.xlu0 %5006
    %v5008 = vsel %vm219, %v4509, 0.0
    %5009 = vadd.xlane.f32.xlu0 %v5008
    %v5010 = vpop.xlane.xlu0 %5009
    %v5011 = vsel %vm219, %v4511, 0.0
    %5012 = vadd.xlane.f32.xlu0 %v5011
    %v5013 = vpop.xlane.xlu0 %5012
    %v5014 = vsel %vm219, %v4513, 0.0
    %5015 = vadd.xlane.f32.xlu0 %v5014
    %v5016 = vpop.xlane.xlu0 %5015
    %v5017 = vsel %vm219, %v4515, 0.0
    %5018 = vadd.xlane.f32.xlu0 %v5017
    %v5019 = vpop.xlane.xlu0 %5018
    %v5020 = vsel %vm219, %v4517, 0.0
    %5021 = vadd.xlane.f32.xlu0 %v5020
    %v5022 = vpop.xlane.xlu0 %5021
    %v5023 = vsel %vm219, %v4519, 0.0
    %5024 = vadd.xlane.f32.xlu0 %v5023
    %v5025 = vpop.xlane.xlu0 %5024
    %v5026 = vsel %vm219, %v4521, 0.0
    %5027 = vadd.xlane.f32.xlu0 %v5026
    %v5028 = vpop.xlane.xlu0 %5027
    %v5029 = vsel %vm219, %v4523, 0.0
    %5030 = vadd.xlane.f32.xlu0 %v5029
    %v5031 = vpop.xlane.xlu0 %5030
    %v5032 = vsel %vm219, %v4525, 0.0
    %5033 = vadd.xlane.f32.xlu0 %v5032
    %v5034 = vpop.xlane.xlu0 %5033
    %v5035 = vsel %vm219, %v4527, 0.0
    %5036 = vadd.xlane.f32.xlu0 %v5035
    %v5037 = vpop.xlane.xlu0 %5036
    %v5038 = vsel %vm219, %v4529, 0.0
    %5039 = vadd.xlane.f32.xlu0 %v5038
    %v5040 = vpop.xlane.xlu0 %5039
    %v5041 = vsel %vm219, %v4531, 0.0
    %5042 = vadd.xlane.f32.xlu0 %v5041
    %v5043 = vpop.xlane.xlu0 %5042
    %v5044 = vsel %vm219, %v4533, 0.0
    %5045 = vadd.xlane.f32.xlu0 %v5044
    %v5046 = vpop.xlane.xlu0 %5045
    %v5047 = vsel %vm219, %v4535, 0.0
    %5048 = vadd.xlane.f32.xlu0 %v5047
    %v5049 = vpop.xlane.xlu0 %5048
    %v5050 = vsel %vm219, %v4537, 0.0
    %5051 = vadd.xlane.f32.xlu0 %v5050
    %v5052 = vpop.xlane.xlu0 %5051
    %v5053 = vsel %vm219, %v4539, 0.0
    %5054 = vadd.xlane.f32.xlu0 %v5053
    %v5055 = vpop.xlane.xlu0 %5054
    %v5056 = vsel %vm219, %v4541, 0.0
    %5057 = vadd.xlane.f32.xlu0 %v5056
    %v5058 = vpop.xlane.xlu0 %5057
    %v5059 = vsel %vm219, %v4543, 0.0
    %5060 = vadd.xlane.f32.xlu0 %v5059
    %v5061 = vpop.xlane.xlu0 %5060
    %v5062 = vsel %vm219, %v4545, 0.0
    %5063 = vadd.xlane.f32.xlu0 %v5062
    %v5064 = vpop.xlane.xlu0 %5063
    %v5065 = vsel %vm219, %v4547, 0.0
    %5066 = vadd.xlane.f32.xlu0 %v5065
    %v5067 = vpop.xlane.xlu0 %5066
    %v5068 = vsel %vm219, %v4549, 0.0
    %5069 = vadd.xlane.f32.xlu0 %v5068
    %v5070 = vpop.xlane.xlu0 %5069
    %v5071 = vsel %vm219, %v4551, 0.0
    %5072 = vadd.xlane.f32.xlu0 %v5071
    %v5073 = vpop.xlane.xlu0 %5072
    %v5074 = vsel %vm219, %v4553, 0.0
    %5075 = vadd.xlane.f32.xlu0 %v5074
    %v5076 = vpop.xlane.xlu0 %5075
    %v5077 = vsel %vm219, %v4555, 0.0
    %5078 = vadd.xlane.f32.xlu0 %v5077
    %v5079 = vpop.xlane.xlu0 %5078
    %v5080 = vsel %vm219, %v4557, 0.0
    %5081 = vadd.xlane.f32.xlu0 %v5080
    %v5082 = vpop.xlane.xlu0 %5081
    %v5083 = vsel %vm219, %v4559, 0.0
    %5084 = vadd.xlane.f32.xlu0 %v5083
    %v5085 = vpop.xlane.xlu0 %5084
    %v5086 = vsel %vm219, %v4561, 0.0
    %5087 = vadd.xlane.f32.xlu0 %v5086
    %v5088 = vpop.xlane.xlu0 %5087
    %v5089 = vsel %vm219, %v4563, 0.0
    %5090 = vadd.xlane.f32.xlu0 %v5089
    %v5091 = vpop.xlane.xlu0 %5090
    %v5092 = vsel %vm219, %v4565, 0.0
    %5093 = vadd.xlane.f32.xlu0 %v5092
    %v5094 = vpop.xlane.xlu0 %5093
    %v5095 = vsel %vm219, %v4567, 0.0
    %5096 = vadd.xlane.f32.xlu0 %v5095
    %v5097 = vpop.xlane.xlu0 %5096
    %v5098 = vsel %vm219, %v4569, 0.0
    %5099 = vadd.xlane.f32.xlu0 %v5098
    %v5100 = vpop.xlane.xlu0 %5099
    %v5101 = vsel %vm219, %v4571, 0.0
    %5102 = vadd.xlane.f32.xlu0 %v5101
    %v5103 = vpop.xlane.xlu0 %5102
    %v5104 = vsel %vm219, %v4573, 0.0
    %5105 = vadd.xlane.f32.xlu0 %v5104
    %v5106 = vpop.xlane.xlu0 %5105
    %v5107 = vsel %vm219, %v4575, 0.0
    %5108 = vadd.xlane.f32.xlu0 %v5107
    %v5109 = vpop.xlane.xlu0 %5108
    %v5110 = vsel %vm219, %v4577, 0.0
    %5111 = vadd.xlane.f32.xlu0 %v5110
    %v5112 = vpop.xlane.xlu0 %5111
    %v5113 = vsel %vm219, %v4579, 0.0
    %5114 = vadd.xlane.f32.xlu0 %v5113
    %v5115 = vpop.xlane.xlu0 %5114
    %v5116 = vsel %vm219, %v4581, 0.0
    %5117 = vadd.xlane.f32.xlu0 %v5116
    %v5118 = vpop.xlane.xlu0 %5117
    %v5119 = vsel %vm219, %v4583, 0.0
    %5120 = vadd.xlane.f32.xlu0 %v5119
    %v5121 = vpop.xlane.xlu0 %5120
    %v5122 = vsel %vm219, %v4585, 0.0
    %5123 = vadd.xlane.f32.xlu0 %v5122
    %v5124 = vpop.xlane.xlu0 %5123
    %v5125 = vsel %vm219, %v4587, 0.0
    %5126 = vadd.xlane.f32.xlu0 %v5125
    %v5127 = vpop.xlane.xlu0 %5126
    %v5128 = vsel %vm219, %v4589, 0.0
    %5129 = vadd.xlane.f32.xlu0 %v5128
    %v5130 = vpop.xlane.xlu0 %5129
    %v5131 = vsel %vm219, %v4591, 0.0
    %5132 = vadd.xlane.f32.xlu0 %v5131
    %v5133 = vpop.xlane.xlu0 %5132
    %v5134 = vsel %vm219, %v4593, 0.0
    %5135 = vadd.xlane.f32.xlu0 %v5134
    %v5136 = vpop.xlane.xlu0 %5135
    %v5137 = vsel %vm219, %v4595, 0.0
    %5138 = vadd.xlane.f32.xlu0 %v5137
    %v5139 = vpop.xlane.xlu0 %5138
    %v5140 = vsel %vm219, %v4597, 0.0
    %5141 = vadd.xlane.f32.xlu0 %v5140
    %v5142 = vpop.xlane.xlu0 %5141
    %v5143 = vsel %vm219, %v4599, 0.0
    %5144 = vadd.xlane.f32.xlu0 %v5143
    %v5145 = vpop.xlane.xlu0 %5144
    %v5146 = vsel %vm219, %v4601, 0.0
    %5147 = vadd.xlane.f32.xlu0 %v5146
    %v5148 = vpop.xlane.xlu0 %5147
    %v5149 = vsel %vm219, %v4603, 0.0
    %5150 = vadd.xlane.f32.xlu0 %v5149
    %v5151 = vpop.xlane.xlu0 %5150
    %v5152 = vsel %vm219, %v4605, 0.0
    %5153 = vadd.xlane.f32.xlu0 %v5152
    %v5154 = vpop.xlane.xlu0 %5153
    %v5155 = vsel %vm219, %v4607, 0.0
    %5156 = vadd.xlane.f32.xlu0 %v5155
    %v5157 = vpop.xlane.xlu0 %5156
    %v5158 = vsel %vm219, %v4609, 0.0
    %5159 = vadd.xlane.f32.xlu0 %v5158
    %v5160 = vpop.xlane.xlu0 %5159
    %v5161 = vsel %vm219, %v4611, 0.0
    %5162 = vadd.xlane.f32.xlu0 %v5161
    %v5163 = vpop.xlane.xlu0 %5162
    %v5164 = vsel %vm219, %v4613, 0.0
    %5165 = vadd.xlane.f32.xlu0 %v5164
    %v5166 = vpop.xlane.xlu0 %5165
    %v5167 = vsel %vm219, %v4615, 0.0
    %5168 = vadd.xlane.f32.xlu0 %v5167
    %v5169 = vpop.xlane.xlu0 %5168
    %v5170 = vsel %vm219, %v4617, 0.0
    %5171 = vadd.xlane.f32.xlu0 %v5170
    %v5172 = vpop.xlane.xlu0 %5171
    %v5173 = vsel %vm219, %v4619, 0.0
    %5174 = vadd.xlane.f32.xlu0 %v5173
    %v5175 = vpop.xlane.xlu0 %5174
    %v5176 = vsel %vm219, %v4621, 0.0
    %5177 = vadd.xlane.f32.xlu0 %v5176
    %v5178 = vpop.xlane.xlu0 %5177
    %v5179 = vsel %vm219, %v4623, 0.0
    %5180 = vadd.xlane.f32.xlu0 %v5179
    %v5181 = vpop.xlane.xlu0 %5180
    %v5182 = vsel %vm219, %v4625, 0.0
    %5183 = vadd.xlane.f32.xlu0 %v5182
    %v5184 = vpop.xlane.xlu0 %5183
    %v5185 = vsel %vm219, %v4627, 0.0
    %5186 = vadd.xlane.f32.xlu0 %v5185
    %v5187 = vpop.xlane.xlu0 %5186
    %v5188 = vsel %vm219, %v4629, 0.0
    %5189 = vadd.xlane.f32.xlu0 %v5188
    %v5190 = vpop.xlane.xlu0 %5189
    %v5191 = vsel %vm219, %v4631, 0.0
    %5192 = vadd.xlane.f32.xlu0 %v5191
    %v5193 = vpop.xlane.xlu0 %5192
    %v5194 = vsel %vm219, %v4633, 0.0
    %5195 = vadd.xlane.f32.xlu0 %v5194
    %v5196 = vpop.xlane.xlu0 %5195
    %v5197 = vsel %vm219, %v4635, 0.0
    %5198 = vadd.xlane.f32.xlu0 %v5197
    %v5199 = vpop.xlane.xlu0 %5198
    %v5200 = vsel %vm219, %v4637, 0.0
    %5201 = vadd.xlane.f32.xlu0 %v5200
    %v5202 = vpop.xlane.xlu0 %5201
    %v5203 = vsel %vm219, %v4639, 0.0
    %5204 = vadd.xlane.f32.xlu0 %v5203
    %v5205 = vpop.xlane.xlu0 %5204
    %v5206 = vsel %vm219, %v4641, 0.0
    %5207 = vadd.xlane.f32.xlu0 %v5206
    %v5208 = vpop.xlane.xlu0 %5207
    %v5209 = vsel %vm219, %v4643, 0.0
    %5210 = vadd.xlane.f32.xlu0 %v5209
    %v5211 = vpop.xlane.xlu0 %5210
    %v5212 = vsel %vm219, %v4645, 0.0
    %5213 = vadd.xlane.f32.xlu0 %v5212
    %v5214 = vpop.xlane.xlu0 %5213
    %v5215 = vsel %vm219, %v4647, 0.0
    %5216 = vadd.xlane.f32.xlu0 %v5215
    %v5217 = vpop.xlane.xlu0 %5216
    %v5218 = vsel %vm219, %v4649, 0.0
    %5219 = vadd.xlane.f32.xlu0 %v5218
    %v5220 = vpop.xlane.xlu0 %5219
    %v5221 = vsel %vm219, %v4651, 0.0
    %5222 = vadd.xlane.f32.xlu0 %v5221
    %v5223 = vpop.xlane.xlu0 %5222
    %v5224 = vsel %vm219, %v4653, 0.0
    %5225 = vadd.xlane.f32.xlu0 %v5224
    %v5226 = vpop.xlane.xlu0 %5225
    %v5227 = vsel %vm219, %v4655, 0.0
    %5228 = vadd.xlane.f32.xlu0 %v5227
    %v5229 = vpop.xlane.xlu0 %5228
    %v5230 = vsel %vm219, %v4657, 0.0
    %5231 = vadd.xlane.f32.xlu0 %v5230
    %v5232 = vpop.xlane.xlu0 %5231
    %v5233 = vsel %vm219, %v4659, 0.0
    %5234 = vadd.xlane.f32.xlu0 %v5233
    %v5235 = vpop.xlane.xlu0 %5234
    %v5236 = vrcp.pop %v4662
    %v5237 = vrcp.pop %v4665
    %v5238 = vrcp.pop %v4668
    %v5239 = vrcp.pop %v4671
    %v5240 = vrcp.pop %v4674
    %v5241 = vrcp.pop %v4677
    %v5242 = vrcp.pop %v4680
    %v5243 = vrcp.pop %v4683
    %v5244 = vrcp.pop %v4686
    %v5245 = vrcp.pop %v4689
    %v5246 = vrcp.pop %v4692
    %v5247 = vrcp.pop %v4695
    %v5248 = vrcp.pop %v4698
    %v5249 = vrcp.pop %v4701
    %v5250 = vrcp.pop %v4704
    %v5251 = vrcp.pop %v4707
    %v5252 = vrcp.pop %v4710
    %v5253 = vrcp.pop %v4713
    %v5254 = vrcp.pop %v4716
    %v5255 = vrcp.pop %v4719
    %v5256 = vrcp.pop %v4722
    %v5257 = vrcp.pop %v4725
    %v5258 = vrcp.pop %v4728
    %v5259 = vrcp.pop %v4731
    %v5260 = vrcp.pop %v4734
    %v5261 = vrcp.pop %v4737
    %v5262 = vrcp.pop %v4740
    %v5263 = vrcp.pop %v4743
    %v5264 = vrcp.pop %v4746
    %v5265 = vrcp.pop %v4749
    %v5266 = vrcp.pop %v4752
    %v5267 = vrcp.pop %v4755
    %v5268 = vrcp.pop %v4758
    %v5269 = vrcp.pop %v4761
    %v5270 = vrcp.pop %v4764
    %v5271 = vrcp.pop %v4767
    %v5272 = vrcp.pop %v4770
    %v5273 = vrcp.pop %v4773
    %v5274 = vrcp.pop %v4776
    %v5275 = vrcp.pop %v4779
    %v5276 = vrcp.pop %v4782
    %v5277 = vrcp.pop %v4785
    %v5278 = vrcp.pop %v4788
    %v5279 = vrcp.pop %v4791
    %v5280 = vrcp.pop %v4794
    %v5281 = vrcp.pop %v4797
    %v5282 = vrcp.pop %v4800
    %v5283 = vrcp.pop %v4803
    %v5284 = vrcp.pop %v4806
    %v5285 = vrcp.pop %v4809
    %v5286 = vrcp.pop %v4812
    %v5287 = vrcp.pop %v4815
    %v5288 = vrcp.pop %v4818
    %v5289 = vrcp.pop %v4821
    %v5290 = vrcp.pop %v4824
    %v5291 = vrcp.pop %v4827
    %v5292 = vrcp.pop %v4830
    %v5293 = vrcp.pop %v4833
    %v5294 = vrcp.pop %v4836
    %v5295 = vrcp.pop %v4839
    %v5296 = vrcp.pop %v4842
    %v5297 = vrcp.pop %v4845
    %v5298 = vrcp.pop %v4848
    %v5299 = vrcp.pop %v4851
    %v5300 = vrcp.pop %v4854
    %v5301 = vrcp.pop %v4857
    %v5302 = vrcp.pop %v4860
    %v5303 = vrcp.pop %v4863
    %v5304 = vrcp.pop %v4866
    %v5305 = vrcp.pop %v4869
    %v5306 = vrcp.pop %v4872
    %v5307 = vrcp.pop %v4875
    %v5308 = vrcp.pop %v4878
    %v5309 = vrcp.pop %v4881
    %v5310 = vrcp.pop %v4884
    %v5311 = vrcp.pop %v4887
    %v5312 = vrcp.pop %v4890
    %v5313 = vrcp.pop %v4893
    %v5314 = vrcp.pop %v4896
    %v5315 = vrcp.pop %v4899
    %v5316 = vrcp.pop %v4902
    %v5317 = vrcp.pop %v4905
    %v5318 = vrcp.pop %v4908
    %v5319 = vrcp.pop %v4911
    %v5320 = vrcp.pop %v4914
    %v5321 = vrcp.pop %v4917
    %v5322 = vrcp.pop %v4920
    %v5323 = vrcp.pop %v4923
    %v5324 = vrcp.pop %v4926
    %v5325 = vrcp.pop %v4929
    %v5326 = vrcp.pop %v4932
    %v5327 = vrcp.pop %v4935
    %v5328 = vrcp.pop %v4938
    %v5329 = vrcp.pop %v4941
    %v5330 = vrcp.pop %v4944
    %v5331 = vrcp.pop %v4947
    %v5332 = vrcp.pop %v4950
    %v5333 = vrcp.pop %v4953
    %v5334 = vrcp.pop %v4956
    %v5335 = vrcp.pop %v4959
    %v5336 = vrcp.pop %v4962
    %v5337 = vrcp.pop %v4965
    %v5338 = vrcp.pop %v4968
    %v5339 = vrcp.pop %v4971
    %v5340 = vrcp.pop %v4974
    %v5341 = vrcp.pop %v4977
    %v5342 = vrcp.pop %v4980
    %v5343 = vrcp.pop %v4983
    %v5344 = vrcp.pop %v4986
    %v5345 = vrcp.pop %v4989
    %v5346 = vrcp.pop %v4992
    %v5347 = vrcp.pop %v4995
    %v5348 = vrcp.pop %v4998
    %v5349 = vrcp.pop %v5001
    %v5350 = vrcp.pop %v5004
    %v5351 = vrcp.pop %v5007
    %v5352 = vrcp.pop %v5010
    %v5353 = vrcp.pop %v5013
    %v5354 = vrcp.pop %v5016
    %v5355 = vrcp.pop %v5019
    %v5356 = vrcp.pop %v5022
    %v5357 = vrcp.pop %v5025
    %v5358 = vrcp.pop %v5028
    %v5359 = vrcp.pop %v5031
    %v5360 = vrcp.pop %v5034
    %v5361 = vrcp.pop %v5037
    %v5362 = vrcp.pop %v5040
    %v5363 = vrcp.pop %v5043
    %v5364 = vrcp.pop %v5046
    %v5365 = vrcp.pop %v5049
    %v5366 = vrcp.pop %v5052
    %v5367 = vrcp.pop %v5055
    %v5368 = vrcp.pop %v5058
    %v5369 = vrcp.pop %v5061
    %v5370 = vrcp.pop %v5064
    %v5371 = vrcp.pop %v5067
    %v5372 = vrcp.pop %v5070
    %v5373 = vrcp.pop %v5073
    %v5374 = vrcp.pop %v5076
    %v5375 = vrcp.pop %v5079
    %v5376 = vrcp.pop %v5082
    %v5377 = vrcp.pop %v5085
    %v5378 = vrcp.pop %v5088
    %v5379 = vrcp.pop %v5091
    %v5380 = vrcp.pop %v5094
    %v5381 = vrcp.pop %v5097
    %v5382 = vrcp.pop %v5100
    %v5383 = vrcp.pop %v5103
    %v5384 = vrcp.pop %v5106
    %v5385 = vrcp.pop %v5109
    %v5386 = vrcp.pop %v5112
    %v5387 = vrcp.pop %v5115
    %v5388 = vrcp.pop %v5118
    %v5389 = vrcp.pop %v5121
    %v5390 = vrcp.pop %v5124
    %v5391 = vrcp.pop %v5127
    %v5392 = vrcp.pop %v5130
    %v5393 = vrcp.pop %v5133
    %v5394 = vrcp.pop %v5136
    %v5395 = vrcp.pop %v5139
    %v5396 = vrcp.pop %v5142
    %v5397 = vrcp.pop %v5145
    %v5398 = vrcp.pop %v5148
    %v5399 = vrcp.pop %v5151
    %v5400 = vrcp.pop %v5154
    %v5401 = vrcp.pop %v5157
    %v5402 = vrcp.pop %v5160
    %v5403 = vrcp.pop %v5163
    %v5404 = vrcp.pop %v5166
    %v5405 = vrcp.pop %v5169
    %v5406 = vrcp.pop %v5172
    %v5407 = vrcp.pop %v5175
    %v5408 = vrcp.pop %v5178
    %v5409 = vrcp.pop %v5181
    %v5410 = vrcp.pop %v5184
    %v5411 = vrcp.pop %v5187
    %v5412 = vrcp.pop %v5190
    %v5413 = vrcp.pop %v5193
    %v5414 = vrcp.pop %v5196
    %v5415 = vrcp.pop %v5199
    %v5416 = vrcp.pop %v5202
    %v5417 = vrcp.pop %v5205
    %v5418 = vrcp.pop %v5208
    %v5419 = vrcp.pop %v5211
    %v5420 = vrcp.pop %v5214
    %v5421 = vrcp.pop %v5217
    %v5422 = vrcp.pop %v5220
    %v5423 = vrcp.pop %v5223
    %v5424 = vrcp.pop %v5226
    %v5425 = vrcp.pop %v5229
    %v5426 = vrcp.pop %v5232
    %v5427 = vrcp.pop %v5235
    %v5428 = vmul.f32 %v4277, %v5236
    %v5429 = vmul.f32 %v4279, %v5237
    %v5430 = vmul.f32 %v4281, %v5238
    %v5431 = vmul.f32 %v4283, %v5239
    %v5432 = vmul.f32 %v4285, %v5240
    %v5433 = vmul.f32 %v4287, %v5241
    %v5434 = vmul.f32 %v4289, %v5242
    %v5435 = vmul.f32 %v4291, %v5243
    %v5436 = vmul.f32 %v4293, %v5244
    %v5437 = vmul.f32 %v4295, %v5245
    %v5438 = vmul.f32 %v4297, %v5246
    %v5439 = vmul.f32 %v4299, %v5247
    %v5440 = vmul.f32 %v4301, %v5248
    %v5441 = vmul.f32 %v4303, %v5249
    %v5442 = vmul.f32 %v4305, %v5250
    %v5443 = vmul.f32 %v4307, %v5251
    %v5444 = vmul.f32 %v4309, %v5252
    %v5445 = vmul.f32 %v4311, %v5253
    %v5446 = vmul.f32 %v4313, %v5254
    %v5447 = vmul.f32 %v4315, %v5255
    %v5448 = vmul.f32 %v4317, %v5256
    %v5449 = vmul.f32 %v4319, %v5257
    %v5450 = vmul.f32 %v4321, %v5258
    %v5451 = vmul.f32 %v4323, %v5259
    %v5452 = vmul.f32 %v4325, %v5260
    %v5453 = vmul.f32 %v4327, %v5261
    %v5454 = vmul.f32 %v4329, %v5262
    %v5455 = vmul.f32 %v4331, %v5263
    %v5456 = vmul.f32 %v4333, %v5264
    %v5457 = vmul.f32 %v4335, %v5265
    %v5458 = vmul.f32 %v4337, %v5266
    %v5459 = vmul.f32 %v4339, %v5267
    %v5460 = vmul.f32 %v4341, %v5268
    %v5461 = vmul.f32 %v4343, %v5269
    %v5462 = vmul.f32 %v4345, %v5270
    %v5463 = vmul.f32 %v4347, %v5271
    %v5464 = vmul.f32 %v4349, %v5272
    %v5465 = vmul.f32 %v4351, %v5273
    %v5466 = vmul.f32 %v4353, %v5274
    %v5467 = vmul.f32 %v4355, %v5275
    %v5468 = vmul.f32 %v4357, %v5276
    %v5469 = vmul.f32 %v4359, %v5277
    %v5470 = vmul.f32 %v4361, %v5278
    %v5471 = vmul.f32 %v4363, %v5279
    %v5472 = vmul.f32 %v4365, %v5280
    %v5473 = vmul.f32 %v4367, %v5281
    %v5474 = vmul.f32 %v4369, %v5282
    %v5475 = vmul.f32 %v4371, %v5283
    %v5476 = vmul.f32 %v4373, %v5284
    %v5477 = vmul.f32 %v4375, %v5285
    %v5478 = vmul.f32 %v4377, %v5286
    %v5479 = vmul.f32 %v4379, %v5287
    %v5480 = vmul.f32 %v4381, %v5288
    %v5481 = vmul.f32 %v4383, %v5289
    %v5482 = vmul.f32 %v4385, %v5290
    %v5483 = vmul.f32 %v4387, %v5291
    %v5484 = vmul.f32 %v4389, %v5292
    %v5485 = vmul.f32 %v4391, %v5293
    %v5486 = vmul.f32 %v4393, %v5294
    %v5487 = vmul.f32 %v4395, %v5295
    %v5488 = vmul.f32 %v4397, %v5296
    %v5489 = vmul.f32 %v4399, %v5297
    %v5490 = vmul.f32 %v4401, %v5298
    %v5491 = vmul.f32 %v4403, %v5299
    %v5492 = vmul.f32 %v4405, %v5300
    %v5493 = vmul.f32 %v4407, %v5301
    %v5494 = vmul.f32 %v4409, %v5302
    %v5495 = vmul.f32 %v4411, %v5303
    %v5496 = vmul.f32 %v4413, %v5304
    %v5497 = vmul.f32 %v4415, %v5305
    %v5498 = vmul.f32 %v4417, %v5306
    %v5499 = vmul.f32 %v4419, %v5307
    %v5500 = vmul.f32 %v4421, %v5308
    %v5501 = vmul.f32 %v4423, %v5309
    %v5502 = vmul.f32 %v4425, %v5310
    %v5503 = vmul.f32 %v4427, %v5311
    %v5504 = vmul.f32 %v4429, %v5312
    %v5505 = vmul.f32 %v4431, %v5313
    %v5506 = vmul.f32 %v4433, %v5314
    %v5507 = vmul.f32 %v4435, %v5315
    %v5508 = vmul.f32 %v4437, %v5316
    %v5509 = vmul.f32 %v4439, %v5317
    %v5510 = vmul.f32 %v4441, %v5318
    %v5511 = vmul.f32 %v4443, %v5319
    %v5512 = vmul.f32 %v4445, %v5320
    %v5513 = vmul.f32 %v4447, %v5321
    %v5514 = vmul.f32 %v4449, %v5322
    %v5515 = vmul.f32 %v4451, %v5323
    %v5516 = vmul.f32 %v4453, %v5324
    %v5517 = vmul.f32 %v4455, %v5325
    %v5518 = vmul.f32 %v4457, %v5326
    %v5519 = vmul.f32 %v4459, %v5327
    %v5520 = vmul.f32 %v4461, %v5328
    %v5521 = vmul.f32 %v4463, %v5329
    %v5522 = vmul.f32 %v4465, %v5330
    %v5523 = vmul.f32 %v4467, %v5331
    %v5524 = vmul.f32 %v4469, %v5332
    %v5525 = vmul.f32 %v4471, %v5333
    %v5526 = vmul.f32 %v4473, %v5334
    %v5527 = vmul.f32 %v4475, %v5335
    %v5528 = vmul.f32 %v4477, %v5336
    %v5529 = vmul.f32 %v4479, %v5337
    %v5530 = vmul.f32 %v4481, %v5338
    %v5531 = vmul.f32 %v4483, %v5339
    %v5532 = vmul.f32 %v4485, %v5340
    %v5533 = vmul.f32 %v4487, %v5341
    %v5534 = vmul.f32 %v4489, %v5342
    %v5535 = vmul.f32 %v4491, %v5343
    %v5536 = vmul.f32 %v4493, %v5344
    %v5537 = vmul.f32 %v4495, %v5345
    %v5538 = vmul.f32 %v4497, %v5346
    %v5539 = vmul.f32 %v4499, %v5347
    %v5540 = vmul.f32 %v4501, %v5348
    %v5541 = vmul.f32 %v4503, %v5349
    %v5542 = vmul.f32 %v4505, %v5350
    %v5543 = vmul.f32 %v4507, %v5351
    %v5544 = vmul.f32 %v4509, %v5352
    %v5545 = vmul.f32 %v4511, %v5353
    %v5546 = vmul.f32 %v4513, %v5354
    %v5547 = vmul.f32 %v4515, %v5355
    %v5548 = vmul.f32 %v4517, %v5356
    %v5549 = vmul.f32 %v4519, %v5357
    %v5550 = vmul.f32 %v4521, %v5358
    %v5551 = vmul.f32 %v4523, %v5359
    %v5552 = vmul.f32 %v4525, %v5360
    %v5553 = vmul.f32 %v4527, %v5361
    %v5554 = vmul.f32 %v4529, %v5362
    %v5555 = vmul.f32 %v4531, %v5363
    %v5556 = vmul.f32 %v4533, %v5364
    %v5557 = vmul.f32 %v4535, %v5365
    %v5558 = vmul.f32 %v4537, %v5366
    %v5559 = vmul.f32 %v4539, %v5367
    %v5560 = vmul.f32 %v4541, %v5368
    %v5561 = vmul.f32 %v4543, %v5369
    %v5562 = vmul.f32 %v4545, %v5370
    %v5563 = vmul.f32 %v4547, %v5371
    %v5564 = vmul.f32 %v4549, %v5372
    %v5565 = vmul.f32 %v4551, %v5373
    %v5566 = vmul.f32 %v4553, %v5374
    %v5567 = vmul.f32 %v4555, %v5375
    %v5568 = vmul.f32 %v4557, %v5376
    %v5569 = vmul.f32 %v4559, %v5377
    %v5570 = vmul.f32 %v4561, %v5378
    %v5571 = vmul.f32 %v4563, %v5379
    %v5572 = vmul.f32 %v4565, %v5380
    %v5573 = vmul.f32 %v4567, %v5381
    %v5574 = vmul.f32 %v4569, %v5382
    %v5575 = vmul.f32 %v4571, %v5383
    %v5576 = vmul.f32 %v4573, %v5384
    %v5577 = vmul.f32 %v4575, %v5385
    %v5578 = vmul.f32 %v4577, %v5386
    %v5579 = vmul.f32 %v4579, %v5387
    %v5580 = vmul.f32 %v4581, %v5388
    %v5581 = vmul.f32 %v4583, %v5389
    %v5582 = vmul.f32 %v4585, %v5390
    %v5583 = vmul.f32 %v4587, %v5391
    %v5584 = vmul.f32 %v4589, %v5392
    %v5585 = vmul.f32 %v4591, %v5393
    %v5586 = vmul.f32 %v4593, %v5394
    %v5587 = vmul.f32 %v4595, %v5395
    %v5588 = vmul.f32 %v4597, %v5396
    %v5589 = vmul.f32 %v4599, %v5397
    %v5590 = vmul.f32 %v4601, %v5398
    %v5591 = vmul.f32 %v4603, %v5399
    %v5592 = vmul.f32 %v4605, %v5400
    %v5593 = vmul.f32 %v4607, %v5401
    %v5594 = vmul.f32 %v4609, %v5402
    %v5595 = vmul.f32 %v4611, %v5403
    %v5596 = vmul.f32 %v4613, %v5404
    %v5597 = vmul.f32 %v4615, %v5405
    %v5598 = vmul.f32 %v4617, %v5406
    %v5599 = vmul.f32 %v4619, %v5407
    %v5600 = vmul.f32 %v4621, %v5408
    %v5601 = vmul.f32 %v4623, %v5409
    %v5602 = vmul.f32 %v4625, %v5410
    %v5603 = vmul.f32 %v4627, %v5411
    %v5604 = vmul.f32 %v4629, %v5412
    %v5605 = vmul.f32 %v4631, %v5413
    %v5606 = vmul.f32 %v4633, %v5414
    %v5607 = vmul.f32 %v4635, %v5415
    %v5608 = vmul.f32 %v4637, %v5416
    %v5609 = vmul.f32 %v4639, %v5417
    %v5610 = vmul.f32 %v4641, %v5418
    %v5611 = vmul.f32 %v4643, %v5419
    %v5612 = vmul.f32 %v4645, %v5420
    %v5613 = vmul.f32 %v4647, %v5421
    %v5614 = vmul.f32 %v4649, %v5422
    %v5615 = vmul.f32 %v4651, %v5423
    %v5616 = vmul.f32 %v4653, %v5424
    %v5617 = vmul.f32 %v4655, %v5425
    %v5618 = vmul.f32 %v4657, %v5426
    %v5619 = vmul.f32 %v4659, %v5427
    %v5621 = vsel %vm219, %v5428, 0
    %v5624 = vsel %vm219, %v5429, 0
    %v5627 = vsel %vm219, %v5430, 0
    %v5630 = vsel %vm219, %v5431, 0
    %v5633 = vsel %vm219, %v5432, 0
    %v5636 = vsel %vm219, %v5433, 0
    %v5639 = vsel %vm219, %v5434, 0
    %v5642 = vsel %vm219, %v5435, 0
    %5644 = vmatprep.subr.mxu0 0.0
    %5645 = vmatpush1.msra.mxu0 %v27
    %5646 = vmatprep.subr.mxu0 0.0
    %5647 = vmatpush1.msra.mxu0 %v28
    %5648 = vmatprep.subr.mxu0 0.0
    %5649 = vmatpush1.msra.mxu0 %v29
    %5650 = vmatprep.subr.mxu0 0.0
    %5651 = vmatpush1.msra.mxu0 %v30
    %5652 = vmatprep.subr.mxu0 0.0
    %5653 = vmatpush1.msra.mxu0 %v31
    %5654 = vmatprep.subr.mxu0 0.0
    %5655 = vmatpush1.msra.mxu0 %v32
    %5656 = vmatprep.subr.mxu0 0.0
    %5657 = vmatpush1.msra.mxu0 %v33
    %5658 = vmatprep.subr.mxu0 0.0
    %5659 = vmatpush1.msra.mxu0 %v34
    %5660 = vmatprep.subr.mxu0 0.0
    %5661 = vmatpush1.msra.mxu0 0.0
    %5662 = vmatprep.subr.mxu0 0.0
    %5663 = vmatpush1.msra.mxu0 0.0
    %5664 = vmatprep.subr.mxu0 0.0
    %5665 = vmatpush1.msra.mxu0 0.0
    %5666 = vmatprep.subr.mxu0 0.0
    %5667 = vmatpush1.msra.mxu0 0.0
    %5668 = vmatprep.subr.mxu0 0.0
    %5669 = vmatpush1.msra.mxu0 0.0
    %5670 = vmatprep.subr.mxu0 0.0
    %5671 = vmatpush1.msra.mxu0 0.0
    %5672 = vmatprep.subr.mxu0 0.0
    %5673 = vmatpush1.msra.mxu0 0.0
    %5674 = vmatprep.subr.mxu0 0.0
    %5675 = vmatpush1.msra.mxu0 0.0
    %5676 = vmatprep.subr.mxu0 0.0
    %5677 = vmatpush1.msra.mxu0 0.0
    %5678 = vmatprep.subr.mxu0 0.0
    %5679 = vmatpush1.msra.mxu0 0.0
    %5680 = vmatprep.subr.mxu0 0.0
    %5681 = vmatpush1.msra.mxu0 0.0
    %5682 = vmatprep.subr.mxu0 0.0
    %5683 = vmatpush1.msra.mxu0 0.0
    %5684 = vmatprep.subr.mxu0 0.0
    %5685 = vmatpush1.msra.mxu0 0.0
    %5686 = vmatprep.subr.mxu0 0.0
    %5687 = vmatpush1.msra.mxu0 0.0
    %5688 = vmatprep.subr.mxu0 0.0
    %5689 = vmatpush1.msra.mxu0 0.0
    %5690 = vmatprep.subr.mxu0 0.0
    %5691 = vmatpush1.msra.mxu0 0.0
    %5692 = vmatprep.subr.mxu0 0.0
    %5693 = vmatpush1.msra.mxu0 0.0
    %5694 = vmatprep.subr.mxu0 0.0
    %5695 = vmatpush1.msra.mxu0 0.0
    %5696 = vmatprep.subr.mxu0 0.0
    %5697 = vmatpush1.msra.mxu0 0.0
    %5698 = vmatprep.subr.mxu0 0.0
    %5699 = vmatpush1.msra.mxu0 0.0
    %5700 = vmatprep.subr.mxu0 0.0
    %5701 = vmatpush1.msra.mxu0 0.0
    %5702 = vmatprep.subr.mxu0 0.0
    %5703 = vmatpush1.msra.mxu0 0.0
    %5704 = vmatprep.subr.mxu0 0.0
    %5705 = vmatpush1.msra.mxu0 0.0
    %5706 = vmatprep.subr.mxu0 0.0
    %5707 = vmatpush1.msra.mxu0 0.0
    %5708 = vmatprep.mubr.f32.mxu0 0.0
    %5709 = vmatmul.mubr.f32.gmra.mrb[0].mxu0 %v5621
    %v5710 = vpop.f32.mrb[0].mxu0
    %v5711 = vadd.f32 0.0, %v5710
    %v5712 = vpop.f32.mrb[0].mxu0
    %5713 = vmatprep.mubr.f32.mxu0 0.0
    %5714 = vmatmul.mubr.f32.gmra.mrb[0].mxu0 %v5624
    %v5715 = vpop.f32.mrb[0].mxu0
    %v5716 = vadd.f32 0.0, %v5715
    %v5717 = vpop.f32.mrb[0].mxu0
    %5718 = vmatprep.mubr.f32.mxu0 0.0
    %5719 = vmatmul.mubr.f32.gmra.mrb[0].mxu0 %v5627
    %v5720 = vpop.f32.mrb[0].mxu0
    %v5721 = vadd.f32 0.0, %v5720
    %v5722 = vpop.f32.mrb[0].mxu0
    %5723 = vmatprep.mubr.f32.mxu0 0.0
    %5724 = vmatmul.mubr.f32.gmra.mrb[0].mxu0 %v5630
    %v5725 = vpop.f32.mrb[0].mxu0
    %v5726 = vadd.f32 0.0, %v5725
    %v5727 = vpop.f32.mrb[0].mxu0
    %5728 = vmatprep.mubr.f32.mxu0 0.0
    %5729 = vmatmul.mubr.f32.gmra.mrb[0].mxu0 %v5633
    %v5730 = vpop.f32.mrb[0].mxu0
    %v5731 = vadd.f32 0.0, %v5730
    %v5732 = vpop.f32.mrb[0].mxu0
    %5733 = vmatprep.mubr.f32.mxu0 0.0
    %5734 = vmatmul.mubr.f32.gmra.mrb[0].mxu0 %v5636
    %v5735 = vpop.f32.mrb[0].mxu0
    %v5736 = vadd.f32 0.0, %v5735
    %v5737 = vpop.f32.mrb[0].mxu0
    %5738 = vmatprep.mubr.f32.mxu0 0.0
    %5739 = vmatmul.mubr.f32.gmra.mrb[0].mxu0 %v5639
    %v5740 = vpop.f32.mrb[0].mxu0
    %v5741 = vadd.f32 0.0, %v5740
    %v5742 = vpop.f32.mrb[0].mxu0
    %5743 = vmatprep.mubr.f32.mxu0 0.0
    %5744 = vmatmul.mubr.f32.gmra.mrb[0].mxu0 %v5642
    %v5745 = vpop.f32.mrb[0].mxu0
    %v5746 = vadd.f32 0.0, %v5745
    %v5747 = vpop.f32.mrb[0].mxu0
    %5748 = vdwg.mxu0
    %v5750 = vsel %vm219, %v5436, 0
    %v5753 = vsel %vm219, %v5437, 0
    %v5756 = vsel %vm219, %v5438, 0
    %v5759 = vsel %vm219, %v5439, 0
    %v5762 = vsel %vm219, %v5440, 0
    %v5765 = vsel %vm219, %v5441, 0
    %v5768 = vsel %vm219, %v5442, 0
    %v5771 = vsel %vm219, %v5443, 0
    %5773 = vmatprep.subr.mxu0 0.0
    %5774 = vmatpush1.msra.mxu0 %v35
    %5775 = vmatprep.subr.mxu0 0.0
    %5776 = vmatpush1.msra.mxu0 %v36
    %5777 = vmatprep.subr.mxu0 0.0
    %5778 = vmatpush1.msra.mxu0 %v37
    %5779 = vmatprep.subr.mxu0 0.0
    %5780 = vmatpush1.msra.mxu0 %v38
    %5781 = vmatprep.subr.mxu0 0.0
    %5782 = vmatpush1.msra.mxu0 %v39
    %5783 = vmatprep.subr.mxu0 0.0
    %5784 = vmatpush1.msra.mxu0 %v40
    %5785 = vmatprep.subr.mxu0 0.0
    %5786 = vmatpush1.msra.mxu0 %v41
    %5787 = vmatprep.subr.mxu0 0.0
    %5788 = vmatpush1.msra.mxu0 %v42
    %5789 = vmatprep.subr.mxu0 0.0
    %5790 = vmatpush1.msra.mxu0 0.0
    %5791 = vmatprep.subr.mxu0 0.0
    %5792 = vmatpush1.msra.mxu0 0.0
    %5793 = vmatprep.subr.mxu0 0.0
    %5794 = vmatpush1.msra.mxu0 0.0
    %5795 = vmatprep.subr.mxu0 0.0
    %5796 = vmatpush1.msra.mxu0 0.0
    %5797 = vmatprep.subr.mxu0 0.0
    %5798 = vmatpush1.msra.mxu0 0.0
    %5799 = vmatprep.subr.mxu0 0.0
    %5800 = vmatpush1.msra.mxu0 0.0
    %5801 = vmatprep.subr.mxu0 0.0
    %5802 = vmatpush1.msra.mxu0 0.0
    %5803 = vmatprep.subr.mxu0 0.0
    %5804 = vmatpush1.msra.mxu0 0.0
    %5805 = vmatprep.subr.mxu0 0.0
    %5806 = vmatpush1.msra.mxu0 0.0
    %5807 = vmatprep.subr.mxu0 0.0
    %5808 = vmatpush1.msra.mxu0 0.0
    %5809 = vmatprep.subr.mxu0 0.0
    %5810 = vmatpush1.msra.mxu0 0.0
    %5811 = vmatprep.subr.mxu0 0.0
    %5812 = vmatpush1.msra.mxu0 0.0
    %5813 = vmatprep.subr.mxu0 0.0
    %5814 = vmatpush1.msra.mxu0 0.0
    %5815 = vmatprep.subr.mxu0 0.0
    %5816 = vmatpush1.msra.mxu0 0.0
    %5817 = vmatprep.subr.mxu0 0.0
    %5818 = vmatpush1.msra.mxu0 0.0
    %5819 = vmatprep.subr.mxu0 0.0
    %5820 = vmatpush1.msra.mxu0 0.0
    %5821 = vmatprep.subr.mxu0 0.0
    %5822 = vmatpush1.msra.mxu0 0.0
    %5823 = vmatprep.subr.mxu0 0.0
    %5824 = vmatpush1.msra.mxu0 0.0
    %5825 = vmatprep.subr.mxu0 0.0
    %5826 = vmatpush1.msra.mxu0 0.0
    %5827 = vmatprep.subr.mxu0 0.0
    %5828 = vmatpush1.msra.mxu0 0.0
    %5829 = vmatprep.subr.mxu0 0.0
    %5830 = vmatpush1.msra.mxu0 0.0
    %5831 = vmatprep.subr.mxu0 0.0
    %5832 = vmatpush1.msra.mxu0 0.0
    %5833 = vmatprep.subr.mxu0 0.0
    %5834 = vmatpush1.msra.mxu0 0.0
    %5835 = vmatprep.subr.mxu0 0.0
    %5836 = vmatpush1.msra.mxu0 0.0
    %5837 = vmatprep.mubr.f32.mxu0 0.0
    %5838 = vmatmul.mubr.f32.gmra.mrb[0].mxu0 %v5750
    %v5839 = vpop.f32.mrb[0].mxu0
    %v5840 = vadd.f32 0.0, %v5839
    %v5841 = vpop.f32.mrb[0].mxu0
    %5842 = vmatprep.mubr.f32.mxu0 0.0
    %5843 = vmatmul.mubr.f32.gmra.mrb[0].mxu0 %v5753
    %v5844 = vpop.f32.mrb[0].mxu0
    %v5845 = vadd.f32 0.0, %v5844
    %v5846 = vpop.f32.mrb[0].mxu0
    %5847 = vmatprep.mubr.f32.mxu0 0.0
    %5848 = vmatmul.mubr.f32.gmra.mrb[0].mxu0 %v5756
    %v5849 = vpop.f32.mrb[0].mxu0
    %v5850 = vadd.f32 0.0, %v5849
    %v5851 = vpop.f32.mrb[0].mxu0
    %5852 = vmatprep.mubr.f32.mxu0 0.0
    %5853 = vmatmul.mubr.f32.gmra.mrb[0].mxu0 %v5759
    %v5854 = vpop.f32.mrb[0].mxu0
    %v5855 = vadd.f32 0.0, %v5854
    %v5856 = vpop.f32.mrb[0].mxu0
    %5857 = vmatprep.mubr.f32.mxu0 0.0
    %5858 = vmatmul.mubr.f32.gmra.mrb[0].mxu0 %v5762
    %v5859 = vpop.f32.mrb[0].mxu0
    %v5860 = vadd.f32 0.0, %v5859
    %v5861 = vpop.f32.mrb[0].mxu0
    %5862 = vmatprep.mubr.f32.mxu0 0.0
    %5863 = vmatmul.mubr.f32.gmra.mrb[0].mxu0 %v5765
    %v5864 = vpop.f32.mrb[0].mxu0
    %v5865 = vadd.f32 0.0, %v5864
    %v5866 = vpop.f32.mrb[0].mxu0
    %5867 = vmatprep.mubr.f32.mxu0 0.0
    %5868 = vmatmul.mubr.f32.gmra.mrb[0].mxu0 %v5768
    %v5869 = vpop.f32.mrb[0].mxu0
    %v5870 = vadd.f32 0.0, %v5869
    %v5871 = vpop.f32.mrb[0].mxu0
    %5872 = vmatprep.mubr.f32.mxu0 0.0
    %5873 = vmatmul.mubr.f32.gmra.mrb[0].mxu0 %v5771
    %v5874 = vpop.f32.mrb[0].mxu0
    %v5875 = vadd.f32 0.0, %v5874
    %v5876 = vpop.f32.mrb[0].mxu0
    %5877 = vdwg.mxu0
    %v5879 = vsel %vm219, %v5444, 0
    %v5882 = vsel %vm219, %v5445, 0
    %v5885 = vsel %vm219, %v5446, 0
    %v5888 = vsel %vm219, %v5447, 0
    %v5891 = vsel %vm219, %v5448, 0
    %v5894 = vsel %vm219, %v5449, 0
    %v5897 = vsel %vm219, %v5450, 0
    %v5900 = vsel %vm219, %v5451, 0
    %5902 = vmatprep.subr.mxu0 0.0
    %5903 = vmatpush1.msra.mxu0 %v43
    %5904 = vmatprep.subr.mxu0 0.0
    %5905 = vmatpush1.msra.mxu0 %v44
    %5906 = vmatprep.subr.mxu0 0.0
    %5907 = vmatpush1.msra.mxu0 %v45
    %5908 = vmatprep.subr.mxu0 0.0
    %5909 = vmatpush1.msra.mxu0 %v46
    %5910 = vmatprep.subr.mxu0 0.0
    %5911 = vmatpush1.msra.mxu0 %v47
    %5912 = vmatprep.subr.mxu0 0.0
    %5913 = vmatpush1.msra.mxu0 %v48
    %5914 = vmatprep.subr.mxu0 0.0
    %5915 = vmatpush1.msra.mxu0 %v49
    %5916 = vmatprep.subr.mxu0 0.0
    %5917 = vmatpush1.msra.mxu0 %v50
    %5918 = vmatprep.subr.mxu0 0.0
    %5919 = vmatpush1.msra.mxu0 0.0
    %5920 = vmatprep.subr.mxu0 0.0
    %5921 = vmatpush1.msra.mxu0 0.0
    %5922 = vmatprep.subr.mxu0 0.0
    %5923 = vmatpush1.msra.mxu0 0.0
    %5924 = vmatprep.subr.mxu0 0.0
    %5925 = vmatpush1.msra.mxu0 0.0
    %5926 = vmatprep.subr.mxu0 0.0
    %5927 = vmatpush1.msra.mxu0 0.0
    %5928 = vmatprep.subr.mxu0 0.0
    %5929 = vmatpush1.msra.mxu0 0.0
    %5930 = vmatprep.subr.mxu0 0.0
    %5931 = vmatpush1.msra.mxu0 0.0
    %5932 = vmatprep.subr.mxu0 0.0
    %5933 = vmatpush1.msra.mxu0 0.0
    %5934 = vmatprep.subr.mxu0 0.0
    %5935 = vmatpush1.msra.mxu0 0.0
    %5936 = vmatprep.subr.mxu0 0.0
    %5937 = vmatpush1.msra.mxu0 0.0
    %5938 = vmatprep.subr.mxu0 0.0
    %5939 = vmatpush1.msra.mxu0 0.0
    %5940 = vmatprep.subr.mxu0 0.0
    %5941 = vmatpush1.msra.mxu0 0.0
    %5942 = vmatprep.subr.mxu0 0.0
    %5943 = vmatpush1.msra.mxu0 0.0
    %5944 = vmatprep.subr.mxu0 0.0
    %5945 = vmatpush1.msra.mxu0 0.0
    %5946 = vmatprep.subr.mxu0 0.0
    %5947 = vmatpush1.msra.mxu0 0.0
    %5948 = vmatprep.subr.mxu0 0.0
    %5949 = vmatpush1.msra.mxu0 0.0
    %5950 = vmatprep.subr.mxu0 0.0
    %5951 = vmatpush1.msra.mxu0 0.0
    %5952 = vmatprep.subr.mxu0 0.0
    %5953 = vmatpush1.msra.mxu0 0.0
    %5954 = vmatprep.subr.mxu0 0.0
    %5955 = vmatpush1.msra.mxu0 0.0
    %5956 = vmatprep.subr.mxu0 0.0
    %5957 = vmatpush1.msra.mxu0 0.0
    %5958 = vmatprep.subr.mxu0 0.0
    %5959 = vmatpush1.msra.mxu0 0.0
    %5960 = vmatprep.subr.mxu0 0.0
    %5961 = vmatpush1.msra.mxu0 0.0
    %5962 = vmatprep.subr.mxu0 0.0
    %5963 = vmatpush1.msra.mxu0 0.0
    %5964 = vmatprep.subr.mxu0 0.0
    %5965 = vmatpush1.msra.mxu0 0.0
    %5966 = vmatprep.mubr.f32.mxu0 0.0
    %5967 = vmatmul.mubr.f32.gmra.mrb[0].mxu0 %v5879
    %v5968 = vpop.f32.mrb[0].mxu0
    %v5969 = vadd.f32 0.0, %v5968
    %v5970 = vpop.f32.mrb[0].mxu0
    %5971 = vmatprep.mubr.f32.mxu0 0.0
    %5972 = vmatmul.mubr.f32.gmra.mrb[0].mxu0 %v5882
    %v5973 = vpop.f32.mrb[0].mxu0
    %v5974 = vadd.f32 0.0, %v5973
    %v5975 = vpop.f32.mrb[0].mxu0
    %5976 = vmatprep.mubr.f32.mxu0 0.0
    %5977 = vmatmul.mubr.f32.gmra.mrb[0].mxu0 %v5885
    %v5978 = vpop.f32.mrb[0].mxu0
    %v5979 = vadd.f32 0.0, %v5978
    %v5980 = vpop.f32.mrb[0].mxu0
    %5981 = vmatprep.mubr.f32.mxu0 0.0
    %5982 = vmatmul.mubr.f32.gmra.mrb[0].mxu0 %v5888
    %v5983 = vpop.f32.mrb[0].mxu0
    %v5984 = vadd.f32 0.0, %v5983
    %v5985 = vpop.f32.mrb[0].mxu0
    %5986 = vmatprep.mubr.f32.mxu0 0.0
    %5987 = vmatmul.mubr.f32.gmra.mrb[0].mxu0 %v5891
    %v5988 = vpop.f32.mrb[0].mxu0
    %v5989 = vadd.f32 0.0, %v5988
    %v5990 = vpop.f32.mrb[0].mxu0
    %5991 = vmatprep.mubr.f32.mxu0 0.0
    %5992 = vmatmul.mubr.f32.gmra.mrb[0].mxu0 %v5894
    %v5993 = vpop.f32.mrb[0].mxu0
    %v5994 = vadd.f32 0.0, %v5993
    %v5995 = vpop.f32.mrb[0].mxu0
    %5996 = vmatprep.mubr.f32.mxu0 0.0
    %5997 = vmatmul.mubr.f32.gmra.mrb[0].mxu0 %v5897
    %v5998 = vpop.f32.mrb[0].mxu0
    %v5999 = vadd.f32 0.0, %v5998
    %v6000 = vpop.f32.mrb[0].mxu0
    %6001 = vmatprep.mubr.f32.mxu0 0.0
    %6002 = vmatmul.mubr.f32.gmra.mrb[0].mxu0 %v5900
    %v6003 = vpop.f32.mrb[0].mxu0
    %v6004 = vadd.f32 0.0, %v6003
    %v6005 = vpop.f32.mrb[0].mxu0
    %6006 = vdwg.mxu0
    %v6008 = vsel %vm219, %v5452, 0
    %v6011 = vsel %vm219, %v5453, 0
    %v6014 = vsel %vm219, %v5454, 0
    %v6017 = vsel %vm219, %v5455, 0
    %v6020 = vsel %vm219, %v5456, 0
    %v6023 = vsel %vm219, %v5457, 0
    %v6026 = vsel %vm219, %v5458, 0
    %v6029 = vsel %vm219, %v5459, 0
    %6031 = vmatprep.subr.mxu0 0.0
    %6032 = vmatpush1.msra.mxu0 %v51
    %6033 = vmatprep.subr.mxu0 0.0
    %6034 = vmatpush1.msra.mxu0 %v52
    %6035 = vmatprep.subr.mxu0 0.0
    %6036 = vmatpush1.msra.mxu0 %v53
    %6037 = vmatprep.subr.mxu0 0.0
    %6038 = vmatpush1.msra.mxu0 %v54
    %6039 = vmatprep.subr.mxu0 0.0
    %6040 = vmatpush1.msra.mxu0 %v55
    %6041 = vmatprep.subr.mxu0 0.0
    %6042 = vmatpush1.msra.mxu0 %v56
    %6043 = vmatprep.subr.mxu0 0.0
    %6044 = vmatpush1.msra.mxu0 %v57
    %6045 = vmatprep.subr.mxu0 0.0
    %6046 = vmatpush1.msra.mxu0 %v58
    %6047 = vmatprep.subr.mxu0 0.0
    %6048 = vmatpush1.msra.mxu0 0.0
    %6049 = vmatprep.subr.mxu0 0.0
    %6050 = vmatpush1.msra.mxu0 0.0
    %6051 = vmatprep.subr.mxu0 0.0
    %6052 = vmatpush1.msra.mxu0 0.0
    %6053 = vmatprep.subr.mxu0 0.0
    %6054 = vmatpush1.msra.mxu0 0.0
    %6055 = vmatprep.subr.mxu0 0.0
    %6056 = vmatpush1.msra.mxu0 0.0
    %6057 = vmatprep.subr.mxu0 0.0
    %6058 = vmatpush1.msra.mxu0 0.0
    %6059 = vmatprep.subr.mxu0 0.0
    %6060 = vmatpush1.msra.mxu0 0.0
    %6061 = vmatprep.subr.mxu0 0.0
    %6062 = vmatpush1.msra.mxu0 0.0
    %6063 = vmatprep.subr.mxu0 0.0
    %6064 = vmatpush1.msra.mxu0 0.0
    %6065 = vmatprep.subr.mxu0 0.0
    %6066 = vmatpush1.msra.mxu0 0.0
    %6067 = vmatprep.subr.mxu0 0.0
    %6068 = vmatpush1.msra.mxu0 0.0
    %6069 = vmatprep.subr.mxu0 0.0
    %6070 = vmatpush1.msra.mxu0 0.0
    %6071 = vmatprep.subr.mxu0 0.0
    %6072 = vmatpush1.msra.mxu0 0.0
    %6073 = vmatprep.subr.mxu0 0.0
    %6074 = vmatpush1.msra.mxu0 0.0
    %6075 = vmatprep.subr.mxu0 0.0
    %6076 = vmatpush1.msra.mxu0 0.0
    %6077 = vmatprep.subr.mxu0 0.0
    %6078 = vmatpush1.msra.mxu0 0.0
    %6079 = vmatprep.subr.mxu0 0.0
    %6080 = vmatpush1.msra.mxu0 0.0
    %6081 = vmatprep.subr.mxu0 0.0
    %6082 = vmatpush1.msra.mxu0 0.0
    %6083 = vmatprep.subr.mxu0 0.0
    %6084 = vmatpush1.msra.mxu0 0.0
    %6085 = vmatprep.subr.mxu0 0.0
    %6086 = vmatpush1.msra.mxu0 0.0
    %6087 = vmatprep.subr.mxu0 0.0
    %6088 = vmatpush1.msra.mxu0 0.0
    %6089 = vmatprep.subr.mxu0 0.0
    %6090 = vmatpush1.msra.mxu0 0.0
    %6091 = vmatprep.subr.mxu0 0.0
    %6092 = vmatpush1.msra.mxu0 0.0
    %6093 = vmatprep.subr.mxu0 0.0
    %6094 = vmatpush1.msra.mxu0 0.0
    %6095 = vmatprep.mubr.f32.mxu0 0.0
    %6096 = vmatmul.mubr.f32.gmra.mrb[0].mxu0 %v6008
    %v6097 = vpop.f32.mrb[0].mxu0
    %v6098 = vadd.f32 0.0, %v6097
    %v6099 = vpop.f32.mrb[0].mxu0
    %6100 = vmatprep.mubr.f32.mxu0 0.0
    %6101 = vmatmul.mubr.f32.gmra.mrb[0].mxu0 %v6011
    %v6102 = vpop.f32.mrb[0].mxu0
    %v6103 = vadd.f32 0.0, %v6102
    %v6104 = vpop.f32.mrb[0].mxu0
    %6105 = vmatprep.mubr.f32.mxu0 0.0
    %6106 = vmatmul.mubr.f32.gmra.mrb[0].mxu0 %v6014
    %v6107 = vpop.f32.mrb[0].mxu0
    %v6108 = vadd.f32 0.0, %v6107
    %v6109 = vpop.f32.mrb[0].mxu0
    %6110 = vmatprep.mubr.f32.mxu0 0.0
    %6111 = vmatmul.mubr.f32.gmra.mrb[0].mxu0 %v6017
    %v6112 = vpop.f32.mrb[0].mxu0
    %v6113 = vadd.f32 0.0, %v6112
    %v6114 = vpop.f32.mrb[0].mxu0
    %6115 = vmatprep.mubr.f32.mxu0 0.0
    %6116 = vmatmul.mubr.f32.gmra.mrb[0].mxu0 %v6020
    %v6117 = vpop.f32.mrb[0].mxu0
    %v6118 = vadd.f32 0.0, %v6117
    %v6119 = vpop.f32.mrb[0].mxu0
    %6120 = vmatprep.mubr.f32.mxu0 0.0
    %6121 = vmatmul.mubr.f32.gmra.mrb[0].mxu0 %v6023
    %v6122 = vpop.f32.mrb[0].mxu0
    %v6123 = vadd.f32 0.0, %v6122
    %v6124 = vpop.f32.mrb[0].mxu0
    %6125 = vmatprep.mubr.f32.mxu0 0.0
    %6126 = vmatmul.mubr.f32.gmra.mrb[0].mxu0 %v6026
    %v6127 = vpop.f32.mrb[0].mxu0
    %v6128 = vadd.f32 0.0, %v6127
    %v6129 = vpop.f32.mrb[0].mxu0
    %6130 = vmatprep.mubr.f32.mxu0 0.0
    %6131 = vmatmul.mubr.f32.gmra.mrb[0].mxu0 %v6029
    %v6132 = vpop.f32.mrb[0].mxu0
    %v6133 = vadd.f32 0.0, %v6132
    %v6134 = vpop.f32.mrb[0].mxu0
    %6135 = vdwg.mxu0
    %v6137 = vsel %vm219, %v5460, 0
    %v6140 = vsel %vm219, %v5461, 0
    %v6143 = vsel %vm219, %v5462, 0
    %v6146 = vsel %vm219, %v5463, 0
    %v6149 = vsel %vm219, %v5464, 0
    %v6152 = vsel %vm219, %v5465, 0
    %v6155 = vsel %vm219, %v5466, 0
    %v6158 = vsel %vm219, %v5467, 0
    %6160 = vmatprep.subr.mxu0 0.0
    %6161 = vmatpush1.msra.mxu0 %v59
    %6162 = vmatprep.subr.mxu0 0.0
    %6163 = vmatpush1.msra.mxu0 %v60
    %6164 = vmatprep.subr.mxu0 0.0
    %6165 = vmatpush1.msra.mxu0 %v61
    %6166 = vmatprep.subr.mxu0 0.0
    %6167 = vmatpush1.msra.mxu0 %v62
    %6168 = vmatprep.subr.mxu0 0.0
    %6169 = vmatpush1.msra.mxu0 %v63
    %6170 = vmatprep.subr.mxu0 0.0
    %6171 = vmatpush1.msra.mxu0 %v64
    %6172 = vmatprep.subr.mxu0 0.0
    %6173 = vmatpush1.msra.mxu0 %v65
    %6174 = vmatprep.subr.mxu0 0.0
    %6175 = vmatpush1.msra.mxu0 %v66
    %6176 = vmatprep.subr.mxu0 0.0
    %6177 = vmatpush1.msra.mxu0 0.0
    %6178 = vmatprep.subr.mxu0 0.0
    %6179 = vmatpush1.msra.mxu0 0.0
    %6180 = vmatprep.subr.mxu0 0.0
    %6181 = vmatpush1.msra.mxu0 0.0
    %6182 = vmatprep.subr.mxu0 0.0
    %6183 = vmatpush1.msra.mxu0 0.0
    %6184 = vmatprep.subr.mxu0 0.0
    %6185 = vmatpush1.msra.mxu0 0.0
    %6186 = vmatprep.subr.mxu0 0.0
    %6187 = vmatpush1.msra.mxu0 0.0
    %6188 = vmatprep.subr.mxu0 0.0
    %6189 = vmatpush1.msra.mxu0 0.0
    %6190 = vmatprep.subr.mxu0 0.0
    %6191 = vmatpush1.msra.mxu0 0.0
    %6192 = vmatprep.subr.mxu0 0.0
    %6193 = vmatpush1.msra.mxu0 0.0
    %6194 = vmatprep.subr.mxu0 0.0
    %6195 = vmatpush1.msra.mxu0 0.0
    %6196 = vmatprep.subr.mxu0 0.0
    %6197 = vmatpush1.msra.mxu0 0.0
    %6198 = vmatprep.subr.mxu0 0.0
    %6199 = vmatpush1.msra.mxu0 0.0
    %6200 = vmatprep.subr.mxu0 0.0
    %6201 = vmatpush1.msra.mxu0 0.0
    %6202 = vmatprep.subr.mxu0 0.0
    %6203 = vmatpush1.msra.mxu0 0.0
    %6204 = vmatprep.subr.mxu0 0.0
    %6205 = vmatpush1.msra.mxu0 0.0
    %6206 = vmatprep.subr.mxu0 0.0
    %6207 = vmatpush1.msra.mxu0 0.0
    %6208 = vmatprep.subr.mxu0 0.0
    %6209 = vmatpush1.msra.mxu0 0.0
    %6210 = vmatprep.subr.mxu0 0.0
    %6211 = vmatpush1.msra.mxu0 0.0
    %6212 = vmatprep.subr.mxu0 0.0
    %6213 = vmatpush1.msra.mxu0 0.0
    %6214 = vmatprep.subr.mxu0 0.0
    %6215 = vmatpush1.msra.mxu0 0.0
    %6216 = vmatprep.subr.mxu0 0.0
    %6217 = vmatpush1.msra.mxu0 0.0
    %6218 = vmatprep.subr.mxu0 0.0
    %6219 = vmatpush1.msra.mxu0 0.0
    %6220 = vmatprep.subr.mxu0 0.0
    %6221 = vmatpush1.msra.mxu0 0.0
    %6222 = vmatprep.subr.mxu0 0.0
    %6223 = vmatpush1.msra.mxu0 0.0
    %6224 = vmatprep.mubr.f32.mxu0 0.0
    %6225 = vmatmul.mubr.f32.gmra.mrb[0].mxu0 %v6137
    %v6226 = vpop.f32.mrb[0].mxu0
    %v6227 = vadd.f32 0.0, %v6226
    %v6228 = vpop.f32.mrb[0].mxu0
    %6229 = vmatprep.mubr.f32.mxu0 0.0
    %6230 = vmatmul.mubr.f32.gmra.mrb[0].mxu0 %v6140
    %v6231 = vpop.f32.mrb[0].mxu0
    %v6232 = vadd.f32 0.0, %v6231
    %v6233 = vpop.f32.mrb[0].mxu0
    %6234 = vmatprep.mubr.f32.mxu0 0.0
    %6235 = vmatmul.mubr.f32.gmra.mrb[0].mxu0 %v6143
    %v6236 = vpop.f32.mrb[0].mxu0
    %v6237 = vadd.f32 0.0, %v6236
    %v6238 = vpop.f32.mrb[0].mxu0
    %6239 = vmatprep.mubr.f32.mxu0 0.0
    %6240 = vmatmul.mubr.f32.gmra.mrb[0].mxu0 %v6146
    %v6241 = vpop.f32.mrb[0].mxu0
    %v6242 = vadd.f32 0.0, %v6241
    %v6243 = vpop.f32.mrb[0].mxu0
    %6244 = vmatprep.mubr.f32.mxu0 0.0
    %6245 = vmatmul.mubr.f32.gmra.mrb[0].mxu0 %v6149
    %v6246 = vpop.f32.mrb[0].mxu0
    %v6247 = vadd.f32 0.0, %v6246
    %v6248 = vpop.f32.mrb[0].mxu0
    %6249 = vmatprep.mubr.f32.mxu0 0.0
    %6250 = vmatmul.mubr.f32.gmra.mrb[0].mxu0 %v6152
    %v6251 = vpop.f32.mrb[0].mxu0
    %v6252 = vadd.f32 0.0, %v6251
    %v6253 = vpop.f32.mrb[0].mxu0
    %6254 = vmatprep.mubr.f32.mxu0 0.0
    %6255 = vmatmul.mubr.f32.gmra.mrb[0].mxu0 %v6155
    %v6256 = vpop.f32.mrb[0].mxu0
    %v6257 = vadd.f32 0.0, %v6256
    %v6258 = vpop.f32.mrb[0].mxu0
    %6259 = vmatprep.mubr.f32.mxu0 0.0
    %6260 = vmatmul.mubr.f32.gmra.mrb[0].mxu0 %v6158
    %v6261 = vpop.f32.mrb[0].mxu0
    %v6262 = vadd.f32 0.0, %v6261
    %v6263 = vpop.f32.mrb[0].mxu0
    %6264 = vdwg.mxu0
    %v6266 = vsel %vm219, %v5468, 0
    %v6269 = vsel %vm219, %v5469, 0
    %v6272 = vsel %vm219, %v5470, 0
    %v6275 = vsel %vm219, %v5471, 0
    %v6278 = vsel %vm219, %v5472, 0
    %v6281 = vsel %vm219, %v5473, 0
    %v6284 = vsel %vm219, %v5474, 0
    %v6287 = vsel %vm219, %v5475, 0
    %6289 = vmatprep.subr.mxu0 0.0
    %6290 = vmatpush1.msra.mxu0 %v67
    %6291 = vmatprep.subr.mxu0 0.0
    %6292 = vmatpush1.msra.mxu0 %v68
    %6293 = vmatprep.subr.mxu0 0.0
    %6294 = vmatpush1.msra.mxu0 %v69
    %6295 = vmatprep.subr.mxu0 0.0
    %6296 = vmatpush1.msra.mxu0 %v70
    %6297 = vmatprep.subr.mxu0 0.0
    %6298 = vmatpush1.msra.mxu0 %v71
    %6299 = vmatprep.subr.mxu0 0.0
    %6300 = vmatpush1.msra.mxu0 %v72
    %6301 = vmatprep.subr.mxu0 0.0
    %6302 = vmatpush1.msra.mxu0 %v73
    %6303 = vmatprep.subr.mxu0 0.0
    %6304 = vmatpush1.msra.mxu0 %v74
    %6305 = vmatprep.subr.mxu0 0.0
    %6306 = vmatpush1.msra.mxu0 0.0
    %6307 = vmatprep.subr.mxu0 0.0
    %6308 = vmatpush1.msra.mxu0 0.0
    %6309 = vmatprep.subr.mxu0 0.0
    %6310 = vmatpush1.msra.mxu0 0.0
    %6311 = vmatprep.subr.mxu0 0.0
    %6312 = vmatpush1.msra.mxu0 0.0
    %6313 = vmatprep.subr.mxu0 0.0
    %6314 = vmatpush1.msra.mxu0 0.0
    %6315 = vmatprep.subr.mxu0 0.0
    %6316 = vmatpush1.msra.mxu0 0.0
    %6317 = vmatprep.subr.mxu0 0.0
    %6318 = vmatpush1.msra.mxu0 0.0
    %6319 = vmatprep.subr.mxu0 0.0
    %6320 = vmatpush1.msra.mxu0 0.0
    %6321 = vmatprep.subr.mxu0 0.0
    %6322 = vmatpush1.msra.mxu0 0.0
    %6323 = vmatprep.subr.mxu0 0.0
    %6324 = vmatpush1.msra.mxu0 0.0
    %6325 = vmatprep.subr.mxu0 0.0
    %6326 = vmatpush1.msra.mxu0 0.0
    %6327 = vmatprep.subr.mxu0 0.0
    %6328 = vmatpush1.msra.mxu0 0.0
    %6329 = vmatprep.subr.mxu0 0.0
    %6330 = vmatpush1.msra.mxu0 0.0
    %6331 = vmatprep.subr.mxu0 0.0
    %6332 = vmatpush1.msra.mxu0 0.0
    %6333 = vmatprep.subr.mxu0 0.0
    %6334 = vmatpush1.msra.mxu0 0.0
    %6335 = vmatprep.subr.mxu0 0.0
    %6336 = vmatpush1.msra.mxu0 0.0
    %6337 = vmatprep.subr.mxu0 0.0
    %6338 = vmatpush1.msra.mxu0 0.0
    %6339 = vmatprep.subr.mxu0 0.0
    %6340 = vmatpush1.msra.mxu0 0.0
    %6341 = vmatprep.subr.mxu0 0.0
    %6342 = vmatpush1.msra.mxu0 0.0
    %6343 = vmatprep.subr.mxu0 0.0
    %6344 = vmatpush1.msra.mxu0 0.0
    %6345 = vmatprep.subr.mxu0 0.0
    %6346 = vmatpush1.msra.mxu0 0.0
    %6347 = vmatprep.subr.mxu0 0.0
    %6348 = vmatpush1.msra.mxu0 0.0
    %6349 = vmatprep.subr.mxu0 0.0
    %6350 = vmatpush1.msra.mxu0 0.0
    %6351 = vmatprep.subr.mxu0 0.0
    %6352 = vmatpush1.msra.mxu0 0.0
    %6353 = vmatprep.mubr.f32.mxu0 0.0
    %6354 = vmatmul.mubr.f32.gmra.mrb[0].mxu0 %v6266
    %v6355 = vpop.f32.mrb[0].mxu0
    %v6356 = vadd.f32 0.0, %v6355
    %v6357 = vpop.f32.mrb[0].mxu0
    %6358 = vmatprep.mubr.f32.mxu0 0.0
    %6359 = vmatmul.mubr.f32.gmra.mrb[0].mxu0 %v6269
    %v6360 = vpop.f32.mrb[0].mxu0
    %v6361 = vadd.f32 0.0, %v6360
    %v6362 = vpop.f32.mrb[0].mxu0
    %6363 = vmatprep.mubr.f32.mxu0 0.0
    %6364 = vmatmul.mubr.f32.gmra.mrb[0].mxu0 %v6272
    %v6365 = vpop.f32.mrb[0].mxu0
    %v6366 = vadd.f32 0.0, %v6365
    %v6367 = vpop.f32.mrb[0].mxu0
    %6368 = vmatprep.mubr.f32.mxu0 0.0
    %6369 = vmatmul.mubr.f32.gmra.mrb[0].mxu0 %v6275
    %v6370 = vpop.f32.mrb[0].mxu0
    %v6371 = vadd.f32 0.0, %v6370
    %v6372 = vpop.f32.mrb[0].mxu0
    %6373 = vmatprep.mubr.f32.mxu0 0.0
    %6374 = vmatmul.mubr.f32.gmra.mrb[0].mxu0 %v6278
    %v6375 = vpop.f32.mrb[0].mxu0
    %v6376 = vadd.f32 0.0, %v6375
    %v6377 = vpop.f32.mrb[0].mxu0
    %6378 = vmatprep.mubr.f32.mxu0 0.0
    %6379 = vmatmul.mubr.f32.gmra.mrb[0].mxu0 %v6281
    %v6380 = vpop.f32.mrb[0].mxu0
    %v6381 = vadd.f32 0.0, %v6380
    %v6382 = vpop.f32.mrb[0].mxu0
    %6383 = vmatprep.mubr.f32.mxu0 0.0
    %6384 = vmatmul.mubr.f32.gmra.mrb[0].mxu0 %v6284
    %v6385 = vpop.f32.mrb[0].mxu0
    %v6386 = vadd.f32 0.0, %v6385
    %v6387 = vpop.f32.mrb[0].mxu0
    %6388 = vmatprep.mubr.f32.mxu0 0.0
    %6389 = vmatmul.mubr.f32.gmra.mrb[0].mxu0 %v6287
    %v6390 = vpop.f32.mrb[0].mxu0
    %v6391 = vadd.f32 0.0, %v6390
    %v6392 = vpop.f32.mrb[0].mxu0
    %6393 = vdwg.mxu0
    %v6395 = vsel %vm219, %v5476, 0
    %v6398 = vsel %vm219, %v5477, 0
    %v6401 = vsel %vm219, %v5478, 0
    %v6404 = vsel %vm219, %v5479, 0
    %v6407 = vsel %vm219, %v5480, 0
    %v6410 = vsel %vm219, %v5481, 0
    %v6413 = vsel %vm219, %v5482, 0
    %v6416 = vsel %vm219, %v5483, 0
    %6418 = vmatprep.subr.mxu0 0.0
    %6419 = vmatpush1.msra.mxu0 %v75
    %6420 = vmatprep.subr.mxu0 0.0
    %6421 = vmatpush1.msra.mxu0 %v76
    %6422 = vmatprep.subr.mxu0 0.0
    %6423 = vmatpush1.msra.mxu0 %v77
    %6424 = vmatprep.subr.mxu0 0.0
    %6425 = vmatpush1.msra.mxu0 %v78
    %6426 = vmatprep.subr.mxu0 0.0
    %6427 = vmatpush1.msra.mxu0 %v79
    %6428 = vmatprep.subr.mxu0 0.0
    %6429 = vmatpush1.msra.mxu0 %v80
    %6430 = vmatprep.subr.mxu0 0.0
    %6431 = vmatpush1.msra.mxu0 %v81
    %6432 = vmatprep.subr.mxu0 0.0
    %6433 = vmatpush1.msra.mxu0 %v82
    %6434 = vmatprep.subr.mxu0 0.0
    %6435 = vmatpush1.msra.mxu0 0.0
    %6436 = vmatprep.subr.mxu0 0.0
    %6437 = vmatpush1.msra.mxu0 0.0
    %6438 = vmatprep.subr.mxu0 0.0
    %6439 = vmatpush1.msra.mxu0 0.0
    %6440 = vmatprep.subr.mxu0 0.0
    %6441 = vmatpush1.msra.mxu0 0.0
    %6442 = vmatprep.subr.mxu0 0.0
    %6443 = vmatpush1.msra.mxu0 0.0
    %6444 = vmatprep.subr.mxu0 0.0
    %6445 = vmatpush1.msra.mxu0 0.0
    %6446 = vmatprep.subr.mxu0 0.0
    %6447 = vmatpush1.msra.mxu0 0.0
    %6448 = vmatprep.subr.mxu0 0.0
    %6449 = vmatpush1.msra.mxu0 0.0
    %6450 = vmatprep.subr.mxu0 0.0
    %6451 = vmatpush1.msra.mxu0 0.0
    %6452 = vmatprep.subr.mxu0 0.0
    %6453 = vmatpush1.msra.mxu0 0.0
    %6454 = vmatprep.subr.mxu0 0.0
    %6455 = vmatpush1.msra.mxu0 0.0
    %6456 = vmatprep.subr.mxu0 0.0
    %6457 = vmatpush1.msra.mxu0 0.0
    %6458 = vmatprep.subr.mxu0 0.0
    %6459 = vmatpush1.msra.mxu0 0.0
    %6460 = vmatprep.subr.mxu0 0.0
    %6461 = vmatpush1.msra.mxu0 0.0
    %6462 = vmatprep.subr.mxu0 0.0
    %6463 = vmatpush1.msra.mxu0 0.0
    %6464 = vmatprep.subr.mxu0 0.0
    %6465 = vmatpush1.msra.mxu0 0.0
    %6466 = vmatprep.subr.mxu0 0.0
    %6467 = vmatpush1.msra.mxu0 0.0
    %6468 = vmatprep.subr.mxu0 0.0
    %6469 = vmatpush1.msra.mxu0 0.0
    %6470 = vmatprep.subr.mxu0 0.0
    %6471 = vmatpush1.msra.mxu0 0.0
    %6472 = vmatprep.subr.mxu0 0.0
    %6473 = vmatpush1.msra.mxu0 0.0
    %6474 = vmatprep.subr.mxu0 0.0
    %6475 = vmatpush1.msra.mxu0 0.0
    %6476 = vmatprep.subr.mxu0 0.0
    %6477 = vmatpush1.msra.mxu0 0.0
    %6478 = vmatprep.subr.mxu0 0.0
    %6479 = vmatpush1.msra.mxu0 0.0
    %6480 = vmatprep.subr.mxu0 0.0
    %6481 = vmatpush1.msra.mxu0 0.0
    %6482 = vmatprep.mubr.f32.mxu0 0.0
    %6483 = vmatmul.mubr.f32.gmra.mrb[0].mxu0 %v6395
    %v6484 = vpop.f32.mrb[0].mxu0
    %v6485 = vadd.f32 0.0, %v6484
    %v6486 = vpop.f32.mrb[0].mxu0
    %6487 = vmatprep.mubr.f32.mxu0 0.0
    %6488 = vmatmul.mubr.f32.gmra.mrb[0].mxu0 %v6398
    %v6489 = vpop.f32.mrb[0].mxu0
    %v6490 = vadd.f32 0.0, %v6489
    %v6491 = vpop.f32.mrb[0].mxu0
    %6492 = vmatprep.mubr.f32.mxu0 0.0
    %6493 = vmatmul.mubr.f32.gmra.mrb[0].mxu0 %v6401
    %v6494 = vpop.f32.mrb[0].mxu0
    %v6495 = vadd.f32 0.0, %v6494
    %v6496 = vpop.f32.mrb[0].mxu0
    %6497 = vmatprep.mubr.f32.mxu0 0.0
    %6498 = vmatmul.mubr.f32.gmra.mrb[0].mxu0 %v6404
    %v6499 = vpop.f32.mrb[0].mxu0
    %v6500 = vadd.f32 0.0, %v6499
    %v6501 = vpop.f32.mrb[0].mxu0
    %6502 = vmatprep.mubr.f32.mxu0 0.0
    %6503 = vmatmul.mubr.f32.gmra.mrb[0].mxu0 %v6407
    %v6504 = vpop.f32.mrb[0].mxu0
    %v6505 = vadd.f32 0.0, %v6504
    %v6506 = vpop.f32.mrb[0].mxu0
    %6507 = vmatprep.mubr.f32.mxu0 0.0
    %6508 = vmatmul.mubr.f32.gmra.mrb[0].mxu0 %v6410
    %v6509 = vpop.f32.mrb[0].mxu0
    %v6510 = vadd.f32 0.0, %v6509
    %v6511 = vpop.f32.mrb[0].mxu0
    %6512 = vmatprep.mubr.f32.mxu0 0.0
    %6513 = vmatmul.mubr.f32.gmra.mrb[0].mxu0 %v6413
    %v6514 = vpop.f32.mrb[0].mxu0
    %v6515 = vadd.f32 0.0, %v6514
    %v6516 = vpop.f32.mrb[0].mxu0
    %6517 = vmatprep.mubr.f32.mxu0 0.0
    %6518 = vmatmul.mubr.f32.gmra.mrb[0].mxu0 %v6416
    %v6519 = vpop.f32.mrb[0].mxu0
    %v6520 = vadd.f32 0.0, %v6519
    %v6521 = vpop.f32.mrb[0].mxu0
    %6522 = vdwg.mxu0
    %v6524 = vsel %vm219, %v5484, 0
    %v6527 = vsel %vm219, %v5485, 0
    %v6530 = vsel %vm219, %v5486, 0
    %v6533 = vsel %vm219, %v5487, 0
    %v6536 = vsel %vm219, %v5488, 0
    %v6539 = vsel %vm219, %v5489, 0
    %v6542 = vsel %vm219, %v5490, 0
    %v6545 = vsel %vm219, %v5491, 0
    %6547 = vmatprep.subr.mxu0 0.0
    %6548 = vmatpush1.msra.mxu0 %v83
    %6549 = vmatprep.subr.mxu0 0.0
    %6550 = vmatpush1.msra.mxu0 %v84
    %6551 = vmatprep.subr.mxu0 0.0
    %6552 = vmatpush1.msra.mxu0 %v85
    %6553 = vmatprep.subr.mxu0 0.0
    %6554 = vmatpush1.msra.mxu0 %v86
    %6555 = vmatprep.subr.mxu0 0.0
    %6556 = vmatpush1.msra.mxu0 %v87
    %6557 = vmatprep.subr.mxu0 0.0
    %6558 = vmatpush1.msra.mxu0 %v88
    %6559 = vmatprep.subr.mxu0 0.0
    %6560 = vmatpush1.msra.mxu0 %v89
    %6561 = vmatprep.subr.mxu0 0.0
    %6562 = vmatpush1.msra.mxu0 %v90
    %6563 = vmatprep.subr.mxu0 0.0
    %6564 = vmatpush1.msra.mxu0 0.0
    %6565 = vmatprep.subr.mxu0 0.0
    %6566 = vmatpush1.msra.mxu0 0.0
    %6567 = vmatprep.subr.mxu0 0.0
    %6568 = vmatpush1.msra.mxu0 0.0
    %6569 = vmatprep.subr.mxu0 0.0
    %6570 = vmatpush1.msra.mxu0 0.0
    %6571 = vmatprep.subr.mxu0 0.0
    %6572 = vmatpush1.msra.mxu0 0.0
    %6573 = vmatprep.subr.mxu0 0.0
    %6574 = vmatpush1.msra.mxu0 0.0
    %6575 = vmatprep.subr.mxu0 0.0
    %6576 = vmatpush1.msra.mxu0 0.0
    %6577 = vmatprep.subr.mxu0 0.0
    %6578 = vmatpush1.msra.mxu0 0.0
    %6579 = vmatprep.subr.mxu0 0.0
    %6580 = vmatpush1.msra.mxu0 0.0
    %6581 = vmatprep.subr.mxu0 0.0
    %6582 = vmatpush1.msra.mxu0 0.0
    %6583 = vmatprep.subr.mxu0 0.0
    %6584 = vmatpush1.msra.mxu0 0.0
    %6585 = vmatprep.subr.mxu0 0.0
    %6586 = vmatpush1.msra.mxu0 0.0
    %6587 = vmatprep.subr.mxu0 0.0
    %6588 = vmatpush1.msra.mxu0 0.0
    %6589 = vmatprep.subr.mxu0 0.0
    %6590 = vmatpush1.msra.mxu0 0.0
    %6591 = vmatprep.subr.mxu0 0.0
    %6592 = vmatpush1.msra.mxu0 0.0
    %6593 = vmatprep.subr.mxu0 0.0
    %6594 = vmatpush1.msra.mxu0 0.0
    %6595 = vmatprep.subr.mxu0 0.0
    %6596 = vmatpush1.msra.mxu0 0.0
    %6597 = vmatprep.subr.mxu0 0.0
    %6598 = vmatpush1.msra.mxu0 0.0
    %6599 = vmatprep.subr.mxu0 0.0
    %6600 = vmatpush1.msra.mxu0 0.0
    %6601 = vmatprep.subr.mxu0 0.0
    %6602 = vmatpush1.msra.mxu0 0.0
    %6603 = vmatprep.subr.mxu0 0.0
    %6604 = vmatpush1.msra.mxu0 0.0
    %6605 = vmatprep.subr.mxu0 0.0
    %6606 = vmatpush1.msra.mxu0 0.0
    %6607 = vmatprep.subr.mxu0 0.0
    %6608 = vmatpush1.msra.mxu0 0.0
    %6609 = vmatprep.subr.mxu0 0.0
    %6610 = vmatpush1.msra.mxu0 0.0
    %6611 = vmatprep.mubr.f32.mxu0 0.0
    %6612 = vmatmul.mubr.f32.gmra.mrb[0].mxu0 %v6524
    %v6613 = vpop.f32.mrb[0].mxu0
    %v6614 = vadd.f32 0.0, %v6613
    %v6615 = vpop.f32.mrb[0].mxu0
    %6616 = vmatprep.mubr.f32.mxu0 0.0
    %6617 = vmatmul.mubr.f32.gmra.mrb[0].mxu0 %v6527
    %v6618 = vpop.f32.mrb[0].mxu0
    %v6619 = vadd.f32 0.0, %v6618
    %v6620 = vpop.f32.mrb[0].mxu0
    %6621 = vmatprep.mubr.f32.mxu0 0.0
    %6622 = vmatmul.mubr.f32.gmra.mrb[0].mxu0 %v6530
    %v6623 = vpop.f32.mrb[0].mxu0
    %v6624 = vadd.f32 0.0, %v6623
    %v6625 = vpop.f32.mrb[0].mxu0
    %6626 = vmatprep.mubr.f32.mxu0 0.0
    %6627 = vmatmul.mubr.f32.gmra.mrb[0].mxu0 %v6533
    %v6628 = vpop.f32.mrb[0].mxu0
    %v6629 = vadd.f32 0.0, %v6628
    %v6630 = vpop.f32.mrb[0].mxu0
    %6631 = vmatprep.mubr.f32.mxu0 0.0
    %6632 = vmatmul.mubr.f32.gmra.mrb[0].mxu0 %v6536
    %v6633 = vpop.f32.mrb[0].mxu0
    %v6634 = vadd.f32 0.0, %v6633
    %v6635 = vpop.f32.mrb[0].mxu0
    %6636 = vmatprep.mubr.f32.mxu0 0.0
    %6637 = vmatmul.mubr.f32.gmra.mrb[0].mxu0 %v6539
    %v6638 = vpop.f32.mrb[0].mxu0
    %v6639 = vadd.f32 0.0, %v6638
    %v6640 = vpop.f32.mrb[0].mxu0
    %6641 = vmatprep.mubr.f32.mxu0 0.0
    %6642 = vmatmul.mubr.f32.gmra.mrb[0].mxu0 %v6542
    %v6643 = vpop.f32.mrb[0].mxu0
    %v6644 = vadd.f32 0.0, %v6643
    %v6645 = vpop.f32.mrb[0].mxu0
    %6646 = vmatprep.mubr.f32.mxu0 0.0
    %6647 = vmatmul.mubr.f32.gmra.mrb[0].mxu0 %v6545
    %v6648 = vpop.f32.mrb[0].mxu0
    %v6649 = vadd.f32 0.0, %v6648
    %v6650 = vpop.f32.mrb[0].mxu0
    %6651 = vdwg.mxu0
    %v6653 = vsel %vm219, %v5492, 0
    %v6656 = vsel %vm219, %v5493, 0
    %v6659 = vsel %vm219, %v5494, 0
    %v6662 = vsel %vm219, %v5495, 0
    %v6665 = vsel %vm219, %v5496, 0
    %v6668 = vsel %vm219, %v5497, 0
    %v6671 = vsel %vm219, %v5498, 0
    %v6674 = vsel %vm219, %v5499, 0
    %6676 = vmatprep.subr.mxu0 0.0
    %6677 = vmatpush1.msra.mxu0 %v91
    %6678 = vmatprep.subr.mxu0 0.0
    %6679 = vmatpush1.msra.mxu0 %v92
    %6680 = vmatprep.subr.mxu0 0.0
    %6681 = vmatpush1.msra.mxu0 %v93
    %6682 = vmatprep.subr.mxu0 0.0
    %6683 = vmatpush1.msra.mxu0 %v94
    %6684 = vmatprep.subr.mxu0 0.0
    %6685 = vmatpush1.msra.mxu0 %v95
    %6686 = vmatprep.subr.mxu0 0.0
    %6687 = vmatpush1.msra.mxu0 %v96
    %6688 = vmatprep.subr.mxu0 0.0
    %6689 = vmatpush1.msra.mxu0 %v97
    %6690 = vmatprep.subr.mxu0 0.0
    %6691 = vmatpush1.msra.mxu0 %v98
    %6692 = vmatprep.subr.mxu0 0.0
    %6693 = vmatpush1.msra.mxu0 0.0
    %6694 = vmatprep.subr.mxu0 0.0
    %6695 = vmatpush1.msra.mxu0 0.0
    %6696 = vmatprep.subr.mxu0 0.0
    %6697 = vmatpush1.msra.mxu0 0.0
    %6698 = vmatprep.subr.mxu0 0.0
    %6699 = vmatpush1.msra.mxu0 0.0
    %6700 = vmatprep.subr.mxu0 0.0
    %6701 = vmatpush1.msra.mxu0 0.0
    %6702 = vmatprep.subr.mxu0 0.0
    %6703 = vmatpush1.msra.mxu0 0.0
    %6704 = vmatprep.subr.mxu0 0.0
    %6705 = vmatpush1.msra.mxu0 0.0
    %6706 = vmatprep.subr.mxu0 0.0
    %6707 = vmatpush1.msra.mxu0 0.0
    %6708 = vmatprep.subr.mxu0 0.0
    %6709 = vmatpush1.msra.mxu0 0.0
    %6710 = vmatprep.subr.mxu0 0.0
    %6711 = vmatpush1.msra.mxu0 0.0
    %6712 = vmatprep.subr.mxu0 0.0
    %6713 = vmatpush1.msra.mxu0 0.0
    %6714 = vmatprep.subr.mxu0 0.0
    %6715 = vmatpush1.msra.mxu0 0.0
    %6716 = vmatprep.subr.mxu0 0.0
    %6717 = vmatpush1.msra.mxu0 0.0
    %6718 = vmatprep.subr.mxu0 0.0
    %6719 = vmatpush1.msra.mxu0 0.0
    %6720 = vmatprep.subr.mxu0 0.0
    %6721 = vmatpush1.msra.mxu0 0.0
    %6722 = vmatprep.subr.mxu0 0.0
    %6723 = vmatpush1.msra.mxu0 0.0
    %6724 = vmatprep.subr.mxu0 0.0
    %6725 = vmatpush1.msra.mxu0 0.0
    %6726 = vmatprep.subr.mxu0 0.0
    %6727 = vmatpush1.msra.mxu0 0.0
    %6728 = vmatprep.subr.mxu0 0.0
    %6729 = vmatpush1.msra.mxu0 0.0
    %6730 = vmatprep.subr.mxu0 0.0
    %6731 = vmatpush1.msra.mxu0 0.0
    %6732 = vmatprep.subr.mxu0 0.0
    %6733 = vmatpush1.msra.mxu0 0.0
    %6734 = vmatprep.subr.mxu0 0.0
    %6735 = vmatpush1.msra.mxu0 0.0
    %6736 = vmatprep.subr.mxu0 0.0
    %6737 = vmatpush1.msra.mxu0 0.0
    %6738 = vmatprep.subr.mxu0 0.0
    %6739 = vmatpush1.msra.mxu0 0.0
    %6740 = vmatprep.mubr.f32.mxu0 0.0
    %6741 = vmatmul.mubr.f32.gmra.mrb[0].mxu0 %v6653
    %v6742 = vpop.f32.mrb[0].mxu0
    %v6743 = vadd.f32 0.0, %v6742
    %v6744 = vpop.f32.mrb[0].mxu0
    %6745 = vmatprep.mubr.f32.mxu0 0.0
    %6746 = vmatmul.mubr.f32.gmra.mrb[0].mxu0 %v6656
    %v6747 = vpop.f32.mrb[0].mxu0
    %v6748 = vadd.f32 0.0, %v6747
    %v6749 = vpop.f32.mrb[0].mxu0
    %6750 = vmatprep.mubr.f32.mxu0 0.0
    %6751 = vmatmul.mubr.f32.gmra.mrb[0].mxu0 %v6659
    %v6752 = vpop.f32.mrb[0].mxu0
    %v6753 = vadd.f32 0.0, %v6752
    %v6754 = vpop.f32.mrb[0].mxu0
    %6755 = vmatprep.mubr.f32.mxu0 0.0
    %6756 = vmatmul.mubr.f32.gmra.mrb[0].mxu0 %v6662
    %v6757 = vpop.f32.mrb[0].mxu0
    %v6758 = vadd.f32 0.0, %v6757
    %v6759 = vpop.f32.mrb[0].mxu0
    %6760 = vmatprep.mubr.f32.mxu0 0.0
    %6761 = vmatmul.mubr.f32.gmra.mrb[0].mxu0 %v6665
    %v6762 = vpop.f32.mrb[0].mxu0
    %v6763 = vadd.f32 0.0, %v6762
    %v6764 = vpop.f32.mrb[0].mxu0
    %6765 = vmatprep.mubr.f32.mxu0 0.0
    %6766 = vmatmul.mubr.f32.gmra.mrb[0].mxu0 %v6668
    %v6767 = vpop.f32.mrb[0].mxu0
    %v6768 = vadd.f32 0.0, %v6767
    %v6769 = vpop.f32.mrb[0].mxu0
    %6770 = vmatprep.mubr.f32.mxu0 0.0
    %6771 = vmatmul.mubr.f32.gmra.mrb[0].mxu0 %v6671
    %v6772 = vpop.f32.mrb[0].mxu0
    %v6773 = vadd.f32 0.0, %v6772
    %v6774 = vpop.f32.mrb[0].mxu0
    %6775 = vmatprep.mubr.f32.mxu0 0.0
    %6776 = vmatmul.mubr.f32.gmra.mrb[0].mxu0 %v6674
    %v6777 = vpop.f32.mrb[0].mxu0
    %v6778 = vadd.f32 0.0, %v6777
    %v6779 = vpop.f32.mrb[0].mxu0
    %6780 = vdwg.mxu0
    %v6782 = vsel %vm219, %v5500, 0
    %v6785 = vsel %vm219, %v5501, 0
    %v6788 = vsel %vm219, %v5502, 0
    %v6791 = vsel %vm219, %v5503, 0
    %v6794 = vsel %vm219, %v5504, 0
    %v6797 = vsel %vm219, %v5505, 0
    %v6800 = vsel %vm219, %v5506, 0
    %v6803 = vsel %vm219, %v5507, 0
    %6805 = vmatprep.subr.mxu0 0.0
    %6806 = vmatpush1.msra.mxu0 %v99
    %6807 = vmatprep.subr.mxu0 0.0
    %6808 = vmatpush1.msra.mxu0 %v100
    %6809 = vmatprep.subr.mxu0 0.0
    %6810 = vmatpush1.msra.mxu0 %v101
    %6811 = vmatprep.subr.mxu0 0.0
    %6812 = vmatpush1.msra.mxu0 %v102
    %6813 = vmatprep.subr.mxu0 0.0
    %6814 = vmatpush1.msra.mxu0 %v103
    %6815 = vmatprep.subr.mxu0 0.0
    %6816 = vmatpush1.msra.mxu0 %v104
    %6817 = vmatprep.subr.mxu0 0.0
    %6818 = vmatpush1.msra.mxu0 %v105
    %6819 = vmatprep.subr.mxu0 0.0
    %6820 = vmatpush1.msra.mxu0 %v106
    %6821 = vmatprep.subr.mxu0 0.0
    %6822 = vmatpush1.msra.mxu0 0.0
    %6823 = vmatprep.subr.mxu0 0.0
    %6824 = vmatpush1.msra.mxu0 0.0
    %6825 = vmatprep.subr.mxu0 0.0
    %6826 = vmatpush1.msra.mxu0 0.0
    %6827 = vmatprep.subr.mxu0 0.0
    %6828 = vmatpush1.msra.mxu0 0.0
    %6829 = vmatprep.subr.mxu0 0.0
    %6830 = vmatpush1.msra.mxu0 0.0
    %6831 = vmatprep.subr.mxu0 0.0
    %6832 = vmatpush1.msra.mxu0 0.0
    %6833 = vmatprep.subr.mxu0 0.0
    %6834 = vmatpush1.msra.mxu0 0.0
    %6835 = vmatprep.subr.mxu0 0.0
    %6836 = vmatpush1.msra.mxu0 0.0
    %6837 = vmatprep.subr.mxu0 0.0
    %6838 = vmatpush1.msra.mxu0 0.0
    %6839 = vmatprep.subr.mxu0 0.0
    %6840 = vmatpush1.msra.mxu0 0.0
    %6841 = vmatprep.subr.mxu0 0.0
    %6842 = vmatpush1.msra.mxu0 0.0
    %6843 = vmatprep.subr.mxu0 0.0
    %6844 = vmatpush1.msra.mxu0 0.0
    %6845 = vmatprep.subr.mxu0 0.0
    %6846 = vmatpush1.msra.mxu0 0.0
    %6847 = vmatprep.subr.mxu0 0.0
    %6848 = vmatpush1.msra.mxu0 0.0
    %6849 = vmatprep.subr.mxu0 0.0
    %6850 = vmatpush1.msra.mxu0 0.0
    %6851 = vmatprep.subr.mxu0 0.0
    %6852 = vmatpush1.msra.mxu0 0.0
    %6853 = vmatprep.subr.mxu0 0.0
    %6854 = vmatpush1.msra.mxu0 0.0
    %6855 = vmatprep.subr.mxu0 0.0
    %6856 = vmatpush1.msra.mxu0 0.0
    %6857 = vmatprep.subr.mxu0 0.0
    %6858 = vmatpush1.msra.mxu0 0.0
    %6859 = vmatprep.subr.mxu0 0.0
    %6860 = vmatpush1.msra.mxu0 0.0
    %6861 = vmatprep.subr.mxu0 0.0
    %6862 = vmatpush1.msra.mxu0 0.0
    %6863 = vmatprep.subr.mxu0 0.0
    %6864 = vmatpush1.msra.mxu0 0.0
    %6865 = vmatprep.subr.mxu0 0.0
    %6866 = vmatpush1.msra.mxu0 0.0
    %6867 = vmatprep.subr.mxu0 0.0
    %6868 = vmatpush1.msra.mxu0 0.0
    %6869 = vmatprep.mubr.f32.mxu0 0.0
    %6870 = vmatmul.mubr.f32.gmra.mrb[0].mxu0 %v6782
    %v6871 = vpop.f32.mrb[0].mxu0
    %v6872 = vadd.f32 0.0, %v6871
    %v6873 = vpop.f32.mrb[0].mxu0
    %6874 = vmatprep.mubr.f32.mxu0 0.0
    %6875 = vmatmul.mubr.f32.gmra.mrb[0].mxu0 %v6785
    %v6876 = vpop.f32.mrb[0].mxu0
    %v6877 = vadd.f32 0.0, %v6876
    %v6878 = vpop.f32.mrb[0].mxu0
    %6879 = vmatprep.mubr.f32.mxu0 0.0
    %6880 = vmatmul.mubr.f32.gmra.mrb[0].mxu0 %v6788
    %v6881 = vpop.f32.mrb[0].mxu0
    %v6882 = vadd.f32 0.0, %v6881
    %v6883 = vpop.f32.mrb[0].mxu0
    %6884 = vmatprep.mubr.f32.mxu0 0.0
    %6885 = vmatmul.mubr.f32.gmra.mrb[0].mxu0 %v6791
    %v6886 = vpop.f32.mrb[0].mxu0
    %v6887 = vadd.f32 0.0, %v6886
    %v6888 = vpop.f32.mrb[0].mxu0
    %6889 = vmatprep.mubr.f32.mxu0 0.0
    %6890 = vmatmul.mubr.f32.gmra.mrb[0].mxu0 %v6794
    %v6891 = vpop.f32.mrb[0].mxu0
    %v6892 = vadd.f32 0.0, %v6891
    %v6893 = vpop.f32.mrb[0].mxu0
    %6894 = vmatprep.mubr.f32.mxu0 0.0
    %6895 = vmatmul.mubr.f32.gmra.mrb[0].mxu0 %v6797
    %v6896 = vpop.f32.mrb[0].mxu0
    %v6897 = vadd.f32 0.0, %v6896
    %v6898 = vpop.f32.mrb[0].mxu0
    %6899 = vmatprep.mubr.f32.mxu0 0.0
    %6900 = vmatmul.mubr.f32.gmra.mrb[0].mxu0 %v6800
    %v6901 = vpop.f32.mrb[0].mxu0
    %v6902 = vadd.f32 0.0, %v6901
    %v6903 = vpop.f32.mrb[0].mxu0
    %6904 = vmatprep.mubr.f32.mxu0 0.0
    %6905 = vmatmul.mubr.f32.gmra.mrb[0].mxu0 %v6803
    %v6906 = vpop.f32.mrb[0].mxu0
    %v6907 = vadd.f32 0.0, %v6906
    %v6908 = vpop.f32.mrb[0].mxu0
    %6909 = vdwg.mxu0
    %v6911 = vsel %vm219, %v5508, 0
    %v6914 = vsel %vm219, %v5509, 0
    %v6917 = vsel %vm219, %v5510, 0
    %v6920 = vsel %vm219, %v5511, 0
    %v6923 = vsel %vm219, %v5512, 0
    %v6926 = vsel %vm219, %v5513, 0
    %v6929 = vsel %vm219, %v5514, 0
    %v6932 = vsel %vm219, %v5515, 0
    %6934 = vmatprep.subr.mxu0 0.0
    %6935 = vmatpush1.msra.mxu0 %v107
    %6936 = vmatprep.subr.mxu0 0.0
    %6937 = vmatpush1.msra.mxu0 %v108
    %6938 = vmatprep.subr.mxu0 0.0
    %6939 = vmatpush1.msra.mxu0 %v109
    %6940 = vmatprep.subr.mxu0 0.0
    %6941 = vmatpush1.msra.mxu0 %v110
    %6942 = vmatprep.subr.mxu0 0.0
    %6943 = vmatpush1.msra.mxu0 %v111
    %6944 = vmatprep.subr.mxu0 0.0
    %6945 = vmatpush1.msra.mxu0 %v112
    %6946 = vmatprep.subr.mxu0 0.0
    %6947 = vmatpush1.msra.mxu0 %v113
    %6948 = vmatprep.subr.mxu0 0.0
    %6949 = vmatpush1.msra.mxu0 %v114
    %6950 = vmatprep.subr.mxu0 0.0
    %6951 = vmatpush1.msra.mxu0 0.0
    %6952 = vmatprep.subr.mxu0 0.0
    %6953 = vmatpush1.msra.mxu0 0.0
    %6954 = vmatprep.subr.mxu0 0.0
    %6955 = vmatpush1.msra.mxu0 0.0
    %6956 = vmatprep.subr.mxu0 0.0
    %6957 = vmatpush1.msra.mxu0 0.0
    %6958 = vmatprep.subr.mxu0 0.0
    %6959 = vmatpush1.msra.mxu0 0.0
    %6960 = vmatprep.subr.mxu0 0.0
    %6961 = vmatpush1.msra.mxu0 0.0
    %6962 = vmatprep.subr.mxu0 0.0
    %6963 = vmatpush1.msra.mxu0 0.0
    %6964 = vmatprep.subr.mxu0 0.0
    %6965 = vmatpush1.msra.mxu0 0.0
    %6966 = vmatprep.subr.mxu0 0.0
    %6967 = vmatpush1.msra.mxu0 0.0
    %6968 = vmatprep.subr.mxu0 0.0
    %6969 = vmatpush1.msra.mxu0 0.0
    %6970 = vmatprep.subr.mxu0 0.0
    %6971 = vmatpush1.msra.mxu0 0.0
    %6972 = vmatprep.subr.mxu0 0.0
    %6973 = vmatpush1.msra.mxu0 0.0
    %6974 = vmatprep.subr.mxu0 0.0
    %6975 = vmatpush1.msra.mxu0 0.0
    %6976 = vmatprep.subr.mxu0 0.0
    %6977 = vmatpush1.msra.mxu0 0.0
    %6978 = vmatprep.subr.mxu0 0.0
    %6979 = vmatpush1.msra.mxu0 0.0
    %6980 = vmatprep.subr.mxu0 0.0
    %6981 = vmatpush1.msra.mxu0 0.0
    %6982 = vmatprep.subr.mxu0 0.0
    %6983 = vmatpush1.msra.mxu0 0.0
    %6984 = vmatprep.subr.mxu0 0.0
    %6985 = vmatpush1.msra.mxu0 0.0
    %6986 = vmatprep.subr.mxu0 0.0
    %6987 = vmatpush1.msra.mxu0 0.0
    %6988 = vmatprep.subr.mxu0 0.0
    %6989 = vmatpush1.msra.mxu0 0.0
    %6990 = vmatprep.subr.mxu0 0.0
    %6991 = vmatpush1.msra.mxu0 0.0
    %6992 = vmatprep.subr.mxu0 0.0
    %6993 = vmatpush1.msra.mxu0 0.0
    %6994 = vmatprep.subr.mxu0 0.0
    %6995 = vmatpush1.msra.mxu0 0.0
    %6996 = vmatprep.subr.mxu0 0.0
    %6997 = vmatpush1.msra.mxu0 0.0
    %6998 = vmatprep.mubr.f32.mxu0 0.0
    %6999 = vmatmul.mubr.f32.gmra.mrb[0].mxu0 %v6911
    %v7000 = vpop.f32.mrb[0].mxu0
    %v7001 = vadd.f32 0.0, %v7000
    %v7002 = vpop.f32.mrb[0].mxu0
    %7003 = vmatprep.mubr.f32.mxu0 0.0
    %7004 = vmatmul.mubr.f32.gmra.mrb[0].mxu0 %v6914
    %v7005 = vpop.f32.mrb[0].mxu0
    %v7006 = vadd.f32 0.0, %v7005
    %v7007 = vpop.f32.mrb[0].mxu0
    %7008 = vmatprep.mubr.f32.mxu0 0.0
    %7009 = vmatmul.mubr.f32.gmra.mrb[0].mxu0 %v6917
    %v7010 = vpop.f32.mrb[0].mxu0
    %v7011 = vadd.f32 0.0, %v7010
    %v7012 = vpop.f32.mrb[0].mxu0
    %7013 = vmatprep.mubr.f32.mxu0 0.0
    %7014 = vmatmul.mubr.f32.gmra.mrb[0].mxu0 %v6920
    %v7015 = vpop.f32.mrb[0].mxu0
    %v7016 = vadd.f32 0.0, %v7015
    %v7017 = vpop.f32.mrb[0].mxu0
    %7018 = vmatprep.mubr.f32.mxu0 0.0
    %7019 = vmatmul.mubr.f32.gmra.mrb[0].mxu0 %v6923
    %v7020 = vpop.f32.mrb[0].mxu0
    %v7021 = vadd.f32 0.0, %v7020
    %v7022 = vpop.f32.mrb[0].mxu0
    %7023 = vmatprep.mubr.f32.mxu0 0.0
    %7024 = vmatmul.mubr.f32.gmra.mrb[0].mxu0 %v6926
    %v7025 = vpop.f32.mrb[0].mxu0
    %v7026 = vadd.f32 0.0, %v7025
    %v7027 = vpop.f32.mrb[0].mxu0
    %7028 = vmatprep.mubr.f32.mxu0 0.0
    %7029 = vmatmul.mubr.f32.gmra.mrb[0].mxu0 %v6929
    %v7030 = vpop.f32.mrb[0].mxu0
    %v7031 = vadd.f32 0.0, %v7030
    %v7032 = vpop.f32.mrb[0].mxu0
    %7033 = vmatprep.mubr.f32.mxu0 0.0
    %7034 = vmatmul.mubr.f32.gmra.mrb[0].mxu0 %v6932
    %v7035 = vpop.f32.mrb[0].mxu0
    %v7036 = vadd.f32 0.0, %v7035
    %v7037 = vpop.f32.mrb[0].mxu0
    %7038 = vdwg.mxu0
    %v7040 = vsel %vm219, %v5516, 0
    %v7043 = vsel %vm219, %v5517, 0
    %v7046 = vsel %vm219, %v5518, 0
    %v7049 = vsel %vm219, %v5519, 0
    %v7052 = vsel %vm219, %v5520, 0
    %v7055 = vsel %vm219, %v5521, 0
    %v7058 = vsel %vm219, %v5522, 0
    %v7061 = vsel %vm219, %v5523, 0
    %7063 = vmatprep.subr.mxu0 0.0
    %7064 = vmatpush1.msra.mxu0 %v115
    %7065 = vmatprep.subr.mxu0 0.0
    %7066 = vmatpush1.msra.mxu0 %v116
    %7067 = vmatprep.subr.mxu0 0.0
    %7068 = vmatpush1.msra.mxu0 %v117
    %7069 = vmatprep.subr.mxu0 0.0
    %7070 = vmatpush1.msra.mxu0 %v118
    %7071 = vmatprep.subr.mxu0 0.0
    %7072 = vmatpush1.msra.mxu0 %v119
    %7073 = vmatprep.subr.mxu0 0.0
    %7074 = vmatpush1.msra.mxu0 %v120
    %7075 = vmatprep.subr.mxu0 0.0
    %7076 = vmatpush1.msra.mxu0 %v121
    %7077 = vmatprep.subr.mxu0 0.0
    %7078 = vmatpush1.msra.mxu0 %v122
    %7079 = vmatprep.subr.mxu0 0.0
    %7080 = vmatpush1.msra.mxu0 0.0
    %7081 = vmatprep.subr.mxu0 0.0
    %7082 = vmatpush1.msra.mxu0 0.0
    %7083 = vmatprep.subr.mxu0 0.0
    %7084 = vmatpush1.msra.mxu0 0.0
    %7085 = vmatprep.subr.mxu0 0.0
    %7086 = vmatpush1.msra.mxu0 0.0
    %7087 = vmatprep.subr.mxu0 0.0
    %7088 = vmatpush1.msra.mxu0 0.0
    %7089 = vmatprep.subr.mxu0 0.0
    %7090 = vmatpush1.msra.mxu0 0.0
    %7091 = vmatprep.subr.mxu0 0.0
    %7092 = vmatpush1.msra.mxu0 0.0
    %7093 = vmatprep.subr.mxu0 0.0
    %7094 = vmatpush1.msra.mxu0 0.0
    %7095 = vmatprep.subr.mxu0 0.0
    %7096 = vmatpush1.msra.mxu0 0.0
    %7097 = vmatprep.subr.mxu0 0.0
    %7098 = vmatpush1.msra.mxu0 0.0
    %7099 = vmatprep.subr.mxu0 0.0
    %7100 = vmatpush1.msra.mxu0 0.0
    %7101 = vmatprep.subr.mxu0 0.0
    %7102 = vmatpush1.msra.mxu0 0.0
    %7103 = vmatprep.subr.mxu0 0.0
    %7104 = vmatpush1.msra.mxu0 0.0
    %7105 = vmatprep.subr.mxu0 0.0
    %7106 = vmatpush1.msra.mxu0 0.0
    %7107 = vmatprep.subr.mxu0 0.0
    %7108 = vmatpush1.msra.mxu0 0.0
    %7109 = vmatprep.subr.mxu0 0.0
    %7110 = vmatpush1.msra.mxu0 0.0
    %7111 = vmatprep.subr.mxu0 0.0
    %7112 = vmatpush1.msra.mxu0 0.0
    %7113 = vmatprep.subr.mxu0 0.0
    %7114 = vmatpush1.msra.mxu0 0.0
    %7115 = vmatprep.subr.mxu0 0.0
    %7116 = vmatpush1.msra.mxu0 0.0
    %7117 = vmatprep.subr.mxu0 0.0
    %7118 = vmatpush1.msra.mxu0 0.0
    %7119 = vmatprep.subr.mxu0 0.0
    %7120 = vmatpush1.msra.mxu0 0.0
    %7121 = vmatprep.subr.mxu0 0.0
    %7122 = vmatpush1.msra.mxu0 0.0
    %7123 = vmatprep.subr.mxu0 0.0
    %7124 = vmatpush1.msra.mxu0 0.0
    %7125 = vmatprep.subr.mxu0 0.0
    %7126 = vmatpush1.msra.mxu0 0.0
    %7127 = vmatprep.mubr.f32.mxu0 0.0
    %7128 = vmatmul.mubr.f32.gmra.mrb[0].mxu0 %v7040
    %v7129 = vpop.f32.mrb[0].mxu0
    %v7130 = vadd.f32 0.0, %v7129
    %v7131 = vpop.f32.mrb[0].mxu0
    %7132 = vmatprep.mubr.f32.mxu0 0.0
    %7133 = vmatmul.mubr.f32.gmra.mrb[0].mxu0 %v7043
    %v7134 = vpop.f32.mrb[0].mxu0
    %v7135 = vadd.f32 0.0, %v7134
    %v7136 = vpop.f32.mrb[0].mxu0
    %7137 = vmatprep.mubr.f32.mxu0 0.0
    %7138 = vmatmul.mubr.f32.gmra.mrb[0].mxu0 %v7046
    %v7139 = vpop.f32.mrb[0].mxu0
    %v7140 = vadd.f32 0.0, %v7139
    %v7141 = vpop.f32.mrb[0].mxu0
    %7142 = vmatprep.mubr.f32.mxu0 0.0
    %7143 = vmatmul.mubr.f32.gmra.mrb[0].mxu0 %v7049
    %v7144 = vpop.f32.mrb[0].mxu0
    %v7145 = vadd.f32 0.0, %v7144
    %v7146 = vpop.f32.mrb[0].mxu0
    %7147 = vmatprep.mubr.f32.mxu0 0.0
    %7148 = vmatmul.mubr.f32.gmra.mrb[0].mxu0 %v7052
    %v7149 = vpop.f32.mrb[0].mxu0
    %v7150 = vadd.f32 0.0, %v7149
    %v7151 = vpop.f32.mrb[0].mxu0
    %7152 = vmatprep.mubr.f32.mxu0 0.0
    %7153 = vmatmul.mubr.f32.gmra.mrb[0].mxu0 %v7055
    %v7154 = vpop.f32.mrb[0].mxu0
    %v7155 = vadd.f32 0.0, %v7154
    %v7156 = vpop.f32.mrb[0].mxu0
    %7157 = vmatprep.mubr.f32.mxu0 0.0
    %7158 = vmatmul.mubr.f32.gmra.mrb[0].mxu0 %v7058
    %v7159 = vpop.f32.mrb[0].mxu0
    %v7160 = vadd.f32 0.0, %v7159
    %v7161 = vpop.f32.mrb[0].mxu0
    %7162 = vmatprep.mubr.f32.mxu0 0.0
    %7163 = vmatmul.mubr.f32.gmra.mrb[0].mxu0 %v7061
    %v7164 = vpop.f32.mrb[0].mxu0
    %v7165 = vadd.f32 0.0, %v7164
    %v7166 = vpop.f32.mrb[0].mxu0
    %7167 = vdwg.mxu0
    %v7169 = vsel %vm219, %v5524, 0
    %v7172 = vsel %vm219, %v5525, 0
    %v7175 = vsel %vm219, %v5526, 0
    %v7178 = vsel %vm219, %v5527, 0
    %v7181 = vsel %vm219, %v5528, 0
    %v7184 = vsel %vm219, %v5529, 0
    %v7187 = vsel %vm219, %v5530, 0
    %v7190 = vsel %vm219, %v5531, 0
    %7192 = vmatprep.subr.mxu0 0.0
    %7193 = vmatpush1.msra.mxu0 %v123
    %7194 = vmatprep.subr.mxu0 0.0
    %7195 = vmatpush1.msra.mxu0 %v124
    %7196 = vmatprep.subr.mxu0 0.0
    %7197 = vmatpush1.msra.mxu0 %v125
    %7198 = vmatprep.subr.mxu0 0.0
    %7199 = vmatpush1.msra.mxu0 %v126
    %7200 = vmatprep.subr.mxu0 0.0
    %7201 = vmatpush1.msra.mxu0 %v127
    %7202 = vmatprep.subr.mxu0 0.0
    %7203 = vmatpush1.msra.mxu0 %v128
    %7204 = vmatprep.subr.mxu0 0.0
    %7205 = vmatpush1.msra.mxu0 %v129
    %7206 = vmatprep.subr.mxu0 0.0
    %7207 = vmatpush1.msra.mxu0 %v130
    %7208 = vmatprep.subr.mxu0 0.0
    %7209 = vmatpush1.msra.mxu0 0.0
    %7210 = vmatprep.subr.mxu0 0.0
    %7211 = vmatpush1.msra.mxu0 0.0
    %7212 = vmatprep.subr.mxu0 0.0
    %7213 = vmatpush1.msra.mxu0 0.0
    %7214 = vmatprep.subr.mxu0 0.0
    %7215 = vmatpush1.msra.mxu0 0.0
    %7216 = vmatprep.subr.mxu0 0.0
    %7217 = vmatpush1.msra.mxu0 0.0
    %7218 = vmatprep.subr.mxu0 0.0
    %7219 = vmatpush1.msra.mxu0 0.0
    %7220 = vmatprep.subr.mxu0 0.0
    %7221 = vmatpush1.msra.mxu0 0.0
    %7222 = vmatprep.subr.mxu0 0.0
    %7223 = vmatpush1.msra.mxu0 0.0
    %7224 = vmatprep.subr.mxu0 0.0
    %7225 = vmatpush1.msra.mxu0 0.0
    %7226 = vmatprep.subr.mxu0 0.0
    %7227 = vmatpush1.msra.mxu0 0.0
    %7228 = vmatprep.subr.mxu0 0.0
    %7229 = vmatpush1.msra.mxu0 0.0
    %7230 = vmatprep.subr.mxu0 0.0
    %7231 = vmatpush1.msra.mxu0 0.0
    %7232 = vmatprep.subr.mxu0 0.0
    %7233 = vmatpush1.msra.mxu0 0.0
    %7234 = vmatprep.subr.mxu0 0.0
    %7235 = vmatpush1.msra.mxu0 0.0
    %7236 = vmatprep.subr.mxu0 0.0
    %7237 = vmatpush1.msra.mxu0 0.0
    %7238 = vmatprep.subr.mxu0 0.0
    %7239 = vmatpush1.msra.mxu0 0.0
    %7240 = vmatprep.subr.mxu0 0.0
    %7241 = vmatpush1.msra.mxu0 0.0
    %7242 = vmatprep.subr.mxu0 0.0
    %7243 = vmatpush1.msra.mxu0 0.0
    %7244 = vmatprep.subr.mxu0 0.0
    %7245 = vmatpush1.msra.mxu0 0.0
    %7246 = vmatprep.subr.mxu0 0.0
    %7247 = vmatpush1.msra.mxu0 0.0
    %7248 = vmatprep.subr.mxu0 0.0
    %7249 = vmatpush1.msra.mxu0 0.0
    %7250 = vmatprep.subr.mxu0 0.0
    %7251 = vmatpush1.msra.mxu0 0.0
    %7252 = vmatprep.subr.mxu0 0.0
    %7253 = vmatpush1.msra.mxu0 0.0
    %7254 = vmatprep.subr.mxu0 0.0
    %7255 = vmatpush1.msra.mxu0 0.0
    %7256 = vmatprep.mubr.f32.mxu0 0.0
    %7257 = vmatmul.mubr.f32.gmra.mrb[0].mxu0 %v7169
    %v7258 = vpop.f32.mrb[0].mxu0
    %v7259 = vadd.f32 0.0, %v7258
    %v7260 = vpop.f32.mrb[0].mxu0
    %7261 = vmatprep.mubr.f32.mxu0 0.0
    %7262 = vmatmul.mubr.f32.gmra.mrb[0].mxu0 %v7172
    %v7263 = vpop.f32.mrb[0].mxu0
    %v7264 = vadd.f32 0.0, %v7263
    %v7265 = vpop.f32.mrb[0].mxu0
    %7266 = vmatprep.mubr.f32.mxu0 0.0
    %7267 = vmatmul.mubr.f32.gmra.mrb[0].mxu0 %v7175
    %v7268 = vpop.f32.mrb[0].mxu0
    %v7269 = vadd.f32 0.0, %v7268
    %v7270 = vpop.f32.mrb[0].mxu0
    %7271 = vmatprep.mubr.f32.mxu0 0.0
    %7272 = vmatmul.mubr.f32.gmra.mrb[0].mxu0 %v7178
    %v7273 = vpop.f32.mrb[0].mxu0
    %v7274 = vadd.f32 0.0, %v7273
    %v7275 = vpop.f32.mrb[0].mxu0
    %7276 = vmatprep.mubr.f32.mxu0 0.0
    %7277 = vmatmul.mubr.f32.gmra.mrb[0].mxu0 %v7181
    %v7278 = vpop.f32.mrb[0].mxu0
    %v7279 = vadd.f32 0.0, %v7278
    %v7280 = vpop.f32.mrb[0].mxu0
    %7281 = vmatprep.mubr.f32.mxu0 0.0
    %7282 = vmatmul.mubr.f32.gmra.mrb[0].mxu0 %v7184
    %v7283 = vpop.f32.mrb[0].mxu0
    %v7284 = vadd.f32 0.0, %v7283
    %v7285 = vpop.f32.mrb[0].mxu0
    %7286 = vmatprep.mubr.f32.mxu0 0.0
    %7287 = vmatmul.mubr.f32.gmra.mrb[0].mxu0 %v7187
    %v7288 = vpop.f32.mrb[0].mxu0
    %v7289 = vadd.f32 0.0, %v7288
    %v7290 = vpop.f32.mrb[0].mxu0
    %7291 = vmatprep.mubr.f32.mxu0 0.0
    %7292 = vmatmul.mubr.f32.gmra.mrb[0].mxu0 %v7190
    %v7293 = vpop.f32.mrb[0].mxu0
    %v7294 = vadd.f32 0.0, %v7293
    %v7295 = vpop.f32.mrb[0].mxu0
    %7296 = vdwg.mxu0
    %v7298 = vsel %vm219, %v5532, 0
    %v7301 = vsel %vm219, %v5533, 0
    %v7304 = vsel %vm219, %v5534, 0
    %v7307 = vsel %vm219, %v5535, 0
    %v7310 = vsel %vm219, %v5536, 0
    %v7313 = vsel %vm219, %v5537, 0
    %v7316 = vsel %vm219, %v5538, 0
    %v7319 = vsel %vm219, %v5539, 0
    %7321 = vmatprep.subr.mxu0 0.0
    %7322 = vmatpush1.msra.mxu0 %v131
    %7323 = vmatprep.subr.mxu0 0.0
    %7324 = vmatpush1.msra.mxu0 %v132
    %7325 = vmatprep.subr.mxu0 0.0
    %7326 = vmatpush1.msra.mxu0 %v133
    %7327 = vmatprep.subr.mxu0 0.0
    %7328 = vmatpush1.msra.mxu0 %v134
    %7329 = vmatprep.subr.mxu0 0.0
    %7330 = vmatpush1.msra.mxu0 %v135
    %7331 = vmatprep.subr.mxu0 0.0
    %7332 = vmatpush1.msra.mxu0 %v136
    %7333 = vmatprep.subr.mxu0 0.0
    %7334 = vmatpush1.msra.mxu0 %v137
    %7335 = vmatprep.subr.mxu0 0.0
    %7336 = vmatpush1.msra.mxu0 %v138
    %7337 = vmatprep.subr.mxu0 0.0
    %7338 = vmatpush1.msra.mxu0 0.0
    %7339 = vmatprep.subr.mxu0 0.0
    %7340 = vmatpush1.msra.mxu0 0.0
    %7341 = vmatprep.subr.mxu0 0.0
    %7342 = vmatpush1.msra.mxu0 0.0
    %7343 = vmatprep.subr.mxu0 0.0
    %7344 = vmatpush1.msra.mxu0 0.0
    %7345 = vmatprep.subr.mxu0 0.0
    %7346 = vmatpush1.msra.mxu0 0.0
    %7347 = vmatprep.subr.mxu0 0.0
    %7348 = vmatpush1.msra.mxu0 0.0
    %7349 = vmatprep.subr.mxu0 0.0
    %7350 = vmatpush1.msra.mxu0 0.0
    %7351 = vmatprep.subr.mxu0 0.0
    %7352 = vmatpush1.msra.mxu0 0.0
    %7353 = vmatprep.subr.mxu0 0.0
    %7354 = vmatpush1.msra.mxu0 0.0
    %7355 = vmatprep.subr.mxu0 0.0
    %7356 = vmatpush1.msra.mxu0 0.0
    %7357 = vmatprep.subr.mxu0 0.0
    %7358 = vmatpush1.msra.mxu0 0.0
    %7359 = vmatprep.subr.mxu0 0.0
    %7360 = vmatpush1.msra.mxu0 0.0
    %7361 = vmatprep.subr.mxu0 0.0
    %7362 = vmatpush1.msra.mxu0 0.0
    %7363 = vmatprep.subr.mxu0 0.0
    %7364 = vmatpush1.msra.mxu0 0.0
    %7365 = vmatprep.subr.mxu0 0.0
    %7366 = vmatpush1.msra.mxu0 0.0
    %7367 = vmatprep.subr.mxu0 0.0
    %7368 = vmatpush1.msra.mxu0 0.0
    %7369 = vmatprep.subr.mxu0 0.0
    %7370 = vmatpush1.msra.mxu0 0.0
    %7371 = vmatprep.subr.mxu0 0.0
    %7372 = vmatpush1.msra.mxu0 0.0
    %7373 = vmatprep.subr.mxu0 0.0
    %7374 = vmatpush1.msra.mxu0 0.0
    %7375 = vmatprep.subr.mxu0 0.0
    %7376 = vmatpush1.msra.mxu0 0.0
    %7377 = vmatprep.subr.mxu0 0.0
    %7378 = vmatpush1.msra.mxu0 0.0
    %7379 = vmatprep.subr.mxu0 0.0
    %7380 = vmatpush1.msra.mxu0 0.0
    %7381 = vmatprep.subr.mxu0 0.0
    %7382 = vmatpush1.msra.mxu0 0.0
    %7383 = vmatprep.subr.mxu0 0.0
    %7384 = vmatpush1.msra.mxu0 0.0
    %7385 = vmatprep.mubr.f32.mxu0 0.0
    %7386 = vmatmul.mubr.f32.gmra.mrb[0].mxu0 %v7298
    %v7387 = vpop.f32.mrb[0].mxu0
    %v7388 = vadd.f32 0.0, %v7387
    %v7389 = vpop.f32.mrb[0].mxu0
    %7390 = vmatprep.mubr.f32.mxu0 0.0
    %7391 = vmatmul.mubr.f32.gmra.mrb[0].mxu0 %v7301
    %v7392 = vpop.f32.mrb[0].mxu0
    %v7393 = vadd.f32 0.0, %v7392
    %v7394 = vpop.f32.mrb[0].mxu0
    %7395 = vmatprep.mubr.f32.mxu0 0.0
    %7396 = vmatmul.mubr.f32.gmra.mrb[0].mxu0 %v7304
    %v7397 = vpop.f32.mrb[0].mxu0
    %v7398 = vadd.f32 0.0, %v7397
    %v7399 = vpop.f32.mrb[0].mxu0
    %7400 = vmatprep.mubr.f32.mxu0 0.0
    %7401 = vmatmul.mubr.f32.gmra.mrb[0].mxu0 %v7307
    %v7402 = vpop.f32.mrb[0].mxu0
    %v7403 = vadd.f32 0.0, %v7402
    %v7404 = vpop.f32.mrb[0].mxu0
    %7405 = vmatprep.mubr.f32.mxu0 0.0
    %7406 = vmatmul.mubr.f32.gmra.mrb[0].mxu0 %v7310
    %v7407 = vpop.f32.mrb[0].mxu0
    %v7408 = vadd.f32 0.0, %v7407
    %v7409 = vpop.f32.mrb[0].mxu0
    %7410 = vmatprep.mubr.f32.mxu0 0.0
    %7411 = vmatmul.mubr.f32.gmra.mrb[0].mxu0 %v7313
    %v7412 = vpop.f32.mrb[0].mxu0
    %v7413 = vadd.f32 0.0, %v7412
    %v7414 = vpop.f32.mrb[0].mxu0
    %7415 = vmatprep.mubr.f32.mxu0 0.0
    %7416 = vmatmul.mubr.f32.gmra.mrb[0].mxu0 %v7316
    %v7417 = vpop.f32.mrb[0].mxu0
    %v7418 = vadd.f32 0.0, %v7417
    %v7419 = vpop.f32.mrb[0].mxu0
    %7420 = vmatprep.mubr.f32.mxu0 0.0
    %7421 = vmatmul.mubr.f32.gmra.mrb[0].mxu0 %v7319
    %v7422 = vpop.f32.mrb[0].mxu0
    %v7423 = vadd.f32 0.0, %v7422
    %v7424 = vpop.f32.mrb[0].mxu0
    %7425 = vdwg.mxu0
    %v7427 = vsel %vm219, %v5540, 0
    %v7430 = vsel %vm219, %v5541, 0
    %v7433 = vsel %vm219, %v5542, 0
    %v7436 = vsel %vm219, %v5543, 0
    %v7439 = vsel %vm219, %v5544, 0
    %v7442 = vsel %vm219, %v5545, 0
    %v7445 = vsel %vm219, %v5546, 0
    %v7448 = vsel %vm219, %v5547, 0
    %7450 = vmatprep.subr.mxu0 0.0
    %7451 = vmatpush1.msra.mxu0 %v139
    %7452 = vmatprep.subr.mxu0 0.0
    %7453 = vmatpush1.msra.mxu0 %v140
    %7454 = vmatprep.subr.mxu0 0.0
    %7455 = vmatpush1.msra.mxu0 %v141
    %7456 = vmatprep.subr.mxu0 0.0
    %7457 = vmatpush1.msra.mxu0 %v142
    %7458 = vmatprep.subr.mxu0 0.0
    %7459 = vmatpush1.msra.mxu0 %v143
    %7460 = vmatprep.subr.mxu0 0.0
    %7461 = vmatpush1.msra.mxu0 %v144
    %7462 = vmatprep.subr.mxu0 0.0
    %7463 = vmatpush1.msra.mxu0 %v145
    %7464 = vmatprep.subr.mxu0 0.0
    %7465 = vmatpush1.msra.mxu0 %v146
    %7466 = vmatprep.subr.mxu0 0.0
    %7467 = vmatpush1.msra.mxu0 0.0
    %7468 = vmatprep.subr.mxu0 0.0
    %7469 = vmatpush1.msra.mxu0 0.0
    %7470 = vmatprep.subr.mxu0 0.0
    %7471 = vmatpush1.msra.mxu0 0.0
    %7472 = vmatprep.subr.mxu0 0.0
    %7473 = vmatpush1.msra.mxu0 0.0
    %7474 = vmatprep.subr.mxu0 0.0
    %7475 = vmatpush1.msra.mxu0 0.0
    %7476 = vmatprep.subr.mxu0 0.0
    %7477 = vmatpush1.msra.mxu0 0.0
    %7478 = vmatprep.subr.mxu0 0.0
    %7479 = vmatpush1.msra.mxu0 0.0
    %7480 = vmatprep.subr.mxu0 0.0
    %7481 = vmatpush1.msra.mxu0 0.0
    %7482 = vmatprep.subr.mxu0 0.0
    %7483 = vmatpush1.msra.mxu0 0.0
    %7484 = vmatprep.subr.mxu0 0.0
    %7485 = vmatpush1.msra.mxu0 0.0
    %7486 = vmatprep.subr.mxu0 0.0
    %7487 = vmatpush1.msra.mxu0 0.0
    %7488 = vmatprep.subr.mxu0 0.0
    %7489 = vmatpush1.msra.mxu0 0.0
    %7490 = vmatprep.subr.mxu0 0.0
    %7491 = vmatpush1.msra.mxu0 0.0
    %7492 = vmatprep.subr.mxu0 0.0
    %7493 = vmatpush1.msra.mxu0 0.0
    %7494 = vmatprep.subr.mxu0 0.0
    %7495 = vmatpush1.msra.mxu0 0.0
    %7496 = vmatprep.subr.mxu0 0.0
    %7497 = vmatpush1.msra.mxu0 0.0
    %7498 = vmatprep.subr.mxu0 0.0
    %7499 = vmatpush1.msra.mxu0 0.0
    %7500 = vmatprep.subr.mxu0 0.0
    %7501 = vmatpush1.msra.mxu0 0.0
    %7502 = vmatprep.subr.mxu0 0.0
    %7503 = vmatpush1.msra.mxu0 0.0
    %7504 = vmatprep.subr.mxu0 0.0
    %7505 = vmatpush1.msra.mxu0 0.0
    %7506 = vmatprep.subr.mxu0 0.0
    %7507 = vmatpush1.msra.mxu0 0.0
    %7508 = vmatprep.subr.mxu0 0.0
    %7509 = vmatpush1.msra.mxu0 0.0
    %7510 = vmatprep.subr.mxu0 0.0
    %7511 = vmatpush1.msra.mxu0 0.0
    %7512 = vmatprep.subr.mxu0 0.0
    %7513 = vmatpush1.msra.mxu0 0.0
    %7514 = vmatprep.mubr.f32.mxu0 0.0
    %7515 = vmatmul.mubr.f32.gmra.mrb[0].mxu0 %v7427
    %v7516 = vpop.f32.mrb[0].mxu0
    %v7517 = vadd.f32 0.0, %v7516
    %v7518 = vpop.f32.mrb[0].mxu0
    %7519 = vmatprep.mubr.f32.mxu0 0.0
    %7520 = vmatmul.mubr.f32.gmra.mrb[0].mxu0 %v7430
    %v7521 = vpop.f32.mrb[0].mxu0
    %v7522 = vadd.f32 0.0, %v7521
    %v7523 = vpop.f32.mrb[0].mxu0
    %7524 = vmatprep.mubr.f32.mxu0 0.0
    %7525 = vmatmul.mubr.f32.gmra.mrb[0].mxu0 %v7433
    %v7526 = vpop.f32.mrb[0].mxu0
    %v7527 = vadd.f32 0.0, %v7526
    %v7528 = vpop.f32.mrb[0].mxu0
    %7529 = vmatprep.mubr.f32.mxu0 0.0
    %7530 = vmatmul.mubr.f32.gmra.mrb[0].mxu0 %v7436
    %v7531 = vpop.f32.mrb[0].mxu0
    %v7532 = vadd.f32 0.0, %v7531
    %v7533 = vpop.f32.mrb[0].mxu0
    %7534 = vmatprep.mubr.f32.mxu0 0.0
    %7535 = vmatmul.mubr.f32.gmra.mrb[0].mxu0 %v7439
    %v7536 = vpop.f32.mrb[0].mxu0
    %v7537 = vadd.f32 0.0, %v7536
    %v7538 = vpop.f32.mrb[0].mxu0
    %7539 = vmatprep.mubr.f32.mxu0 0.0
    %7540 = vmatmul.mubr.f32.gmra.mrb[0].mxu0 %v7442
    %v7541 = vpop.f32.mrb[0].mxu0
    %v7542 = vadd.f32 0.0, %v7541
    %v7543 = vpop.f32.mrb[0].mxu0
    %7544 = vmatprep.mubr.f32.mxu0 0.0
    %7545 = vmatmul.mubr.f32.gmra.mrb[0].mxu0 %v7445
    %v7546 = vpop.f32.mrb[0].mxu0
    %v7547 = vadd.f32 0.0, %v7546
    %v7548 = vpop.f32.mrb[0].mxu0
    %7549 = vmatprep.mubr.f32.mxu0 0.0
    %7550 = vmatmul.mubr.f32.gmra.mrb[0].mxu0 %v7448
    %v7551 = vpop.f32.mrb[0].mxu0
    %v7552 = vadd.f32 0.0, %v7551
    %v7553 = vpop.f32.mrb[0].mxu0
    %7554 = vdwg.mxu0
    %v7556 = vsel %vm219, %v5548, 0
    %v7559 = vsel %vm219, %v5549, 0
    %v7562 = vsel %vm219, %v5550, 0
    %v7565 = vsel %vm219, %v5551, 0
    %v7568 = vsel %vm219, %v5552, 0
    %v7571 = vsel %vm219, %v5553, 0
    %v7574 = vsel %vm219, %v5554, 0
    %v7577 = vsel %vm219, %v5555, 0
    %7579 = vmatprep.subr.mxu0 0.0
    %7580 = vmatpush1.msra.mxu0 %v147
    %7581 = vmatprep.subr.mxu0 0.0
    %7582 = vmatpush1.msra.mxu0 %v148
    %7583 = vmatprep.subr.mxu0 0.0
    %7584 = vmatpush1.msra.mxu0 %v149
    %7585 = vmatprep.subr.mxu0 0.0
    %7586 = vmatpush1.msra.mxu0 %v150
    %7587 = vmatprep.subr.mxu0 0.0
    %7588 = vmatpush1.msra.mxu0 %v151
    %7589 = vmatprep.subr.mxu0 0.0
    %7590 = vmatpush1.msra.mxu0 %v152
    %7591 = vmatprep.subr.mxu0 0.0
    %7592 = vmatpush1.msra.mxu0 %v153
    %7593 = vmatprep.subr.mxu0 0.0
    %7594 = vmatpush1.msra.mxu0 %v154
    %7595 = vmatprep.subr.mxu0 0.0
    %7596 = vmatpush1.msra.mxu0 0.0
    %7597 = vmatprep.subr.mxu0 0.0
    %7598 = vmatpush1.msra.mxu0 0.0
    %7599 = vmatprep.subr.mxu0 0.0
    %7600 = vmatpush1.msra.mxu0 0.0
    %7601 = vmatprep.subr.mxu0 0.0
    %7602 = vmatpush1.msra.mxu0 0.0
    %7603 = vmatprep.subr.mxu0 0.0
    %7604 = vmatpush1.msra.mxu0 0.0
    %7605 = vmatprep.subr.mxu0 0.0
    %7606 = vmatpush1.msra.mxu0 0.0
    %7607 = vmatprep.subr.mxu0 0.0
    %7608 = vmatpush1.msra.mxu0 0.0
    %7609 = vmatprep.subr.mxu0 0.0
    %7610 = vmatpush1.msra.mxu0 0.0
    %7611 = vmatprep.subr.mxu0 0.0
    %7612 = vmatpush1.msra.mxu0 0.0
    %7613 = vmatprep.subr.mxu0 0.0
    %7614 = vmatpush1.msra.mxu0 0.0
    %7615 = vmatprep.subr.mxu0 0.0
    %7616 = vmatpush1.msra.mxu0 0.0
    %7617 = vmatprep.subr.mxu0 0.0
    %7618 = vmatpush1.msra.mxu0 0.0
    %7619 = vmatprep.subr.mxu0 0.0
    %7620 = vmatpush1.msra.mxu0 0.0
    %7621 = vmatprep.subr.mxu0 0.0
    %7622 = vmatpush1.msra.mxu0 0.0
    %7623 = vmatprep.subr.mxu0 0.0
    %7624 = vmatpush1.msra.mxu0 0.0
    %7625 = vmatprep.subr.mxu0 0.0
    %7626 = vmatpush1.msra.mxu0 0.0
    %7627 = vmatprep.subr.mxu0 0.0
    %7628 = vmatpush1.msra.mxu0 0.0
    %7629 = vmatprep.subr.mxu0 0.0
    %7630 = vmatpush1.msra.mxu0 0.0
    %7631 = vmatprep.subr.mxu0 0.0
    %7632 = vmatpush1.msra.mxu0 0.0
    %7633 = vmatprep.subr.mxu0 0.0
    %7634 = vmatpush1.msra.mxu0 0.0
    %7635 = vmatprep.subr.mxu0 0.0
    %7636 = vmatpush1.msra.mxu0 0.0
    %7637 = vmatprep.subr.mxu0 0.0
    %7638 = vmatpush1.msra.mxu0 0.0
    %7639 = vmatprep.subr.mxu0 0.0
    %7640 = vmatpush1.msra.mxu0 0.0
    %7641 = vmatprep.subr.mxu0 0.0
    %7642 = vmatpush1.msra.mxu0 0.0
    %7643 = vmatprep.mubr.f32.mxu0 0.0
    %7644 = vmatmul.mubr.f32.gmra.mrb[0].mxu0 %v7556
    %v7645 = vpop.f32.mrb[0].mxu0
    %v7646 = vadd.f32 0.0, %v7645
    %v7647 = vpop.f32.mrb[0].mxu0
    %7648 = vmatprep.mubr.f32.mxu0 0.0
    %7649 = vmatmul.mubr.f32.gmra.mrb[0].mxu0 %v7559
    %v7650 = vpop.f32.mrb[0].mxu0
    %v7651 = vadd.f32 0.0, %v7650
    %v7652 = vpop.f32.mrb[0].mxu0
    %7653 = vmatprep.mubr.f32.mxu0 0.0
    %7654 = vmatmul.mubr.f32.gmra.mrb[0].mxu0 %v7562
    %v7655 = vpop.f32.mrb[0].mxu0
    %v7656 = vadd.f32 0.0, %v7655
    %v7657 = vpop.f32.mrb[0].mxu0
    %7658 = vmatprep.mubr.f32.mxu0 0.0
    %7659 = vmatmul.mubr.f32.gmra.mrb[0].mxu0 %v7565
    %v7660 = vpop.f32.mrb[0].mxu0
    %v7661 = vadd.f32 0.0, %v7660
    %v7662 = vpop.f32.mrb[0].mxu0
    %7663 = vmatprep.mubr.f32.mxu0 0.0
    %7664 = vmatmul.mubr.f32.gmra.mrb[0].mxu0 %v7568
    %v7665 = vpop.f32.mrb[0].mxu0
    %v7666 = vadd.f32 0.0, %v7665
    %v7667 = vpop.f32.mrb[0].mxu0
    %7668 = vmatprep.mubr.f32.mxu0 0.0
    %7669 = vmatmul.mubr.f32.gmra.mrb[0].mxu0 %v7571
    %v7670 = vpop.f32.mrb[0].mxu0
    %v7671 = vadd.f32 0.0, %v7670
    %v7672 = vpop.f32.mrb[0].mxu0
    %7673 = vmatprep.mubr.f32.mxu0 0.0
    %7674 = vmatmul.mubr.f32.gmra.mrb[0].mxu0 %v7574
    %v7675 = vpop.f32.mrb[0].mxu0
    %v7676 = vadd.f32 0.0, %v7675
    %v7677 = vpop.f32.mrb[0].mxu0
    %7678 = vmatprep.mubr.f32.mxu0 0.0
    %7679 = vmatmul.mubr.f32.gmra.mrb[0].mxu0 %v7577
    %v7680 = vpop.f32.mrb[0].mxu0
    %v7681 = vadd.f32 0.0, %v7680
    %v7682 = vpop.f32.mrb[0].mxu0
    %7683 = vdwg.mxu0
    %v7685 = vsel %vm219, %v5556, 0
    %v7688 = vsel %vm219, %v5557, 0
    %v7691 = vsel %vm219, %v5558, 0
    %v7694 = vsel %vm219, %v5559, 0
    %v7697 = vsel %vm219, %v5560, 0
    %v7700 = vsel %vm219, %v5561, 0
    %v7703 = vsel %vm219, %v5562, 0
    %v7706 = vsel %vm219, %v5563, 0
    %7708 = vmatprep.subr.mxu0 0.0
    %7709 = vmatpush1.msra.mxu0 %v155
    %7710 = vmatprep.subr.mxu0 0.0
    %7711 = vmatpush1.msra.mxu0 %v156
    %7712 = vmatprep.subr.mxu0 0.0
    %7713 = vmatpush1.msra.mxu0 %v157
    %7714 = vmatprep.subr.mxu0 0.0
    %7715 = vmatpush1.msra.mxu0 %v158
    %7716 = vmatprep.subr.mxu0 0.0
    %7717 = vmatpush1.msra.mxu0 %v159
    %7718 = vmatprep.subr.mxu0 0.0
    %7719 = vmatpush1.msra.mxu0 %v160
    %7720 = vmatprep.subr.mxu0 0.0
    %7721 = vmatpush1.msra.mxu0 %v161
    %7722 = vmatprep.subr.mxu0 0.0
    %7723 = vmatpush1.msra.mxu0 %v162
    %7724 = vmatprep.subr.mxu0 0.0
    %7725 = vmatpush1.msra.mxu0 0.0
    %7726 = vmatprep.subr.mxu0 0.0
    %7727 = vmatpush1.msra.mxu0 0.0
    %7728 = vmatprep.subr.mxu0 0.0
    %7729 = vmatpush1.msra.mxu0 0.0
    %7730 = vmatprep.subr.mxu0 0.0
    %7731 = vmatpush1.msra.mxu0 0.0
    %7732 = vmatprep.subr.mxu0 0.0
    %7733 = vmatpush1.msra.mxu0 0.0
    %7734 = vmatprep.subr.mxu0 0.0
    %7735 = vmatpush1.msra.mxu0 0.0
    %7736 = vmatprep.subr.mxu0 0.0
    %7737 = vmatpush1.msra.mxu0 0.0
    %7738 = vmatprep.subr.mxu0 0.0
    %7739 = vmatpush1.msra.mxu0 0.0
    %7740 = vmatprep.subr.mxu0 0.0
    %7741 = vmatpush1.msra.mxu0 0.0
    %7742 = vmatprep.subr.mxu0 0.0
    %7743 = vmatpush1.msra.mxu0 0.0
    %7744 = vmatprep.subr.mxu0 0.0
    %7745 = vmatpush1.msra.mxu0 0.0
    %7746 = vmatprep.subr.mxu0 0.0
    %7747 = vmatpush1.msra.mxu0 0.0
    %7748 = vmatprep.subr.mxu0 0.0
    %7749 = vmatpush1.msra.mxu0 0.0
    %7750 = vmatprep.subr.mxu0 0.0
    %7751 = vmatpush1.msra.mxu0 0.0
    %7752 = vmatprep.subr.mxu0 0.0
    %7753 = vmatpush1.msra.mxu0 0.0
    %7754 = vmatprep.subr.mxu0 0.0
    %7755 = vmatpush1.msra.mxu0 0.0
    %7756 = vmatprep.subr.mxu0 0.0
    %7757 = vmatpush1.msra.mxu0 0.0
    %7758 = vmatprep.subr.mxu0 0.0
    %7759 = vmatpush1.msra.mxu0 0.0
    %7760 = vmatprep.subr.mxu0 0.0
    %7761 = vmatpush1.msra.mxu0 0.0
    %7762 = vmatprep.subr.mxu0 0.0
    %7763 = vmatpush1.msra.mxu0 0.0
    %7764 = vmatprep.subr.mxu0 0.0
    %7765 = vmatpush1.msra.mxu0 0.0
    %7766 = vmatprep.subr.mxu0 0.0
    %7767 = vmatpush1.msra.mxu0 0.0
    %7768 = vmatprep.subr.mxu0 0.0
    %7769 = vmatpush1.msra.mxu0 0.0
    %7770 = vmatprep.subr.mxu0 0.0
    %7771 = vmatpush1.msra.mxu0 0.0
    %7772 = vmatprep.mubr.f32.mxu0 0.0
    %7773 = vmatmul.mubr.f32.gmra.mrb[0].mxu0 %v7685
    %v7774 = vpop.f32.mrb[0].mxu0
    %v7775 = vadd.f32 0.0, %v7774
    %v7776 = vpop.f32.mrb[0].mxu0
    %7777 = vmatprep.mubr.f32.mxu0 0.0
    %7778 = vmatmul.mubr.f32.gmra.mrb[0].mxu0 %v7688
    %v7779 = vpop.f32.mrb[0].mxu0
    %v7780 = vadd.f32 0.0, %v7779
    %v7781 = vpop.f32.mrb[0].mxu0
    %7782 = vmatprep.mubr.f32.mxu0 0.0
    %7783 = vmatmul.mubr.f32.gmra.mrb[0].mxu0 %v7691
    %v7784 = vpop.f32.mrb[0].mxu0
    %v7785 = vadd.f32 0.0, %v7784
    %v7786 = vpop.f32.mrb[0].mxu0
    %7787 = vmatprep.mubr.f32.mxu0 0.0
    %7788 = vmatmul.mubr.f32.gmra.mrb[0].mxu0 %v7694
    %v7789 = vpop.f32.mrb[0].mxu0
    %v7790 = vadd.f32 0.0, %v7789
    %v7791 = vpop.f32.mrb[0].mxu0
    %7792 = vmatprep.mubr.f32.mxu0 0.0
    %7793 = vmatmul.mubr.f32.gmra.mrb[0].mxu0 %v7697
    %v7794 = vpop.f32.mrb[0].mxu0
    %v7795 = vadd.f32 0.0, %v7794
    %v7796 = vpop.f32.mrb[0].mxu0
    %7797 = vmatprep.mubr.f32.mxu0 0.0
    %7798 = vmatmul.mubr.f32.gmra.mrb[0].mxu0 %v7700
    %v7799 = vpop.f32.mrb[0].mxu0
    %v7800 = vadd.f32 0.0, %v7799
    %v7801 = vpop.f32.mrb[0].mxu0
    %7802 = vmatprep.mubr.f32.mxu0 0.0
    %7803 = vmatmul.mubr.f32.gmra.mrb[0].mxu0 %v7703
    %v7804 = vpop.f32.mrb[0].mxu0
    %v7805 = vadd.f32 0.0, %v7804
    %v7806 = vpop.f32.mrb[0].mxu0
    %7807 = vmatprep.mubr.f32.mxu0 0.0
    %7808 = vmatmul.mubr.f32.gmra.mrb[0].mxu0 %v7706
    %v7809 = vpop.f32.mrb[0].mxu0
    %v7810 = vadd.f32 0.0, %v7809
    %v7811 = vpop.f32.mrb[0].mxu0
    %7812 = vdwg.mxu0
    %v7814 = vsel %vm219, %v5564, 0
    %v7817 = vsel %vm219, %v5565, 0
    %v7820 = vsel %vm219, %v5566, 0
    %v7823 = vsel %vm219, %v5567, 0
    %v7826 = vsel %vm219, %v5568, 0
    %v7829 = vsel %vm219, %v5569, 0
    %v7832 = vsel %vm219, %v5570, 0
    %v7835 = vsel %vm219, %v5571, 0
    %7837 = vmatprep.subr.mxu0 0.0
    %7838 = vmatpush1.msra.mxu0 %v163
    %7839 = vmatprep.subr.mxu0 0.0
    %7840 = vmatpush1.msra.mxu0 %v164
    %7841 = vmatprep.subr.mxu0 0.0
    %7842 = vmatpush1.msra.mxu0 %v165
    %7843 = vmatprep.subr.mxu0 0.0
    %7844 = vmatpush1.msra.mxu0 %v166
    %7845 = vmatprep.subr.mxu0 0.0
    %7846 = vmatpush1.msra.mxu0 %v167
    %7847 = vmatprep.subr.mxu0 0.0
    %7848 = vmatpush1.msra.mxu0 %v168
    %7849 = vmatprep.subr.mxu0 0.0
    %7850 = vmatpush1.msra.mxu0 %v169
    %7851 = vmatprep.subr.mxu0 0.0
    %7852 = vmatpush1.msra.mxu0 %v170
    %7853 = vmatprep.subr.mxu0 0.0
    %7854 = vmatpush1.msra.mxu0 0.0
    %7855 = vmatprep.subr.mxu0 0.0
    %7856 = vmatpush1.msra.mxu0 0.0
    %7857 = vmatprep.subr.mxu0 0.0
    %7858 = vmatpush1.msra.mxu0 0.0
    %7859 = vmatprep.subr.mxu0 0.0
    %7860 = vmatpush1.msra.mxu0 0.0
    %7861 = vmatprep.subr.mxu0 0.0
    %7862 = vmatpush1.msra.mxu0 0.0
    %7863 = vmatprep.subr.mxu0 0.0
    %7864 = vmatpush1.msra.mxu0 0.0
    %7865 = vmatprep.subr.mxu0 0.0
    %7866 = vmatpush1.msra.mxu0 0.0
    %7867 = vmatprep.subr.mxu0 0.0
    %7868 = vmatpush1.msra.mxu0 0.0
    %7869 = vmatprep.subr.mxu0 0.0
    %7870 = vmatpush1.msra.mxu0 0.0
    %7871 = vmatprep.subr.mxu0 0.0
    %7872 = vmatpush1.msra.mxu0 0.0
    %7873 = vmatprep.subr.mxu0 0.0
    %7874 = vmatpush1.msra.mxu0 0.0
    %7875 = vmatprep.subr.mxu0 0.0
    %7876 = vmatpush1.msra.mxu0 0.0
    %7877 = vmatprep.subr.mxu0 0.0
    %7878 = vmatpush1.msra.mxu0 0.0
    %7879 = vmatprep.subr.mxu0 0.0
    %7880 = vmatpush1.msra.mxu0 0.0
    %7881 = vmatprep.subr.mxu0 0.0
    %7882 = vmatpush1.msra.mxu0 0.0
    %7883 = vmatprep.subr.mxu0 0.0
    %7884 = vmatpush1.msra.mxu0 0.0
    %7885 = vmatprep.subr.mxu0 0.0
    %7886 = vmatpush1.msra.mxu0 0.0
    %7887 = vmatprep.subr.mxu0 0.0
    %7888 = vmatpush1.msra.mxu0 0.0
    %7889 = vmatprep.subr.mxu0 0.0
    %7890 = vmatpush1.msra.mxu0 0.0
    %7891 = vmatprep.subr.mxu0 0.0
    %7892 = vmatpush1.msra.mxu0 0.0
    %7893 = vmatprep.subr.mxu0 0.0
    %7894 = vmatpush1.msra.mxu0 0.0
    %7895 = vmatprep.subr.mxu0 0.0
    %7896 = vmatpush1.msra.mxu0 0.0
    %7897 = vmatprep.subr.mxu0 0.0
    %7898 = vmatpush1.msra.mxu0 0.0
    %7899 = vmatprep.subr.mxu0 0.0
    %7900 = vmatpush1.msra.mxu0 0.0
    %7901 = vmatprep.mubr.f32.mxu0 0.0
    %7902 = vmatmul.mubr.f32.gmra.mrb[0].mxu0 %v7814
    %v7903 = vpop.f32.mrb[0].mxu0
    %v7904 = vadd.f32 0.0, %v7903
    %v7905 = vpop.f32.mrb[0].mxu0
    %7906 = vmatprep.mubr.f32.mxu0 0.0
    %7907 = vmatmul.mubr.f32.gmra.mrb[0].mxu0 %v7817
    %v7908 = vpop.f32.mrb[0].mxu0
    %v7909 = vadd.f32 0.0, %v7908
    %v7910 = vpop.f32.mrb[0].mxu0
    %7911 = vmatprep.mubr.f32.mxu0 0.0
    %7912 = vmatmul.mubr.f32.gmra.mrb[0].mxu0 %v7820
    %v7913 = vpop.f32.mrb[0].mxu0
    %v7914 = vadd.f32 0.0, %v7913
    %v7915 = vpop.f32.mrb[0].mxu0
    %7916 = vmatprep.mubr.f32.mxu0 0.0
    %7917 = vmatmul.mubr.f32.gmra.mrb[0].mxu0 %v7823
    %v7918 = vpop.f32.mrb[0].mxu0
    %v7919 = vadd.f32 0.0, %v7918
    %v7920 = vpop.f32.mrb[0].mxu0
    %7921 = vmatprep.mubr.f32.mxu0 0.0
    %7922 = vmatmul.mubr.f32.gmra.mrb[0].mxu0 %v7826
    %v7923 = vpop.f32.mrb[0].mxu0
    %v7924 = vadd.f32 0.0, %v7923
    %v7925 = vpop.f32.mrb[0].mxu0
    %7926 = vmatprep.mubr.f32.mxu0 0.0
    %7927 = vmatmul.mubr.f32.gmra.mrb[0].mxu0 %v7829
    %v7928 = vpop.f32.mrb[0].mxu0
    %v7929 = vadd.f32 0.0, %v7928
    %v7930 = vpop.f32.mrb[0].mxu0
    %7931 = vmatprep.mubr.f32.mxu0 0.0
    %7932 = vmatmul.mubr.f32.gmra.mrb[0].mxu0 %v7832
    %v7933 = vpop.f32.mrb[0].mxu0
    %v7934 = vadd.f32 0.0, %v7933
    %v7935 = vpop.f32.mrb[0].mxu0
    %7936 = vmatprep.mubr.f32.mxu0 0.0
    %7937 = vmatmul.mubr.f32.gmra.mrb[0].mxu0 %v7835
    %v7938 = vpop.f32.mrb[0].mxu0
    %v7939 = vadd.f32 0.0, %v7938
    %v7940 = vpop.f32.mrb[0].mxu0
    %7941 = vdwg.mxu0
    %v7943 = vsel %vm219, %v5572, 0
    %v7946 = vsel %vm219, %v5573, 0
    %v7949 = vsel %vm219, %v5574, 0
    %v7952 = vsel %vm219, %v5575, 0
    %v7955 = vsel %vm219, %v5576, 0
    %v7958 = vsel %vm219, %v5577, 0
    %v7961 = vsel %vm219, %v5578, 0
    %v7964 = vsel %vm219, %v5579, 0
    %7966 = vmatprep.subr.mxu0 0.0
    %7967 = vmatpush1.msra.mxu0 %v171
    %7968 = vmatprep.subr.mxu0 0.0
    %7969 = vmatpush1.msra.mxu0 %v172
    %7970 = vmatprep.subr.mxu0 0.0
    %7971 = vmatpush1.msra.mxu0 %v173
    %7972 = vmatprep.subr.mxu0 0.0
    %7973 = vmatpush1.msra.mxu0 %v174
    %7974 = vmatprep.subr.mxu0 0.0
    %7975 = vmatpush1.msra.mxu0 %v175
    %7976 = vmatprep.subr.mxu0 0.0
    %7977 = vmatpush1.msra.mxu0 %v176
    %7978 = vmatprep.subr.mxu0 0.0
    %7979 = vmatpush1.msra.mxu0 %v177
    %7980 = vmatprep.subr.mxu0 0.0
    %7981 = vmatpush1.msra.mxu0 %v178
    %7982 = vmatprep.subr.mxu0 0.0
    %7983 = vmatpush1.msra.mxu0 0.0
    %7984 = vmatprep.subr.mxu0 0.0
    %7985 = vmatpush1.msra.mxu0 0.0
    %7986 = vmatprep.subr.mxu0 0.0
    %7987 = vmatpush1.msra.mxu0 0.0
    %7988 = vmatprep.subr.mxu0 0.0
    %7989 = vmatpush1.msra.mxu0 0.0
    %7990 = vmatprep.subr.mxu0 0.0
    %7991 = vmatpush1.msra.mxu0 0.0
    %7992 = vmatprep.subr.mxu0 0.0
    %7993 = vmatpush1.msra.mxu0 0.0
    %7994 = vmatprep.subr.mxu0 0.0
    %7995 = vmatpush1.msra.mxu0 0.0
    %7996 = vmatprep.subr.mxu0 0.0
    %7997 = vmatpush1.msra.mxu0 0.0
    %7998 = vmatprep.subr.mxu0 0.0
    %7999 = vmatpush1.msra.mxu0 0.0
    %8000 = vmatprep.subr.mxu0 0.0
    %8001 = vmatpush1.msra.mxu0 0.0
    %8002 = vmatprep.subr.mxu0 0.0
    %8003 = vmatpush1.msra.mxu0 0.0
    %8004 = vmatprep.subr.mxu0 0.0
    %8005 = vmatpush1.msra.mxu0 0.0
    %8006 = vmatprep.subr.mxu0 0.0
    %8007 = vmatpush1.msra.mxu0 0.0
    %8008 = vmatprep.subr.mxu0 0.0
    %8009 = vmatpush1.msra.mxu0 0.0
    %8010 = vmatprep.subr.mxu0 0.0
    %8011 = vmatpush1.msra.mxu0 0.0
    %8012 = vmatprep.subr.mxu0 0.0
    %8013 = vmatpush1.msra.mxu0 0.0
    %8014 = vmatprep.subr.mxu0 0.0
    %8015 = vmatpush1.msra.mxu0 0.0
    %8016 = vmatprep.subr.mxu0 0.0
    %8017 = vmatpush1.msra.mxu0 0.0
    %8018 = vmatprep.subr.mxu0 0.0
    %8019 = vmatpush1.msra.mxu0 0.0
    %8020 = vmatprep.subr.mxu0 0.0
    %8021 = vmatpush1.msra.mxu0 0.0
    %8022 = vmatprep.subr.mxu0 0.0
    %8023 = vmatpush1.msra.mxu0 0.0
    %8024 = vmatprep.subr.mxu0 0.0
    %8025 = vmatpush1.msra.mxu0 0.0
    %8026 = vmatprep.subr.mxu0 0.0
    %8027 = vmatpush1.msra.mxu0 0.0
    %8028 = vmatprep.subr.mxu0 0.0
    %8029 = vmatpush1.msra.mxu0 0.0
    %8030 = vmatprep.mubr.f32.mxu0 0.0
    %8031 = vmatmul.mubr.f32.gmra.mrb[0].mxu0 %v7943
    %v8032 = vpop.f32.mrb[0].mxu0
    %v8033 = vadd.f32 0.0, %v8032
    %v8034 = vpop.f32.mrb[0].mxu0
    %8035 = vmatprep.mubr.f32.mxu0 0.0
    %8036 = vmatmul.mubr.f32.gmra.mrb[0].mxu0 %v7946
    %v8037 = vpop.f32.mrb[0].mxu0
    %v8038 = vadd.f32 0.0, %v8037
    %v8039 = vpop.f32.mrb[0].mxu0
    %8040 = vmatprep.mubr.f32.mxu0 0.0
    %8041 = vmatmul.mubr.f32.gmra.mrb[0].mxu0 %v7949
    %v8042 = vpop.f32.mrb[0].mxu0
    %v8043 = vadd.f32 0.0, %v8042
    %v8044 = vpop.f32.mrb[0].mxu0
    %8045 = vmatprep.mubr.f32.mxu0 0.0
    %8046 = vmatmul.mubr.f32.gmra.mrb[0].mxu0 %v7952
    %v8047 = vpop.f32.mrb[0].mxu0
    %v8048 = vadd.f32 0.0, %v8047
    %v8049 = vpop.f32.mrb[0].mxu0
    %8050 = vmatprep.mubr.f32.mxu0 0.0
    %8051 = vmatmul.mubr.f32.gmra.mrb[0].mxu0 %v7955
    %v8052 = vpop.f32.mrb[0].mxu0
    %v8053 = vadd.f32 0.0, %v8052
    %v8054 = vpop.f32.mrb[0].mxu0
    %8055 = vmatprep.mubr.f32.mxu0 0.0
    %8056 = vmatmul.mubr.f32.gmra.mrb[0].mxu0 %v7958
    %v8057 = vpop.f32.mrb[0].mxu0
    %v8058 = vadd.f32 0.0, %v8057
    %v8059 = vpop.f32.mrb[0].mxu0
    %8060 = vmatprep.mubr.f32.mxu0 0.0
    %8061 = vmatmul.mubr.f32.gmra.mrb[0].mxu0 %v7961
    %v8062 = vpop.f32.mrb[0].mxu0
    %v8063 = vadd.f32 0.0, %v8062
    %v8064 = vpop.f32.mrb[0].mxu0
    %8065 = vmatprep.mubr.f32.mxu0 0.0
    %8066 = vmatmul.mubr.f32.gmra.mrb[0].mxu0 %v7964
    %v8067 = vpop.f32.mrb[0].mxu0
    %v8068 = vadd.f32 0.0, %v8067
    %v8069 = vpop.f32.mrb[0].mxu0
    %8070 = vdwg.mxu0
    %v8072 = vsel %vm219, %v5580, 0
    %v8075 = vsel %vm219, %v5581, 0
    %v8078 = vsel %vm219, %v5582, 0
    %v8081 = vsel %vm219, %v5583, 0
    %v8084 = vsel %vm219, %v5584, 0
    %v8087 = vsel %vm219, %v5585, 0
    %v8090 = vsel %vm219, %v5586, 0
    %v8093 = vsel %vm219, %v5587, 0
    %8095 = vmatprep.subr.mxu0 0.0
    %8096 = vmatpush1.msra.mxu0 %v179
    %8097 = vmatprep.subr.mxu0 0.0
    %8098 = vmatpush1.msra.mxu0 %v180
    %8099 = vmatprep.subr.mxu0 0.0
    %8100 = vmatpush1.msra.mxu0 %v181
    %8101 = vmatprep.subr.mxu0 0.0
    %8102 = vmatpush1.msra.mxu0 %v182
    %8103 = vmatprep.subr.mxu0 0.0
    %8104 = vmatpush1.msra.mxu0 %v183
    %8105 = vmatprep.subr.mxu0 0.0
    %8106 = vmatpush1.msra.mxu0 %v184
    %8107 = vmatprep.subr.mxu0 0.0
    %8108 = vmatpush1.msra.mxu0 %v185
    %8109 = vmatprep.subr.mxu0 0.0
    %8110 = vmatpush1.msra.mxu0 %v186
    %8111 = vmatprep.subr.mxu0 0.0
    %8112 = vmatpush1.msra.mxu0 0.0
    %8113 = vmatprep.subr.mxu0 0.0
    %8114 = vmatpush1.msra.mxu0 0.0
    %8115 = vmatprep.subr.mxu0 0.0
    %8116 = vmatpush1.msra.mxu0 0.0
    %8117 = vmatprep.subr.mxu0 0.0
    %8118 = vmatpush1.msra.mxu0 0.0
    %8119 = vmatprep.subr.mxu0 0.0
    %8120 = vmatpush1.msra.mxu0 0.0
    %8121 = vmatprep.subr.mxu0 0.0
    %8122 = vmatpush1.msra.mxu0 0.0
    %8123 = vmatprep.subr.mxu0 0.0
    %8124 = vmatpush1.msra.mxu0 0.0
    %8125 = vmatprep.subr.mxu0 0.0
    %8126 = vmatpush1.msra.mxu0 0.0
    %8127 = vmatprep.subr.mxu0 0.0
    %8128 = vmatpush1.msra.mxu0 0.0
    %8129 = vmatprep.subr.mxu0 0.0
    %8130 = vmatpush1.msra.mxu0 0.0
    %8131 = vmatprep.subr.mxu0 0.0
    %8132 = vmatpush1.msra.mxu0 0.0
    %8133 = vmatprep.subr.mxu0 0.0
    %8134 = vmatpush1.msra.mxu0 0.0
    %8135 = vmatprep.subr.mxu0 0.0
    %8136 = vmatpush1.msra.mxu0 0.0
    %8137 = vmatprep.subr.mxu0 0.0
    %8138 = vmatpush1.msra.mxu0 0.0
    %8139 = vmatprep.subr.mxu0 0.0
    %8140 = vmatpush1.msra.mxu0 0.0
    %8141 = vmatprep.subr.mxu0 0.0
    %8142 = vmatpush1.msra.mxu0 0.0
    %8143 = vmatprep.subr.mxu0 0.0
    %8144 = vmatpush1.msra.mxu0 0.0
    %8145 = vmatprep.subr.mxu0 0.0
    %8146 = vmatpush1.msra.mxu0 0.0
    %8147 = vmatprep.subr.mxu0 0.0
    %8148 = vmatpush1.msra.mxu0 0.0
    %8149 = vmatprep.subr.mxu0 0.0
    %8150 = vmatpush1.msra.mxu0 0.0
    %8151 = vmatprep.subr.mxu0 0.0
    %8152 = vmatpush1.msra.mxu0 0.0
    %8153 = vmatprep.subr.mxu0 0.0
    %8154 = vmatpush1.msra.mxu0 0.0
    %8155 = vmatprep.subr.mxu0 0.0
    %8156 = vmatpush1.msra.mxu0 0.0
    %8157 = vmatprep.subr.mxu0 0.0
    %8158 = vmatpush1.msra.mxu0 0.0
    %8159 = vmatprep.mubr.f32.mxu0 0.0
    %8160 = vmatmul.mubr.f32.gmra.mrb[0].mxu0 %v8072
    %v8161 = vpop.f32.mrb[0].mxu0
    %v8162 = vadd.f32 0.0, %v8161
    %v8163 = vpop.f32.mrb[0].mxu0
    %8164 = vmatprep.mubr.f32.mxu0 0.0
    %8165 = vmatmul.mubr.f32.gmra.mrb[0].mxu0 %v8075
    %v8166 = vpop.f32.mrb[0].mxu0
    %v8167 = vadd.f32 0.0, %v8166
    %v8168 = vpop.f32.mrb[0].mxu0
    %8169 = vmatprep.mubr.f32.mxu0 0.0
    %8170 = vmatmul.mubr.f32.gmra.mrb[0].mxu0 %v8078
    %v8171 = vpop.f32.mrb[0].mxu0
    %v8172 = vadd.f32 0.0, %v8171
    %v8173 = vpop.f32.mrb[0].mxu0
    %8174 = vmatprep.mubr.f32.mxu0 0.0
    %8175 = vmatmul.mubr.f32.gmra.mrb[0].mxu0 %v8081
    %v8176 = vpop.f32.mrb[0].mxu0
    %v8177 = vadd.f32 0.0, %v8176
    %v8178 = vpop.f32.mrb[0].mxu0
    %8179 = vmatprep.mubr.f32.mxu0 0.0
    %8180 = vmatmul.mubr.f32.gmra.mrb[0].mxu0 %v8084
    %v8181 = vpop.f32.mrb[0].mxu0
    %v8182 = vadd.f32 0.0, %v8181
    %v8183 = vpop.f32.mrb[0].mxu0
    %8184 = vmatprep.mubr.f32.mxu0 0.0
    %8185 = vmatmul.mubr.f32.gmra.mrb[0].mxu0 %v8087
    %v8186 = vpop.f32.mrb[0].mxu0
    %v8187 = vadd.f32 0.0, %v8186
    %v8188 = vpop.f32.mrb[0].mxu0
    %8189 = vmatprep.mubr.f32.mxu0 0.0
    %8190 = vmatmul.mubr.f32.gmra.mrb[0].mxu0 %v8090
    %v8191 = vpop.f32.mrb[0].mxu0
    %v8192 = vadd.f32 0.0, %v8191
    %v8193 = vpop.f32.mrb[0].mxu0
    %8194 = vmatprep.mubr.f32.mxu0 0.0
    %8195 = vmatmul.mubr.f32.gmra.mrb[0].mxu0 %v8093
    %v8196 = vpop.f32.mrb[0].mxu0
    %v8197 = vadd.f32 0.0, %v8196
    %v8198 = vpop.f32.mrb[0].mxu0
    %8199 = vdwg.mxu0
    %v8201 = vsel %vm219, %v5588, 0
    %v8204 = vsel %vm219, %v5589, 0
    %v8207 = vsel %vm219, %v5590, 0
    %v8210 = vsel %vm219, %v5591, 0
    %v8213 = vsel %vm219, %v5592, 0
    %v8216 = vsel %vm219, %v5593, 0
    %v8219 = vsel %vm219, %v5594, 0
    %v8222 = vsel %vm219, %v5595, 0
    %8224 = vmatprep.subr.mxu0 0.0
    %8225 = vmatpush1.msra.mxu0 %v187
    %8226 = vmatprep.subr.mxu0 0.0
    %8227 = vmatpush1.msra.mxu0 %v188
    %8228 = vmatprep.subr.mxu0 0.0
    %8229 = vmatpush1.msra.mxu0 %v189
    %8230 = vmatprep.subr.mxu0 0.0
    %8231 = vmatpush1.msra.mxu0 %v190
    %8232 = vmatprep.subr.mxu0 0.0
    %8233 = vmatpush1.msra.mxu0 %v191
    %8234 = vmatprep.subr.mxu0 0.0
    %8235 = vmatpush1.msra.mxu0 %v192
    %8236 = vmatprep.subr.mxu0 0.0
    %8237 = vmatpush1.msra.mxu0 %v193
    %8238 = vmatprep.subr.mxu0 0.0
    %8239 = vmatpush1.msra.mxu0 %v194
    %8240 = vmatprep.subr.mxu0 0.0
    %8241 = vmatpush1.msra.mxu0 0.0
    %8242 = vmatprep.subr.mxu0 0.0
    %8243 = vmatpush1.msra.mxu0 0.0
    %8244 = vmatprep.subr.mxu0 0.0
    %8245 = vmatpush1.msra.mxu0 0.0
    %8246 = vmatprep.subr.mxu0 0.0
    %8247 = vmatpush1.msra.mxu0 0.0
    %8248 = vmatprep.subr.mxu0 0.0
    %8249 = vmatpush1.msra.mxu0 0.0
    %8250 = vmatprep.subr.mxu0 0.0
    %8251 = vmatpush1.msra.mxu0 0.0
    %8252 = vmatprep.subr.mxu0 0.0
    %8253 = vmatpush1.msra.mxu0 0.0
    %8254 = vmatprep.subr.mxu0 0.0
    %8255 = vmatpush1.msra.mxu0 0.0
    %8256 = vmatprep.subr.mxu0 0.0
    %8257 = vmatpush1.msra.mxu0 0.0
    %8258 = vmatprep.subr.mxu0 0.0
    %8259 = vmatpush1.msra.mxu0 0.0
    %8260 = vmatprep.subr.mxu0 0.0
    %8261 = vmatpush1.msra.mxu0 0.0
    %8262 = vmatprep.subr.mxu0 0.0
    %8263 = vmatpush1.msra.mxu0 0.0
    %8264 = vmatprep.subr.mxu0 0.0
    %8265 = vmatpush1.msra.mxu0 0.0
    %8266 = vmatprep.subr.mxu0 0.0
    %8267 = vmatpush1.msra.mxu0 0.0
    %8268 = vmatprep.subr.mxu0 0.0
    %8269 = vmatpush1.msra.mxu0 0.0
    %8270 = vmatprep.subr.mxu0 0.0
    %8271 = vmatpush1.msra.mxu0 0.0
    %8272 = vmatprep.subr.mxu0 0.0
    %8273 = vmatpush1.msra.mxu0 0.0
    %8274 = vmatprep.subr.mxu0 0.0
    %8275 = vmatpush1.msra.mxu0 0.0
    %8276 = vmatprep.subr.mxu0 0.0
    %8277 = vmatpush1.msra.mxu0 0.0
    %8278 = vmatprep.subr.mxu0 0.0
    %8279 = vmatpush1.msra.mxu0 0.0
    %8280 = vmatprep.subr.mxu0 0.0
    %8281 = vmatpush1.msra.mxu0 0.0
    %8282 = vmatprep.subr.mxu0 0.0
    %8283 = vmatpush1.msra.mxu0 0.0
    %8284 = vmatprep.subr.mxu0 0.0
    %8285 = vmatpush1.msra.mxu0 0.0
    %8286 = vmatprep.subr.mxu0 0.0
    %8287 = vmatpush1.msra.mxu0 0.0
    %8288 = vmatprep.mubr.f32.mxu0 0.0
    %8289 = vmatmul.mubr.f32.gmra.mrb[0].mxu0 %v8201
    %v8290 = vpop.f32.mrb[0].mxu0
    %v8291 = vadd.f32 0.0, %v8290
    %v8292 = vpop.f32.mrb[0].mxu0
    %8293 = vmatprep.mubr.f32.mxu0 0.0
    %8294 = vmatmul.mubr.f32.gmra.mrb[0].mxu0 %v8204
    %v8295 = vpop.f32.mrb[0].mxu0
    %v8296 = vadd.f32 0.0, %v8295
    %v8297 = vpop.f32.mrb[0].mxu0
    %8298 = vmatprep.mubr.f32.mxu0 0.0
    %8299 = vmatmul.mubr.f32.gmra.mrb[0].mxu0 %v8207
    %v8300 = vpop.f32.mrb[0].mxu0
    %v8301 = vadd.f32 0.0, %v8300
    %v8302 = vpop.f32.mrb[0].mxu0
    %8303 = vmatprep.mubr.f32.mxu0 0.0
    %8304 = vmatmul.mubr.f32.gmra.mrb[0].mxu0 %v8210
    %v8305 = vpop.f32.mrb[0].mxu0
    %v8306 = vadd.f32 0.0, %v8305
    %v8307 = vpop.f32.mrb[0].mxu0
    %8308 = vmatprep.mubr.f32.mxu0 0.0
    %8309 = vmatmul.mubr.f32.gmra.mrb[0].mxu0 %v8213
    %v8310 = vpop.f32.mrb[0].mxu0
    %v8311 = vadd.f32 0.0, %v8310
    %v8312 = vpop.f32.mrb[0].mxu0
    %8313 = vmatprep.mubr.f32.mxu0 0.0
    %8314 = vmatmul.mubr.f32.gmra.mrb[0].mxu0 %v8216
    %v8315 = vpop.f32.mrb[0].mxu0
    %v8316 = vadd.f32 0.0, %v8315
    %v8317 = vpop.f32.mrb[0].mxu0
    %8318 = vmatprep.mubr.f32.mxu0 0.0
    %8319 = vmatmul.mubr.f32.gmra.mrb[0].mxu0 %v8219
    %v8320 = vpop.f32.mrb[0].mxu0
    %v8321 = vadd.f32 0.0, %v8320
    %v8322 = vpop.f32.mrb[0].mxu0
    %8323 = vmatprep.mubr.f32.mxu0 0.0
    %8324 = vmatmul.mubr.f32.gmra.mrb[0].mxu0 %v8222
    %v8325 = vpop.f32.mrb[0].mxu0
    %v8326 = vadd.f32 0.0, %v8325
    %v8327 = vpop.f32.mrb[0].mxu0
    %8328 = vdwg.mxu0
    %v8330 = vsel %vm219, %v5596, 0
    %v8333 = vsel %vm219, %v5597, 0
    %v8336 = vsel %vm219, %v5598, 0
    %v8339 = vsel %vm219, %v5599, 0
    %v8342 = vsel %vm219, %v5600, 0
    %v8345 = vsel %vm219, %v5601, 0
    %v8348 = vsel %vm219, %v5602, 0
    %v8351 = vsel %vm219, %v5603, 0
    %8353 = vmatprep.subr.mxu0 0.0
    %8354 = vmatpush1.msra.mxu0 %v195
    %8355 = vmatprep.subr.mxu0 0.0
    %8356 = vmatpush1.msra.mxu0 %v196
    %8357 = vmatprep.subr.mxu0 0.0
    %8358 = vmatpush1.msra.mxu0 %v197
    %8359 = vmatprep.subr.mxu0 0.0
    %8360 = vmatpush1.msra.mxu0 %v198
    %8361 = vmatprep.subr.mxu0 0.0
    %8362 = vmatpush1.msra.mxu0 %v199
    %8363 = vmatprep.subr.mxu0 0.0
    %8364 = vmatpush1.msra.mxu0 %v200
    %8365 = vmatprep.subr.mxu0 0.0
    %8366 = vmatpush1.msra.mxu0 %v201
    %8367 = vmatprep.subr.mxu0 0.0
    %8368 = vmatpush1.msra.mxu0 %v202
    %8369 = vmatprep.subr.mxu0 0.0
    %8370 = vmatpush1.msra.mxu0 0.0
    %8371 = vmatprep.subr.mxu0 0.0
    %8372 = vmatpush1.msra.mxu0 0.0
    %8373 = vmatprep.subr.mxu0 0.0
    %8374 = vmatpush1.msra.mxu0 0.0
    %8375 = vmatprep.subr.mxu0 0.0
    %8376 = vmatpush1.msra.mxu0 0.0
    %8377 = vmatprep.subr.mxu0 0.0
    %8378 = vmatpush1.msra.mxu0 0.0
    %8379 = vmatprep.subr.mxu0 0.0
    %8380 = vmatpush1.msra.mxu0 0.0
    %8381 = vmatprep.subr.mxu0 0.0
    %8382 = vmatpush1.msra.mxu0 0.0
    %8383 = vmatprep.subr.mxu0 0.0
    %8384 = vmatpush1.msra.mxu0 0.0
    %8385 = vmatprep.subr.mxu0 0.0
    %8386 = vmatpush1.msra.mxu0 0.0
    %8387 = vmatprep.subr.mxu0 0.0
    %8388 = vmatpush1.msra.mxu0 0.0
    %8389 = vmatprep.subr.mxu0 0.0
    %8390 = vmatpush1.msra.mxu0 0.0
    %8391 = vmatprep.subr.mxu0 0.0
    %8392 = vmatpush1.msra.mxu0 0.0
    %8393 = vmatprep.subr.mxu0 0.0
    %8394 = vmatpush1.msra.mxu0 0.0
    %8395 = vmatprep.subr.mxu0 0.0
    %8396 = vmatpush1.msra.mxu0 0.0
    %8397 = vmatprep.subr.mxu0 0.0
    %8398 = vmatpush1.msra.mxu0 0.0
    %8399 = vmatprep.subr.mxu0 0.0
    %8400 = vmatpush1.msra.mxu0 0.0
    %8401 = vmatprep.subr.mxu0 0.0
    %8402 = vmatpush1.msra.mxu0 0.0
    %8403 = vmatprep.subr.mxu0 0.0
    %8404 = vmatpush1.msra.mxu0 0.0
    %8405 = vmatprep.subr.mxu0 0.0
    %8406 = vmatpush1.msra.mxu0 0.0
    %8407 = vmatprep.subr.mxu0 0.0
    %8408 = vmatpush1.msra.mxu0 0.0
    %8409 = vmatprep.subr.mxu0 0.0
    %8410 = vmatpush1.msra.mxu0 0.0
    %8411 = vmatprep.subr.mxu0 0.0
    %8412 = vmatpush1.msra.mxu0 0.0
    %8413 = vmatprep.subr.mxu0 0.0
    %8414 = vmatpush1.msra.mxu0 0.0
    %8415 = vmatprep.subr.mxu0 0.0
    %8416 = vmatpush1.msra.mxu0 0.0
    %8417 = vmatprep.mubr.f32.mxu0 0.0
    %8418 = vmatmul.mubr.f32.gmra.mrb[0].mxu0 %v8330
    %v8419 = vpop.f32.mrb[0].mxu0
    %v8420 = vadd.f32 0.0, %v8419
    %v8421 = vpop.f32.mrb[0].mxu0
    %8422 = vmatprep.mubr.f32.mxu0 0.0
    %8423 = vmatmul.mubr.f32.gmra.mrb[0].mxu0 %v8333
    %v8424 = vpop.f32.mrb[0].mxu0
    %v8425 = vadd.f32 0.0, %v8424
    %v8426 = vpop.f32.mrb[0].mxu0
    %8427 = vmatprep.mubr.f32.mxu0 0.0
    %8428 = vmatmul.mubr.f32.gmra.mrb[0].mxu0 %v8336
    %v8429 = vpop.f32.mrb[0].mxu0
    %v8430 = vadd.f32 0.0, %v8429
    %v8431 = vpop.f32.mrb[0].mxu0
    %8432 = vmatprep.mubr.f32.mxu0 0.0
    %8433 = vmatmul.mubr.f32.gmra.mrb[0].mxu0 %v8339
    %v8434 = vpop.f32.mrb[0].mxu0
    %v8435 = vadd.f32 0.0, %v8434
    %v8436 = vpop.f32.mrb[0].mxu0
    %8437 = vmatprep.mubr.f32.mxu0 0.0
    %8438 = vmatmul.mubr.f32.gmra.mrb[0].mxu0 %v8342
    %v8439 = vpop.f32.mrb[0].mxu0
    %v8440 = vadd.f32 0.0, %v8439
    %v8441 = vpop.f32.mrb[0].mxu0
    %8442 = vmatprep.mubr.f32.mxu0 0.0
    %8443 = vmatmul.mubr.f32.gmra.mrb[0].mxu0 %v8345
    %v8444 = vpop.f32.mrb[0].mxu0
    %v8445 = vadd.f32 0.0, %v8444
    %v8446 = vpop.f32.mrb[0].mxu0
    %8447 = vmatprep.mubr.f32.mxu0 0.0
    %8448 = vmatmul.mubr.f32.gmra.mrb[0].mxu0 %v8348
    %v8449 = vpop.f32.mrb[0].mxu0
    %v8450 = vadd.f32 0.0, %v8449
    %v8451 = vpop.f32.mrb[0].mxu0
    %8452 = vmatprep.mubr.f32.mxu0 0.0
    %8453 = vmatmul.mubr.f32.gmra.mrb[0].mxu0 %v8351
    %v8454 = vpop.f32.mrb[0].mxu0
    %v8455 = vadd.f32 0.0, %v8454
    %v8456 = vpop.f32.mrb[0].mxu0
    %8457 = vdwg.mxu0
    %v8459 = vsel %vm219, %v5604, 0
    %v8462 = vsel %vm219, %v5605, 0
    %v8465 = vsel %vm219, %v5606, 0
    %v8468 = vsel %vm219, %v5607, 0
    %v8471 = vsel %vm219, %v5608, 0
    %v8474 = vsel %vm219, %v5609, 0
    %v8477 = vsel %vm219, %v5610, 0
    %v8480 = vsel %vm219, %v5611, 0
    %8482 = vmatprep.subr.mxu0 0.0
    %8483 = vmatpush1.msra.mxu0 %v203
    %8484 = vmatprep.subr.mxu0 0.0
    %8485 = vmatpush1.msra.mxu0 %v204
    %8486 = vmatprep.subr.mxu0 0.0
    %8487 = vmatpush1.msra.mxu0 %v205
    %8488 = vmatprep.subr.mxu0 0.0
    %8489 = vmatpush1.msra.mxu0 %v206
    %8490 = vmatprep.subr.mxu0 0.0
    %8491 = vmatpush1.msra.mxu0 %v207
    %8492 = vmatprep.subr.mxu0 0.0
    %8493 = vmatpush1.msra.mxu0 %v208
    %8494 = vmatprep.subr.mxu0 0.0
    %8495 = vmatpush1.msra.mxu0 %v209
    %8496 = vmatprep.subr.mxu0 0.0
    %8497 = vmatpush1.msra.mxu0 %v210
    %8498 = vmatprep.subr.mxu0 0.0
    %8499 = vmatpush1.msra.mxu0 0.0
    %8500 = vmatprep.subr.mxu0 0.0
    %8501 = vmatpush1.msra.mxu0 0.0
    %8502 = vmatprep.subr.mxu0 0.0
    %8503 = vmatpush1.msra.mxu0 0.0
    %8504 = vmatprep.subr.mxu0 0.0
    %8505 = vmatpush1.msra.mxu0 0.0
    %8506 = vmatprep.subr.mxu0 0.0
    %8507 = vmatpush1.msra.mxu0 0.0
    %8508 = vmatprep.subr.mxu0 0.0
    %8509 = vmatpush1.msra.mxu0 0.0
    %8510 = vmatprep.subr.mxu0 0.0
    %8511 = vmatpush1.msra.mxu0 0.0
    %8512 = vmatprep.subr.mxu0 0.0
    %8513 = vmatpush1.msra.mxu0 0.0
    %8514 = vmatprep.subr.mxu0 0.0
    %8515 = vmatpush1.msra.mxu0 0.0
    %8516 = vmatprep.subr.mxu0 0.0
    %8517 = vmatpush1.msra.mxu0 0.0
    %8518 = vmatprep.subr.mxu0 0.0
    %8519 = vmatpush1.msra.mxu0 0.0
    %8520 = vmatprep.subr.mxu0 0.0
    %8521 = vmatpush1.msra.mxu0 0.0
    %8522 = vmatprep.subr.mxu0 0.0
    %8523 = vmatpush1.msra.mxu0 0.0
    %8524 = vmatprep.subr.mxu0 0.0
    %8525 = vmatpush1.msra.mxu0 0.0
    %8526 = vmatprep.subr.mxu0 0.0
    %8527 = vmatpush1.msra.mxu0 0.0
    %8528 = vmatprep.subr.mxu0 0.0
    %8529 = vmatpush1.msra.mxu0 0.0
    %8530 = vmatprep.subr.mxu0 0.0
    %8531 = vmatpush1.msra.mxu0 0.0
    %8532 = vmatprep.subr.mxu0 0.0
    %8533 = vmatpush1.msra.mxu0 0.0
    %8534 = vmatprep.subr.mxu0 0.0
    %8535 = vmatpush1.msra.mxu0 0.0
    %8536 = vmatprep.subr.mxu0 0.0
    %8537 = vmatpush1.msra.mxu0 0.0
    %8538 = vmatprep.subr.mxu0 0.0
    %8539 = vmatpush1.msra.mxu0 0.0
    %8540 = vmatprep.subr.mxu0 0.0
    %8541 = vmatpush1.msra.mxu0 0.0
    %8542 = vmatprep.subr.mxu0 0.0
    %8543 = vmatpush1.msra.mxu0 0.0
    %8544 = vmatprep.subr.mxu0 0.0
    %8545 = vmatpush1.msra.mxu0 0.0
    %8546 = vmatprep.mubr.f32.mxu0 0.0
    %8547 = vmatmul.mubr.f32.gmra.mrb[0].mxu0 %v8459
    %v8548 = vpop.f32.mrb[0].mxu0
    %v8549 = vadd.f32 0.0, %v8548
    %v8550 = vpop.f32.mrb[0].mxu0
    %8551 = vmatprep.mubr.f32.mxu0 0.0
    %8552 = vmatmul.mubr.f32.gmra.mrb[0].mxu0 %v8462
    %v8553 = vpop.f32.mrb[0].mxu0
    %v8554 = vadd.f32 0.0, %v8553
    %v8555 = vpop.f32.mrb[0].mxu0
    %8556 = vmatprep.mubr.f32.mxu0 0.0
    %8557 = vmatmul.mubr.f32.gmra.mrb[0].mxu0 %v8465
    %v8558 = vpop.f32.mrb[0].mxu0
    %v8559 = vadd.f32 0.0, %v8558
    %v8560 = vpop.f32.mrb[0].mxu0
    %8561 = vmatprep.mubr.f32.mxu0 0.0
    %8562 = vmatmul.mubr.f32.gmra.mrb[0].mxu0 %v8468
    %v8563 = vpop.f32.mrb[0].mxu0
    %v8564 = vadd.f32 0.0, %v8563
    %v8565 = vpop.f32.mrb[0].mxu0
    %8566 = vmatprep.mubr.f32.mxu0 0.0
    %8567 = vmatmul.mubr.f32.gmra.mrb[0].mxu0 %v8471
    %v8568 = vpop.f32.mrb[0].mxu0
    %v8569 = vadd.f32 0.0, %v8568
    %v8570 = vpop.f32.mrb[0].mxu0
    %8571 = vmatprep.mubr.f32.mxu0 0.0
    %8572 = vmatmul.mubr.f32.gmra.mrb[0].mxu0 %v8474
    %v8573 = vpop.f32.mrb[0].mxu0
    %v8574 = vadd.f32 0.0, %v8573
    %v8575 = vpop.f32.mrb[0].mxu0
    %8576 = vmatprep.mubr.f32.mxu0 0.0
    %8577 = vmatmul.mubr.f32.gmra.mrb[0].mxu0 %v8477
    %v8578 = vpop.f32.mrb[0].mxu0
    %v8579 = vadd.f32 0.0, %v8578
    %v8580 = vpop.f32.mrb[0].mxu0
    %8581 = vmatprep.mubr.f32.mxu0 0.0
    %8582 = vmatmul.mubr.f32.gmra.mrb[0].mxu0 %v8480
    %v8583 = vpop.f32.mrb[0].mxu0
    %v8584 = vadd.f32 0.0, %v8583
    %v8585 = vpop.f32.mrb[0].mxu0
    %8586 = vdwg.mxu0
    %v8588 = vsel %vm219, %v5612, 0
    %v8591 = vsel %vm219, %v5613, 0
    %v8594 = vsel %vm219, %v5614, 0
    %v8597 = vsel %vm219, %v5615, 0
    %v8600 = vsel %vm219, %v5616, 0
    %v8603 = vsel %vm219, %v5617, 0
    %v8606 = vsel %vm219, %v5618, 0
    %v8609 = vsel %vm219, %v5619, 0
    %8611 = vmatprep.subr.mxu0 0.0
    %8612 = vmatpush1.msra.mxu0 %v211
    %8613 = vmatprep.subr.mxu0 0.0
    %8614 = vmatpush1.msra.mxu0 %v212
    %8615 = vmatprep.subr.mxu0 0.0
    %8616 = vmatpush1.msra.mxu0 %v213
    %8617 = vmatprep.subr.mxu0 0.0
    %8618 = vmatpush1.msra.mxu0 %v214
    %8619 = vmatprep.subr.mxu0 0.0
    %8620 = vmatpush1.msra.mxu0 %v215
    %8621 = vmatprep.subr.mxu0 0.0
    %8622 = vmatpush1.msra.mxu0 %v216
    %8623 = vmatprep.subr.mxu0 0.0
    %8624 = vmatpush1.msra.mxu0 %v217
    %8625 = vmatprep.subr.mxu0 0.0
    %8626 = vmatpush1.msra.mxu0 %v218
    %8627 = vmatprep.subr.mxu0 0.0
    %8628 = vmatpush1.msra.mxu0 0.0
    %8629 = vmatprep.subr.mxu0 0.0
    %8630 = vmatpush1.msra.mxu0 0.0
    %8631 = vmatprep.subr.mxu0 0.0
    %8632 = vmatpush1.msra.mxu0 0.0
    %8633 = vmatprep.subr.mxu0 0.0
    %8634 = vmatpush1.msra.mxu0 0.0
    %8635 = vmatprep.subr.mxu0 0.0
    %8636 = vmatpush1.msra.mxu0 0.0
    %8637 = vmatprep.subr.mxu0 0.0
    %8638 = vmatpush1.msra.mxu0 0.0
    %8639 = vmatprep.subr.mxu0 0.0
    %8640 = vmatpush1.msra.mxu0 0.0
    %8641 = vmatprep.subr.mxu0 0.0
    %8642 = vmatpush1.msra.mxu0 0.0
    %8643 = vmatprep.subr.mxu0 0.0
    %8644 = vmatpush1.msra.mxu0 0.0
    %8645 = vmatprep.subr.mxu0 0.0
    %8646 = vmatpush1.msra.mxu0 0.0
    %8647 = vmatprep.subr.mxu0 0.0
    %8648 = vmatpush1.msra.mxu0 0.0
    %8649 = vmatprep.subr.mxu0 0.0
    %8650 = vmatpush1.msra.mxu0 0.0
    %8651 = vmatprep.subr.mxu0 0.0
    %8652 = vmatpush1.msra.mxu0 0.0
    %8653 = vmatprep.subr.mxu0 0.0
    %8654 = vmatpush1.msra.mxu0 0.0
    %8655 = vmatprep.subr.mxu0 0.0
    %8656 = vmatpush1.msra.mxu0 0.0
    %8657 = vmatprep.subr.mxu0 0.0
    %8658 = vmatpush1.msra.mxu0 0.0
    %8659 = vmatprep.subr.mxu0 0.0
    %8660 = vmatpush1.msra.mxu0 0.0
    %8661 = vmatprep.subr.mxu0 0.0
    %8662 = vmatpush1.msra.mxu0 0.0
    %8663 = vmatprep.subr.mxu0 0.0
    %8664 = vmatpush1.msra.mxu0 0.0
    %8665 = vmatprep.subr.mxu0 0.0
    %8666 = vmatpush1.msra.mxu0 0.0
    %8667 = vmatprep.subr.mxu0 0.0
    %8668 = vmatpush1.msra.mxu0 0.0
    %8669 = vmatprep.subr.mxu0 0.0
    %8670 = vmatpush1.msra.mxu0 0.0
    %8671 = vmatprep.subr.mxu0 0.0
    %8672 = vmatpush1.msra.mxu0 0.0
    %8673 = vmatprep.subr.mxu0 0.0
    %8674 = vmatpush1.msra.mxu0 0.0
    %8675 = vmatprep.mubr.f32.mxu0 0.0
    %8676 = vmatmul.mubr.f32.gmra.mrb[0].mxu0 %v8588
    %v8677 = vpop.f32.mrb[0].mxu0
    %v8678 = vadd.f32 0.0, %v8677
    %v8679 = vpop.f32.mrb[0].mxu0
    %8680 = vmatprep.mubr.f32.mxu0 0.0
    %8681 = vmatmul.mubr.f32.gmra.mrb[0].mxu0 %v8591
    %v8682 = vpop.f32.mrb[0].mxu0
    %v8683 = vadd.f32 0.0, %v8682
    %v8684 = vpop.f32.mrb[0].mxu0
    %8685 = vmatprep.mubr.f32.mxu0 0.0
    %8686 = vmatmul.mubr.f32.gmra.mrb[0].mxu0 %v8594
    %v8687 = vpop.f32.mrb[0].mxu0
    %v8688 = vadd.f32 0.0, %v8687
    %v8689 = vpop.f32.mrb[0].mxu0
    %8690 = vmatprep.mubr.f32.mxu0 0.0
    %8691 = vmatmul.mubr.f32.gmra.mrb[0].mxu0 %v8597
    %v8692 = vpop.f32.mrb[0].mxu0
    %v8693 = vadd.f32 0.0, %v8692
    %v8694 = vpop.f32.mrb[0].mxu0
    %8695 = vmatprep.mubr.f32.mxu0 0.0
    %8696 = vmatmul.mubr.f32.gmra.mrb[0].mxu0 %v8600
    %v8697 = vpop.f32.mrb[0].mxu0
    %v8698 = vadd.f32 0.0, %v8697
    %v8699 = vpop.f32.mrb[0].mxu0
    %8700 = vmatprep.mubr.f32.mxu0 0.0
    %8701 = vmatmul.mubr.f32.gmra.mrb[0].mxu0 %v8603
    %v8702 = vpop.f32.mrb[0].mxu0
    %v8703 = vadd.f32 0.0, %v8702
    %v8704 = vpop.f32.mrb[0].mxu0
    %8705 = vmatprep.mubr.f32.mxu0 0.0
    %8706 = vmatmul.mubr.f32.gmra.mrb[0].mxu0 %v8606
    %v8707 = vpop.f32.mrb[0].mxu0
    %v8708 = vadd.f32 0.0, %v8707
    %v8709 = vpop.f32.mrb[0].mxu0
    %8710 = vmatprep.mubr.f32.mxu0 0.0
    %8711 = vmatmul.mubr.f32.gmra.mrb[0].mxu0 %v8609
    %v8712 = vpop.f32.mrb[0].mxu0
    %v8713 = vadd.f32 0.0, %v8712
    %v8714 = vpop.f32.mrb[0].mxu0
    %8715 = vdwg.mxu0
    %8716 = vst.msk [vmem:[#allocation5] sm:$0xff] %vm219, %v5711
    %8717 = vst.msk [vmem:[#allocation5 + $0x8] sm:$0xff] %vm219, %v5716
    %8718 = vst.msk [vmem:[#allocation5 + $0x10] sm:$0xff] %vm219, %v5721
    %8719 = vst.msk [vmem:[#allocation5 + $0x18] sm:$0xff] %vm219, %v5726
    %8720 = vst.msk [vmem:[#allocation5 + $0x20] sm:$0xff] %vm219, %v5731
    %8721 = vst.msk [vmem:[#allocation5 + $0x28] sm:$0xff] %vm219, %v5736
    %8722 = vst.msk [vmem:[#allocation5 + $0x30] sm:$0xff] %vm219, %v5741
    %8723 = vst.msk [vmem:[#allocation5 + $0x38] sm:$0xff] %vm219, %v5746
    %8724 = vst.msk [vmem:[#allocation5 + $0x40] sm:$0xff] %vm219, %v5840
    %8725 = vst.msk [vmem:[#allocation5 + $0x48] sm:$0xff] %vm219, %v5845
    %8726 = vst.msk [vmem:[#allocation5 + $0x50] sm:$0xff] %vm219, %v5850
    %8727 = vst.msk [vmem:[#allocation5 + $0x58] sm:$0xff] %vm219, %v5855
    %8728 = vst.msk [vmem:[#allocation5 + $0x60] sm:$0xff] %vm219, %v5860
    %8729 = vst.msk [vmem:[#allocation5 + $0x68] sm:$0xff] %vm219, %v5865
    %8730 = vst.msk [vmem:[#allocation5 + $0x70] sm:$0xff] %vm219, %v5870
    %8731 = vst.msk [vmem:[#allocation5 + $0x78] sm:$0xff] %vm219, %v5875
    %8732 = vst.msk [vmem:[#allocation5 + $0x80] sm:$0xff] %vm219, %v5969
    %8733 = vst.msk [vmem:[#allocation5 + $0x88] sm:$0xff] %vm219, %v5974
    %8734 = vst.msk [vmem:[#allocation5 + $0x90] sm:$0xff] %vm219, %v5979
    %8735 = vst.msk [vmem:[#allocation5 + $0x98] sm:$0xff] %vm219, %v5984
    %8736 = vst.msk [vmem:[#allocation5 + $0xa0] sm:$0xff] %vm219, %v5989
    %8737 = vst.msk [vmem:[#allocation5 + $0xa8] sm:$0xff] %vm219, %v5994
    %8738 = vst.msk [vmem:[#allocation5 + $0xb0] sm:$0xff] %vm219, %v5999
    %8739 = vst.msk [vmem:[#allocation5 + $0xb8] sm:$0xff] %vm219, %v6004
    %8740 = vst.msk [vmem:[#allocation5 + $0xc0] sm:$0xff] %vm219, %v6098
    %8741 = vst.msk [vmem:[#allocation5 + $0xc8] sm:$0xff] %vm219, %v6103
    %8742 = vst.msk [vmem:[#allocation5 + $0xd0] sm:$0xff] %vm219, %v6108
    %8743 = vst.msk [vmem:[#allocation5 + $0xd8] sm:$0xff] %vm219, %v6113
    %8744 = vst.msk [vmem:[#allocation5 + $0xe0] sm:$0xff] %vm219, %v6118
    %8745 = vst.msk [vmem:[#allocation5 + $0xe8] sm:$0xff] %vm219, %v6123
    %8746 = vst.msk [vmem:[#allocation5 + $0xf0] sm:$0xff] %vm219, %v6128
    %8747 = vst.msk [vmem:[#allocation5 + $0xf8] sm:$0xff] %vm219, %v6133
    %8748 = vst.msk [vmem:[#allocation5 + $0x100] sm:$0xff] %vm219, %v6227
    %8749 = vst.msk [vmem:[#allocation5 + $0x108] sm:$0xff] %vm219, %v6232
    %8750 = vst.msk [vmem:[#allocation5 + $0x110] sm:$0xff] %vm219, %v6237
    %8751 = vst.msk [vmem:[#allocation5 + $0x118] sm:$0xff] %vm219, %v6242
    %8752 = vst.msk [vmem:[#allocation5 + $0x120] sm:$0xff] %vm219, %v6247
    %8753 = vst.msk [vmem:[#allocation5 + $0x128] sm:$0xff] %vm219, %v6252
    %8754 = vst.msk [vmem:[#allocation5 + $0x130] sm:$0xff] %vm219, %v6257
    %8755 = vst.msk [vmem:[#allocation5 + $0x138] sm:$0xff] %vm219, %v6262
    %8756 = vst.msk [vmem:[#allocation5 + $0x140] sm:$0xff] %vm219, %v6356
    %8757 = vst.msk [vmem:[#allocation5 + $0x148] sm:$0xff] %vm219, %v6361
    %8758 = vst.msk [vmem:[#allocation5 + $0x150] sm:$0xff] %vm219, %v6366
    %8759 = vst.msk [vmem:[#allocation5 + $0x158] sm:$0xff] %vm219, %v6371
    %8760 = vst.msk [vmem:[#allocation5 + $0x160] sm:$0xff] %vm219, %v6376
    %8761 = vst.msk [vmem:[#allocation5 + $0x168] sm:$0xff] %vm219, %v6381
    %8762 = vst.msk [vmem:[#allocation5 + $0x170] sm:$0xff] %vm219, %v6386
    %8763 = vst.msk [vmem:[#allocation5 + $0x178] sm:$0xff] %vm219, %v6391
    %8764 = vst.msk [vmem:[#allocation5 + $0x180] sm:$0xff] %vm219, %v6485
    %8765 = vst.msk [vmem:[#allocation5 + $0x188] sm:$0xff] %vm219, %v6490
    %8766 = vst.msk [vmem:[#allocation5 + $0x190] sm:$0xff] %vm219, %v6495
    %8767 = vst.msk [vmem:[#allocation5 + $0x198] sm:$0xff] %vm219, %v6500
    %8768 = vst.msk [vmem:[#allocation5 + $0x1a0] sm:$0xff] %vm219, %v6505
    %8769 = vst.msk [vmem:[#allocation5 + $0x1a8] sm:$0xff] %vm219, %v6510
    %8770 = vst.msk [vmem:[#allocation5 + $0x1b0] sm:$0xff] %vm219, %v6515
    %8771 = vst.msk [vmem:[#allocation5 + $0x1b8] sm:$0xff] %vm219, %v6520
    %8772 = vst.msk [vmem:[#allocation5 + $0x1c0] sm:$0xff] %vm219, %v6614
    %8773 = vst.msk [vmem:[#allocation5 + $0x1c8] sm:$0xff] %vm219, %v6619
    %8774 = vst.msk [vmem:[#allocation5 + $0x1d0] sm:$0xff] %vm219, %v6624
    %8775 = vst.msk [vmem:[#allocation5 + $0x1d8] sm:$0xff] %vm219, %v6629
    %8776 = vst.msk [vmem:[#allocation5 + $0x1e0] sm:$0xff] %vm219, %v6634
    %8777 = vst.msk [vmem:[#allocation5 + $0x1e8] sm:$0xff] %vm219, %v6639
    %8778 = vst.msk [vmem:[#allocation5 + $0x1f0] sm:$0xff] %vm219, %v6644
    %8779 = vst.msk [vmem:[#allocation5 + $0x1f8] sm:$0xff] %vm219, %v6649
    %8780 = vst.msk [vmem:[#allocation6] sm:$0xff] %vm219, %v6743
    %8781 = vst.msk [vmem:[#allocation6 + $0x8] sm:$0xff] %vm219, %v6748
    %8782 = vst.msk [vmem:[#allocation6 + $0x10] sm:$0xff] %vm219, %v6753
    %8783 = vst.msk [vmem:[#allocation6 + $0x18] sm:$0xff] %vm219, %v6758
    %8784 = vst.msk [vmem:[#allocation6 + $0x20] sm:$0xff] %vm219, %v6763
    %8785 = vst.msk [vmem:[#allocation6 + $0x28] sm:$0xff] %vm219, %v6768
    %8786 = vst.msk [vmem:[#allocation6 + $0x30] sm:$0xff] %vm219, %v6773
    %8787 = vst.msk [vmem:[#allocation6 + $0x38] sm:$0xff] %vm219, %v6778
    %8788 = vst.msk [vmem:[#allocation6 + $0x40] sm:$0xff] %vm219, %v6872
    %8789 = vst.msk [vmem:[#allocation6 + $0x48] sm:$0xff] %vm219, %v6877
    %8790 = vst.msk [vmem:[#allocation6 + $0x50] sm:$0xff] %vm219, %v6882
    %8791 = vst.msk [vmem:[#allocation6 + $0x58] sm:$0xff] %vm219, %v6887
    %8792 = vst.msk [vmem:[#allocation6 + $0x60] sm:$0xff] %vm219, %v6892
    %8793 = vst.msk [vmem:[#allocation6 + $0x68] sm:$0xff] %vm219, %v6897
    %8794 = vst.msk [vmem:[#allocation6 + $0x70] sm:$0xff] %vm219, %v6902
    %8795 = vst.msk [vmem:[#allocation6 + $0x78] sm:$0xff] %vm219, %v6907
    %8796 = vst.msk [vmem:[#allocation6 + $0x80] sm:$0xff] %vm219, %v7001
    %8797 = vst.msk [vmem:[#allocation6 + $0x88] sm:$0xff] %vm219, %v7006
    %8798 = vst.msk [vmem:[#allocation6 + $0x90] sm:$0xff] %vm219, %v7011
    %8799 = vst.msk [vmem:[#allocation6 + $0x98] sm:$0xff] %vm219, %v7016
    %8800 = vst.msk [vmem:[#allocation6 + $0xa0] sm:$0xff] %vm219, %v7021
    %8801 = vst.msk [vmem:[#allocation6 + $0xa8] sm:$0xff] %vm219, %v7026
    %8802 = vst.msk [vmem:[#allocation6 + $0xb0] sm:$0xff] %vm219, %v7031
    %8803 = vst.msk [vmem:[#allocation6 + $0xb8] sm:$0xff] %vm219, %v7036
    %8804 = vst.msk [vmem:[#allocation6 + $0xc0] sm:$0xff] %vm219, %v7130
    %8805 = vst.msk [vmem:[#allocation6 + $0xc8] sm:$0xff] %vm219, %v7135
    %8806 = vst.msk [vmem:[#allocation6 + $0xd0] sm:$0xff] %vm219, %v7140
    %8807 = vst.msk [vmem:[#allocation6 + $0xd8] sm:$0xff] %vm219, %v7145
    %8808 = vst.msk [vmem:[#allocation6 + $0xe0] sm:$0xff] %vm219, %v7150
    %8809 = vst.msk [vmem:[#allocation6 + $0xe8] sm:$0xff] %vm219, %v7155
    %8810 = vst.msk [vmem:[#allocation6 + $0xf0] sm:$0xff] %vm219, %v7160
    %8811 = vst.msk [vmem:[#allocation6 + $0xf8] sm:$0xff] %vm219, %v7165
    %8812 = vst.msk [vmem:[#allocation6 + $0x100] sm:$0xff] %vm219, %v7259
    %8813 = vst.msk [vmem:[#allocation6 + $0x108] sm:$0xff] %vm219, %v7264
    %8814 = vst.msk [vmem:[#allocation6 + $0x110] sm:$0xff] %vm219, %v7269
    %8815 = vst.msk [vmem:[#allocation6 + $0x118] sm:$0xff] %vm219, %v7274
    %8816 = vst.msk [vmem:[#allocation6 + $0x120] sm:$0xff] %vm219, %v7279
    %8817 = vst.msk [vmem:[#allocation6 + $0x128] sm:$0xff] %vm219, %v7284
    %8818 = vst.msk [vmem:[#allocation6 + $0x130] sm:$0xff] %vm219, %v7289
    %8819 = vst.msk [vmem:[#allocation6 + $0x138] sm:$0xff] %vm219, %v7294
    %8820 = vst.msk [vmem:[#allocation6 + $0x140] sm:$0xff] %vm219, %v7388
    %8821 = vst.msk [vmem:[#allocation6 + $0x148] sm:$0xff] %vm219, %v7393
    %8822 = vst.msk [vmem:[#allocation6 + $0x150] sm:$0xff] %vm219, %v7398
    %8823 = vst.msk [vmem:[#allocation6 + $0x158] sm:$0xff] %vm219, %v7403
    %8824 = vst.msk [vmem:[#allocation6 + $0x160] sm:$0xff] %vm219, %v7408
    %8825 = vst.msk [vmem:[#allocation6 + $0x168] sm:$0xff] %vm219, %v7413
    %8826 = vst.msk [vmem:[#allocation6 + $0x170] sm:$0xff] %vm219, %v7418
    %8827 = vst.msk [vmem:[#allocation6 + $0x178] sm:$0xff] %vm219, %v7423
    %8828 = vst.msk [vmem:[#allocation6 + $0x180] sm:$0xff] %vm219, %v7517
    %8829 = vst.msk [vmem:[#allocation6 + $0x188] sm:$0xff] %vm219, %v7522
    %8830 = vst.msk [vmem:[#allocation6 + $0x190] sm:$0xff] %vm219, %v7527
    %8831 = vst.msk [vmem:[#allocation6 + $0x198] sm:$0xff] %vm219, %v7532
    %8832 = vst.msk [vmem:[#allocation6 + $0x1a0] sm:$0xff] %vm219, %v7537
    %8833 = vst.msk [vmem:[#allocation6 + $0x1a8] sm:$0xff] %vm219, %v7542
    %8834 = vst.msk [vmem:[#allocation6 + $0x1b0] sm:$0xff] %vm219, %v7547
    %8835 = vst.msk [vmem:[#allocation6 + $0x1b8] sm:$0xff] %vm219, %v7552
    %8836 = vst.msk [vmem:[#allocation6 + $0x1c0] sm:$0xff] %vm219, %v7646
    %8837 = vst.msk [vmem:[#allocation6 + $0x1c8] sm:$0xff] %vm219, %v7651
    %8838 = vst.msk [vmem:[#allocation6 + $0x1d0] sm:$0xff] %vm219, %v7656
    %8839 = vst.msk [vmem:[#allocation6 + $0x1d8] sm:$0xff] %vm219, %v7661
    %8840 = vst.msk [vmem:[#allocation6 + $0x1e0] sm:$0xff] %vm219, %v7666
    %8841 = vst.msk [vmem:[#allocation6 + $0x1e8] sm:$0xff] %vm219, %v7671
    %8842 = vst.msk [vmem:[#allocation6 + $0x1f0] sm:$0xff] %vm219, %v7676
    %8843 = vst.msk [vmem:[#allocation6 + $0x1f8] sm:$0xff] %vm219, %v7681
    %8844 = vst.msk [vmem:[#allocation8] sm:$0xff] %vm219, %v7775
    %8845 = vst.msk [vmem:[#allocation8 + $0x8] sm:$0xff] %vm219, %v7780
    %8846 = vst.msk [vmem:[#allocation8 + $0x10] sm:$0xff] %vm219, %v7785
    %8847 = vst.msk [vmem:[#allocation8 + $0x18] sm:$0xff] %vm219, %v7790
    %8848 = vst.msk [vmem:[#allocation8 + $0x20] sm:$0xff] %vm219, %v7795
    %8849 = vst.msk [vmem:[#allocation8 + $0x28] sm:$0xff] %vm219, %v7800
    %8850 = vst.msk [vmem:[#allocation8 + $0x30] sm:$0xff] %vm219, %v7805
    %8851 = vst.msk [vmem:[#allocation8 + $0x38] sm:$0xff] %vm219, %v7810
    %8852 = vst.msk [vmem:[#allocation8 + $0x40] sm:$0xff] %vm219, %v7904
    %8853 = vst.msk [vmem:[#allocation8 + $0x48] sm:$0xff] %vm219, %v7909
    %8854 = vst.msk [vmem:[#allocation8 + $0x50] sm:$0xff] %vm219, %v7914
    %8855 = vst.msk [vmem:[#allocation8 + $0x58] sm:$0xff] %vm219, %v7919
    %8856 = vst.msk [vmem:[#allocation8 + $0x60] sm:$0xff] %vm219, %v7924
    %8857 = vst.msk [vmem:[#allocation8 + $0x68] sm:$0xff] %vm219, %v7929
    %8858 = vst.msk [vmem:[#allocation8 + $0x70] sm:$0xff] %vm219, %v7934
    %8859 = vst.msk [vmem:[#allocation8 + $0x78] sm:$0xff] %vm219, %v7939
    %8860 = vst.msk [vmem:[#allocation8 + $0x80] sm:$0xff] %vm219, %v8033
    %8861 = vst.msk [vmem:[#allocation8 + $0x88] sm:$0xff] %vm219, %v8038
    %8862 = vst.msk [vmem:[#allocation8 + $0x90] sm:$0xff] %vm219, %v8043
    %8863 = vst.msk [vmem:[#allocation8 + $0x98] sm:$0xff] %vm219, %v8048
    %8864 = vst.msk [vmem:[#allocation8 + $0xa0] sm:$0xff] %vm219, %v8053
    %8865 = vst.msk [vmem:[#allocation8 + $0xa8] sm:$0xff] %vm219, %v8058
    %8866 = vst.msk [vmem:[#allocation8 + $0xb0] sm:$0xff] %vm219, %v8063
    %8867 = vst.msk [vmem:[#allocation8 + $0xb8] sm:$0xff] %vm219, %v8068
    %8868 = vst.msk [vmem:[#allocation8 + $0xc0] sm:$0xff] %vm219, %v8162
    %8869 = vst.msk [vmem:[#allocation8 + $0xc8] sm:$0xff] %vm219, %v8167
    %8870 = vst.msk [vmem:[#allocation8 + $0xd0] sm:$0xff] %vm219, %v8172
    %8871 = vst.msk [vmem:[#allocation8 + $0xd8] sm:$0xff] %vm219, %v8177
    %8872 = vst.msk [vmem:[#allocation8 + $0xe0] sm:$0xff] %vm219, %v8182
    %8873 = vst.msk [vmem:[#allocation8 + $0xe8] sm:$0xff] %vm219, %v8187
    %8874 = vst.msk [vmem:[#allocation8 + $0xf0] sm:$0xff] %vm219, %v8192
    %8875 = vst.msk [vmem:[#allocation8 + $0xf8] sm:$0xff] %vm219, %v8197
    %8876 = vst.msk [vmem:[#allocation8 + $0x100] sm:$0xff] %vm219, %v8291
    %8877 = vst.msk [vmem:[#allocation8 + $0x108] sm:$0xff] %vm219, %v8296
    %8878 = vst.msk [vmem:[#allocation8 + $0x110] sm:$0xff] %vm219, %v8301
    %8879 = vst.msk [vmem:[#allocation8 + $0x118] sm:$0xff] %vm219, %v8306
    %8880 = vst.msk [vmem:[#allocation8 + $0x120] sm:$0xff] %vm219, %v8311
    %8881 = vst.msk [vmem:[#allocation8 + $0x128] sm:$0xff] %vm219, %v8316
    %8882 = vst.msk [vmem:[#allocation8 + $0x130] sm:$0xff] %vm219, %v8321
    %8883 = vst.msk [vmem:[#allocation8 + $0x138] sm:$0xff] %vm219, %v8326
    %8884 = vst.msk [vmem:[#allocation8 + $0x140] sm:$0xff] %vm219, %v8420
    %8885 = vst.msk [vmem:[#allocation8 + $0x148] sm:$0xff] %vm219, %v8425
    %8886 = vst.msk [vmem:[#allocation8 + $0x150] sm:$0xff] %vm219, %v8430
    %8887 = vst.msk [vmem:[#allocation8 + $0x158] sm:$0xff] %vm219, %v8435
    %8888 = vst.msk [vmem:[#allocation8 + $0x160] sm:$0xff] %vm219, %v8440
    %8889 = vst.msk [vmem:[#allocation8 + $0x168] sm:$0xff] %vm219, %v8445
    %8890 = vst.msk [vmem:[#allocation8 + $0x170] sm:$0xff] %vm219, %v8450
    %8891 = vst.msk [vmem:[#allocation8 + $0x178] sm:$0xff] %vm219, %v8455
    %8892 = vst.msk [vmem:[#allocation8 + $0x180] sm:$0xff] %vm219, %v8549
    %8893 = vst.msk [vmem:[#allocation8 + $0x188] sm:$0xff] %vm219, %v8554
    %8894 = vst.msk [vmem:[#allocation8 + $0x190] sm:$0xff] %vm219, %v8559
    %8895 = vst.msk [vmem:[#allocation8 + $0x198] sm:$0xff] %vm219, %v8564
    %8896 = vst.msk [vmem:[#allocation8 + $0x1a0] sm:$0xff] %vm219, %v8569
    %8897 = vst.msk [vmem:[#allocation8 + $0x1a8] sm:$0xff] %vm219, %v8574
    %8898 = vst.msk [vmem:[#allocation8 + $0x1b0] sm:$0xff] %vm219, %v8579
    %8899 = vst.msk [vmem:[#allocation8 + $0x1b8] sm:$0xff] %vm219, %v8584
    %8900 = vst.msk [vmem:[#allocation8 + $0x1c0] sm:$0xff] %vm219, %v8678
    %8901 = vst.msk [vmem:[#allocation8 + $0x1c8] sm:$0xff] %vm219, %v8683
    %8902 = vst.msk [vmem:[#allocation8 + $0x1d0] sm:$0xff] %vm219, %v8688
    %8903 = vst.msk [vmem:[#allocation8 + $0x1d8] sm:$0xff] %vm219, %v8693
    %8904 = vst.msk [vmem:[#allocation8 + $0x1e0] sm:$0xff] %vm219, %v8698
    %8905 = vst.msk [vmem:[#allocation8 + $0x1e8] sm:$0xff] %vm219, %v8703
    %8906 = vst.msk [vmem:[#allocation8 + $0x1f0] sm:$0xff] %vm219, %v8708
    %8907 = vst.msk [vmem:[#allocation8 + $0x1f8] sm:$0xff] %vm219, %v8713
    // Predicated region
    $region10: #{model_forward.1} parent=1 // pred_check
      _
    $region11: #{model_forward.1} parent=1 // pred_check_branch
      %8909 = sbr.rel (0) target = $region13
    $region12: #{model_forward.1} parent=1 // pred_region
      %s8911 = ssub.s32 8192, 8192
      %8912 = vsyncadd [#allocation4], %s8911
      %s8913 = sshll.u32 [#allocation5], 4
      %s8914 = int_to_ptr.vmem [resolvable:$true] %s8913
      %8919 = dma.vmem_to_hbm [thread:$0]  %s8914, 8192, %s1, [#allocation4], 128, 128, 8
    $region13: #{model_forward.1} parent=1 // pred_fallthru
      _
    // Predicated region
    $region14: #{model_forward.1} parent=1 // pred_check
      _
    $region15: #{model_forward.1} parent=1 // pred_check_branch
      %8921 = sbr.rel (0) target = $region17
    $region16: #{model_forward.1} parent=1 // pred_region
      %s8923 = ssub.s32 8192, 8192
      %8924 = vsyncadd [#allocation7], %s8923
      %s8925 = sshll.u32 [#allocation6], 4
      %s8926 = int_to_ptr.vmem [resolvable:$true] %s8925
      %8931 = dma.vmem_to_hbm [thread:$0]  %s8926, 8192, %s2, [#allocation7], 128, 128, 8
    $region17: #{model_forward.1} parent=1 // pred_fallthru
      _
    // Predicated region
    $region18: #{model_forward.1} parent=1 // pred_check
      _
    $region19: #{model_forward.1} parent=1 // pred_check_branch
      %8933 = sbr.rel (0) target = $region21
    $region20: #{model_forward.1} parent=1 // pred_region
      %s8935 = ssub.s32 8192, 8192
      %8936 = vsyncadd [#allocation7], %s8935
      %s8937 = sshll.u32 [#allocation8], 4
      %s8938 = int_to_ptr.vmem [resolvable:$true] %s8937
      %8943 = dma.vmem_to_hbm [thread:$0]  %s8938, 8192, %s3, [#allocation7], 128, 128, 8
    $region21: #{model_forward.1} parent=1 // pred_fallthru
      _
    // Predicated region
    $region22: #{model_forward.1} parent=1 // pred_check
      _
    $region23: #{model_forward.1} parent=1 // pred_check_branch
      %8945 = sbr.rel (0) target = $region25
    $region24: #{model_forward.1} parent=1 // pred_region
      %8946 = dma.done [#allocation4], 8192
    $region25: #{model_forward.1} parent=1 // pred_fallthru
      _
    // Predicated region
    $region26: #{model_forward.1} parent=1 // pred_check
      _
    $region27: #{model_forward.1} parent=1 // pred_check_branch
      %8948 = sbr.rel (0) target = $region29
    $region28: #{model_forward.1} parent=1 // pred_region
      %8949 = dma.done [#allocation7], 8192
    $region29: #{model_forward.1} parent=1 // pred_fallthru
      _
    // Predicated region
    $region30: #{model_forward.1} parent=1 // pred_check
      _
    $region31: #{model_forward.1} parent=1 // pred_check_branch
      %8951 = sbr.rel (0) target = $region33
    $region32: #{model_forward.1} parent=1 // pred_region
      %8952 = dma.done [#allocation7], 8192
    $region33: #{model_forward.1} parent=1 // pred_fallthru
      _
    %8953 = vsyncpa [#allocation3], 1
    %8954 = vsyncpa [#allocation4], 1
    %8955 = vsyncpa [#allocation7], 1

</llo_original>
